<compile_context>
chip_gen: v5e
topology: v5e:2x2
jax: 0.10.0
libtpu: 0.0.40
codegen_flags: <defaults>
</compile_context>

<pallas_src>
import math
from functools import partial

import numpy as np
import jax
import jax.numpy as jnp
from jax.experimental import pallas as pl
from jax.experimental.pallas import tpu as pltpu

_LANE = 128                      # lane width / MXU alignment target
_MXU_DTYPE = jnp.bfloat16        # matmul operand dtype (accumulation is f32)
_MAX_SPATIAL_POSITIONS = 1024    # keeps the K*K shift operators VMEM-friendly


def _round_up(x, m):
    return ((x + m - 1) // m) * m


def _build_shift_operators(H, W, Hout, Wout, K, stride, padding):
    """Constant 0/1 matrices P_t (t = kh*K + kw), P_t[m, q] = 1 iff output
    position m = (ho, wo) reads input position q = (r, c) with
    r = ho*stride + kh - padding, c = wo*stride + kw - padding (in range).
    Conv+bias then becomes  sum_t (P_t @ x_rows) @ W_t + b : im2col is a row
    gather done by the MXU inside the kernel, never materialized in HBM."""
    ops = np.zeros((K * K, Hout * Wout, H * W), np.float32)
    ho = np.arange(Hout)
    wo = np.arange(Wout)
    for kh in range(K):
        r = ho * stride + kh - padding
        vr = (r >= 0) & (r < H)
        for kw in range(K):
            c = wo * stride + kw - padding
            vc = (c >= 0) & (c < W)
            valid = vr[:, None] & vc[None, :]
            m_idx = (ho[:, None] * Wout + wo[None, :])[valid]
            q_idx = (np.clip(r, 0, H - 1)[:, None] * W
                     + np.clip(c, 0, W - 1)[None, :])[valid]
            ops[kh * K + kw, m_idx, q_idx] = 1.0
    return jnp.asarray(ops, dtype=_MXU_DTYPE)


def _make_fused_cnn_kernel(num_layers):
    """Kernel body: all conv layers + ELUs for one batch element, fully in VMEM."""

    def kernel(x_ref, p_ref, *rest):
        out_ref = rest[-1]
        kk = p_ref.shape[0]                       # K*K kernel offsets
        m_out = p_ref.shape[1]                    # Hout*Wout output positions
        act = x_ref[0].astype(_MXU_DTYPE)         # (H*W, Cin) rows of this image
        act_f32 = None
        for layer in range(num_layers):
            w_ref = rest[2 * layer]               # (K*K, Cin_l, Cout_l) bf16
            b_ref = rest[2 * layer + 1]           # (1, Cout_l) f32
            cout = w_ref.shape[2]
            acc = jnp.zeros((m_out, cout), jnp.float32)
            for t in range(kk):
                # in-kernel im2col: gather the (kh,kw)-shifted rows with a 0/1
                # matmul (MXU, exact), then contract over input channels with
                # f32 accumulation.
                g = jnp.dot(p_ref[t], act, preferred_element_type=jnp.float32)
                acc = acc + jnp.dot(g.astype(_MXU_DTYPE), w_ref[t],
                                    preferred_element_type=jnp.float32)
            acc = acc + b_ref[...]                # f32 bias (VPU)
            # ELU epilogue in f32.  exp(min(x,0))-1 == expm1(x) to ~1 ulp for all
            # finite x and is guaranteed to lower on Mosaic (EUP + VPU).
            act_f32 = jnp.where(acc > 0.0, acc,
                                jnp.exp(jnp.minimum(acc, 0.0)) - 1.0)
            # next layer's input stays a VMEM-resident bf16 value (no HBM trip).
            act = act_f32.astype(_MXU_DTYPE)
        # lane-dense f32 store (last layer's Cout is pre-padded to x128).
        out_ref[0] = act_f32

    return kernel


def init_cnn_params(key, input_dim, layers_num_channels, kernel_size=3):
    """Deterministic init mirroring nn.Conv2d default (uniform +/- 1/sqrt(fan_in))."""
    chans = [input_dim[0]] + list(layers_num_channels)
    params = []
    for cin, cout in zip(chans[:-1], chans[1:]):
        key, wk, bk = jax.random.split(key, 3)
        bound = 1.0 / math.sqrt(cin * kernel_size * kernel_size)
        w = jax.random.uniform(wk, (cout, cin, kernel_size, kernel_size),
                               jnp.float32, -bound, bound)
        b = jax.random.uniform(bk, (cout,), jnp.float32, -bound, bound)
        params.append((w, b))
    return params


def pack_cnn_params(params):
    """One-time packing, hoisted out of the forward path (review feedback):
    weights -> (K*K, Cin, Cout) bf16 in (kh, kw) order, bias -> (1, Cout) f32.
    Only the LAST layer's Cout is zero-padded to a multiple of 128 so the
    kernel's single HBM store is lane-dense; intermediate activations never
    leave VMEM so their channel counts stay real."""
    packed = []
    last = len(params) - 1
    for idx, (w, b) in enumerate(params):
        cout, cin, K, _ = w.shape
        w_t = jnp.transpose(w, (2, 3, 1, 0)).reshape(K * K, cin, cout)
        b_t = b.reshape(1, cout).astype(jnp.float32)
        if idx == last:
            cout_pad = _round_up(cout, _LANE)
            w_t = jnp.pad(w_t, ((0, 0), (0, 0), (0, cout_pad - cout)))
            b_t = jnp.pad(b_t, ((0, 0), (0, cout_pad - cout)))
        packed.append((w_t.astype(_MXU_DTYPE), b_t))
    return packed


@partial(jax.jit,
         static_argnames=("stride", "padding", "kernel_size", "out_channels"))
def cnn_forward(packed_params, x_nchw, *, stride, padding, kernel_size,
                out_channels):
    N, cin, H, W = x_nchw.shape
    K = kernel_size
    Hout = (H + 2 * padding - K) // stride + 1
    Wout = (W + 2 * padding - K) // stride + 1
    if (Hout, Wout) != (H, W):
        # TODO(synk): build per-layer shift operators when spatial dims change.
        raise NotImplementedError("fused CNN kernel assumes spatially-preserving layers")
    if H * W > _MAX_SPATIAL_POSITIONS:
        # TODO(synk): tile spatially / per-layer pipeline for large feature maps.
        raise NotImplementedError("fused CNN kernel is sized for small feature maps")

    # Constant shift operators (built with numpy at trace time -> XLA constant).
    shift_ops = _build_shift_operators(H, W, Hout, Wout, K, stride, padding)

    # NCHW -> per-image row matrix (H*W, Cin): the only layout glue at the entry.
    x_rows = jnp.transpose(x_nchw, (0, 2, 3, 1)).reshape(N, H * W, cin)

    num_layers = len(packed_params)
    cout_pad = packed_params[-1][0].shape[-1]

    flat_inputs = [x_rows, shift_ops]
    in_specs = [
        pl.BlockSpec((1, H * W, cin), lambda n: (n, 0, 0)),        # this image
        pl.BlockSpec(shift_ops.shape, lambda n: (0, 0, 0)),        # resident constant
    ]
    for w_p, b_p in packed_params:                                  # resident weights
        flat_inputs += [w_p, b_p]
        in_specs.append(pl.BlockSpec(w_p.shape, lambda n: (0, 0, 0)))
        in_specs.append(pl.BlockSpec(b_p.shape, lambda n: (0, 0)))

    out = pl.pallas_call(
        _make_fused_cnn_kernel(num_layers),
        out_shape=jax.ShapeDtypeStruct((N, Hout * Wout, cout_pad), jnp.float32),
        grid_spec=pltpu.PrefetchScalarGridSpec(
            num_scalar_prefetch=0,
            grid=(N,),
            in_specs=in_specs,
            out_specs=pl.BlockSpec((1, Hout * Wout, cout_pad), lambda n: (n, 0, 0)),
        ),
        compiler_params=pltpu.CompilerParams(dimension_semantics=("parallel",)),
    )(*flat_inputs)

    out = out[:, :, :out_channels].reshape(N, Hout, Wout, out_channels)
    return jnp.transpose(out, (0, 3, 1, 2))                        # NHWC -> NCHW once


def _reference_forward(params, x, stride, padding):
    # pure-JAX reference (XLA conv) for a correctness check
    for w, b in params:
        x = jax.lax.conv_general_dilated(
            x, w, window_strides=(stride, stride),
            padding=((padding, padding), (padding, padding)),
            dimension_numbers=("NCHW", "OIHW", "NCHW"))
        x = x + b[None, :, None, None]
        x = jax.nn.elu(x)
    return x


if __name__ == "__main__":
    # Module config: input_dim=(4, 16, 16), layers_num_channels=[8, 16], stride=2, k=3
    input_dim = (4, 16, 16)
    layers_num_channels = [8, 16]
    stride, kernel_size = 2, 3
    _, input_h, _ = input_dim
    # same formula as the PyTorch __init__
    padding = math.ceil((input_h * (stride - 1) + kernel_size - stride) / 2)  # = 9

    key = jax.random.PRNGKey(0)
    key, xk, pk = jax.random.split(key, 3)
    x = jax.random.normal(xk, (2, *input_dim), jnp.float32)   # (N=2, C=4, H=16, W=16)
    params = init_cnn_params(pk, input_dim, layers_num_channels, kernel_size)
    packed = pack_cnn_params(params)                          # one-time packing

    out = jax.block_until_ready(
        cnn_forward(packed, x, stride=stride, padding=padding,
                    kernel_size=kernel_size,
                    out_channels=layers_num_channels[-1]))
    ref = jax.block_until_ready(_reference_forward(params, x, stride, padding))

    assert out.shape == ref.shape, (out.shape, ref.shape)
    max_err = float(jnp.max(jnp.abs(out - ref)))
    # bf16 MXU operands (f32 accumulation) introduce small quantization noise vs
    # the pure-f32 XLA reference; 2e-2 comfortably bounds it at these scales.
    assert max_err < 2e-2, f"max abs error {max_err}"

    print("KERNEL_OK")
</pallas_src>

<mosaic_0001>
module attributes {stable_mosaic.version = 11 : i64} {
  func.func @kernel(%arg0: i32, %arg1: memref<1x256x4xf32, #tpu.memory_space<vmem>>, %arg2: memref<9x256x256xbf16, #tpu.memory_space<vmem>>, %arg3: memref<9x4x8xbf16, #tpu.memory_space<vmem>>, %arg4: memref<1x8xf32, #tpu.memory_space<vmem>>, %arg5: memref<9x8x128xbf16, #tpu.memory_space<vmem>>, %arg6: memref<1x128xf32, #tpu.memory_space<vmem>>, %arg7: memref<1x256x128xf32, #tpu.memory_space<vmem>>) attributes {dimension_semantics = [#tpu.dimension_semantics<parallel>], iteration_bounds = array<i64: 2>, scalar_prefetch = 0 : i64, scratch_operands = 0 : i64, tpu.core_type = #tpu.core_type<tc>, window_params = [{transform_indices = @transform_0, window_bounds = array<i64: 1, 256, 4>}, {pipeline_mode = #tpu.pipeline_mode<synchronous>, transform_indices = @transform_1, window_bounds = array<i64: 9, 256, 256>}, {pipeline_mode = #tpu.pipeline_mode<synchronous>, transform_indices = @transform_2, window_bounds = array<i64: 9, 4, 8>}, {pipeline_mode = #tpu.pipeline_mode<synchronous>, transform_indices = @transform_3, window_bounds = array<i64: 1, 8>}, {pipeline_mode = #tpu.pipeline_mode<synchronous>, transform_indices = @transform_4, window_bounds = array<i64: 9, 8, 128>}, {pipeline_mode = #tpu.pipeline_mode<synchronous>, transform_indices = @transform_5, window_bounds = array<i64: 1, 128>}, {transform_indices = @transform_6, window_bounds = array<i64: 1, 256, 128>}]} {
    %c0 = arith.constant 0 : index
    %c0_0 = arith.constant 0 : index
    %c0_1 = arith.constant 0 : index
    %0 = vector.load %arg1[%c0, %c0_0, %c0_1] : memref<1x256x4xf32, #tpu.memory_space<vmem>>, vector<1x256x4xf32>
    %1 = vector.shape_cast %0 : vector<1x256x4xf32> to vector<256x4xf32>
    %2 = arith.truncf %1 : vector<256x4xf32> to vector<256x4xbf16>
    %cst = arith.constant 0.000000e+00 : f32
    %3 = vector.broadcast %cst : f32 to vector<256x8xf32>
    %c0_2 = arith.constant 0 : index
    %c0_3 = arith.constant 0 : index
    %c0_4 = arith.constant 0 : index
    %4 = vector.load %arg2[%c0_2, %c0_3, %c0_4] : memref<9x256x256xbf16, #tpu.memory_space<vmem>>, vector<1x256x256xbf16>
    %5 = vector.shape_cast %4 : vector<1x256x256xbf16> to vector<256x256xbf16>
    %cst_5 = arith.constant dense<0.000000e+00> : vector<256x4xf32>
    %6 = tpu.matmul %5, %2, %cst_5 {dimension_numbers = #tpu.dot_dimension_numbers<[1], [0], [0], [1], [0, 0, 1, 1], [], []>} : vector<256x256xbf16>, vector<256x4xbf16>, vector<256x4xf32> -> vector<256x4xf32>
    %7 = arith.truncf %6 : vector<256x4xf32> to vector<256x4xbf16>
    %c0_6 = arith.constant 0 : index
    %c0_7 = arith.constant 0 : index
    %c0_8 = arith.constant 0 : index
    %8 = vector.load %arg3[%c0_6, %c0_7, %c0_8] : memref<9x4x8xbf16, #tpu.memory_space<vmem>>, vector<1x4x8xbf16>
    %9 = vector.shape_cast %8 : vector<1x4x8xbf16> to vector<4x8xbf16>
    %cst_9 = arith.constant dense<0.000000e+00> : vector<256x8xf32>
    %10 = tpu.matmul %7, %9, %cst_9 {dimension_numbers = #tpu.dot_dimension_numbers<[1], [0], [0], [1], [0, 0, 1, 1], [], []>} : vector<256x4xbf16>, vector<4x8xbf16>, vector<256x8xf32> -> vector<256x8xf32>
    %11 = arith.addf %3, %10 : vector<256x8xf32>
    %c1 = arith.constant 1 : index
    %c0_10 = arith.constant 0 : index
    %c0_11 = arith.constant 0 : index
    %12 = vector.load %arg2[%c1, %c0_10, %c0_11] : memref<9x256x256xbf16, #tpu.memory_space<vmem>>, vector<1x256x256xbf16>
    %13 = vector.shape_cast %12 : vector<1x256x256xbf16> to vector<256x256xbf16>
    %cst_12 = arith.constant dense<0.000000e+00> : vector<256x4xf32>
    %14 = tpu.matmul %13, %2, %cst_12 {dimension_numbers = #tpu.dot_dimension_numbers<[1], [0], [0], [1], [0, 0, 1, 1], [], []>} : vector<256x256xbf16>, vector<256x4xbf16>, vector<256x4xf32> -> vector<256x4xf32>
    %15 = arith.truncf %14 : vector<256x4xf32> to vector<256x4xbf16>
    %c1_13 = arith.constant 1 : index
    %c0_14 = arith.constant 0 : index
    %c0_15 = arith.constant 0 : index
    %16 = vector.load %arg3[%c1_13, %c0_14, %c0_15] : memref<9x4x8xbf16, #tpu.memory_space<vmem>>, vector<1x4x8xbf16>
    %17 = vector.shape_cast %16 : vector<1x4x8xbf16> to vector<4x8xbf16>
    %cst_16 = arith.constant dense<0.000000e+00> : vector<256x8xf32>
    %18 = tpu.matmul %15, %17, %cst_16 {dimension_numbers = #tpu.dot_dimension_numbers<[1], [0], [0], [1], [0, 0, 1, 1], [], []>} : vector<256x4xbf16>, vector<4x8xbf16>, vector<256x8xf32> -> vector<256x8xf32>
    %19 = arith.addf %11, %18 : vector<256x8xf32>
    %c2 = arith.constant 2 : index
    %c0_17 = arith.constant 0 : index
    %c0_18 = arith.constant 0 : index
    %20 = vector.load %arg2[%c2, %c0_17, %c0_18] : memref<9x256x256xbf16, #tpu.memory_space<vmem>>, vector<1x256x256xbf16>
    %21 = vector.shape_cast %20 : vector<1x256x256xbf16> to vector<256x256xbf16>
    %cst_19 = arith.constant dense<0.000000e+00> : vector<256x4xf32>
    %22 = tpu.matmul %21, %2, %cst_19 {dimension_numbers = #tpu.dot_dimension_numbers<[1], [0], [0], [1], [0, 0, 1, 1], [], []>} : vector<256x256xbf16>, vector<256x4xbf16>, vector<256x4xf32> -> vector<256x4xf32>
    %23 = arith.truncf %22 : vector<256x4xf32> to vector<256x4xbf16>
    %c2_20 = arith.constant 2 : index
    %c0_21 = arith.constant 0 : index
    %c0_22 = arith.constant 0 : index
    %24 = vector.load %arg3[%c2_20, %c0_21, %c0_22] : memref<9x4x8xbf16, #tpu.memory_space<vmem>>, vector<1x4x8xbf16>
    %25 = vector.shape_cast %24 : vector<1x4x8xbf16> to vector<4x8xbf16>
    %cst_23 = arith.constant dense<0.000000e+00> : vector<256x8xf32>
    %26 = tpu.matmul %23, %25, %cst_23 {dimension_numbers = #tpu.dot_dimension_numbers<[1], [0], [0], [1], [0, 0, 1, 1], [], []>} : vector<256x4xbf16>, vector<4x8xbf16>, vector<256x8xf32> -> vector<256x8xf32>
    %27 = arith.addf %19, %26 : vector<256x8xf32>
    %c3 = arith.constant 3 : index
    %c0_24 = arith.constant 0 : index
    %c0_25 = arith.constant 0 : index
    %28 = vector.load %arg2[%c3, %c0_24, %c0_25] : memref<9x256x256xbf16, #tpu.memory_space<vmem>>, vector<1x256x256xbf16>
    %29 = vector.shape_cast %28 : vector<1x256x256xbf16> to vector<256x256xbf16>
    %cst_26 = arith.constant dense<0.000000e+00> : vector<256x4xf32>
    %30 = tpu.matmul %29, %2, %cst_26 {dimension_numbers = #tpu.dot_dimension_numbers<[1], [0], [0], [1], [0, 0, 1, 1], [], []>} : vector<256x256xbf16>, vector<256x4xbf16>, vector<256x4xf32> -> vector<256x4xf32>
    %31 = arith.truncf %30 : vector<256x4xf32> to vector<256x4xbf16>
    %c3_27 = arith.constant 3 : index
    %c0_28 = arith.constant 0 : index
    %c0_29 = arith.constant 0 : index
    %32 = vector.load %arg3[%c3_27, %c0_28, %c0_29] : memref<9x4x8xbf16, #tpu.memory_space<vmem>>, vector<1x4x8xbf16>
    %33 = vector.shape_cast %32 : vector<1x4x8xbf16> to vector<4x8xbf16>
    %cst_30 = arith.constant dense<0.000000e+00> : vector<256x8xf32>
    %34 = tpu.matmul %31, %33, %cst_30 {dimension_numbers = #tpu.dot_dimension_numbers<[1], [0], [0], [1], [0, 0, 1, 1], [], []>} : vector<256x4xbf16>, vector<4x8xbf16>, vector<256x8xf32> -> vector<256x8xf32>
    %35 = arith.addf %27, %34 : vector<256x8xf32>
    %c4 = arith.constant 4 : index
    %c0_31 = arith.constant 0 : index
    %c0_32 = arith.constant 0 : index
    %36 = vector.load %arg2[%c4, %c0_31, %c0_32] : memref<9x256x256xbf16, #tpu.memory_space<vmem>>, vector<1x256x256xbf16>
    %37 = vector.shape_cast %36 : vector<1x256x256xbf16> to vector<256x256xbf16>
    %cst_33 = arith.constant dense<0.000000e+00> : vector<256x4xf32>
    %38 = tpu.matmul %37, %2, %cst_33 {dimension_numbers = #tpu.dot_dimension_numbers<[1], [0], [0], [1], [0, 0, 1, 1], [], []>} : vector<256x256xbf16>, vector<256x4xbf16>, vector<256x4xf32> -> vector<256x4xf32>
    %39 = arith.truncf %38 : vector<256x4xf32> to vector<256x4xbf16>
    %c4_34 = arith.constant 4 : index
    %c0_35 = arith.constant 0 : index
    %c0_36 = arith.constant 0 : index
    %40 = vector.load %arg3[%c4_34, %c0_35, %c0_36] : memref<9x4x8xbf16, #tpu.memory_space<vmem>>, vector<1x4x8xbf16>
    %41 = vector.shape_cast %40 : vector<1x4x8xbf16> to vector<4x8xbf16>
    %cst_37 = arith.constant dense<0.000000e+00> : vector<256x8xf32>
    %42 = tpu.matmul %39, %41, %cst_37 {dimension_numbers = #tpu.dot_dimension_numbers<[1], [0], [0], [1], [0, 0, 1, 1], [], []>} : vector<256x4xbf16>, vector<4x8xbf16>, vector<256x8xf32> -> vector<256x8xf32>
    %43 = arith.addf %35, %42 : vector<256x8xf32>
    %c5 = arith.constant 5 : index
    %c0_38 = arith.constant 0 : index
    %c0_39 = arith.constant 0 : index
    %44 = vector.load %arg2[%c5, %c0_38, %c0_39] : memref<9x256x256xbf16, #tpu.memory_space<vmem>>, vector<1x256x256xbf16>
    %45 = vector.shape_cast %44 : vector<1x256x256xbf16> to vector<256x256xbf16>
    %cst_40 = arith.constant dense<0.000000e+00> : vector<256x4xf32>
    %46 = tpu.matmul %45, %2, %cst_40 {dimension_numbers = #tpu.dot_dimension_numbers<[1], [0], [0], [1], [0, 0, 1, 1], [], []>} : vector<256x256xbf16>, vector<256x4xbf16>, vector<256x4xf32> -> vector<256x4xf32>
    %47 = arith.truncf %46 : vector<256x4xf32> to vector<256x4xbf16>
    %c5_41 = arith.constant 5 : index
    %c0_42 = arith.constant 0 : index
    %c0_43 = arith.constant 0 : index
    %48 = vector.load %arg3[%c5_41, %c0_42, %c0_43] : memref<9x4x8xbf16, #tpu.memory_space<vmem>>, vector<1x4x8xbf16>
    %49 = vector.shape_cast %48 : vector<1x4x8xbf16> to vector<4x8xbf16>
    %cst_44 = arith.constant dense<0.000000e+00> : vector<256x8xf32>
    %50 = tpu.matmul %47, %49, %cst_44 {dimension_numbers = #tpu.dot_dimension_numbers<[1], [0], [0], [1], [0, 0, 1, 1], [], []>} : vector<256x4xbf16>, vector<4x8xbf16>, vector<256x8xf32> -> vector<256x8xf32>
    %51 = arith.addf %43, %50 : vector<256x8xf32>
    %c6 = arith.constant 6 : index
    %c0_45 = arith.constant 0 : index
    %c0_46 = arith.constant 0 : index
    %52 = vector.load %arg2[%c6, %c0_45, %c0_46] : memref<9x256x256xbf16, #tpu.memory_space<vmem>>, vector<1x256x256xbf16>
    %53 = vector.shape_cast %52 : vector<1x256x256xbf16> to vector<256x256xbf16>
    %cst_47 = arith.constant dense<0.000000e+00> : vector<256x4xf32>
    %54 = tpu.matmul %53, %2, %cst_47 {dimension_numbers = #tpu.dot_dimension_numbers<[1], [0], [0], [1], [0, 0, 1, 1], [], []>} : vector<256x256xbf16>, vector<256x4xbf16>, vector<256x4xf32> -> vector<256x4xf32>
    %55 = arith.truncf %54 : vector<256x4xf32> to vector<256x4xbf16>
    %c6_48 = arith.constant 6 : index
    %c0_49 = arith.constant 0 : index
    %c0_50 = arith.constant 0 : index
    %56 = vector.load %arg3[%c6_48, %c0_49, %c0_50] : memref<9x4x8xbf16, #tpu.memory_space<vmem>>, vector<1x4x8xbf16>
    %57 = vector.shape_cast %56 : vector<1x4x8xbf16> to vector<4x8xbf16>
    %cst_51 = arith.constant dense<0.000000e+00> : vector<256x8xf32>
    %58 = tpu.matmul %55, %57, %cst_51 {dimension_numbers = #tpu.dot_dimension_numbers<[1], [0], [0], [1], [0, 0, 1, 1], [], []>} : vector<256x4xbf16>, vector<4x8xbf16>, vector<256x8xf32> -> vector<256x8xf32>
    %59 = arith.addf %51, %58 : vector<256x8xf32>
    %c7 = arith.constant 7 : index
    %c0_52 = arith.constant 0 : index
    %c0_53 = arith.constant 0 : index
    %60 = vector.load %arg2[%c7, %c0_52, %c0_53] : memref<9x256x256xbf16, #tpu.memory_space<vmem>>, vector<1x256x256xbf16>
    %61 = vector.shape_cast %60 : vector<1x256x256xbf16> to vector<256x256xbf16>
    %cst_54 = arith.constant dense<0.000000e+00> : vector<256x4xf32>
    %62 = tpu.matmul %61, %2, %cst_54 {dimension_numbers = #tpu.dot_dimension_numbers<[1], [0], [0], [1], [0, 0, 1, 1], [], []>} : vector<256x256xbf16>, vector<256x4xbf16>, vector<256x4xf32> -> vector<256x4xf32>
    %63 = arith.truncf %62 : vector<256x4xf32> to vector<256x4xbf16>
    %c7_55 = arith.constant 7 : index
    %c0_56 = arith.constant 0 : index
    %c0_57 = arith.constant 0 : index
    %64 = vector.load %arg3[%c7_55, %c0_56, %c0_57] : memref<9x4x8xbf16, #tpu.memory_space<vmem>>, vector<1x4x8xbf16>
    %65 = vector.shape_cast %64 : vector<1x4x8xbf16> to vector<4x8xbf16>
    %cst_58 = arith.constant dense<0.000000e+00> : vector<256x8xf32>
    %66 = tpu.matmul %63, %65, %cst_58 {dimension_numbers = #tpu.dot_dimension_numbers<[1], [0], [0], [1], [0, 0, 1, 1], [], []>} : vector<256x4xbf16>, vector<4x8xbf16>, vector<256x8xf32> -> vector<256x8xf32>
    %67 = arith.addf %59, %66 : vector<256x8xf32>
    %c8 = arith.constant 8 : index
    %c0_59 = arith.constant 0 : index
    %c0_60 = arith.constant 0 : index
    %68 = vector.load %arg2[%c8, %c0_59, %c0_60] : memref<9x256x256xbf16, #tpu.memory_space<vmem>>, vector<1x256x256xbf16>
    %69 = vector.shape_cast %68 : vector<1x256x256xbf16> to vector<256x256xbf16>
    %cst_61 = arith.constant dense<0.000000e+00> : vector<256x4xf32>
    %70 = tpu.matmul %69, %2, %cst_61 {dimension_numbers = #tpu.dot_dimension_numbers<[1], [0], [0], [1], [0, 0, 1, 1], [], []>} : vector<256x256xbf16>, vector<256x4xbf16>, vector<256x4xf32> -> vector<256x4xf32>
    %71 = arith.truncf %70 : vector<256x4xf32> to vector<256x4xbf16>
    %c8_62 = arith.constant 8 : index
    %c0_63 = arith.constant 0 : index
    %c0_64 = arith.constant 0 : index
    %72 = vector.load %arg3[%c8_62, %c0_63, %c0_64] : memref<9x4x8xbf16, #tpu.memory_space<vmem>>, vector<1x4x8xbf16>
    %73 = vector.shape_cast %72 : vector<1x4x8xbf16> to vector<4x8xbf16>
    %cst_65 = arith.constant dense<0.000000e+00> : vector<256x8xf32>
    %74 = tpu.matmul %71, %73, %cst_65 {dimension_numbers = #tpu.dot_dimension_numbers<[1], [0], [0], [1], [0, 0, 1, 1], [], []>} : vector<256x4xbf16>, vector<4x8xbf16>, vector<256x8xf32> -> vector<256x8xf32>
    %75 = arith.addf %67, %74 : vector<256x8xf32>
    %c0_66 = arith.constant 0 : index
    %c0_67 = arith.constant 0 : index
    %76 = vector.load %arg4[%c0_66, %c0_67] : memref<1x8xf32, #tpu.memory_space<vmem>>, vector<1x8xf32>
    %77 = vector.broadcast %76 : vector<1x8xf32> to vector<256x8xf32>
    %78 = arith.addf %75, %77 : vector<256x8xf32>
    %cst_68 = arith.constant 0.000000e+00 : f32
    %79 = vector.broadcast %cst_68 : f32 to vector<256x8xf32>
    %80 = arith.cmpf ogt, %78, %79 : vector<256x8xf32>
    %cst_69 = arith.constant 0.000000e+00 : f32
    %81 = vector.broadcast %cst_69 : f32 to vector<256x8xf32>
    %82 = arith.minimumf %78, %81 : vector<256x8xf32>
    %83 = math.exp %82 : vector<256x8xf32>
    %cst_70 = arith.constant 1.000000e+00 : f32
    %84 = vector.broadcast %cst_70 : f32 to vector<256x8xf32>
    %85 = arith.subf %83, %84 : vector<256x8xf32>
    %86 = arith.select %80, %78, %85 : vector<256x8xi1>, vector<256x8xf32>
    %87 = arith.truncf %86 : vector<256x8xf32> to vector<256x8xbf16>
    %cst_71 = arith.constant 0.000000e+00 : f32
    %88 = vector.broadcast %cst_71 : f32 to vector<256x128xf32>
    %c0_72 = arith.constant 0 : index
    %c0_73 = arith.constant 0 : index
    %c0_74 = arith.constant 0 : index
    %89 = vector.load %arg2[%c0_72, %c0_73, %c0_74] : memref<9x256x256xbf16, #tpu.memory_space<vmem>>, vector<1x256x256xbf16>
    %90 = vector.shape_cast %89 : vector<1x256x256xbf16> to vector<256x256xbf16>
    %cst_75 = arith.constant dense<0.000000e+00> : vector<256x8xf32>
    %91 = tpu.matmul %90, %87, %cst_75 {dimension_numbers = #tpu.dot_dimension_numbers<[1], [0], [0], [1], [0, 0, 1, 1], [], []>} : vector<256x256xbf16>, vector<256x8xbf16>, vector<256x8xf32> -> vector<256x8xf32>
    %92 = arith.truncf %91 : vector<256x8xf32> to vector<256x8xbf16>
    %c0_76 = arith.constant 0 : index
    %c0_77 = arith.constant 0 : index
    %c0_78 = arith.constant 0 : index
    %93 = vector.load %arg5[%c0_76, %c0_77, %c0_78] : memref<9x8x128xbf16, #tpu.memory_space<vmem>>, vector<1x8x128xbf16>
    %94 = vector.shape_cast %93 : vector<1x8x128xbf16> to vector<8x128xbf16>
    %cst_79 = arith.constant dense<0.000000e+00> : vector<256x128xf32>
    %95 = tpu.matmul %92, %94, %cst_79 {dimension_numbers = #tpu.dot_dimension_numbers<[1], [0], [0], [1], [0, 0, 1, 1], [], []>} : vector<256x8xbf16>, vector<8x128xbf16>, vector<256x128xf32> -> vector<256x128xf32>
    %96 = arith.addf %88, %95 : vector<256x128xf32>
    %c1_80 = arith.constant 1 : index
    %c0_81 = arith.constant 0 : index
    %c0_82 = arith.constant 0 : index
    %97 = vector.load %arg2[%c1_80, %c0_81, %c0_82] : memref<9x256x256xbf16, #tpu.memory_space<vmem>>, vector<1x256x256xbf16>
    %98 = vector.shape_cast %97 : vector<1x256x256xbf16> to vector<256x256xbf16>
    %cst_83 = arith.constant dense<0.000000e+00> : vector<256x8xf32>
    %99 = tpu.matmul %98, %87, %cst_83 {dimension_numbers = #tpu.dot_dimension_numbers<[1], [0], [0], [1], [0, 0, 1, 1], [], []>} : vector<256x256xbf16>, vector<256x8xbf16>, vector<256x8xf32> -> vector<256x8xf32>
    %100 = arith.truncf %99 : vector<256x8xf32> to vector<256x8xbf16>
    %c1_84 = arith.constant 1 : index
    %c0_85 = arith.constant 0 : index
    %c0_86 = arith.constant 0 : index
    %101 = vector.load %arg5[%c1_84, %c0_85, %c0_86] : memref<9x8x128xbf16, #tpu.memory_space<vmem>>, vector<1x8x128xbf16>
    %102 = vector.shape_cast %101 : vector<1x8x128xbf16> to vector<8x128xbf16>
    %cst_87 = arith.constant dense<0.000000e+00> : vector<256x128xf32>
    %103 = tpu.matmul %100, %102, %cst_87 {dimension_numbers = #tpu.dot_dimension_numbers<[1], [0], [0], [1], [0, 0, 1, 1], [], []>} : vector<256x8xbf16>, vector<8x128xbf16>, vector<256x128xf32> -> vector<256x128xf32>
    %104 = arith.addf %96, %103 : vector<256x128xf32>
    %c2_88 = arith.constant 2 : index
    %c0_89 = arith.constant 0 : index
    %c0_90 = arith.constant 0 : index
    %105 = vector.load %arg2[%c2_88, %c0_89, %c0_90] : memref<9x256x256xbf16, #tpu.memory_space<vmem>>, vector<1x256x256xbf16>
    %106 = vector.shape_cast %105 : vector<1x256x256xbf16> to vector<256x256xbf16>
    %cst_91 = arith.constant dense<0.000000e+00> : vector<256x8xf32>
    %107 = tpu.matmul %106, %87, %cst_91 {dimension_numbers = #tpu.dot_dimension_numbers<[1], [0], [0], [1], [0, 0, 1, 1], [], []>} : vector<256x256xbf16>, vector<256x8xbf16>, vector<256x8xf32> -> vector<256x8xf32>
    %108 = arith.truncf %107 : vector<256x8xf32> to vector<256x8xbf16>
    %c2_92 = arith.constant 2 : index
    %c0_93 = arith.constant 0 : index
    %c0_94 = arith.constant 0 : index
    %109 = vector.load %arg5[%c2_92, %c0_93, %c0_94] : memref<9x8x128xbf16, #tpu.memory_space<vmem>>, vector<1x8x128xbf16>
    %110 = vector.shape_cast %109 : vector<1x8x128xbf16> to vector<8x128xbf16>
    %cst_95 = arith.constant dense<0.000000e+00> : vector<256x128xf32>
    %111 = tpu.matmul %108, %110, %cst_95 {dimension_numbers = #tpu.dot_dimension_numbers<[1], [0], [0], [1], [0, 0, 1, 1], [], []>} : vector<256x8xbf16>, vector<8x128xbf16>, vector<256x128xf32> -> vector<256x128xf32>
    %112 = arith.addf %104, %111 : vector<256x128xf32>
    %c3_96 = arith.constant 3 : index
    %c0_97 = arith.constant 0 : index
    %c0_98 = arith.constant 0 : index
    %113 = vector.load %arg2[%c3_96, %c0_97, %c0_98] : memref<9x256x256xbf16, #tpu.memory_space<vmem>>, vector<1x256x256xbf16>
    %114 = vector.shape_cast %113 : vector<1x256x256xbf16> to vector<256x256xbf16>
    %cst_99 = arith.constant dense<0.000000e+00> : vector<256x8xf32>
    %115 = tpu.matmul %114, %87, %cst_99 {dimension_numbers = #tpu.dot_dimension_numbers<[1], [0], [0], [1], [0, 0, 1, 1], [], []>} : vector<256x256xbf16>, vector<256x8xbf16>, vector<256x8xf32> -> vector<256x8xf32>
    %116 = arith.truncf %115 : vector<256x8xf32> to vector<256x8xbf16>
    %c3_100 = arith.constant 3 : index
    %c0_101 = arith.constant 0 : index
    %c0_102 = arith.constant 0 : index
    %117 = vector.load %arg5[%c3_100, %c0_101, %c0_102] : memref<9x8x128xbf16, #tpu.memory_space<vmem>>, vector<1x8x128xbf16>
    %118 = vector.shape_cast %117 : vector<1x8x128xbf16> to vector<8x128xbf16>
    %cst_103 = arith.constant dense<0.000000e+00> : vector<256x128xf32>
    %119 = tpu.matmul %116, %118, %cst_103 {dimension_numbers = #tpu.dot_dimension_numbers<[1], [0], [0], [1], [0, 0, 1, 1], [], []>} : vector<256x8xbf16>, vector<8x128xbf16>, vector<256x128xf32> -> vector<256x128xf32>
    %120 = arith.addf %112, %119 : vector<256x128xf32>
    %c4_104 = arith.constant 4 : index
    %c0_105 = arith.constant 0 : index
    %c0_106 = arith.constant 0 : index
    %121 = vector.load %arg2[%c4_104, %c0_105, %c0_106] : memref<9x256x256xbf16, #tpu.memory_space<vmem>>, vector<1x256x256xbf16>
    %122 = vector.shape_cast %121 : vector<1x256x256xbf16> to vector<256x256xbf16>
    %cst_107 = arith.constant dense<0.000000e+00> : vector<256x8xf32>
    %123 = tpu.matmul %122, %87, %cst_107 {dimension_numbers = #tpu.dot_dimension_numbers<[1], [0], [0], [1], [0, 0, 1, 1], [], []>} : vector<256x256xbf16>, vector<256x8xbf16>, vector<256x8xf32> -> vector<256x8xf32>
    %124 = arith.truncf %123 : vector<256x8xf32> to vector<256x8xbf16>
    %c4_108 = arith.constant 4 : index
    %c0_109 = arith.constant 0 : index
    %c0_110 = arith.constant 0 : index
    %125 = vector.load %arg5[%c4_108, %c0_109, %c0_110] : memref<9x8x128xbf16, #tpu.memory_space<vmem>>, vector<1x8x128xbf16>
    %126 = vector.shape_cast %125 : vector<1x8x128xbf16> to vector<8x128xbf16>
    %cst_111 = arith.constant dense<0.000000e+00> : vector<256x128xf32>
    %127 = tpu.matmul %124, %126, %cst_111 {dimension_numbers = #tpu.dot_dimension_numbers<[1], [0], [0], [1], [0, 0, 1, 1], [], []>} : vector<256x8xbf16>, vector<8x128xbf16>, vector<256x128xf32> -> vector<256x128xf32>
    %128 = arith.addf %120, %127 : vector<256x128xf32>
    %c5_112 = arith.constant 5 : index
    %c0_113 = arith.constant 0 : index
    %c0_114 = arith.constant 0 : index
    %129 = vector.load %arg2[%c5_112, %c0_113, %c0_114] : memref<9x256x256xbf16, #tpu.memory_space<vmem>>, vector<1x256x256xbf16>
    %130 = vector.shape_cast %129 : vector<1x256x256xbf16> to vector<256x256xbf16>
    %cst_115 = arith.constant dense<0.000000e+00> : vector<256x8xf32>
    %131 = tpu.matmul %130, %87, %cst_115 {dimension_numbers = #tpu.dot_dimension_numbers<[1], [0], [0], [1], [0, 0, 1, 1], [], []>} : vector<256x256xbf16>, vector<256x8xbf16>, vector<256x8xf32> -> vector<256x8xf32>
    %132 = arith.truncf %131 : vector<256x8xf32> to vector<256x8xbf16>
    %c5_116 = arith.constant 5 : index
    %c0_117 = arith.constant 0 : index
    %c0_118 = arith.constant 0 : index
    %133 = vector.load %arg5[%c5_116, %c0_117, %c0_118] : memref<9x8x128xbf16, #tpu.memory_space<vmem>>, vector<1x8x128xbf16>
    %134 = vector.shape_cast %133 : vector<1x8x128xbf16> to vector<8x128xbf16>
    %cst_119 = arith.constant dense<0.000000e+00> : vector<256x128xf32>
    %135 = tpu.matmul %132, %134, %cst_119 {dimension_numbers = #tpu.dot_dimension_numbers<[1], [0], [0], [1], [0, 0, 1, 1], [], []>} : vector<256x8xbf16>, vector<8x128xbf16>, vector<256x128xf32> -> vector<256x128xf32>
    %136 = arith.addf %128, %135 : vector<256x128xf32>
    %c6_120 = arith.constant 6 : index
    %c0_121 = arith.constant 0 : index
    %c0_122 = arith.constant 0 : index
    %137 = vector.load %arg2[%c6_120, %c0_121, %c0_122] : memref<9x256x256xbf16, #tpu.memory_space<vmem>>, vector<1x256x256xbf16>
    %138 = vector.shape_cast %137 : vector<1x256x256xbf16> to vector<256x256xbf16>
    %cst_123 = arith.constant dense<0.000000e+00> : vector<256x8xf32>
    %139 = tpu.matmul %138, %87, %cst_123 {dimension_numbers = #tpu.dot_dimension_numbers<[1], [0], [0], [1], [0, 0, 1, 1], [], []>} : vector<256x256xbf16>, vector<256x8xbf16>, vector<256x8xf32> -> vector<256x8xf32>
    %140 = arith.truncf %139 : vector<256x8xf32> to vector<256x8xbf16>
    %c6_124 = arith.constant 6 : index
    %c0_125 = arith.constant 0 : index
    %c0_126 = arith.constant 0 : index
    %141 = vector.load %arg5[%c6_124, %c0_125, %c0_126] : memref<9x8x128xbf16, #tpu.memory_space<vmem>>, vector<1x8x128xbf16>
    %142 = vector.shape_cast %141 : vector<1x8x128xbf16> to vector<8x128xbf16>
    %cst_127 = arith.constant dense<0.000000e+00> : vector<256x128xf32>
    %143 = tpu.matmul %140, %142, %cst_127 {dimension_numbers = #tpu.dot_dimension_numbers<[1], [0], [0], [1], [0, 0, 1, 1], [], []>} : vector<256x8xbf16>, vector<8x128xbf16>, vector<256x128xf32> -> vector<256x128xf32>
    %144 = arith.addf %136, %143 : vector<256x128xf32>
    %c7_128 = arith.constant 7 : index
    %c0_129 = arith.constant 0 : index
    %c0_130 = arith.constant 0 : index
    %145 = vector.load %arg2[%c7_128, %c0_129, %c0_130] : memref<9x256x256xbf16, #tpu.memory_space<vmem>>, vector<1x256x256xbf16>
    %146 = vector.shape_cast %145 : vector<1x256x256xbf16> to vector<256x256xbf16>
    %cst_131 = arith.constant dense<0.000000e+00> : vector<256x8xf32>
    %147 = tpu.matmul %146, %87, %cst_131 {dimension_numbers = #tpu.dot_dimension_numbers<[1], [0], [0], [1], [0, 0, 1, 1], [], []>} : vector<256x256xbf16>, vector<256x8xbf16>, vector<256x8xf32> -> vector<256x8xf32>
    %148 = arith.truncf %147 : vector<256x8xf32> to vector<256x8xbf16>
    %c7_132 = arith.constant 7 : index
    %c0_133 = arith.constant 0 : index
    %c0_134 = arith.constant 0 : index
    %149 = vector.load %arg5[%c7_132, %c0_133, %c0_134] : memref<9x8x128xbf16, #tpu.memory_space<vmem>>, vector<1x8x128xbf16>
    %150 = vector.shape_cast %149 : vector<1x8x128xbf16> to vector<8x128xbf16>
    %cst_135 = arith.constant dense<0.000000e+00> : vector<256x128xf32>
    %151 = tpu.matmul %148, %150, %cst_135 {dimension_numbers = #tpu.dot_dimension_numbers<[1], [0], [0], [1], [0, 0, 1, 1], [], []>} : vector<256x8xbf16>, vector<8x128xbf16>, vector<256x128xf32> -> vector<256x128xf32>
    %152 = arith.addf %144, %151 : vector<256x128xf32>
    %c8_136 = arith.constant 8 : index
    %c0_137 = arith.constant 0 : index
    %c0_138 = arith.constant 0 : index
    %153 = vector.load %arg2[%c8_136, %c0_137, %c0_138] : memref<9x256x256xbf16, #tpu.memory_space<vmem>>, vector<1x256x256xbf16>
    %154 = vector.shape_cast %153 : vector<1x256x256xbf16> to vector<256x256xbf16>
    %cst_139 = arith.constant dense<0.000000e+00> : vector<256x8xf32>
    %155 = tpu.matmul %154, %87, %cst_139 {dimension_numbers = #tpu.dot_dimension_numbers<[1], [0], [0], [1], [0, 0, 1, 1], [], []>} : vector<256x256xbf16>, vector<256x8xbf16>, vector<256x8xf32> -> vector<256x8xf32>
    %156 = arith.truncf %155 : vector<256x8xf32> to vector<256x8xbf16>
    %c8_140 = arith.constant 8 : index
    %c0_141 = arith.constant 0 : index
    %c0_142 = arith.constant 0 : index
    %157 = vector.load %arg5[%c8_140, %c0_141, %c0_142] : memref<9x8x128xbf16, #tpu.memory_space<vmem>>, vector<1x8x128xbf16>
    %158 = vector.shape_cast %157 : vector<1x8x128xbf16> to vector<8x128xbf16>
    %cst_143 = arith.constant dense<0.000000e+00> : vector<256x128xf32>
    %159 = tpu.matmul %156, %158, %cst_143 {dimension_numbers = #tpu.dot_dimension_numbers<[1], [0], [0], [1], [0, 0, 1, 1], [], []>} : vector<256x8xbf16>, vector<8x128xbf16>, vector<256x128xf32> -> vector<256x128xf32>
    %160 = arith.addf %152, %159 : vector<256x128xf32>
    %c0_144 = arith.constant 0 : index
    %c0_145 = arith.constant 0 : index
    %161 = vector.load %arg6[%c0_144, %c0_145] : memref<1x128xf32, #tpu.memory_space<vmem>>, vector<1x128xf32>
    %162 = vector.broadcast %161 : vector<1x128xf32> to vector<256x128xf32>
    %163 = arith.addf %160, %162 : vector<256x128xf32>
    %cst_146 = arith.constant 0.000000e+00 : f32
    %164 = vector.broadcast %cst_146 : f32 to vector<256x128xf32>
    %165 = arith.cmpf ogt, %163, %164 : vector<256x128xf32>
    %cst_147 = arith.constant 0.000000e+00 : f32
    %166 = vector.broadcast %cst_147 : f32 to vector<256x128xf32>
    %167 = arith.minimumf %163, %166 : vector<256x128xf32>
    %168 = math.exp %167 : vector<256x128xf32>
    %cst_148 = arith.constant 1.000000e+00 : f32
    %169 = vector.broadcast %cst_148 : f32 to vector<256x128xf32>
    %170 = arith.subf %168, %169 : vector<256x128xf32>
    %171 = arith.select %165, %163, %170 : vector<256x128xi1>, vector<256x128xf32>
    %c0_149 = arith.constant 0 : index
    %c0_150 = arith.constant 0 : index
    %c0_151 = arith.constant 0 : index
    %172 = vector.load %arg7[%c0_149, %c0_150, %c0_151] : memref<1x256x128xf32, #tpu.memory_space<vmem>>, vector<1x256x128xf32>
    %173 = vector.shape_cast %172 : vector<1x256x128xf32> to vector<256x128xf32>
    %174 = vector.shape_cast %171 : vector<256x128xf32> to vector<1x256x128xf32>
    tpu.vector_store %arg7[%c0_149, %c0_150, %c0_151], %174 {strides = array<i32>} : memref<1x256x128xf32, #tpu.memory_space<vmem>>, vector<1x256x128xf32>,
    return
  }
  func.func @transform_0(%arg0: i32) -> (i32, i32, i32) {
    %c0_i32 = arith.constant 0 : i32
    %c0_i32_0 = arith.constant 0 : i32
    %c0_i32_1 = arith.constant 0 : i32
    return %arg0, %c0_i32, %c0_i32_0 : i32, i32, i32
  }
  func.func @transform_1(%arg0: i32) -> (i32, i32, i32) {
    %c0_i32 = arith.constant 0 : i32
    %c0_i32_0 = arith.constant 0 : i32
    %c0_i32_1 = arith.constant 0 : i32
    %c0_i32_2 = arith.constant 0 : i32
    return %c0_i32, %c0_i32_0, %c0_i32_1 : i32, i32, i32
  }
  func.func @transform_2(%arg0: i32) -> (i32, i32, i32) {
    %c0_i32 = arith.constant 0 : i32
    %c0_i32_0 = arith.constant 0 : i32
    %c0_i32_1 = arith.constant 0 : i32
    %c0_i32_2 = arith.constant 0 : i32
    return %c0_i32, %c0_i32_0, %c0_i32_1 : i32, i32, i32
  }
  func.func @transform_3(%arg0: i32) -> (i32, i32) {
    %c0_i32 = arith.constant 0 : i32
    %c0_i32_0 = arith.constant 0 : i32
    %c0_i32_1 = arith.constant 0 : i32
    return %c0_i32, %c0_i32_0 : i32, i32
  }
  func.func @transform_4(%arg0: i32) -> (i32, i32, i32) {
    %c0_i32 = arith.constant 0 : i32
    %c0_i32_0 = arith.constant 0 : i32
    %c0_i32_1 = arith.constant 0 : i32
    %c0_i32_2 = arith.constant 0 : i32
    return %c0_i32, %c0_i32_0, %c0_i32_1 : i32, i32, i32
  }
  func.func @transform_5(%arg0: i32) -> (i32, i32) {
    %c0_i32 = arith.constant 0 : i32
    %c0_i32_0 = arith.constant 0 : i32
    %c0_i32_1 = arith.constant 0 : i32
    return %c0_i32, %c0_i32_0 : i32, i32
  }
  func.func @transform_6(%arg0: i32) -> (i32, i32, i32) {
    %c0_i32 = arith.constant 0 : i32
    %c0_i32_0 = arith.constant 0 : i32
    %c0_i32_1 = arith.constant 0 : i32
    return %arg0, %c0_i32, %c0_i32_0 : i32, i32, i32
  }
}

</mosaic_0001>

<llo_original>
// kernel: cnn_forward.1
$region0: #{cnn_forward.1}
  #allocation0 [shape = 'u32[]', space=smem, size = 0x4, offset = 0x4, fixed_abs, tag = 'smem constant byte address 0x4 - core index']
  #allocation1 [shape = 'u32[72,128]{1,0:T(1,128)}', space=vmem, size = 0x9000, scoped, tag = 'internal scratch']
  %s0 = inlined_call_operand.vmem [shape: f32[2,256,4], index: 0, kind: input, shape index: {}]
  %s1 = inlined_call_operand.hbm [shape: bf16[9,256,256], index: 1, kind: input, shape index: {}]
  %s2 = inlined_call_operand.vmem [shape: bf16[9,4,8], index: 2, kind: input, shape index: {}]
  %s3 = inlined_call_operand.hbm [shape: f32[1,8], index: 3, kind: input, shape index: {}]
  %s4 = inlined_call_operand.hbm [shape: bf16[9,8,128], index: 4, kind: input, shape index: {}]
  %s5 = inlined_call_operand.hbm [shape: f32[1,128], index: 5, kind: input, shape index: {}]
  %s6 = inlined_call_operand.vmem [shape: f32[2,256,128], index: 6, kind: output, shape index: {}]
  %s7 = sld [smem:[#allocation0]]
  $region73: #{cnn_forward.1} parent=0
    _
  %s9 = ssub.s32 1, %s7
  %s10 = scalar_select 0, %s9, %s7
  $region1: #{cnn_forward.1} parent=0
    #allocation2 [shape = 'u8[1179648]{0}', space=vmem, size = 0x120000, scoped, tag = 'input window, operand 1, single buffered']
    #allocation3 [shape = 's32[2]{0}', space=sflag, size = 0x8, scoped, tag = 'scoped memory for cnn_forward.1']
    #allocation4 [shape = 'u8[512]{0}', space=vmem, size = 0x400, scoped, tag = 'input window, operand 3, single buffered']
    #allocation5 [shape = 's32[1]{0}', space=sflag, size = 0x4, scoped, tag = 'scoped memory for cnn_forward.1']
    #allocation6 [shape = 'u8[18432]{0}', space=vmem, size = 0x4800, scoped, tag = 'input window, operand 4, single buffered']
    #allocation7 [shape = 'u8[512]{0}', space=vmem, size = 0x400, scoped, tag = 'input window, operand 5, single buffered']
    #allocation8 [shape = 's32[1]{0}', space=sflag, size = 0x4, scoped, tag = 'scoped memory for cnn_forward.1']
    %11 = vsyncpa [#allocation3], 0
    %12 = vsyncpa [#allocation5], 0
    %13 = vsyncpa [#allocation8], 0
    loop: start=0, step=1, limit=4
    $region2: #{cnn_forward.1} parent=1 // loop_pre_header
      _
    $region3: #{cnn_forward.1} parent=1 // loop_header
      %s15 = sphi 0, %s19
      %p16 = scmp.ge.s32.totalorder %s15, 4
      %s25 = sphi 0, %s27
      %s28 = sphi 0, %s25
      %s29 = sphi 0, %s28
      %s45 = sphi 0, %s29
      %s49 = sphi 0, %s49
      %s51 = sphi 0, %s49
      %s52 = sphi 0, %s51
      %s66 = sphi 0, %s52
      %s70 = sphi 0, %s70
      %s72 = sphi 0, %s70
      %s73 = sphi 0, %s72
      %s87 = sphi 0, %s73
      %s91 = sphi 0, %s91
      %s93 = sphi 0, %s91
      %s94 = sphi 0, %s93
      %s108 = sphi 0, %s94
      %s112 = sphi 0, %s112
      %s114 = sphi 0, %s112
      %s115 = sphi 0, %s114
      %s129 = sphi 0, %s115
      %s133 = sphi 0, %s133
      %s135 = sphi 0, %s133
      %s136 = sphi 0, %s135
      %s150 = sphi 0, %s136
      %s156 = sphi 0, %s158
      %s159 = sphi 0, %s156
      %s160 = sphi 0, %s159
      %s176 = sphi 0, %s160
    $region4: #{cnn_forward.1} parent=1 // loop_header_branch
      %18 = sbr.rel (%p16) target = $region8
    $region5: #{cnn_forward.1} parent=1 // loop_body
      %s20 = ssub.s32 %s15, 1
      %s21 = ssub.s32 %s15, 2
      %s22 = sadd.s32 %s15, 1
      %s23 = ssub.s32 %s15, %s22
      %p24 = scmp.eq.s32.totalorder %s23, 0
      %s26 = sadd.s32 %s25, 1
      %s27 = scalar_select %p24, %s25, %s26
      %p30 = pneg %p24
      %p31 = scmp.eq.s32.totalorder %s15, 1
      %p32 = por %p30, %p31
      %p33 = scmp.ne.s32.totalorder %s25, %s28
      %p34 = scmp.eq.s32.totalorder %s15, 0
      %p35 = por %p33, %p34
      %p36 = scmp.ne.s32.totalorder %s25, %s28
      %p37 = scmp.eq.s32.totalorder %s20, 1
      %p38 = por %p36, %p37
      %p39 = scmp.ne.s32.totalorder %s28, %s29
      %p40 = scmp.eq.s32.totalorder %s20, 0
      %p41 = por %p39, %p40
      %p42 = scmp.ne.s32.totalorder %s28, %s29
      %p43 = scmp.eq.s32.totalorder %s21, 1
      %p44 = por %p42, %p43
      %p46 = scmp.ne.s32.totalorder %s29, %s45
      %p47 = scmp.eq.s32.totalorder %s21, 0
      %p48 = por %p46, %p47
      %s50 = sadd.s32 %s49, 1
      %p53 = scmp.eq.s32.totalorder %s15, 1
      %p54 = scmp.ne.s32.totalorder %s49, %s51
      %p55 = scmp.eq.s32.totalorder %s15, 0
      %p56 = por %p54, %p55
      %p57 = scmp.ne.s32.totalorder %s49, %s51
      %p58 = scmp.eq.s32.totalorder %s20, 1
      %p59 = por %p57, %p58
      %p60 = scmp.ne.s32.totalorder %s51, %s52
      %p61 = scmp.eq.s32.totalorder %s20, 0
      %p62 = por %p60, %p61
      %p63 = scmp.ne.s32.totalorder %s51, %s52
      %p64 = scmp.eq.s32.totalorder %s21, 1
      %p65 = por %p63, %p64
      %p67 = scmp.ne.s32.totalorder %s52, %s66
      %p68 = scmp.eq.s32.totalorder %s21, 0
      %p69 = por %p67, %p68
      %s71 = sadd.s32 %s70, 1
      %p74 = scmp.eq.s32.totalorder %s15, 1
      %p75 = scmp.ne.s32.totalorder %s70, %s72
      %p76 = scmp.eq.s32.totalorder %s15, 0
      %p77 = por %p75, %p76
      %p78 = scmp.ne.s32.totalorder %s70, %s72
      %p79 = scmp.eq.s32.totalorder %s20, 1
      %p80 = por %p78, %p79
      %p81 = scmp.ne.s32.totalorder %s72, %s73
      %p82 = scmp.eq.s32.totalorder %s20, 0
      %p83 = por %p81, %p82
      %p84 = scmp.ne.s32.totalorder %s72, %s73
      %p85 = scmp.eq.s32.totalorder %s21, 1
      %p86 = por %p84, %p85
      %p88 = scmp.ne.s32.totalorder %s73, %s87
      %p89 = scmp.eq.s32.totalorder %s21, 0
      %p90 = por %p88, %p89
      %s92 = sadd.s32 %s91, 1
      %p95 = scmp.eq.s32.totalorder %s15, 1
      %p96 = scmp.ne.s32.totalorder %s91, %s93
      %p97 = scmp.eq.s32.totalorder %s15, 0
      %p98 = por %p96, %p97
      %p99 = scmp.ne.s32.totalorder %s91, %s93
      %p100 = scmp.eq.s32.totalorder %s20, 1
      %p101 = por %p99, %p100
      %p102 = scmp.ne.s32.totalorder %s93, %s94
      %p103 = scmp.eq.s32.totalorder %s20, 0
      %p104 = por %p102, %p103
      %p105 = scmp.ne.s32.totalorder %s93, %s94
      %p106 = scmp.eq.s32.totalorder %s21, 1
      %p107 = por %p105, %p106
      %p109 = scmp.ne.s32.totalorder %s94, %s108
      %p110 = scmp.eq.s32.totalorder %s21, 0
      %p111 = por %p109, %p110
      %s113 = sadd.s32 %s112, 1
      %p116 = scmp.eq.s32.totalorder %s15, 1
      %p117 = scmp.ne.s32.totalorder %s112, %s114
      %p118 = scmp.eq.s32.totalorder %s15, 0
      %p119 = por %p117, %p118
      %p120 = scmp.ne.s32.totalorder %s112, %s114
      %p121 = scmp.eq.s32.totalorder %s20, 1
      %p122 = por %p120, %p121
      %p123 = scmp.ne.s32.totalorder %s114, %s115
      %p124 = scmp.eq.s32.totalorder %s20, 0
      %p125 = por %p123, %p124
      %p126 = scmp.ne.s32.totalorder %s114, %s115
      %p127 = scmp.eq.s32.totalorder %s21, 1
      %p128 = por %p126, %p127
      %p130 = scmp.ne.s32.totalorder %s115, %s129
      %p131 = scmp.eq.s32.totalorder %s21, 0
      %p132 = por %p130, %p131
      %s134 = sadd.s32 %s133, 1
      %p137 = scmp.eq.s32.totalorder %s15, 1
      %p138 = scmp.ne.s32.totalorder %s133, %s135
      %p139 = scmp.eq.s32.totalorder %s15, 0
      %p140 = por %p138, %p139
      %p141 = scmp.ne.s32.totalorder %s133, %s135
      %p142 = scmp.eq.s32.totalorder %s20, 1
      %p143 = por %p141, %p142
      %p144 = scmp.ne.s32.totalorder %s135, %s136
      %p145 = scmp.eq.s32.totalorder %s20, 0
      %p146 = por %p144, %p145
      %p147 = scmp.ne.s32.totalorder %s135, %s136
      %p148 = scmp.eq.s32.totalorder %s21, 1
      %p149 = por %p147, %p148
      %p151 = scmp.ne.s32.totalorder %s136, %s150
      %p152 = scmp.eq.s32.totalorder %s21, 0
      %p153 = por %p151, %p152
      %s154 = ssub.s32 %s15, %s22
      %p155 = scmp.eq.s32.totalorder %s154, 0
      %s157 = sadd.s32 %s156, 1
      %s158 = scalar_select %p155, %s156, %s157
      %p161 = pneg %p155
      %p162 = scmp.eq.s32.totalorder %s15, 1
      %p163 = por %p161, %p162
      %p164 = scmp.ne.s32.totalorder %s156, %s159
      %p165 = scmp.eq.s32.totalorder %s15, 0
      %p166 = por %p164, %p165
      %p167 = scmp.ne.s32.totalorder %s156, %s159
      %p168 = scmp.eq.s32.totalorder %s20, 1
      %p169 = por %p167, %p168
      %p170 = scmp.ne.s32.totalorder %s159, %s160
      %p171 = scmp.eq.s32.totalorder %s20, 0
      %p172 = por %p170, %p171
      %p173 = scmp.ne.s32.totalorder %s159, %s160
      %p174 = scmp.eq.s32.totalorder %s21, 1
      %p175 = por %p173, %p174
      %p177 = scmp.ne.s32.totalorder %s160, %s176
      %p178 = scmp.eq.s32.totalorder %s21, 0
      %p179 = por %p177, %p178
      %p180 = scmp.le.s32.totalorder 1, %s15
      %p181 = scmp.lt.s32.totalorder %s15, 3
      %p182 = pnand %p180, %p181
      %p183 = pneg %p182
      // Predicated region
      $region9: #{cnn_forward.1} parent=5 // pred_check
        _
      $region10: #{cnn_forward.1} parent=5 // pred_check_branch
        %185 = sbr.rel (%p182) target = $region12
      $region11: #{cnn_forward.1} parent=5 // pred_region
        %s186 = ssub.s32 %s15, 1
        // Predicated region
        $region13: #{cnn_forward.1} parent=11 // pred_check
          %p187 = pneg %p62
        $region14: #{cnn_forward.1} parent=11 // pred_check_branch
          %189 = sbr.rel (%p187) target = $region16
        $region15: #{cnn_forward.1} parent=11 // pred_region
          %191 = vsyncadd [#allocation3], 0
          %s192 = sshll.u32 %s1, 4
          %s193 = int_to_ptr.hbm [resolvable:$true] %s192
          %s194 = sshll.u32 [#allocation2], 4
          %s195 = int_to_ptr.vmem [resolvable:$true] %s194
          %200 = dma.hbm_to_vmem [thread:$0]  %s193, 36864, %s195, [#allocation3], 128, 128, 8
        $region16: #{cnn_forward.1} parent=11 // pred_fallthru
          _
        // Predicated region
        $region17: #{cnn_forward.1} parent=11 // pred_check
          %p201 = pneg %p83
        $region18: #{cnn_forward.1} parent=11 // pred_check_branch
          %203 = sbr.rel (%p201) target = $region20
        $region19: #{cnn_forward.1} parent=11 // pred_region
          _
        $region20: #{cnn_forward.1} parent=11 // pred_fallthru
          _
        // Predicated region
        $region21: #{cnn_forward.1} parent=11 // pred_check
          %p204 = pneg %p104
        $region22: #{cnn_forward.1} parent=11 // pred_check_branch
          %206 = sbr.rel (%p204) target = $region24
        $region23: #{cnn_forward.1} parent=11 // pred_region
          %208 = vsyncadd [#allocation5], 0
          %s210 = sshll.u32 %s3, 4
          %s211 = int_to_ptr.hbm [resolvable:$true] %s210
          %s212 = sshll.u32 [#allocation4], 4
          %s213 = int_to_ptr.vmem [resolvable:$true] %s212
          %215 = dma.hbm_to_vmem [thread:$0]  %s211, 16, %s213, [#allocation5]
        $region24: #{cnn_forward.1} parent=11 // pred_fallthru
          _
        // Predicated region
        $region25: #{cnn_forward.1} parent=11 // pred_check
          %p216 = pneg %p125
        $region26: #{cnn_forward.1} parent=11 // pred_check_branch
          %218 = sbr.rel (%p216) target = $region28
        $region27: #{cnn_forward.1} parent=11 // pred_region
          %220 = vsyncadd [#allocation5], 0
          %s221 = sshll.u32 %s4, 4
          %s222 = int_to_ptr.hbm [resolvable:$true] %s221
          %s223 = sshll.u32 [#allocation6], 4
          %s224 = int_to_ptr.vmem [resolvable:$true] %s223
          %229 = dma.hbm_to_vmem [thread:$0]  %s222, 576, %s224, [#allocation5], 64, 64, 4
        $region28: #{cnn_forward.1} parent=11 // pred_fallthru
          _
        // Predicated region
        $region29: #{cnn_forward.1} parent=11 // pred_check
          %p230 = pneg %p146
        $region30: #{cnn_forward.1} parent=11 // pred_check_branch
          %232 = sbr.rel (%p230) target = $region32
        $region31: #{cnn_forward.1} parent=11 // pred_region
          %234 = vsyncadd [#allocation8], 0
          %s236 = sshll.u32 %s5, 4
          %s237 = int_to_ptr.hbm [resolvable:$true] %s236
          %s238 = sshll.u32 [#allocation7], 4
          %s239 = int_to_ptr.vmem [resolvable:$true] %s238
          %241 = dma.hbm_to_vmem [thread:$0]  %s237, 16, %s239, [#allocation8]
        $region32: #{cnn_forward.1} parent=11 // pred_fallthru
          _
      $region12: #{cnn_forward.1} parent=5 // pred_fallthru
        _
      %p242 = scmp.lt.s32.totalorder %s15, 2
      // Predicated region
      $region33: #{cnn_forward.1} parent=5 // pred_check
        %p243 = pneg %p242
      $region34: #{cnn_forward.1} parent=5 // pred_check_branch
        %245 = sbr.rel (%p243) target = $region36
      $region35: #{cnn_forward.1} parent=5 // pred_region
        // Predicated region
        $region37: #{cnn_forward.1} parent=35 // pred_check
          %p246 = pneg %p35
        $region38: #{cnn_forward.1} parent=35 // pred_check_branch
          %248 = sbr.rel (%p246) target = $region40
        $region39: #{cnn_forward.1} parent=35 // pred_region
          %p249 = scmp.lt.s32.totalorder %s15, 1
          %s250 = scalar_select %p249, %s15, 1
          %s251 = smul.addr %s250, 32
          %s252 = smul.addr %s251, 8
          %s253 = scalar_lea.vmem %s0, %s252
        $region40: #{cnn_forward.1} parent=35 // pred_fallthru
          _
      $region36: #{cnn_forward.1} parent=5 // pred_fallthru
        _
      %p254 = scmp.le.s32.totalorder 1, %s15
      %p255 = scmp.lt.s32.totalorder %s15, 3
      %p256 = pnand %p254, %p255
      %p257 = pneg %p256
      // Predicated region
      $region41: #{cnn_forward.1} parent=5 // pred_check
        _
      $region42: #{cnn_forward.1} parent=5 // pred_check_branch
        %259 = sbr.rel (%p256) target = $region44
      $region43: #{cnn_forward.1} parent=5 // pred_region
        %s260 = ssub.s32 %s15, 1
        // Predicated region
        $region45: #{cnn_forward.1} parent=43 // pred_check
          %p261 = pneg %p62
        $region46: #{cnn_forward.1} parent=43 // pred_check_branch
          %263 = sbr.rel (%p261) target = $region48
        $region47: #{cnn_forward.1} parent=43 // pred_region
          %265 = dma.done [#allocation3], 36864
        $region48: #{cnn_forward.1} parent=43 // pred_fallthru
          _
        // Predicated region
        $region49: #{cnn_forward.1} parent=43 // pred_check
          %p266 = pneg %p104
        $region50: #{cnn_forward.1} parent=43 // pred_check_branch
          %268 = sbr.rel (%p266) target = $region52
        $region51: #{cnn_forward.1} parent=43 // pred_region
          %270 = dma.done [#allocation5], 16
        $region52: #{cnn_forward.1} parent=43 // pred_fallthru
          _
        // Predicated region
        $region53: #{cnn_forward.1} parent=43 // pred_check
          %p271 = pneg %p125
        $region54: #{cnn_forward.1} parent=43 // pred_check_branch
          %273 = sbr.rel (%p271) target = $region56
        $region55: #{cnn_forward.1} parent=43 // pred_region
          %275 = dma.done [#allocation5], 576
        $region56: #{cnn_forward.1} parent=43 // pred_fallthru
          _
        // Predicated region
        $region57: #{cnn_forward.1} parent=43 // pred_check
          %p276 = pneg %p146
        $region58: #{cnn_forward.1} parent=43 // pred_check_branch
          %278 = sbr.rel (%p276) target = $region60
        $region59: #{cnn_forward.1} parent=43 // pred_region
          %280 = dma.done [#allocation8], 16
        $region60: #{cnn_forward.1} parent=43 // pred_fallthru
          _
        %p281 = scmp.lt.s32.totalorder %s20, 1
        %s282 = scalar_select %p281, %s20, 1
        %s283 = smul.addr %s282, 32
        %s284 = smul.addr %s283, 8
        %s285 = scalar_lea.vmem %s0, %s284
        %p286 = pneg %p41
        %p287 = pneg %p38
        %p288 = pneg %p62
        %p289 = pneg %p59
        %p290 = pneg %p83
        %p291 = pneg %p80
        %p292 = pneg %p104
        %p293 = pneg %p101
        %p294 = pneg %p125
        %p295 = pneg %p122
        %p296 = pneg %p146
        %p297 = pneg %p143
        %p298 = pneg %p172
        %p299 = pneg %p169
        %p300 = scmp.lt.s32.totalorder %s20, 1
        %s301 = scalar_select %p300, %s20, 1
        %s302 = smul.addr %s301, 32
        %s303 = smul.addr %s302, 8
        %s304 = scalar_lea.vmem %s6, %s303
        %p305 = scmp.lt.s32.totalorder %s20, 1
        %s306 = scalar_select %p305, %s20, 1
        %s307 = smul.addr %s306, 32
        %s308 = smul.addr %s307, 8
        %s309 = scalar_lea.vmem %s0, %s308
        %p310 = scmp.lt.s32.totalorder %s20, 1
        %s311 = scalar_select %p310, %s20, 1
        %s312 = smul.addr %s311, 32
        %s313 = smul.addr %s312, 8
        %s314 = scalar_lea.vmem %s6, %s313
        %v316 = vld [vmem:[%s309] sm:$0xff]
        %v317 = vld [vmem:[%s309 + $0x8] sm:$0xff]
        %v318 = vld [vmem:[%s309 + $0x10] sm:$0xff]
        %v319 = vld [vmem:[%s309 + $0x18] sm:$0xff]
        %v320 = vld [vmem:[%s309 + $0x20] sm:$0xff]
        %v321 = vld [vmem:[%s309 + $0x28] sm:$0xff]
        %v322 = vld [vmem:[%s309 + $0x30] sm:$0xff]
        %v323 = vld [vmem:[%s309 + $0x38] sm:$0xff]
        %v324 = vld [vmem:[%s309 + $0x40] sm:$0xff]
        %v325 = vld [vmem:[%s309 + $0x48] sm:$0xff]
        %v326 = vld [vmem:[%s309 + $0x50] sm:$0xff]
        %v327 = vld [vmem:[%s309 + $0x58] sm:$0xff]
        %v328 = vld [vmem:[%s309 + $0x60] sm:$0xff]
        %v329 = vld [vmem:[%s309 + $0x68] sm:$0xff]
        %v330 = vld [vmem:[%s309 + $0x70] sm:$0xff]
        %v331 = vld [vmem:[%s309 + $0x78] sm:$0xff]
        %v332 = vld [vmem:[%s309 + $0x80] sm:$0xff]
        %v333 = vld [vmem:[%s309 + $0x88] sm:$0xff]
        %v334 = vld [vmem:[%s309 + $0x90] sm:$0xff]
        %v335 = vld [vmem:[%s309 + $0x98] sm:$0xff]
        %v336 = vld [vmem:[%s309 + $0xa0] sm:$0xff]
        %v337 = vld [vmem:[%s309 + $0xa8] sm:$0xff]
        %v338 = vld [vmem:[%s309 + $0xb0] sm:$0xff]
        %v339 = vld [vmem:[%s309 + $0xb8] sm:$0xff]
        %v340 = vld [vmem:[%s309 + $0xc0] sm:$0xff]
        %v341 = vld [vmem:[%s309 + $0xc8] sm:$0xff]
        %v342 = vld [vmem:[%s309 + $0xd0] sm:$0xff]
        %v343 = vld [vmem:[%s309 + $0xd8] sm:$0xff]
        %v344 = vld [vmem:[%s309 + $0xe0] sm:$0xff]
        %v345 = vld [vmem:[%s309 + $0xe8] sm:$0xff]
        %v346 = vld [vmem:[%s309 + $0xf0] sm:$0xff]
        %v347 = vld [vmem:[%s309 + $0xf8] sm:$0xff]
        %v348 = vpack.c.bf16 %v317, %v316
        %v349 = vpack.c.bf16 %v319, %v318
        %v350 = vpack.c.bf16 %v321, %v320
        %v351 = vpack.c.bf16 %v323, %v322
        %v352 = vpack.c.bf16 %v325, %v324
        %v353 = vpack.c.bf16 %v327, %v326
        %v354 = vpack.c.bf16 %v329, %v328
        %v355 = vpack.c.bf16 %v331, %v330
        %v356 = vpack.c.bf16 %v333, %v332
        %v357 = vpack.c.bf16 %v335, %v334
        %v358 = vpack.c.bf16 %v337, %v336
        %v359 = vpack.c.bf16 %v339, %v338
        %v360 = vpack.c.bf16 %v341, %v340
        %v361 = vpack.c.bf16 %v343, %v342
        %v362 = vpack.c.bf16 %v345, %v344
        %v363 = vpack.c.bf16 %v347, %v346
        %v364 = vld [vmem:[#allocation2] sm:$0xff]
        %v365 = vld [vmem:[#allocation2 + $0x8] sm:$0xff]
        %v366 = vld [vmem:[#allocation2 + $0x10] sm:$0xff]
        %v367 = vld [vmem:[#allocation2 + $0x18] sm:$0xff]
        %v368 = vld [vmem:[#allocation2 + $0x20] sm:$0xff]
        %v369 = vld [vmem:[#allocation2 + $0x28] sm:$0xff]
        %v370 = vld [vmem:[#allocation2 + $0x30] sm:$0xff]
        %v371 = vld [vmem:[#allocation2 + $0x38] sm:$0xff]
        %v372 = vld [vmem:[#allocation2 + $0x40] sm:$0xff]
        %v373 = vld [vmem:[#allocation2 + $0x48] sm:$0xff]
        %v374 = vld [vmem:[#allocation2 + $0x50] sm:$0xff]
        %v375 = vld [vmem:[#allocation2 + $0x58] sm:$0xff]
        %v376 = vld [vmem:[#allocation2 + $0x60] sm:$0xff]
        %v377 = vld [vmem:[#allocation2 + $0x68] sm:$0xff]
        %v378 = vld [vmem:[#allocation2 + $0x70] sm:$0xff]
        %v379 = vld [vmem:[#allocation2 + $0x78] sm:$0xff]
        %v380 = vld [vmem:[#allocation2 + $0x80] sm:$0xff]
        %v381 = vld [vmem:[#allocation2 + $0x88] sm:$0xff]
        %v382 = vld [vmem:[#allocation2 + $0x90] sm:$0xff]
        %v383 = vld [vmem:[#allocation2 + $0x98] sm:$0xff]
        %v384 = vld [vmem:[#allocation2 + $0xa0] sm:$0xff]
        %v385 = vld [vmem:[#allocation2 + $0xa8] sm:$0xff]
        %v386 = vld [vmem:[#allocation2 + $0xb0] sm:$0xff]
        %v387 = vld [vmem:[#allocation2 + $0xb8] sm:$0xff]
        %v388 = vld [vmem:[#allocation2 + $0xc0] sm:$0xff]
        %v389 = vld [vmem:[#allocation2 + $0xc8] sm:$0xff]
        %v390 = vld [vmem:[#allocation2 + $0xd0] sm:$0xff]
        %v391 = vld [vmem:[#allocation2 + $0xd8] sm:$0xff]
        %v392 = vld [vmem:[#allocation2 + $0xe0] sm:$0xff]
        %v393 = vld [vmem:[#allocation2 + $0xe8] sm:$0xff]
        %v394 = vld [vmem:[#allocation2 + $0xf0] sm:$0xff]
        %v395 = vld [vmem:[#allocation2 + $0xf8] sm:$0xff]
        %v428 = vunpack.c.l.b16 %v364
        %v429 = vunpack.c.h.b16 %v364
        %v430 = vunpack.c.l.b16 %v365
        %v431 = vunpack.c.h.b16 %v365
        %v432 = vunpack.c.l.b16 %v366
        %v433 = vunpack.c.h.b16 %v366
        %v434 = vunpack.c.l.b16 %v367
        %v435 = vunpack.c.h.b16 %v367
        %v436 = vunpack.c.l.b16 %v368
        %v437 = vunpack.c.h.b16 %v368
        %v438 = vunpack.c.l.b16 %v369
        %v439 = vunpack.c.h.b16 %v369
        %v440 = vunpack.c.l.b16 %v370
        %v441 = vunpack.c.h.b16 %v370
        %v442 = vunpack.c.l.b16 %v371
        %v443 = vunpack.c.h.b16 %v371
        %v444 = vunpack.c.l.b16 %v372
        %v445 = vunpack.c.h.b16 %v372
        %v446 = vunpack.c.l.b16 %v373
        %v447 = vunpack.c.h.b16 %v373
        %v448 = vunpack.c.l.b16 %v374
        %v449 = vunpack.c.h.b16 %v374
        %v450 = vunpack.c.l.b16 %v375
        %v451 = vunpack.c.h.b16 %v375
        %v452 = vunpack.c.l.b16 %v376
        %v453 = vunpack.c.h.b16 %v376
        %v454 = vunpack.c.l.b16 %v377
        %v455 = vunpack.c.h.b16 %v377
        %v456 = vunpack.c.l.b16 %v378
        %v457 = vunpack.c.h.b16 %v378
        %v458 = vunpack.c.l.b16 %v379
        %v459 = vunpack.c.h.b16 %v379
        %v460 = vunpack.c.l.b16 %v380
        %v461 = vunpack.c.h.b16 %v380
        %v462 = vunpack.c.l.b16 %v381
        %v463 = vunpack.c.h.b16 %v381
        %v464 = vunpack.c.l.b16 %v382
        %v465 = vunpack.c.h.b16 %v382
        %v466 = vunpack.c.l.b16 %v383
        %v467 = vunpack.c.h.b16 %v383
        %v468 = vunpack.c.l.b16 %v384
        %v469 = vunpack.c.h.b16 %v384
        %v470 = vunpack.c.l.b16 %v385
        %v471 = vunpack.c.h.b16 %v385
        %v472 = vunpack.c.l.b16 %v386
        %v473 = vunpack.c.h.b16 %v386
        %v474 = vunpack.c.l.b16 %v387
        %v475 = vunpack.c.h.b16 %v387
        %v476 = vunpack.c.l.b16 %v388
        %v477 = vunpack.c.h.b16 %v388
        %v478 = vunpack.c.l.b16 %v389
        %v479 = vunpack.c.h.b16 %v389
        %v480 = vunpack.c.l.b16 %v390
        %v481 = vunpack.c.h.b16 %v390
        %v482 = vunpack.c.l.b16 %v391
        %v483 = vunpack.c.h.b16 %v391
        %v484 = vunpack.c.l.b16 %v392
        %v485 = vunpack.c.h.b16 %v392
        %v486 = vunpack.c.l.b16 %v393
        %v487 = vunpack.c.h.b16 %v393
        %v488 = vunpack.c.l.b16 %v394
        %v489 = vunpack.c.h.b16 %v394
        %v490 = vunpack.c.l.b16 %v395
        %v491 = vunpack.c.h.b16 %v395
        %v492 = vpack.c.b16 %v430, %v428
        %v493 = vpack.c.b16 %v431, %v429
        %v494 = vpack.c.b16 %v434, %v432
        %v495 = vpack.c.b16 %v435, %v433
        %v496 = vpack.c.b16 %v438, %v436
        %v497 = vpack.c.b16 %v439, %v437
        %v498 = vpack.c.b16 %v442, %v440
        %v499 = vpack.c.b16 %v443, %v441
        %v500 = vpack.c.b16 %v446, %v444
        %v501 = vpack.c.b16 %v447, %v445
        %v502 = vpack.c.b16 %v450, %v448
        %v503 = vpack.c.b16 %v451, %v449
        %v504 = vpack.c.b16 %v454, %v452
        %v505 = vpack.c.b16 %v455, %v453
        %v506 = vpack.c.b16 %v458, %v456
        %v507 = vpack.c.b16 %v459, %v457
        %v508 = vpack.c.b16 %v462, %v460
        %v509 = vpack.c.b16 %v463, %v461
        %v510 = vpack.c.b16 %v466, %v464
        %v511 = vpack.c.b16 %v467, %v465
        %v512 = vpack.c.b16 %v470, %v468
        %v513 = vpack.c.b16 %v471, %v469
        %v514 = vpack.c.b16 %v474, %v472
        %v515 = vpack.c.b16 %v475, %v473
        %v516 = vpack.c.b16 %v478, %v476
        %v517 = vpack.c.b16 %v479, %v477
        %v518 = vpack.c.b16 %v482, %v480
        %v519 = vpack.c.b16 %v483, %v481
        %v520 = vpack.c.b16 %v486, %v484
        %v521 = vpack.c.b16 %v487, %v485
        %v522 = vpack.c.b16 %v490, %v488
        %v523 = vpack.c.b16 %v491, %v489
        %556 = vmatpush.bf16.msra.mxu0 %v355
        %557 = vmatpush.bf16.msra.mxu0 %v354
        %558 = vmatpush.bf16.msra.mxu0 %v353
        %559 = vmatpush.bf16.msra.mxu0 %v352
        %560 = vmatpush.bf16.msra.mxu0 %v351
        %561 = vmatpush.bf16.msra.mxu0 %v350
        %562 = vmatpush.bf16.msra.mxu0 %v349
        %563 = vmatpush.bf16.msra.mxu0 %v348
        %564 = vmatmul.bf16.gmra.mxu0 %v492
        %v565 = vpop.f32.mrf.mxu0
        %v566 = vadd.f32 0.0, %v565
        %v567 = vpop.f32.mrf.mxu0
        %v568 = vadd.f32 0.0, %v567
        %569 = vmatmul.bf16.gmra.mxu0 %v494
        %v570 = vpop.f32.mrf.mxu0
        %v571 = vadd.f32 0.0, %v570
        %v572 = vpop.f32.mrf.mxu0
        %v573 = vadd.f32 0.0, %v572
        %574 = vmatmul.bf16.gmra.mxu0 %v496
        %v575 = vpop.f32.mrf.mxu0
        %v576 = vadd.f32 0.0, %v575
        %v577 = vpop.f32.mrf.mxu0
        %v578 = vadd.f32 0.0, %v577
        %579 = vmatmul.bf16.gmra.mxu0 %v498
        %v580 = vpop.f32.mrf.mxu0
        %v581 = vadd.f32 0.0, %v580
        %v582 = vpop.f32.mrf.mxu0
        %v583 = vadd.f32 0.0, %v582
        %584 = vmatmul.bf16.gmra.mxu0 %v500
        %v585 = vpop.f32.mrf.mxu0
        %v586 = vadd.f32 0.0, %v585
        %v587 = vpop.f32.mrf.mxu0
        %v588 = vadd.f32 0.0, %v587
        %589 = vmatmul.bf16.gmra.mxu0 %v502
        %v590 = vpop.f32.mrf.mxu0
        %v591 = vadd.f32 0.0, %v590
        %v592 = vpop.f32.mrf.mxu0
        %v593 = vadd.f32 0.0, %v592
        %594 = vmatmul.bf16.gmra.mxu0 %v504
        %v595 = vpop.f32.mrf.mxu0
        %v596 = vadd.f32 0.0, %v595
        %v597 = vpop.f32.mrf.mxu0
        %v598 = vadd.f32 0.0, %v597
        %599 = vmatmul.bf16.gmra.mxu0 %v506
        %v600 = vpop.f32.mrf.mxu0
        %v601 = vadd.f32 0.0, %v600
        %v602 = vpop.f32.mrf.mxu0
        %v603 = vadd.f32 0.0, %v602
        %604 = vmatmul.bf16.gmra.mxu0 %v508
        %v605 = vpop.f32.mrf.mxu0
        %v606 = vadd.f32 0.0, %v605
        %v607 = vpop.f32.mrf.mxu0
        %v608 = vadd.f32 0.0, %v607
        %609 = vmatmul.bf16.gmra.mxu0 %v510
        %v610 = vpop.f32.mrf.mxu0
        %v611 = vadd.f32 0.0, %v610
        %v612 = vpop.f32.mrf.mxu0
        %v613 = vadd.f32 0.0, %v612
        %614 = vmatmul.bf16.gmra.mxu0 %v512
        %v615 = vpop.f32.mrf.mxu0
        %v616 = vadd.f32 0.0, %v615
        %v617 = vpop.f32.mrf.mxu0
        %v618 = vadd.f32 0.0, %v617
        %619 = vmatmul.bf16.gmra.mxu0 %v514
        %v620 = vpop.f32.mrf.mxu0
        %v621 = vadd.f32 0.0, %v620
        %v622 = vpop.f32.mrf.mxu0
        %v623 = vadd.f32 0.0, %v622
        %624 = vmatmul.bf16.gmra.mxu0 %v516
        %v625 = vpop.f32.mrf.mxu0
        %v626 = vadd.f32 0.0, %v625
        %v627 = vpop.f32.mrf.mxu0
        %v628 = vadd.f32 0.0, %v627
        %629 = vmatmul.bf16.gmra.mxu0 %v518
        %v630 = vpop.f32.mrf.mxu0
        %v631 = vadd.f32 0.0, %v630
        %v632 = vpop.f32.mrf.mxu0
        %v633 = vadd.f32 0.0, %v632
        %634 = vmatmul.bf16.gmra.mxu0 %v520
        %v635 = vpop.f32.mrf.mxu0
        %v636 = vadd.f32 0.0, %v635
        %v637 = vpop.f32.mrf.mxu0
        %v638 = vadd.f32 0.0, %v637
        %639 = vmatmul.bf16.gmra.mxu0 %v522
        %v640 = vpop.f32.mrf.mxu0
        %v641 = vadd.f32 0.0, %v640
        %v642 = vpop.f32.mrf.mxu0
        %v643 = vadd.f32 0.0, %v642
        %644 = vdwg.mxu0
        %645 = vmatpush.bf16.msra.mxu0 %v363
        %646 = vmatpush.bf16.msra.mxu0 %v362
        %647 = vmatpush.bf16.msra.mxu0 %v361
        %648 = vmatpush.bf16.msra.mxu0 %v360
        %649 = vmatpush.bf16.msra.mxu0 %v359
        %650 = vmatpush.bf16.msra.mxu0 %v358
        %651 = vmatpush.bf16.msra.mxu0 %v357
        %652 = vmatpush.bf16.msra.mxu0 %v356
        %653 = vmatmul.bf16.gmra.mxu0 %v493
        %v654 = vpop.f32.mrf.mxu0
        %v655 = vadd.f32 %v566, %v654
        %v656 = vpop.f32.mrf.mxu0
        %v657 = vadd.f32 %v568, %v656
        %658 = vmatmul.bf16.gmra.mxu0 %v495
        %v659 = vpop.f32.mrf.mxu0
        %v660 = vadd.f32 %v571, %v659
        %v661 = vpop.f32.mrf.mxu0
        %v662 = vadd.f32 %v573, %v661
        %663 = vmatmul.bf16.gmra.mxu0 %v497
        %v664 = vpop.f32.mrf.mxu0
        %v665 = vadd.f32 %v576, %v664
        %v666 = vpop.f32.mrf.mxu0
        %v667 = vadd.f32 %v578, %v666
        %668 = vmatmul.bf16.gmra.mxu0 %v499
        %v669 = vpop.f32.mrf.mxu0
        %v670 = vadd.f32 %v581, %v669
        %v671 = vpop.f32.mrf.mxu0
        %v672 = vadd.f32 %v583, %v671
        %673 = vmatmul.bf16.gmra.mxu0 %v501
        %v674 = vpop.f32.mrf.mxu0
        %v675 = vadd.f32 %v586, %v674
        %v676 = vpop.f32.mrf.mxu0
        %v677 = vadd.f32 %v588, %v676
        %678 = vmatmul.bf16.gmra.mxu0 %v503
        %v679 = vpop.f32.mrf.mxu0
        %v680 = vadd.f32 %v591, %v679
        %v681 = vpop.f32.mrf.mxu0
        %v682 = vadd.f32 %v593, %v681
        %683 = vmatmul.bf16.gmra.mxu0 %v505
        %v684 = vpop.f32.mrf.mxu0
        %v685 = vadd.f32 %v596, %v684
        %v686 = vpop.f32.mrf.mxu0
        %v687 = vadd.f32 %v598, %v686
        %688 = vmatmul.bf16.gmra.mxu0 %v507
        %v689 = vpop.f32.mrf.mxu0
        %v690 = vadd.f32 %v601, %v689
        %v691 = vpop.f32.mrf.mxu0
        %v692 = vadd.f32 %v603, %v691
        %693 = vmatmul.bf16.gmra.mxu0 %v509
        %v694 = vpop.f32.mrf.mxu0
        %v695 = vadd.f32 %v606, %v694
        %v696 = vpop.f32.mrf.mxu0
        %v697 = vadd.f32 %v608, %v696
        %698 = vmatmul.bf16.gmra.mxu0 %v511
        %v699 = vpop.f32.mrf.mxu0
        %v700 = vadd.f32 %v611, %v699
        %v701 = vpop.f32.mrf.mxu0
        %v702 = vadd.f32 %v613, %v701
        %703 = vmatmul.bf16.gmra.mxu0 %v513
        %v704 = vpop.f32.mrf.mxu0
        %v705 = vadd.f32 %v616, %v704
        %v706 = vpop.f32.mrf.mxu0
        %v707 = vadd.f32 %v618, %v706
        %708 = vmatmul.bf16.gmra.mxu0 %v515
        %v709 = vpop.f32.mrf.mxu0
        %v710 = vadd.f32 %v621, %v709
        %v711 = vpop.f32.mrf.mxu0
        %v712 = vadd.f32 %v623, %v711
        %713 = vmatmul.bf16.gmra.mxu0 %v517
        %v714 = vpop.f32.mrf.mxu0
        %v715 = vadd.f32 %v626, %v714
        %v716 = vpop.f32.mrf.mxu0
        %v717 = vadd.f32 %v628, %v716
        %718 = vmatmul.bf16.gmra.mxu0 %v519
        %v719 = vpop.f32.mrf.mxu0
        %v720 = vadd.f32 %v631, %v719
        %v721 = vpop.f32.mrf.mxu0
        %v722 = vadd.f32 %v633, %v721
        %723 = vmatmul.bf16.gmra.mxu0 %v521
        %v724 = vpop.f32.mrf.mxu0
        %v725 = vadd.f32 %v636, %v724
        %v726 = vpop.f32.mrf.mxu0
        %v727 = vadd.f32 %v638, %v726
        %728 = vmatmul.bf16.gmra.mxu0 %v523
        %v729 = vpop.f32.mrf.mxu0
        %v730 = vadd.f32 %v641, %v729
        %v731 = vpop.f32.mrf.mxu0
        %v732 = vadd.f32 %v643, %v731
        %733 = vdwg.mxu0
        %v734 = vpack.c.bf16 %v657, %v655
        %v735 = vpack.c.bf16 %v662, %v660
        %v736 = vpack.c.bf16 %v667, %v665
        %v737 = vpack.c.bf16 %v672, %v670
        %v738 = vpack.c.bf16 %v677, %v675
        %v739 = vpack.c.bf16 %v682, %v680
        %v740 = vpack.c.bf16 %v687, %v685
        %v741 = vpack.c.bf16 %v692, %v690
        %v742 = vpack.c.bf16 %v697, %v695
        %v743 = vpack.c.bf16 %v702, %v700
        %v744 = vpack.c.bf16 %v707, %v705
        %v745 = vpack.c.bf16 %v712, %v710
        %v746 = vpack.c.bf16 %v717, %v715
        %v747 = vpack.c.bf16 %v722, %v720
        %v748 = vpack.c.bf16 %v727, %v725
        %v749 = vpack.c.bf16 %v732, %v730
        %v750 = vld [vmem:[%s2] sm:$0x3]
        %s751 = scalar_lea.vmem [#allocation2], 256
        %v752 = vld [vmem:[%s751] sm:$0xff]
        %v753 = vld [vmem:[%s751 + $0x8] sm:$0xff]
        %v754 = vld [vmem:[%s751 + $0x10] sm:$0xff]
        %v755 = vld [vmem:[%s751 + $0x18] sm:$0xff]
        %v756 = vld [vmem:[%s751 + $0x20] sm:$0xff]
        %v757 = vld [vmem:[%s751 + $0x28] sm:$0xff]
        %v758 = vld [vmem:[%s751 + $0x30] sm:$0xff]
        %v759 = vld [vmem:[%s751 + $0x38] sm:$0xff]
        %v760 = vld [vmem:[%s751 + $0x40] sm:$0xff]
        %v761 = vld [vmem:[%s751 + $0x48] sm:$0xff]
        %v762 = vld [vmem:[%s751 + $0x50] sm:$0xff]
        %v763 = vld [vmem:[%s751 + $0x58] sm:$0xff]
        %v764 = vld [vmem:[%s751 + $0x60] sm:$0xff]
        %v765 = vld [vmem:[%s751 + $0x68] sm:$0xff]
        %v766 = vld [vmem:[%s751 + $0x70] sm:$0xff]
        %v767 = vld [vmem:[%s751 + $0x78] sm:$0xff]
        %v768 = vld [vmem:[%s751 + $0x80] sm:$0xff]
        %v769 = vld [vmem:[%s751 + $0x88] sm:$0xff]
        %v770 = vld [vmem:[%s751 + $0x90] sm:$0xff]
        %v771 = vld [vmem:[%s751 + $0x98] sm:$0xff]
        %v772 = vld [vmem:[%s751 + $0xa0] sm:$0xff]
        %v773 = vld [vmem:[%s751 + $0xa8] sm:$0xff]
        %v774 = vld [vmem:[%s751 + $0xb0] sm:$0xff]
        %v775 = vld [vmem:[%s751 + $0xb8] sm:$0xff]
        %v776 = vld [vmem:[%s751 + $0xc0] sm:$0xff]
        %v777 = vld [vmem:[%s751 + $0xc8] sm:$0xff]
        %v778 = vld [vmem:[%s751 + $0xd0] sm:$0xff]
        %v779 = vld [vmem:[%s751 + $0xd8] sm:$0xff]
        %v780 = vld [vmem:[%s751 + $0xe0] sm:$0xff]
        %v781 = vld [vmem:[%s751 + $0xe8] sm:$0xff]
        %v782 = vld [vmem:[%s751 + $0xf0] sm:$0xff]
        %v783 = vld [vmem:[%s751 + $0xf8] sm:$0xff]
        %v816 = vunpack.c.l.b16 %v752
        %v817 = vunpack.c.h.b16 %v752
        %v818 = vunpack.c.l.b16 %v753
        %v819 = vunpack.c.h.b16 %v753
        %v820 = vunpack.c.l.b16 %v754
        %v821 = vunpack.c.h.b16 %v754
        %v822 = vunpack.c.l.b16 %v755
        %v823 = vunpack.c.h.b16 %v755
        %v824 = vunpack.c.l.b16 %v756
        %v825 = vunpack.c.h.b16 %v756
        %v826 = vunpack.c.l.b16 %v757
        %v827 = vunpack.c.h.b16 %v757
        %v828 = vunpack.c.l.b16 %v758
        %v829 = vunpack.c.h.b16 %v758
        %v830 = vunpack.c.l.b16 %v759
        %v831 = vunpack.c.h.b16 %v759
        %v832 = vunpack.c.l.b16 %v760
        %v833 = vunpack.c.h.b16 %v760
        %v834 = vunpack.c.l.b16 %v761
        %v835 = vunpack.c.h.b16 %v761
        %v836 = vunpack.c.l.b16 %v762
        %v837 = vunpack.c.h.b16 %v762
        %v838 = vunpack.c.l.b16 %v763
        %v839 = vunpack.c.h.b16 %v763
        %v840 = vunpack.c.l.b16 %v764
        %v841 = vunpack.c.h.b16 %v764
        %v842 = vunpack.c.l.b16 %v765
        %v843 = vunpack.c.h.b16 %v765
        %v844 = vunpack.c.l.b16 %v766
        %v845 = vunpack.c.h.b16 %v766
        %v846 = vunpack.c.l.b16 %v767
        %v847 = vunpack.c.h.b16 %v767
        %v848 = vunpack.c.l.b16 %v768
        %v849 = vunpack.c.h.b16 %v768
        %v850 = vunpack.c.l.b16 %v769
        %v851 = vunpack.c.h.b16 %v769
        %v852 = vunpack.c.l.b16 %v770
        %v853 = vunpack.c.h.b16 %v770
        %v854 = vunpack.c.l.b16 %v771
        %v855 = vunpack.c.h.b16 %v771
        %v856 = vunpack.c.l.b16 %v772
        %v857 = vunpack.c.h.b16 %v772
        %v858 = vunpack.c.l.b16 %v773
        %v859 = vunpack.c.h.b16 %v773
        %v860 = vunpack.c.l.b16 %v774
        %v861 = vunpack.c.h.b16 %v774
        %v862 = vunpack.c.l.b16 %v775
        %v863 = vunpack.c.h.b16 %v775
        %v864 = vunpack.c.l.b16 %v776
        %v865 = vunpack.c.h.b16 %v776
        %v866 = vunpack.c.l.b16 %v777
        %v867 = vunpack.c.h.b16 %v777
        %v868 = vunpack.c.l.b16 %v778
        %v869 = vunpack.c.h.b16 %v778
        %v870 = vunpack.c.l.b16 %v779
        %v871 = vunpack.c.h.b16 %v779
        %v872 = vunpack.c.l.b16 %v780
        %v873 = vunpack.c.h.b16 %v780
        %v874 = vunpack.c.l.b16 %v781
        %v875 = vunpack.c.h.b16 %v781
        %v876 = vunpack.c.l.b16 %v782
        %v877 = vunpack.c.h.b16 %v782
        %v878 = vunpack.c.l.b16 %v783
        %v879 = vunpack.c.h.b16 %v783
        %v880 = vpack.c.b16 %v818, %v816
        %v881 = vpack.c.b16 %v819, %v817
        %v882 = vpack.c.b16 %v822, %v820
        %v883 = vpack.c.b16 %v823, %v821
        %v884 = vpack.c.b16 %v826, %v824
        %v885 = vpack.c.b16 %v827, %v825
        %v886 = vpack.c.b16 %v830, %v828
        %v887 = vpack.c.b16 %v831, %v829
        %v888 = vpack.c.b16 %v834, %v832
        %v889 = vpack.c.b16 %v835, %v833
        %v890 = vpack.c.b16 %v838, %v836
        %v891 = vpack.c.b16 %v839, %v837
        %v892 = vpack.c.b16 %v842, %v840
        %v893 = vpack.c.b16 %v843, %v841
        %v894 = vpack.c.b16 %v846, %v844
        %v895 = vpack.c.b16 %v847, %v845
        %v896 = vpack.c.b16 %v850, %v848
        %v897 = vpack.c.b16 %v851, %v849
        %v898 = vpack.c.b16 %v854, %v852
        %v899 = vpack.c.b16 %v855, %v853
        %v900 = vpack.c.b16 %v858, %v856
        %v901 = vpack.c.b16 %v859, %v857
        %v902 = vpack.c.b16 %v862, %v860
        %v903 = vpack.c.b16 %v863, %v861
        %v904 = vpack.c.b16 %v866, %v864
        %v905 = vpack.c.b16 %v867, %v865
        %v906 = vpack.c.b16 %v870, %v868
        %v907 = vpack.c.b16 %v871, %v869
        %v908 = vpack.c.b16 %v874, %v872
        %v909 = vpack.c.b16 %v875, %v873
        %v910 = vpack.c.b16 %v878, %v876
        %v911 = vpack.c.b16 %v879, %v877
        %944 = vmatpush.bf16.msra.mxu0 %v355
        %945 = vmatpush.bf16.msra.mxu0 %v354
        %946 = vmatpush.bf16.msra.mxu0 %v353
        %947 = vmatpush.bf16.msra.mxu0 %v352
        %948 = vmatpush.bf16.msra.mxu0 %v351
        %949 = vmatpush.bf16.msra.mxu0 %v350
        %950 = vmatpush.bf16.msra.mxu0 %v349
        %951 = vmatpush.bf16.msra.mxu0 %v348
        %952 = vmatmul.bf16.gmra.mxu0 %v880
        %v953 = vpop.f32.mrf.mxu0
        %v954 = vadd.f32 0.0, %v953
        %v955 = vpop.f32.mrf.mxu0
        %v956 = vadd.f32 0.0, %v955
        %957 = vmatmul.bf16.gmra.mxu0 %v882
        %v958 = vpop.f32.mrf.mxu0
        %v959 = vadd.f32 0.0, %v958
        %v960 = vpop.f32.mrf.mxu0
        %v961 = vadd.f32 0.0, %v960
        %962 = vmatmul.bf16.gmra.mxu0 %v884
        %v963 = vpop.f32.mrf.mxu0
        %v964 = vadd.f32 0.0, %v963
        %v965 = vpop.f32.mrf.mxu0
        %v966 = vadd.f32 0.0, %v965
        %967 = vmatmul.bf16.gmra.mxu0 %v886
        %v968 = vpop.f32.mrf.mxu0
        %v969 = vadd.f32 0.0, %v968
        %v970 = vpop.f32.mrf.mxu0
        %v971 = vadd.f32 0.0, %v970
        %972 = vmatmul.bf16.gmra.mxu0 %v888
        %v973 = vpop.f32.mrf.mxu0
        %v974 = vadd.f32 0.0, %v973
        %v975 = vpop.f32.mrf.mxu0
        %v976 = vadd.f32 0.0, %v975
        %977 = vmatmul.bf16.gmra.mxu0 %v890
        %v978 = vpop.f32.mrf.mxu0
        %v979 = vadd.f32 0.0, %v978
        %v980 = vpop.f32.mrf.mxu0
        %v981 = vadd.f32 0.0, %v980
        %982 = vmatmul.bf16.gmra.mxu0 %v892
        %v983 = vpop.f32.mrf.mxu0
        %v984 = vadd.f32 0.0, %v983
        %v985 = vpop.f32.mrf.mxu0
        %v986 = vadd.f32 0.0, %v985
        %987 = vmatmul.bf16.gmra.mxu0 %v894
        %v988 = vpop.f32.mrf.mxu0
        %v989 = vadd.f32 0.0, %v988
        %v990 = vpop.f32.mrf.mxu0
        %v991 = vadd.f32 0.0, %v990
        %992 = vmatmul.bf16.gmra.mxu0 %v896
        %v993 = vpop.f32.mrf.mxu0
        %v994 = vadd.f32 0.0, %v993
        %v995 = vpop.f32.mrf.mxu0
        %v996 = vadd.f32 0.0, %v995
        %997 = vmatmul.bf16.gmra.mxu0 %v898
        %v998 = vpop.f32.mrf.mxu0
        %v999 = vadd.f32 0.0, %v998
        %v1000 = vpop.f32.mrf.mxu0
        %v1001 = vadd.f32 0.0, %v1000
        %1002 = vmatmul.bf16.gmra.mxu0 %v900
        %v1003 = vpop.f32.mrf.mxu0
        %v1004 = vadd.f32 0.0, %v1003
        %v1005 = vpop.f32.mrf.mxu0
        %v1006 = vadd.f32 0.0, %v1005
        %1007 = vmatmul.bf16.gmra.mxu0 %v902
        %v1008 = vpop.f32.mrf.mxu0
        %v1009 = vadd.f32 0.0, %v1008
        %v1010 = vpop.f32.mrf.mxu0
        %v1011 = vadd.f32 0.0, %v1010
        %1012 = vmatmul.bf16.gmra.mxu0 %v904
        %v1013 = vpop.f32.mrf.mxu0
        %v1014 = vadd.f32 0.0, %v1013
        %v1015 = vpop.f32.mrf.mxu0
        %v1016 = vadd.f32 0.0, %v1015
        %1017 = vmatmul.bf16.gmra.mxu0 %v906
        %v1018 = vpop.f32.mrf.mxu0
        %v1019 = vadd.f32 0.0, %v1018
        %v1020 = vpop.f32.mrf.mxu0
        %v1021 = vadd.f32 0.0, %v1020
        %1022 = vmatmul.bf16.gmra.mxu0 %v908
        %v1023 = vpop.f32.mrf.mxu0
        %v1024 = vadd.f32 0.0, %v1023
        %v1025 = vpop.f32.mrf.mxu0
        %v1026 = vadd.f32 0.0, %v1025
        %1027 = vmatmul.bf16.gmra.mxu0 %v910
        %v1028 = vpop.f32.mrf.mxu0
        %v1029 = vadd.f32 0.0, %v1028
        %v1030 = vpop.f32.mrf.mxu0
        %v1031 = vadd.f32 0.0, %v1030
        %1032 = vdwg.mxu0
        %1033 = vmatpush.bf16.msra.mxu0 %v363
        %1034 = vmatpush.bf16.msra.mxu0 %v362
        %1035 = vmatpush.bf16.msra.mxu0 %v361
        %1036 = vmatpush.bf16.msra.mxu0 %v360
        %1037 = vmatpush.bf16.msra.mxu0 %v359
        %1038 = vmatpush.bf16.msra.mxu0 %v358
        %1039 = vmatpush.bf16.msra.mxu0 %v357
        %1040 = vmatpush.bf16.msra.mxu0 %v356
        %1041 = vmatmul.bf16.gmra.mxu0 %v881
        %v1042 = vpop.f32.mrf.mxu0
        %v1043 = vadd.f32 %v954, %v1042
        %v1044 = vpop.f32.mrf.mxu0
        %v1045 = vadd.f32 %v956, %v1044
        %1046 = vmatmul.bf16.gmra.mxu0 %v883
        %v1047 = vpop.f32.mrf.mxu0
        %v1048 = vadd.f32 %v959, %v1047
        %v1049 = vpop.f32.mrf.mxu0
        %v1050 = vadd.f32 %v961, %v1049
        %1051 = vmatmul.bf16.gmra.mxu0 %v885
        %v1052 = vpop.f32.mrf.mxu0
        %v1053 = vadd.f32 %v964, %v1052
        %v1054 = vpop.f32.mrf.mxu0
        %v1055 = vadd.f32 %v966, %v1054
        %1056 = vmatmul.bf16.gmra.mxu0 %v887
        %v1057 = vpop.f32.mrf.mxu0
        %v1058 = vadd.f32 %v969, %v1057
        %v1059 = vpop.f32.mrf.mxu0
        %v1060 = vadd.f32 %v971, %v1059
        %1061 = vmatmul.bf16.gmra.mxu0 %v889
        %v1062 = vpop.f32.mrf.mxu0
        %v1063 = vadd.f32 %v974, %v1062
        %v1064 = vpop.f32.mrf.mxu0
        %v1065 = vadd.f32 %v976, %v1064
        %1066 = vmatmul.bf16.gmra.mxu0 %v891
        %v1067 = vpop.f32.mrf.mxu0
        %v1068 = vadd.f32 %v979, %v1067
        %v1069 = vpop.f32.mrf.mxu0
        %v1070 = vadd.f32 %v981, %v1069
        %1071 = vmatmul.bf16.gmra.mxu0 %v893
        %v1072 = vpop.f32.mrf.mxu0
        %v1073 = vadd.f32 %v984, %v1072
        %v1074 = vpop.f32.mrf.mxu0
        %v1075 = vadd.f32 %v986, %v1074
        %1076 = vmatmul.bf16.gmra.mxu0 %v895
        %v1077 = vpop.f32.mrf.mxu0
        %v1078 = vadd.f32 %v989, %v1077
        %v1079 = vpop.f32.mrf.mxu0
        %v1080 = vadd.f32 %v991, %v1079
        %1081 = vmatmul.bf16.gmra.mxu0 %v897
        %v1082 = vpop.f32.mrf.mxu0
        %v1083 = vadd.f32 %v994, %v1082
        %v1084 = vpop.f32.mrf.mxu0
        %v1085 = vadd.f32 %v996, %v1084
        %1086 = vmatmul.bf16.gmra.mxu0 %v899
        %v1087 = vpop.f32.mrf.mxu0
        %v1088 = vadd.f32 %v999, %v1087
        %v1089 = vpop.f32.mrf.mxu0
        %v1090 = vadd.f32 %v1001, %v1089
        %1091 = vmatmul.bf16.gmra.mxu0 %v901
        %v1092 = vpop.f32.mrf.mxu0
        %v1093 = vadd.f32 %v1004, %v1092
        %v1094 = vpop.f32.mrf.mxu0
        %v1095 = vadd.f32 %v1006, %v1094
        %1096 = vmatmul.bf16.gmra.mxu0 %v903
        %v1097 = vpop.f32.mrf.mxu0
        %v1098 = vadd.f32 %v1009, %v1097
        %v1099 = vpop.f32.mrf.mxu0
        %v1100 = vadd.f32 %v1011, %v1099
        %1101 = vmatmul.bf16.gmra.mxu0 %v905
        %v1102 = vpop.f32.mrf.mxu0
        %v1103 = vadd.f32 %v1014, %v1102
        %v1104 = vpop.f32.mrf.mxu0
        %v1105 = vadd.f32 %v1016, %v1104
        %1106 = vmatmul.bf16.gmra.mxu0 %v907
        %v1107 = vpop.f32.mrf.mxu0
        %v1108 = vadd.f32 %v1019, %v1107
        %v1109 = vpop.f32.mrf.mxu0
        %v1110 = vadd.f32 %v1021, %v1109
        %1111 = vmatmul.bf16.gmra.mxu0 %v909
        %v1112 = vpop.f32.mrf.mxu0
        %v1113 = vadd.f32 %v1024, %v1112
        %v1114 = vpop.f32.mrf.mxu0
        %v1115 = vadd.f32 %v1026, %v1114
        %1116 = vmatmul.bf16.gmra.mxu0 %v911
        %v1117 = vpop.f32.mrf.mxu0
        %v1118 = vadd.f32 %v1029, %v1117
        %v1119 = vpop.f32.mrf.mxu0
        %v1120 = vadd.f32 %v1031, %v1119
        %1121 = vdwg.mxu0
        %v1122 = vpack.c.bf16 %v1045, %v1043
        %v1123 = vpack.c.bf16 %v1050, %v1048
        %v1124 = vpack.c.bf16 %v1055, %v1053
        %v1125 = vpack.c.bf16 %v1060, %v1058
        %v1126 = vpack.c.bf16 %v1065, %v1063
        %v1127 = vpack.c.bf16 %v1070, %v1068
        %v1128 = vpack.c.bf16 %v1075, %v1073
        %v1129 = vpack.c.bf16 %v1080, %v1078
        %v1130 = vpack.c.bf16 %v1085, %v1083
        %v1131 = vpack.c.bf16 %v1090, %v1088
        %v1132 = vpack.c.bf16 %v1095, %v1093
        %v1133 = vpack.c.bf16 %v1100, %v1098
        %v1134 = vpack.c.bf16 %v1105, %v1103
        %v1135 = vpack.c.bf16 %v1110, %v1108
        %v1136 = vpack.c.bf16 %v1115, %v1113
        %v1137 = vpack.c.bf16 %v1120, %v1118
        %s1138 = scalar_lea.vmem %s2, 2
        %v1139 = vld [vmem:[%s1138] sm:$0x3]
        %vm1140 = vcmask 31744
        %v1142 = vsel %vm1140, %v1122, 0
        %v1145 = vsel %vm1140, %v1123, 0
        %v1148 = vsel %vm1140, %v1124, 0
        %v1151 = vsel %vm1140, %v1125, 0
        %v1154 = vsel %vm1140, %v1126, 0
        %v1157 = vsel %vm1140, %v1127, 0
        %v1160 = vsel %vm1140, %v1128, 0
        %v1163 = vsel %vm1140, %v1129, 0
        %v1166 = vsel %vm1140, %v1130, 0
        %v1169 = vsel %vm1140, %v1131, 0
        %v1172 = vsel %vm1140, %v1132, 0
        %v1175 = vsel %vm1140, %v1133, 0
        %v1178 = vsel %vm1140, %v1134, 0
        %v1181 = vsel %vm1140, %v1135, 0
        %v1184 = vsel %vm1140, %v1136, 0
        %v1187 = vsel %vm1140, %v1137, 0
        %vm1189 = vcmask 1041408
        %v1191 = vsel %vm1189, %v1139, 0
        %1193 = vmatpush.bf16.msra.mxu0 0
        %1194 = vmatpush.bf16.msra.mxu0 0
        %1195 = vmatpush.bf16.msra.mxu0 0
        %1196 = vmatpush.bf16.msra.mxu0 0
        %1197 = vmatpush.bf16.msra.mxu0 0
        %1198 = vmatpush.bf16.msra.mxu0 0
        %1199 = vmatpush.bf16.msra.mxu0 0
        %1200 = vmatpush.bf16.msra.mxu0 %v1191
        %1201 = vmatmul.bf16.gmra.mxu0 %v1142
        %v1202 = vpop.f32.mrf.mxu0
        %v1203 = vadd.f32 0.0, %v1202
        %v1204 = vpop.f32.mrf.mxu0
        %v1205 = vadd.f32 0.0, %v1204
        %1206 = vmatmul.bf16.gmra.mxu0 %v1145
        %v1207 = vpop.f32.mrf.mxu0
        %v1208 = vadd.f32 0.0, %v1207
        %v1209 = vpop.f32.mrf.mxu0
        %v1210 = vadd.f32 0.0, %v1209
        %1211 = vmatmul.bf16.gmra.mxu0 %v1148
        %v1212 = vpop.f32.mrf.mxu0
        %v1213 = vadd.f32 0.0, %v1212
        %v1214 = vpop.f32.mrf.mxu0
        %v1215 = vadd.f32 0.0, %v1214
        %1216 = vmatmul.bf16.gmra.mxu0 %v1151
        %v1217 = vpop.f32.mrf.mxu0
        %v1218 = vadd.f32 0.0, %v1217
        %v1219 = vpop.f32.mrf.mxu0
        %v1220 = vadd.f32 0.0, %v1219
        %1221 = vmatmul.bf16.gmra.mxu0 %v1154
        %v1222 = vpop.f32.mrf.mxu0
        %v1223 = vadd.f32 0.0, %v1222
        %v1224 = vpop.f32.mrf.mxu0
        %v1225 = vadd.f32 0.0, %v1224
        %1226 = vmatmul.bf16.gmra.mxu0 %v1157
        %v1227 = vpop.f32.mrf.mxu0
        %v1228 = vadd.f32 0.0, %v1227
        %v1229 = vpop.f32.mrf.mxu0
        %v1230 = vadd.f32 0.0, %v1229
        %1231 = vmatmul.bf16.gmra.mxu0 %v1160
        %v1232 = vpop.f32.mrf.mxu0
        %v1233 = vadd.f32 0.0, %v1232
        %v1234 = vpop.f32.mrf.mxu0
        %v1235 = vadd.f32 0.0, %v1234
        %1236 = vmatmul.bf16.gmra.mxu0 %v1163
        %v1237 = vpop.f32.mrf.mxu0
        %v1238 = vadd.f32 0.0, %v1237
        %v1239 = vpop.f32.mrf.mxu0
        %v1240 = vadd.f32 0.0, %v1239
        %1241 = vmatmul.bf16.gmra.mxu0 %v1166
        %v1242 = vpop.f32.mrf.mxu0
        %v1243 = vadd.f32 0.0, %v1242
        %v1244 = vpop.f32.mrf.mxu0
        %v1245 = vadd.f32 0.0, %v1244
        %1246 = vmatmul.bf16.gmra.mxu0 %v1169
        %v1247 = vpop.f32.mrf.mxu0
        %v1248 = vadd.f32 0.0, %v1247
        %v1249 = vpop.f32.mrf.mxu0
        %v1250 = vadd.f32 0.0, %v1249
        %1251 = vmatmul.bf16.gmra.mxu0 %v1172
        %v1252 = vpop.f32.mrf.mxu0
        %v1253 = vadd.f32 0.0, %v1252
        %v1254 = vpop.f32.mrf.mxu0
        %v1255 = vadd.f32 0.0, %v1254
        %1256 = vmatmul.bf16.gmra.mxu0 %v1175
        %v1257 = vpop.f32.mrf.mxu0
        %v1258 = vadd.f32 0.0, %v1257
        %v1259 = vpop.f32.mrf.mxu0
        %v1260 = vadd.f32 0.0, %v1259
        %1261 = vmatmul.bf16.gmra.mxu0 %v1178
        %v1262 = vpop.f32.mrf.mxu0
        %v1263 = vadd.f32 0.0, %v1262
        %v1264 = vpop.f32.mrf.mxu0
        %v1265 = vadd.f32 0.0, %v1264
        %1266 = vmatmul.bf16.gmra.mxu0 %v1181
        %v1267 = vpop.f32.mrf.mxu0
        %v1268 = vadd.f32 0.0, %v1267
        %v1269 = vpop.f32.mrf.mxu0
        %v1270 = vadd.f32 0.0, %v1269
        %1271 = vmatmul.bf16.gmra.mxu0 %v1184
        %v1272 = vpop.f32.mrf.mxu0
        %v1273 = vadd.f32 0.0, %v1272
        %v1274 = vpop.f32.mrf.mxu0
        %v1275 = vadd.f32 0.0, %v1274
        %1276 = vmatmul.bf16.gmra.mxu0 %v1187
        %v1277 = vpop.f32.mrf.mxu0
        %v1278 = vadd.f32 0.0, %v1277
        %v1279 = vpop.f32.mrf.mxu0
        %v1280 = vadd.f32 0.0, %v1279
        %1281 = vdwg.mxu0
        %v1283 = vsel %vm1140, %v734, 0
        %v1286 = vsel %vm1140, %v735, 0
        %v1289 = vsel %vm1140, %v736, 0
        %v1292 = vsel %vm1140, %v737, 0
        %v1295 = vsel %vm1140, %v738, 0
        %v1298 = vsel %vm1140, %v739, 0
        %v1301 = vsel %vm1140, %v740, 0
        %v1304 = vsel %vm1140, %v741, 0
        %v1307 = vsel %vm1140, %v742, 0
        %v1310 = vsel %vm1140, %v743, 0
        %v1313 = vsel %vm1140, %v744, 0
        %v1316 = vsel %vm1140, %v745, 0
        %v1319 = vsel %vm1140, %v746, 0
        %v1322 = vsel %vm1140, %v747, 0
        %v1325 = vsel %vm1140, %v748, 0
        %v1328 = vsel %vm1140, %v749, 0
        %v1331 = vsel %vm1189, %v750, 0
        %1333 = vmatpush.bf16.msra.mxu0 0
        %1334 = vmatpush.bf16.msra.mxu0 0
        %1335 = vmatpush.bf16.msra.mxu0 0
        %1336 = vmatpush.bf16.msra.mxu0 0
        %1337 = vmatpush.bf16.msra.mxu0 0
        %1338 = vmatpush.bf16.msra.mxu0 0
        %1339 = vmatpush.bf16.msra.mxu0 0
        %1340 = vmatpush.bf16.msra.mxu0 %v1331
        %1341 = vmatmul.bf16.gmra.mxu0 %v1283
        %v1342 = vpop.f32.mrf.mxu0
        %v1343 = vadd.f32 %v1203, %v1342
        %v1344 = vpop.f32.mrf.mxu0
        %v1345 = vadd.f32 %v1205, %v1344
        %1346 = vmatmul.bf16.gmra.mxu0 %v1286
        %v1347 = vpop.f32.mrf.mxu0
        %v1348 = vadd.f32 %v1208, %v1347
        %v1349 = vpop.f32.mrf.mxu0
        %v1350 = vadd.f32 %v1210, %v1349
        %1351 = vmatmul.bf16.gmra.mxu0 %v1289
        %v1352 = vpop.f32.mrf.mxu0
        %v1353 = vadd.f32 %v1213, %v1352
        %v1354 = vpop.f32.mrf.mxu0
        %v1355 = vadd.f32 %v1215, %v1354
        %1356 = vmatmul.bf16.gmra.mxu0 %v1292
        %v1357 = vpop.f32.mrf.mxu0
        %v1358 = vadd.f32 %v1218, %v1357
        %v1359 = vpop.f32.mrf.mxu0
        %v1360 = vadd.f32 %v1220, %v1359
        %1361 = vmatmul.bf16.gmra.mxu0 %v1295
        %v1362 = vpop.f32.mrf.mxu0
        %v1363 = vadd.f32 %v1223, %v1362
        %v1364 = vpop.f32.mrf.mxu0
        %v1365 = vadd.f32 %v1225, %v1364
        %1366 = vmatmul.bf16.gmra.mxu0 %v1298
        %v1367 = vpop.f32.mrf.mxu0
        %v1368 = vadd.f32 %v1228, %v1367
        %v1369 = vpop.f32.mrf.mxu0
        %v1370 = vadd.f32 %v1230, %v1369
        %1371 = vmatmul.bf16.gmra.mxu0 %v1301
        %v1372 = vpop.f32.mrf.mxu0
        %v1373 = vadd.f32 %v1233, %v1372
        %v1374 = vpop.f32.mrf.mxu0
        %v1375 = vadd.f32 %v1235, %v1374
        %1376 = vmatmul.bf16.gmra.mxu0 %v1304
        %v1377 = vpop.f32.mrf.mxu0
        %v1378 = vadd.f32 %v1238, %v1377
        %v1379 = vpop.f32.mrf.mxu0
        %v1380 = vadd.f32 %v1240, %v1379
        %1381 = vmatmul.bf16.gmra.mxu0 %v1307
        %v1382 = vpop.f32.mrf.mxu0
        %v1383 = vadd.f32 %v1243, %v1382
        %v1384 = vpop.f32.mrf.mxu0
        %v1385 = vadd.f32 %v1245, %v1384
        %1386 = vmatmul.bf16.gmra.mxu0 %v1310
        %v1387 = vpop.f32.mrf.mxu0
        %v1388 = vadd.f32 %v1248, %v1387
        %v1389 = vpop.f32.mrf.mxu0
        %v1390 = vadd.f32 %v1250, %v1389
        %1391 = vmatmul.bf16.gmra.mxu0 %v1313
        %v1392 = vpop.f32.mrf.mxu0
        %v1393 = vadd.f32 %v1253, %v1392
        %v1394 = vpop.f32.mrf.mxu0
        %v1395 = vadd.f32 %v1255, %v1394
        %1396 = vmatmul.bf16.gmra.mxu0 %v1316
        %v1397 = vpop.f32.mrf.mxu0
        %v1398 = vadd.f32 %v1258, %v1397
        %v1399 = vpop.f32.mrf.mxu0
        %v1400 = vadd.f32 %v1260, %v1399
        %1401 = vmatmul.bf16.gmra.mxu0 %v1319
        %v1402 = vpop.f32.mrf.mxu0
        %v1403 = vadd.f32 %v1263, %v1402
        %v1404 = vpop.f32.mrf.mxu0
        %v1405 = vadd.f32 %v1265, %v1404
        %1406 = vmatmul.bf16.gmra.mxu0 %v1322
        %v1407 = vpop.f32.mrf.mxu0
        %v1408 = vadd.f32 %v1268, %v1407
        %v1409 = vpop.f32.mrf.mxu0
        %v1410 = vadd.f32 %v1270, %v1409
        %1411 = vmatmul.bf16.gmra.mxu0 %v1325
        %v1412 = vpop.f32.mrf.mxu0
        %v1413 = vadd.f32 %v1273, %v1412
        %v1414 = vpop.f32.mrf.mxu0
        %v1415 = vadd.f32 %v1275, %v1414
        %1416 = vmatmul.bf16.gmra.mxu0 %v1328
        %v1417 = vpop.f32.mrf.mxu0
        %v1418 = vadd.f32 %v1278, %v1417
        %v1419 = vpop.f32.mrf.mxu0
        %v1420 = vadd.f32 %v1280, %v1419
        %1421 = vdwg.mxu0
        %s1422 = scalar_lea.vmem [#allocation2], 512
        %v1423 = vld [vmem:[%s1422] sm:$0xff]
        %v1424 = vld [vmem:[%s1422 + $0x8] sm:$0xff]
        %v1425 = vld [vmem:[%s1422 + $0x10] sm:$0xff]
        %v1426 = vld [vmem:[%s1422 + $0x18] sm:$0xff]
        %v1427 = vld [vmem:[%s1422 + $0x20] sm:$0xff]
        %v1428 = vld [vmem:[%s1422 + $0x28] sm:$0xff]
        %v1429 = vld [vmem:[%s1422 + $0x30] sm:$0xff]
        %v1430 = vld [vmem:[%s1422 + $0x38] sm:$0xff]
        %v1431 = vld [vmem:[%s1422 + $0x40] sm:$0xff]
        %v1432 = vld [vmem:[%s1422 + $0x48] sm:$0xff]
        %v1433 = vld [vmem:[%s1422 + $0x50] sm:$0xff]
        %v1434 = vld [vmem:[%s1422 + $0x58] sm:$0xff]
        %v1435 = vld [vmem:[%s1422 + $0x60] sm:$0xff]
        %v1436 = vld [vmem:[%s1422 + $0x68] sm:$0xff]
        %v1437 = vld [vmem:[%s1422 + $0x70] sm:$0xff]
        %v1438 = vld [vmem:[%s1422 + $0x78] sm:$0xff]
        %v1439 = vld [vmem:[%s1422 + $0x80] sm:$0xff]
        %v1440 = vld [vmem:[%s1422 + $0x88] sm:$0xff]
        %v1441 = vld [vmem:[%s1422 + $0x90] sm:$0xff]
        %v1442 = vld [vmem:[%s1422 + $0x98] sm:$0xff]
        %v1443 = vld [vmem:[%s1422 + $0xa0] sm:$0xff]
        %v1444 = vld [vmem:[%s1422 + $0xa8] sm:$0xff]
        %v1445 = vld [vmem:[%s1422 + $0xb0] sm:$0xff]
        %v1446 = vld [vmem:[%s1422 + $0xb8] sm:$0xff]
        %v1447 = vld [vmem:[%s1422 + $0xc0] sm:$0xff]
        %v1448 = vld [vmem:[%s1422 + $0xc8] sm:$0xff]
        %v1449 = vld [vmem:[%s1422 + $0xd0] sm:$0xff]
        %v1450 = vld [vmem:[%s1422 + $0xd8] sm:$0xff]
        %v1451 = vld [vmem:[%s1422 + $0xe0] sm:$0xff]
        %v1452 = vld [vmem:[%s1422 + $0xe8] sm:$0xff]
        %v1453 = vld [vmem:[%s1422 + $0xf0] sm:$0xff]
        %v1454 = vld [vmem:[%s1422 + $0xf8] sm:$0xff]
        %v1487 = vunpack.c.l.b16 %v1423
        %v1488 = vunpack.c.h.b16 %v1423
        %v1489 = vunpack.c.l.b16 %v1424
        %v1490 = vunpack.c.h.b16 %v1424
        %v1491 = vunpack.c.l.b16 %v1425
        %v1492 = vunpack.c.h.b16 %v1425
        %v1493 = vunpack.c.l.b16 %v1426
        %v1494 = vunpack.c.h.b16 %v1426
        %v1495 = vunpack.c.l.b16 %v1427
        %v1496 = vunpack.c.h.b16 %v1427
        %v1497 = vunpack.c.l.b16 %v1428
        %v1498 = vunpack.c.h.b16 %v1428
        %v1499 = vunpack.c.l.b16 %v1429
        %v1500 = vunpack.c.h.b16 %v1429
        %v1501 = vunpack.c.l.b16 %v1430
        %v1502 = vunpack.c.h.b16 %v1430
        %v1503 = vunpack.c.l.b16 %v1431
        %v1504 = vunpack.c.h.b16 %v1431
        %v1505 = vunpack.c.l.b16 %v1432
        %v1506 = vunpack.c.h.b16 %v1432
        %v1507 = vunpack.c.l.b16 %v1433
        %v1508 = vunpack.c.h.b16 %v1433
        %v1509 = vunpack.c.l.b16 %v1434
        %v1510 = vunpack.c.h.b16 %v1434
        %v1511 = vunpack.c.l.b16 %v1435
        %v1512 = vunpack.c.h.b16 %v1435
        %v1513 = vunpack.c.l.b16 %v1436
        %v1514 = vunpack.c.h.b16 %v1436
        %v1515 = vunpack.c.l.b16 %v1437
        %v1516 = vunpack.c.h.b16 %v1437
        %v1517 = vunpack.c.l.b16 %v1438
        %v1518 = vunpack.c.h.b16 %v1438
        %v1519 = vunpack.c.l.b16 %v1439
        %v1520 = vunpack.c.h.b16 %v1439
        %v1521 = vunpack.c.l.b16 %v1440
        %v1522 = vunpack.c.h.b16 %v1440
        %v1523 = vunpack.c.l.b16 %v1441
        %v1524 = vunpack.c.h.b16 %v1441
        %v1525 = vunpack.c.l.b16 %v1442
        %v1526 = vunpack.c.h.b16 %v1442
        %v1527 = vunpack.c.l.b16 %v1443
        %v1528 = vunpack.c.h.b16 %v1443
        %v1529 = vunpack.c.l.b16 %v1444
        %v1530 = vunpack.c.h.b16 %v1444
        %v1531 = vunpack.c.l.b16 %v1445
        %v1532 = vunpack.c.h.b16 %v1445
        %v1533 = vunpack.c.l.b16 %v1446
        %v1534 = vunpack.c.h.b16 %v1446
        %v1535 = vunpack.c.l.b16 %v1447
        %v1536 = vunpack.c.h.b16 %v1447
        %v1537 = vunpack.c.l.b16 %v1448
        %v1538 = vunpack.c.h.b16 %v1448
        %v1539 = vunpack.c.l.b16 %v1449
        %v1540 = vunpack.c.h.b16 %v1449
        %v1541 = vunpack.c.l.b16 %v1450
        %v1542 = vunpack.c.h.b16 %v1450
        %v1543 = vunpack.c.l.b16 %v1451
        %v1544 = vunpack.c.h.b16 %v1451
        %v1545 = vunpack.c.l.b16 %v1452
        %v1546 = vunpack.c.h.b16 %v1452
        %v1547 = vunpack.c.l.b16 %v1453
        %v1548 = vunpack.c.h.b16 %v1453
        %v1549 = vunpack.c.l.b16 %v1454
        %v1550 = vunpack.c.h.b16 %v1454
        %v1551 = vpack.c.b16 %v1489, %v1487
        %v1552 = vpack.c.b16 %v1490, %v1488
        %v1553 = vpack.c.b16 %v1493, %v1491
        %v1554 = vpack.c.b16 %v1494, %v1492
        %v1555 = vpack.c.b16 %v1497, %v1495
        %v1556 = vpack.c.b16 %v1498, %v1496
        %v1557 = vpack.c.b16 %v1501, %v1499
        %v1558 = vpack.c.b16 %v1502, %v1500
        %v1559 = vpack.c.b16 %v1505, %v1503
        %v1560 = vpack.c.b16 %v1506, %v1504
        %v1561 = vpack.c.b16 %v1509, %v1507
        %v1562 = vpack.c.b16 %v1510, %v1508
        %v1563 = vpack.c.b16 %v1513, %v1511
        %v1564 = vpack.c.b16 %v1514, %v1512
        %v1565 = vpack.c.b16 %v1517, %v1515
        %v1566 = vpack.c.b16 %v1518, %v1516
        %v1567 = vpack.c.b16 %v1521, %v1519
        %v1568 = vpack.c.b16 %v1522, %v1520
        %v1569 = vpack.c.b16 %v1525, %v1523
        %v1570 = vpack.c.b16 %v1526, %v1524
        %v1571 = vpack.c.b16 %v1529, %v1527
        %v1572 = vpack.c.b16 %v1530, %v1528
        %v1573 = vpack.c.b16 %v1533, %v1531
        %v1574 = vpack.c.b16 %v1534, %v1532
        %v1575 = vpack.c.b16 %v1537, %v1535
        %v1576 = vpack.c.b16 %v1538, %v1536
        %v1577 = vpack.c.b16 %v1541, %v1539
        %v1578 = vpack.c.b16 %v1542, %v1540
        %v1579 = vpack.c.b16 %v1545, %v1543
        %v1580 = vpack.c.b16 %v1546, %v1544
        %v1581 = vpack.c.b16 %v1549, %v1547
        %v1582 = vpack.c.b16 %v1550, %v1548
        %1615 = vmatpush.bf16.msra.mxu0 %v355
        %1616 = vmatpush.bf16.msra.mxu0 %v354
        %1617 = vmatpush.bf16.msra.mxu0 %v353
        %1618 = vmatpush.bf16.msra.mxu0 %v352
        %1619 = vmatpush.bf16.msra.mxu0 %v351
        %1620 = vmatpush.bf16.msra.mxu0 %v350
        %1621 = vmatpush.bf16.msra.mxu0 %v349
        %1622 = vmatpush.bf16.msra.mxu0 %v348
        %1623 = vmatmul.bf16.gmra.mxu0 %v1551
        %v1624 = vpop.f32.mrf.mxu0
        %v1625 = vadd.f32 0.0, %v1624
        %v1626 = vpop.f32.mrf.mxu0
        %v1627 = vadd.f32 0.0, %v1626
        %1628 = vmatmul.bf16.gmra.mxu0 %v1553
        %v1629 = vpop.f32.mrf.mxu0
        %v1630 = vadd.f32 0.0, %v1629
        %v1631 = vpop.f32.mrf.mxu0
        %v1632 = vadd.f32 0.0, %v1631
        %1633 = vmatmul.bf16.gmra.mxu0 %v1555
        %v1634 = vpop.f32.mrf.mxu0
        %v1635 = vadd.f32 0.0, %v1634
        %v1636 = vpop.f32.mrf.mxu0
        %v1637 = vadd.f32 0.0, %v1636
        %1638 = vmatmul.bf16.gmra.mxu0 %v1557
        %v1639 = vpop.f32.mrf.mxu0
        %v1640 = vadd.f32 0.0, %v1639
        %v1641 = vpop.f32.mrf.mxu0
        %v1642 = vadd.f32 0.0, %v1641
        %1643 = vmatmul.bf16.gmra.mxu0 %v1559
        %v1644 = vpop.f32.mrf.mxu0
        %v1645 = vadd.f32 0.0, %v1644
        %v1646 = vpop.f32.mrf.mxu0
        %v1647 = vadd.f32 0.0, %v1646
        %1648 = vmatmul.bf16.gmra.mxu0 %v1561
        %v1649 = vpop.f32.mrf.mxu0
        %v1650 = vadd.f32 0.0, %v1649
        %v1651 = vpop.f32.mrf.mxu0
        %v1652 = vadd.f32 0.0, %v1651
        %1653 = vmatmul.bf16.gmra.mxu0 %v1563
        %v1654 = vpop.f32.mrf.mxu0
        %v1655 = vadd.f32 0.0, %v1654
        %v1656 = vpop.f32.mrf.mxu0
        %v1657 = vadd.f32 0.0, %v1656
        %1658 = vmatmul.bf16.gmra.mxu0 %v1565
        %v1659 = vpop.f32.mrf.mxu0
        %v1660 = vadd.f32 0.0, %v1659
        %v1661 = vpop.f32.mrf.mxu0
        %v1662 = vadd.f32 0.0, %v1661
        %1663 = vmatmul.bf16.gmra.mxu0 %v1567
        %v1664 = vpop.f32.mrf.mxu0
        %v1665 = vadd.f32 0.0, %v1664
        %v1666 = vpop.f32.mrf.mxu0
        %v1667 = vadd.f32 0.0, %v1666
        %1668 = vmatmul.bf16.gmra.mxu0 %v1569
        %v1669 = vpop.f32.mrf.mxu0
        %v1670 = vadd.f32 0.0, %v1669
        %v1671 = vpop.f32.mrf.mxu0
        %v1672 = vadd.f32 0.0, %v1671
        %1673 = vmatmul.bf16.gmra.mxu0 %v1571
        %v1674 = vpop.f32.mrf.mxu0
        %v1675 = vadd.f32 0.0, %v1674
        %v1676 = vpop.f32.mrf.mxu0
        %v1677 = vadd.f32 0.0, %v1676
        %1678 = vmatmul.bf16.gmra.mxu0 %v1573
        %v1679 = vpop.f32.mrf.mxu0
        %v1680 = vadd.f32 0.0, %v1679
        %v1681 = vpop.f32.mrf.mxu0
        %v1682 = vadd.f32 0.0, %v1681
        %1683 = vmatmul.bf16.gmra.mxu0 %v1575
        %v1684 = vpop.f32.mrf.mxu0
        %v1685 = vadd.f32 0.0, %v1684
        %v1686 = vpop.f32.mrf.mxu0
        %v1687 = vadd.f32 0.0, %v1686
        %1688 = vmatmul.bf16.gmra.mxu0 %v1577
        %v1689 = vpop.f32.mrf.mxu0
        %v1690 = vadd.f32 0.0, %v1689
        %v1691 = vpop.f32.mrf.mxu0
        %v1692 = vadd.f32 0.0, %v1691
        %1693 = vmatmul.bf16.gmra.mxu0 %v1579
        %v1694 = vpop.f32.mrf.mxu0
        %v1695 = vadd.f32 0.0, %v1694
        %v1696 = vpop.f32.mrf.mxu0
        %v1697 = vadd.f32 0.0, %v1696
        %1698 = vmatmul.bf16.gmra.mxu0 %v1581
        %v1699 = vpop.f32.mrf.mxu0
        %v1700 = vadd.f32 0.0, %v1699
        %v1701 = vpop.f32.mrf.mxu0
        %v1702 = vadd.f32 0.0, %v1701
        %1703 = vdwg.mxu0
        %1704 = vmatpush.bf16.msra.mxu0 %v363
        %1705 = vmatpush.bf16.msra.mxu0 %v362
        %1706 = vmatpush.bf16.msra.mxu0 %v361
        %1707 = vmatpush.bf16.msra.mxu0 %v360
        %1708 = vmatpush.bf16.msra.mxu0 %v359
        %1709 = vmatpush.bf16.msra.mxu0 %v358
        %1710 = vmatpush.bf16.msra.mxu0 %v357
        %1711 = vmatpush.bf16.msra.mxu0 %v356
        %1712 = vmatmul.bf16.gmra.mxu0 %v1552
        %v1713 = vpop.f32.mrf.mxu0
        %v1714 = vadd.f32 %v1625, %v1713
        %v1715 = vpop.f32.mrf.mxu0
        %v1716 = vadd.f32 %v1627, %v1715
        %1717 = vmatmul.bf16.gmra.mxu0 %v1554
        %v1718 = vpop.f32.mrf.mxu0
        %v1719 = vadd.f32 %v1630, %v1718
        %v1720 = vpop.f32.mrf.mxu0
        %v1721 = vadd.f32 %v1632, %v1720
        %1722 = vmatmul.bf16.gmra.mxu0 %v1556
        %v1723 = vpop.f32.mrf.mxu0
        %v1724 = vadd.f32 %v1635, %v1723
        %v1725 = vpop.f32.mrf.mxu0
        %v1726 = vadd.f32 %v1637, %v1725
        %1727 = vmatmul.bf16.gmra.mxu0 %v1558
        %v1728 = vpop.f32.mrf.mxu0
        %v1729 = vadd.f32 %v1640, %v1728
        %v1730 = vpop.f32.mrf.mxu0
        %v1731 = vadd.f32 %v1642, %v1730
        %1732 = vmatmul.bf16.gmra.mxu0 %v1560
        %v1733 = vpop.f32.mrf.mxu0
        %v1734 = vadd.f32 %v1645, %v1733
        %v1735 = vpop.f32.mrf.mxu0
        %v1736 = vadd.f32 %v1647, %v1735
        %1737 = vmatmul.bf16.gmra.mxu0 %v1562
        %v1738 = vpop.f32.mrf.mxu0
        %v1739 = vadd.f32 %v1650, %v1738
        %v1740 = vpop.f32.mrf.mxu0
        %v1741 = vadd.f32 %v1652, %v1740
        %1742 = vmatmul.bf16.gmra.mxu0 %v1564
        %v1743 = vpop.f32.mrf.mxu0
        %v1744 = vadd.f32 %v1655, %v1743
        %v1745 = vpop.f32.mrf.mxu0
        %v1746 = vadd.f32 %v1657, %v1745
        %1747 = vmatmul.bf16.gmra.mxu0 %v1566
        %v1748 = vpop.f32.mrf.mxu0
        %v1749 = vadd.f32 %v1660, %v1748
        %v1750 = vpop.f32.mrf.mxu0
        %v1751 = vadd.f32 %v1662, %v1750
        %1752 = vmatmul.bf16.gmra.mxu0 %v1568
        %v1753 = vpop.f32.mrf.mxu0
        %v1754 = vadd.f32 %v1665, %v1753
        %v1755 = vpop.f32.mrf.mxu0
        %v1756 = vadd.f32 %v1667, %v1755
        %1757 = vmatmul.bf16.gmra.mxu0 %v1570
        %v1758 = vpop.f32.mrf.mxu0
        %v1759 = vadd.f32 %v1670, %v1758
        %v1760 = vpop.f32.mrf.mxu0
        %v1761 = vadd.f32 %v1672, %v1760
        %1762 = vmatmul.bf16.gmra.mxu0 %v1572
        %v1763 = vpop.f32.mrf.mxu0
        %v1764 = vadd.f32 %v1675, %v1763
        %v1765 = vpop.f32.mrf.mxu0
        %v1766 = vadd.f32 %v1677, %v1765
        %1767 = vmatmul.bf16.gmra.mxu0 %v1574
        %v1768 = vpop.f32.mrf.mxu0
        %v1769 = vadd.f32 %v1680, %v1768
        %v1770 = vpop.f32.mrf.mxu0
        %v1771 = vadd.f32 %v1682, %v1770
        %1772 = vmatmul.bf16.gmra.mxu0 %v1576
        %v1773 = vpop.f32.mrf.mxu0
        %v1774 = vadd.f32 %v1685, %v1773
        %v1775 = vpop.f32.mrf.mxu0
        %v1776 = vadd.f32 %v1687, %v1775
        %1777 = vmatmul.bf16.gmra.mxu0 %v1578
        %v1778 = vpop.f32.mrf.mxu0
        %v1779 = vadd.f32 %v1690, %v1778
        %v1780 = vpop.f32.mrf.mxu0
        %v1781 = vadd.f32 %v1692, %v1780
        %1782 = vmatmul.bf16.gmra.mxu0 %v1580
        %v1783 = vpop.f32.mrf.mxu0
        %v1784 = vadd.f32 %v1695, %v1783
        %v1785 = vpop.f32.mrf.mxu0
        %v1786 = vadd.f32 %v1697, %v1785
        %1787 = vmatmul.bf16.gmra.mxu0 %v1582
        %v1788 = vpop.f32.mrf.mxu0
        %v1789 = vadd.f32 %v1700, %v1788
        %v1790 = vpop.f32.mrf.mxu0
        %v1791 = vadd.f32 %v1702, %v1790
        %1792 = vdwg.mxu0
        %v1793 = vpack.c.bf16 %v1716, %v1714
        %v1794 = vpack.c.bf16 %v1721, %v1719
        %v1795 = vpack.c.bf16 %v1726, %v1724
        %v1796 = vpack.c.bf16 %v1731, %v1729
        %v1797 = vpack.c.bf16 %v1736, %v1734
        %v1798 = vpack.c.bf16 %v1741, %v1739
        %v1799 = vpack.c.bf16 %v1746, %v1744
        %v1800 = vpack.c.bf16 %v1751, %v1749
        %v1801 = vpack.c.bf16 %v1756, %v1754
        %v1802 = vpack.c.bf16 %v1761, %v1759
        %v1803 = vpack.c.bf16 %v1766, %v1764
        %v1804 = vpack.c.bf16 %v1771, %v1769
        %v1805 = vpack.c.bf16 %v1776, %v1774
        %v1806 = vpack.c.bf16 %v1781, %v1779
        %v1807 = vpack.c.bf16 %v1786, %v1784
        %v1808 = vpack.c.bf16 %v1791, %v1789
        %s1809 = scalar_lea.vmem %s2, 4
        %v1810 = vld [vmem:[%s1809] sm:$0x3]
        %v1812 = vsel %vm1140, %v1793, 0
        %v1815 = vsel %vm1140, %v1794, 0
        %v1818 = vsel %vm1140, %v1795, 0
        %v1821 = vsel %vm1140, %v1796, 0
        %v1824 = vsel %vm1140, %v1797, 0
        %v1827 = vsel %vm1140, %v1798, 0
        %v1830 = vsel %vm1140, %v1799, 0
        %v1833 = vsel %vm1140, %v1800, 0
        %v1836 = vsel %vm1140, %v1801, 0
        %v1839 = vsel %vm1140, %v1802, 0
        %v1842 = vsel %vm1140, %v1803, 0
        %v1845 = vsel %vm1140, %v1804, 0
        %v1848 = vsel %vm1140, %v1805, 0
        %v1851 = vsel %vm1140, %v1806, 0
        %v1854 = vsel %vm1140, %v1807, 0
        %v1857 = vsel %vm1140, %v1808, 0
        %v1860 = vsel %vm1189, %v1810, 0
        %1862 = vmatpush.bf16.msra.mxu0 0
        %1863 = vmatpush.bf16.msra.mxu0 0
        %1864 = vmatpush.bf16.msra.mxu0 0
        %1865 = vmatpush.bf16.msra.mxu0 0
        %1866 = vmatpush.bf16.msra.mxu0 0
        %1867 = vmatpush.bf16.msra.mxu0 0
        %1868 = vmatpush.bf16.msra.mxu0 0
        %1869 = vmatpush.bf16.msra.mxu0 %v1860
        %1870 = vmatmul.bf16.gmra.mxu0 %v1812
        %v1871 = vpop.f32.mrf.mxu0
        %v1872 = vadd.f32 0.0, %v1871
        %v1873 = vpop.f32.mrf.mxu0
        %v1874 = vadd.f32 0.0, %v1873
        %1875 = vmatmul.bf16.gmra.mxu0 %v1815
        %v1876 = vpop.f32.mrf.mxu0
        %v1877 = vadd.f32 0.0, %v1876
        %v1878 = vpop.f32.mrf.mxu0
        %v1879 = vadd.f32 0.0, %v1878
        %1880 = vmatmul.bf16.gmra.mxu0 %v1818
        %v1881 = vpop.f32.mrf.mxu0
        %v1882 = vadd.f32 0.0, %v1881
        %v1883 = vpop.f32.mrf.mxu0
        %v1884 = vadd.f32 0.0, %v1883
        %1885 = vmatmul.bf16.gmra.mxu0 %v1821
        %v1886 = vpop.f32.mrf.mxu0
        %v1887 = vadd.f32 0.0, %v1886
        %v1888 = vpop.f32.mrf.mxu0
        %v1889 = vadd.f32 0.0, %v1888
        %1890 = vmatmul.bf16.gmra.mxu0 %v1824
        %v1891 = vpop.f32.mrf.mxu0
        %v1892 = vadd.f32 0.0, %v1891
        %v1893 = vpop.f32.mrf.mxu0
        %v1894 = vadd.f32 0.0, %v1893
        %1895 = vmatmul.bf16.gmra.mxu0 %v1827
        %v1896 = vpop.f32.mrf.mxu0
        %v1897 = vadd.f32 0.0, %v1896
        %v1898 = vpop.f32.mrf.mxu0
        %v1899 = vadd.f32 0.0, %v1898
        %1900 = vmatmul.bf16.gmra.mxu0 %v1830
        %v1901 = vpop.f32.mrf.mxu0
        %v1902 = vadd.f32 0.0, %v1901
        %v1903 = vpop.f32.mrf.mxu0
        %v1904 = vadd.f32 0.0, %v1903
        %1905 = vmatmul.bf16.gmra.mxu0 %v1833
        %v1906 = vpop.f32.mrf.mxu0
        %v1907 = vadd.f32 0.0, %v1906
        %v1908 = vpop.f32.mrf.mxu0
        %v1909 = vadd.f32 0.0, %v1908
        %1910 = vmatmul.bf16.gmra.mxu0 %v1836
        %v1911 = vpop.f32.mrf.mxu0
        %v1912 = vadd.f32 0.0, %v1911
        %v1913 = vpop.f32.mrf.mxu0
        %v1914 = vadd.f32 0.0, %v1913
        %1915 = vmatmul.bf16.gmra.mxu0 %v1839
        %v1916 = vpop.f32.mrf.mxu0
        %v1917 = vadd.f32 0.0, %v1916
        %v1918 = vpop.f32.mrf.mxu0
        %v1919 = vadd.f32 0.0, %v1918
        %1920 = vmatmul.bf16.gmra.mxu0 %v1842
        %v1921 = vpop.f32.mrf.mxu0
        %v1922 = vadd.f32 0.0, %v1921
        %v1923 = vpop.f32.mrf.mxu0
        %v1924 = vadd.f32 0.0, %v1923
        %1925 = vmatmul.bf16.gmra.mxu0 %v1845
        %v1926 = vpop.f32.mrf.mxu0
        %v1927 = vadd.f32 0.0, %v1926
        %v1928 = vpop.f32.mrf.mxu0
        %v1929 = vadd.f32 0.0, %v1928
        %1930 = vmatmul.bf16.gmra.mxu0 %v1848
        %v1931 = vpop.f32.mrf.mxu0
        %v1932 = vadd.f32 0.0, %v1931
        %v1933 = vpop.f32.mrf.mxu0
        %v1934 = vadd.f32 0.0, %v1933
        %1935 = vmatmul.bf16.gmra.mxu0 %v1851
        %v1936 = vpop.f32.mrf.mxu0
        %v1937 = vadd.f32 0.0, %v1936
        %v1938 = vpop.f32.mrf.mxu0
        %v1939 = vadd.f32 0.0, %v1938
        %1940 = vmatmul.bf16.gmra.mxu0 %v1854
        %v1941 = vpop.f32.mrf.mxu0
        %v1942 = vadd.f32 0.0, %v1941
        %v1943 = vpop.f32.mrf.mxu0
        %v1944 = vadd.f32 0.0, %v1943
        %1945 = vmatmul.bf16.gmra.mxu0 %v1857
        %v1946 = vpop.f32.mrf.mxu0
        %v1947 = vadd.f32 0.0, %v1946
        %v1948 = vpop.f32.mrf.mxu0
        %v1949 = vadd.f32 0.0, %v1948
        %1950 = vdwg.mxu0
        %v1951 = vadd.f32 %v1343, %v1872
        %v1952 = vadd.f32 %v1345, %v1874
        %v1953 = vadd.f32 %v1348, %v1877
        %v1954 = vadd.f32 %v1350, %v1879
        %v1955 = vadd.f32 %v1353, %v1882
        %v1956 = vadd.f32 %v1355, %v1884
        %v1957 = vadd.f32 %v1358, %v1887
        %v1958 = vadd.f32 %v1360, %v1889
        %v1959 = vadd.f32 %v1363, %v1892
        %v1960 = vadd.f32 %v1365, %v1894
        %v1961 = vadd.f32 %v1368, %v1897
        %v1962 = vadd.f32 %v1370, %v1899
        %v1963 = vadd.f32 %v1373, %v1902
        %v1964 = vadd.f32 %v1375, %v1904
        %v1965 = vadd.f32 %v1378, %v1907
        %v1966 = vadd.f32 %v1380, %v1909
        %v1967 = vadd.f32 %v1383, %v1912
        %v1968 = vadd.f32 %v1385, %v1914
        %v1969 = vadd.f32 %v1388, %v1917
        %v1970 = vadd.f32 %v1390, %v1919
        %v1971 = vadd.f32 %v1393, %v1922
        %v1972 = vadd.f32 %v1395, %v1924
        %v1973 = vadd.f32 %v1398, %v1927
        %v1974 = vadd.f32 %v1400, %v1929
        %v1975 = vadd.f32 %v1403, %v1932
        %v1976 = vadd.f32 %v1405, %v1934
        %v1977 = vadd.f32 %v1408, %v1937
        %v1978 = vadd.f32 %v1410, %v1939
        %v1979 = vadd.f32 %v1413, %v1942
        %v1980 = vadd.f32 %v1415, %v1944
        %v1981 = vadd.f32 %v1418, %v1947
        %v1982 = vadd.f32 %v1420, %v1949
        %s1983 = scalar_lea.vmem [#allocation2], 768
        %v1984 = vld [vmem:[%s1983] sm:$0xff]
        %v1985 = vld [vmem:[%s1983 + $0x8] sm:$0xff]
        %v1986 = vld [vmem:[%s1983 + $0x10] sm:$0xff]
        %v1987 = vld [vmem:[%s1983 + $0x18] sm:$0xff]
        %v1988 = vld [vmem:[%s1983 + $0x20] sm:$0xff]
        %v1989 = vld [vmem:[%s1983 + $0x28] sm:$0xff]
        %v1990 = vld [vmem:[%s1983 + $0x30] sm:$0xff]
        %v1991 = vld [vmem:[%s1983 + $0x38] sm:$0xff]
        %v1992 = vld [vmem:[%s1983 + $0x40] sm:$0xff]
        %v1993 = vld [vmem:[%s1983 + $0x48] sm:$0xff]
        %v1994 = vld [vmem:[%s1983 + $0x50] sm:$0xff]
        %v1995 = vld [vmem:[%s1983 + $0x58] sm:$0xff]
        %v1996 = vld [vmem:[%s1983 + $0x60] sm:$0xff]
        %v1997 = vld [vmem:[%s1983 + $0x68] sm:$0xff]
        %v1998 = vld [vmem:[%s1983 + $0x70] sm:$0xff]
        %v1999 = vld [vmem:[%s1983 + $0x78] sm:$0xff]
        %v2000 = vld [vmem:[%s1983 + $0x80] sm:$0xff]
        %v2001 = vld [vmem:[%s1983 + $0x88] sm:$0xff]
        %v2002 = vld [vmem:[%s1983 + $0x90] sm:$0xff]
        %v2003 = vld [vmem:[%s1983 + $0x98] sm:$0xff]
        %v2004 = vld [vmem:[%s1983 + $0xa0] sm:$0xff]
        %v2005 = vld [vmem:[%s1983 + $0xa8] sm:$0xff]
        %v2006 = vld [vmem:[%s1983 + $0xb0] sm:$0xff]
        %v2007 = vld [vmem:[%s1983 + $0xb8] sm:$0xff]
        %v2008 = vld [vmem:[%s1983 + $0xc0] sm:$0xff]
        %v2009 = vld [vmem:[%s1983 + $0xc8] sm:$0xff]
        %v2010 = vld [vmem:[%s1983 + $0xd0] sm:$0xff]
        %v2011 = vld [vmem:[%s1983 + $0xd8] sm:$0xff]
        %v2012 = vld [vmem:[%s1983 + $0xe0] sm:$0xff]
        %v2013 = vld [vmem:[%s1983 + $0xe8] sm:$0xff]
        %v2014 = vld [vmem:[%s1983 + $0xf0] sm:$0xff]
        %v2015 = vld [vmem:[%s1983 + $0xf8] sm:$0xff]
        %v2048 = vunpack.c.l.b16 %v1984
        %v2049 = vunpack.c.h.b16 %v1984
        %v2050 = vunpack.c.l.b16 %v1985
        %v2051 = vunpack.c.h.b16 %v1985
        %v2052 = vunpack.c.l.b16 %v1986
        %v2053 = vunpack.c.h.b16 %v1986
        %v2054 = vunpack.c.l.b16 %v1987
        %v2055 = vunpack.c.h.b16 %v1987
        %v2056 = vunpack.c.l.b16 %v1988
        %v2057 = vunpack.c.h.b16 %v1988
        %v2058 = vunpack.c.l.b16 %v1989
        %v2059 = vunpack.c.h.b16 %v1989
        %v2060 = vunpack.c.l.b16 %v1990
        %v2061 = vunpack.c.h.b16 %v1990
        %v2062 = vunpack.c.l.b16 %v1991
        %v2063 = vunpack.c.h.b16 %v1991
        %v2064 = vunpack.c.l.b16 %v1992
        %v2065 = vunpack.c.h.b16 %v1992
        %v2066 = vunpack.c.l.b16 %v1993
        %v2067 = vunpack.c.h.b16 %v1993
        %v2068 = vunpack.c.l.b16 %v1994
        %v2069 = vunpack.c.h.b16 %v1994
        %v2070 = vunpack.c.l.b16 %v1995
        %v2071 = vunpack.c.h.b16 %v1995
        %v2072 = vunpack.c.l.b16 %v1996
        %v2073 = vunpack.c.h.b16 %v1996
        %v2074 = vunpack.c.l.b16 %v1997
        %v2075 = vunpack.c.h.b16 %v1997
        %v2076 = vunpack.c.l.b16 %v1998
        %v2077 = vunpack.c.h.b16 %v1998
        %v2078 = vunpack.c.l.b16 %v1999
        %v2079 = vunpack.c.h.b16 %v1999
        %v2080 = vunpack.c.l.b16 %v2000
        %v2081 = vunpack.c.h.b16 %v2000
        %v2082 = vunpack.c.l.b16 %v2001
        %v2083 = vunpack.c.h.b16 %v2001
        %v2084 = vunpack.c.l.b16 %v2002
        %v2085 = vunpack.c.h.b16 %v2002
        %v2086 = vunpack.c.l.b16 %v2003
        %v2087 = vunpack.c.h.b16 %v2003
        %v2088 = vunpack.c.l.b16 %v2004
        %v2089 = vunpack.c.h.b16 %v2004
        %v2090 = vunpack.c.l.b16 %v2005
        %v2091 = vunpack.c.h.b16 %v2005
        %v2092 = vunpack.c.l.b16 %v2006
        %v2093 = vunpack.c.h.b16 %v2006
        %v2094 = vunpack.c.l.b16 %v2007
        %v2095 = vunpack.c.h.b16 %v2007
        %v2096 = vunpack.c.l.b16 %v2008
        %v2097 = vunpack.c.h.b16 %v2008
        %v2098 = vunpack.c.l.b16 %v2009
        %v2099 = vunpack.c.h.b16 %v2009
        %v2100 = vunpack.c.l.b16 %v2010
        %v2101 = vunpack.c.h.b16 %v2010
        %v2102 = vunpack.c.l.b16 %v2011
        %v2103 = vunpack.c.h.b16 %v2011
        %v2104 = vunpack.c.l.b16 %v2012
        %v2105 = vunpack.c.h.b16 %v2012
        %v2106 = vunpack.c.l.b16 %v2013
        %v2107 = vunpack.c.h.b16 %v2013
        %v2108 = vunpack.c.l.b16 %v2014
        %v2109 = vunpack.c.h.b16 %v2014
        %v2110 = vunpack.c.l.b16 %v2015
        %v2111 = vunpack.c.h.b16 %v2015
        %v2112 = vpack.c.b16 %v2050, %v2048
        %v2113 = vpack.c.b16 %v2051, %v2049
        %v2114 = vpack.c.b16 %v2054, %v2052
        %v2115 = vpack.c.b16 %v2055, %v2053
        %v2116 = vpack.c.b16 %v2058, %v2056
        %v2117 = vpack.c.b16 %v2059, %v2057
        %v2118 = vpack.c.b16 %v2062, %v2060
        %v2119 = vpack.c.b16 %v2063, %v2061
        %v2120 = vpack.c.b16 %v2066, %v2064
        %v2121 = vpack.c.b16 %v2067, %v2065
        %v2122 = vpack.c.b16 %v2070, %v2068
        %v2123 = vpack.c.b16 %v2071, %v2069
        %v2124 = vpack.c.b16 %v2074, %v2072
        %v2125 = vpack.c.b16 %v2075, %v2073
        %v2126 = vpack.c.b16 %v2078, %v2076
        %v2127 = vpack.c.b16 %v2079, %v2077
        %v2128 = vpack.c.b16 %v2082, %v2080
        %v2129 = vpack.c.b16 %v2083, %v2081
        %v2130 = vpack.c.b16 %v2086, %v2084
        %v2131 = vpack.c.b16 %v2087, %v2085
        %v2132 = vpack.c.b16 %v2090, %v2088
        %v2133 = vpack.c.b16 %v2091, %v2089
        %v2134 = vpack.c.b16 %v2094, %v2092
        %v2135 = vpack.c.b16 %v2095, %v2093
        %v2136 = vpack.c.b16 %v2098, %v2096
        %v2137 = vpack.c.b16 %v2099, %v2097
        %v2138 = vpack.c.b16 %v2102, %v2100
        %v2139 = vpack.c.b16 %v2103, %v2101
        %v2140 = vpack.c.b16 %v2106, %v2104
        %v2141 = vpack.c.b16 %v2107, %v2105
        %v2142 = vpack.c.b16 %v2110, %v2108
        %v2143 = vpack.c.b16 %v2111, %v2109
        %2176 = vmatpush.bf16.msra.mxu0 %v355
        %2177 = vmatpush.bf16.msra.mxu0 %v354
        %2178 = vmatpush.bf16.msra.mxu0 %v353
        %2179 = vmatpush.bf16.msra.mxu0 %v352
        %2180 = vmatpush.bf16.msra.mxu0 %v351
        %2181 = vmatpush.bf16.msra.mxu0 %v350
        %2182 = vmatpush.bf16.msra.mxu0 %v349
        %2183 = vmatpush.bf16.msra.mxu0 %v348
        %2184 = vmatmul.bf16.gmra.mxu0 %v2112
        %v2185 = vpop.f32.mrf.mxu0
        %v2186 = vadd.f32 0.0, %v2185
        %v2187 = vpop.f32.mrf.mxu0
        %v2188 = vadd.f32 0.0, %v2187
        %2189 = vmatmul.bf16.gmra.mxu0 %v2114
        %v2190 = vpop.f32.mrf.mxu0
        %v2191 = vadd.f32 0.0, %v2190
        %v2192 = vpop.f32.mrf.mxu0
        %v2193 = vadd.f32 0.0, %v2192
        %2194 = vmatmul.bf16.gmra.mxu0 %v2116
        %v2195 = vpop.f32.mrf.mxu0
        %v2196 = vadd.f32 0.0, %v2195
        %v2197 = vpop.f32.mrf.mxu0
        %v2198 = vadd.f32 0.0, %v2197
        %2199 = vmatmul.bf16.gmra.mxu0 %v2118
        %v2200 = vpop.f32.mrf.mxu0
        %v2201 = vadd.f32 0.0, %v2200
        %v2202 = vpop.f32.mrf.mxu0
        %v2203 = vadd.f32 0.0, %v2202
        %2204 = vmatmul.bf16.gmra.mxu0 %v2120
        %v2205 = vpop.f32.mrf.mxu0
        %v2206 = vadd.f32 0.0, %v2205
        %v2207 = vpop.f32.mrf.mxu0
        %v2208 = vadd.f32 0.0, %v2207
        %2209 = vmatmul.bf16.gmra.mxu0 %v2122
        %v2210 = vpop.f32.mrf.mxu0
        %v2211 = vadd.f32 0.0, %v2210
        %v2212 = vpop.f32.mrf.mxu0
        %v2213 = vadd.f32 0.0, %v2212
        %2214 = vmatmul.bf16.gmra.mxu0 %v2124
        %v2215 = vpop.f32.mrf.mxu0
        %v2216 = vadd.f32 0.0, %v2215
        %v2217 = vpop.f32.mrf.mxu0
        %v2218 = vadd.f32 0.0, %v2217
        %2219 = vmatmul.bf16.gmra.mxu0 %v2126
        %v2220 = vpop.f32.mrf.mxu0
        %v2221 = vadd.f32 0.0, %v2220
        %v2222 = vpop.f32.mrf.mxu0
        %v2223 = vadd.f32 0.0, %v2222
        %2224 = vmatmul.bf16.gmra.mxu0 %v2128
        %v2225 = vpop.f32.mrf.mxu0
        %v2226 = vadd.f32 0.0, %v2225
        %v2227 = vpop.f32.mrf.mxu0
        %v2228 = vadd.f32 0.0, %v2227
        %2229 = vmatmul.bf16.gmra.mxu0 %v2130
        %v2230 = vpop.f32.mrf.mxu0
        %v2231 = vadd.f32 0.0, %v2230
        %v2232 = vpop.f32.mrf.mxu0
        %v2233 = vadd.f32 0.0, %v2232
        %2234 = vmatmul.bf16.gmra.mxu0 %v2132
        %v2235 = vpop.f32.mrf.mxu0
        %v2236 = vadd.f32 0.0, %v2235
        %v2237 = vpop.f32.mrf.mxu0
        %v2238 = vadd.f32 0.0, %v2237
        %2239 = vmatmul.bf16.gmra.mxu0 %v2134
        %v2240 = vpop.f32.mrf.mxu0
        %v2241 = vadd.f32 0.0, %v2240
        %v2242 = vpop.f32.mrf.mxu0
        %v2243 = vadd.f32 0.0, %v2242
        %2244 = vmatmul.bf16.gmra.mxu0 %v2136
        %v2245 = vpop.f32.mrf.mxu0
        %v2246 = vadd.f32 0.0, %v2245
        %v2247 = vpop.f32.mrf.mxu0
        %v2248 = vadd.f32 0.0, %v2247
        %2249 = vmatmul.bf16.gmra.mxu0 %v2138
        %v2250 = vpop.f32.mrf.mxu0
        %v2251 = vadd.f32 0.0, %v2250
        %v2252 = vpop.f32.mrf.mxu0
        %v2253 = vadd.f32 0.0, %v2252
        %2254 = vmatmul.bf16.gmra.mxu0 %v2140
        %v2255 = vpop.f32.mrf.mxu0
        %v2256 = vadd.f32 0.0, %v2255
        %v2257 = vpop.f32.mrf.mxu0
        %v2258 = vadd.f32 0.0, %v2257
        %2259 = vmatmul.bf16.gmra.mxu0 %v2142
        %v2260 = vpop.f32.mrf.mxu0
        %v2261 = vadd.f32 0.0, %v2260
        %v2262 = vpop.f32.mrf.mxu0
        %v2263 = vadd.f32 0.0, %v2262
        %2264 = vdwg.mxu0
        %2265 = vmatpush.bf16.msra.mxu0 %v363
        %2266 = vmatpush.bf16.msra.mxu0 %v362
        %2267 = vmatpush.bf16.msra.mxu0 %v361
        %2268 = vmatpush.bf16.msra.mxu0 %v360
        %2269 = vmatpush.bf16.msra.mxu0 %v359
        %2270 = vmatpush.bf16.msra.mxu0 %v358
        %2271 = vmatpush.bf16.msra.mxu0 %v357
        %2272 = vmatpush.bf16.msra.mxu0 %v356
        %2273 = vmatmul.bf16.gmra.mxu0 %v2113
        %v2274 = vpop.f32.mrf.mxu0
        %v2275 = vadd.f32 %v2186, %v2274
        %v2276 = vpop.f32.mrf.mxu0
        %v2277 = vadd.f32 %v2188, %v2276
        %2278 = vmatmul.bf16.gmra.mxu0 %v2115
        %v2279 = vpop.f32.mrf.mxu0
        %v2280 = vadd.f32 %v2191, %v2279
        %v2281 = vpop.f32.mrf.mxu0
        %v2282 = vadd.f32 %v2193, %v2281
        %2283 = vmatmul.bf16.gmra.mxu0 %v2117
        %v2284 = vpop.f32.mrf.mxu0
        %v2285 = vadd.f32 %v2196, %v2284
        %v2286 = vpop.f32.mrf.mxu0
        %v2287 = vadd.f32 %v2198, %v2286
        %2288 = vmatmul.bf16.gmra.mxu0 %v2119
        %v2289 = vpop.f32.mrf.mxu0
        %v2290 = vadd.f32 %v2201, %v2289
        %v2291 = vpop.f32.mrf.mxu0
        %v2292 = vadd.f32 %v2203, %v2291
        %2293 = vmatmul.bf16.gmra.mxu0 %v2121
        %v2294 = vpop.f32.mrf.mxu0
        %v2295 = vadd.f32 %v2206, %v2294
        %v2296 = vpop.f32.mrf.mxu0
        %v2297 = vadd.f32 %v2208, %v2296
        %2298 = vmatmul.bf16.gmra.mxu0 %v2123
        %v2299 = vpop.f32.mrf.mxu0
        %v2300 = vadd.f32 %v2211, %v2299
        %v2301 = vpop.f32.mrf.mxu0
        %v2302 = vadd.f32 %v2213, %v2301
        %2303 = vmatmul.bf16.gmra.mxu0 %v2125
        %v2304 = vpop.f32.mrf.mxu0
        %v2305 = vadd.f32 %v2216, %v2304
        %v2306 = vpop.f32.mrf.mxu0
        %v2307 = vadd.f32 %v2218, %v2306
        %2308 = vmatmul.bf16.gmra.mxu0 %v2127
        %v2309 = vpop.f32.mrf.mxu0
        %v2310 = vadd.f32 %v2221, %v2309
        %v2311 = vpop.f32.mrf.mxu0
        %v2312 = vadd.f32 %v2223, %v2311
        %2313 = vmatmul.bf16.gmra.mxu0 %v2129
        %v2314 = vpop.f32.mrf.mxu0
        %v2315 = vadd.f32 %v2226, %v2314
        %v2316 = vpop.f32.mrf.mxu0
        %v2317 = vadd.f32 %v2228, %v2316
        %2318 = vmatmul.bf16.gmra.mxu0 %v2131
        %v2319 = vpop.f32.mrf.mxu0
        %v2320 = vadd.f32 %v2231, %v2319
        %v2321 = vpop.f32.mrf.mxu0
        %v2322 = vadd.f32 %v2233, %v2321
        %2323 = vmatmul.bf16.gmra.mxu0 %v2133
        %v2324 = vpop.f32.mrf.mxu0
        %v2325 = vadd.f32 %v2236, %v2324
        %v2326 = vpop.f32.mrf.mxu0
        %v2327 = vadd.f32 %v2238, %v2326
        %2328 = vmatmul.bf16.gmra.mxu0 %v2135
        %v2329 = vpop.f32.mrf.mxu0
        %v2330 = vadd.f32 %v2241, %v2329
        %v2331 = vpop.f32.mrf.mxu0
        %v2332 = vadd.f32 %v2243, %v2331
        %2333 = vmatmul.bf16.gmra.mxu0 %v2137
        %v2334 = vpop.f32.mrf.mxu0
        %v2335 = vadd.f32 %v2246, %v2334
        %v2336 = vpop.f32.mrf.mxu0
        %v2337 = vadd.f32 %v2248, %v2336
        %2338 = vmatmul.bf16.gmra.mxu0 %v2139
        %v2339 = vpop.f32.mrf.mxu0
        %v2340 = vadd.f32 %v2251, %v2339
        %v2341 = vpop.f32.mrf.mxu0
        %v2342 = vadd.f32 %v2253, %v2341
        %2343 = vmatmul.bf16.gmra.mxu0 %v2141
        %v2344 = vpop.f32.mrf.mxu0
        %v2345 = vadd.f32 %v2256, %v2344
        %v2346 = vpop.f32.mrf.mxu0
        %v2347 = vadd.f32 %v2258, %v2346
        %2348 = vmatmul.bf16.gmra.mxu0 %v2143
        %v2349 = vpop.f32.mrf.mxu0
        %v2350 = vadd.f32 %v2261, %v2349
        %v2351 = vpop.f32.mrf.mxu0
        %v2352 = vadd.f32 %v2263, %v2351
        %2353 = vdwg.mxu0
        %v2354 = vpack.c.bf16 %v2277, %v2275
        %v2355 = vpack.c.bf16 %v2282, %v2280
        %v2356 = vpack.c.bf16 %v2287, %v2285
        %v2357 = vpack.c.bf16 %v2292, %v2290
        %v2358 = vpack.c.bf16 %v2297, %v2295
        %v2359 = vpack.c.bf16 %v2302, %v2300
        %v2360 = vpack.c.bf16 %v2307, %v2305
        %v2361 = vpack.c.bf16 %v2312, %v2310
        %v2362 = vpack.c.bf16 %v2317, %v2315
        %v2363 = vpack.c.bf16 %v2322, %v2320
        %v2364 = vpack.c.bf16 %v2327, %v2325
        %v2365 = vpack.c.bf16 %v2332, %v2330
        %v2366 = vpack.c.bf16 %v2337, %v2335
        %v2367 = vpack.c.bf16 %v2342, %v2340
        %v2368 = vpack.c.bf16 %v2347, %v2345
        %v2369 = vpack.c.bf16 %v2352, %v2350
        %s2370 = scalar_lea.vmem %s2, 6
        %v2371 = vld [vmem:[%s2370] sm:$0x3]
        %v2373 = vsel %vm1140, %v2354, 0
        %v2376 = vsel %vm1140, %v2355, 0
        %v2379 = vsel %vm1140, %v2356, 0
        %v2382 = vsel %vm1140, %v2357, 0
        %v2385 = vsel %vm1140, %v2358, 0
        %v2388 = vsel %vm1140, %v2359, 0
        %v2391 = vsel %vm1140, %v2360, 0
        %v2394 = vsel %vm1140, %v2361, 0
        %v2397 = vsel %vm1140, %v2362, 0
        %v2400 = vsel %vm1140, %v2363, 0
        %v2403 = vsel %vm1140, %v2364, 0
        %v2406 = vsel %vm1140, %v2365, 0
        %v2409 = vsel %vm1140, %v2366, 0
        %v2412 = vsel %vm1140, %v2367, 0
        %v2415 = vsel %vm1140, %v2368, 0
        %v2418 = vsel %vm1140, %v2369, 0
        %v2421 = vsel %vm1189, %v2371, 0
        %2423 = vmatpush.bf16.msra.mxu0 0
        %2424 = vmatpush.bf16.msra.mxu0 0
        %2425 = vmatpush.bf16.msra.mxu0 0
        %2426 = vmatpush.bf16.msra.mxu0 0
        %2427 = vmatpush.bf16.msra.mxu0 0
        %2428 = vmatpush.bf16.msra.mxu0 0
        %2429 = vmatpush.bf16.msra.mxu0 0
        %2430 = vmatpush.bf16.msra.mxu0 %v2421
        %2431 = vmatmul.bf16.gmra.mxu0 %v2373
        %v2432 = vpop.f32.mrf.mxu0
        %v2433 = vadd.f32 0.0, %v2432
        %v2434 = vpop.f32.mrf.mxu0
        %v2435 = vadd.f32 0.0, %v2434
        %2436 = vmatmul.bf16.gmra.mxu0 %v2376
        %v2437 = vpop.f32.mrf.mxu0
        %v2438 = vadd.f32 0.0, %v2437
        %v2439 = vpop.f32.mrf.mxu0
        %v2440 = vadd.f32 0.0, %v2439
        %2441 = vmatmul.bf16.gmra.mxu0 %v2379
        %v2442 = vpop.f32.mrf.mxu0
        %v2443 = vadd.f32 0.0, %v2442
        %v2444 = vpop.f32.mrf.mxu0
        %v2445 = vadd.f32 0.0, %v2444
        %2446 = vmatmul.bf16.gmra.mxu0 %v2382
        %v2447 = vpop.f32.mrf.mxu0
        %v2448 = vadd.f32 0.0, %v2447
        %v2449 = vpop.f32.mrf.mxu0
        %v2450 = vadd.f32 0.0, %v2449
        %2451 = vmatmul.bf16.gmra.mxu0 %v2385
        %v2452 = vpop.f32.mrf.mxu0
        %v2453 = vadd.f32 0.0, %v2452
        %v2454 = vpop.f32.mrf.mxu0
        %v2455 = vadd.f32 0.0, %v2454
        %2456 = vmatmul.bf16.gmra.mxu0 %v2388
        %v2457 = vpop.f32.mrf.mxu0
        %v2458 = vadd.f32 0.0, %v2457
        %v2459 = vpop.f32.mrf.mxu0
        %v2460 = vadd.f32 0.0, %v2459
        %2461 = vmatmul.bf16.gmra.mxu0 %v2391
        %v2462 = vpop.f32.mrf.mxu0
        %v2463 = vadd.f32 0.0, %v2462
        %v2464 = vpop.f32.mrf.mxu0
        %v2465 = vadd.f32 0.0, %v2464
        %2466 = vmatmul.bf16.gmra.mxu0 %v2394
        %v2467 = vpop.f32.mrf.mxu0
        %v2468 = vadd.f32 0.0, %v2467
        %v2469 = vpop.f32.mrf.mxu0
        %v2470 = vadd.f32 0.0, %v2469
        %2471 = vmatmul.bf16.gmra.mxu0 %v2397
        %v2472 = vpop.f32.mrf.mxu0
        %v2473 = vadd.f32 0.0, %v2472
        %v2474 = vpop.f32.mrf.mxu0
        %v2475 = vadd.f32 0.0, %v2474
        %2476 = vmatmul.bf16.gmra.mxu0 %v2400
        %v2477 = vpop.f32.mrf.mxu0
        %v2478 = vadd.f32 0.0, %v2477
        %v2479 = vpop.f32.mrf.mxu0
        %v2480 = vadd.f32 0.0, %v2479
        %2481 = vmatmul.bf16.gmra.mxu0 %v2403
        %v2482 = vpop.f32.mrf.mxu0
        %v2483 = vadd.f32 0.0, %v2482
        %v2484 = vpop.f32.mrf.mxu0
        %v2485 = vadd.f32 0.0, %v2484
        %2486 = vmatmul.bf16.gmra.mxu0 %v2406
        %v2487 = vpop.f32.mrf.mxu0
        %v2488 = vadd.f32 0.0, %v2487
        %v2489 = vpop.f32.mrf.mxu0
        %v2490 = vadd.f32 0.0, %v2489
        %2491 = vmatmul.bf16.gmra.mxu0 %v2409
        %v2492 = vpop.f32.mrf.mxu0
        %v2493 = vadd.f32 0.0, %v2492
        %v2494 = vpop.f32.mrf.mxu0
        %v2495 = vadd.f32 0.0, %v2494
        %2496 = vmatmul.bf16.gmra.mxu0 %v2412
        %v2497 = vpop.f32.mrf.mxu0
        %v2498 = vadd.f32 0.0, %v2497
        %v2499 = vpop.f32.mrf.mxu0
        %v2500 = vadd.f32 0.0, %v2499
        %2501 = vmatmul.bf16.gmra.mxu0 %v2415
        %v2502 = vpop.f32.mrf.mxu0
        %v2503 = vadd.f32 0.0, %v2502
        %v2504 = vpop.f32.mrf.mxu0
        %v2505 = vadd.f32 0.0, %v2504
        %2506 = vmatmul.bf16.gmra.mxu0 %v2418
        %v2507 = vpop.f32.mrf.mxu0
        %v2508 = vadd.f32 0.0, %v2507
        %v2509 = vpop.f32.mrf.mxu0
        %v2510 = vadd.f32 0.0, %v2509
        %2511 = vdwg.mxu0
        %v2512 = vadd.f32 %v1951, %v2433
        %v2513 = vadd.f32 %v1952, %v2435
        %v2514 = vadd.f32 %v1953, %v2438
        %v2515 = vadd.f32 %v1954, %v2440
        %v2516 = vadd.f32 %v1955, %v2443
        %v2517 = vadd.f32 %v1956, %v2445
        %v2518 = vadd.f32 %v1957, %v2448
        %v2519 = vadd.f32 %v1958, %v2450
        %v2520 = vadd.f32 %v1959, %v2453
        %v2521 = vadd.f32 %v1960, %v2455
        %v2522 = vadd.f32 %v1961, %v2458
        %v2523 = vadd.f32 %v1962, %v2460
        %v2524 = vadd.f32 %v1963, %v2463
        %v2525 = vadd.f32 %v1964, %v2465
        %v2526 = vadd.f32 %v1965, %v2468
        %v2527 = vadd.f32 %v1966, %v2470
        %v2528 = vadd.f32 %v1967, %v2473
        %v2529 = vadd.f32 %v1968, %v2475
        %v2530 = vadd.f32 %v1969, %v2478
        %v2531 = vadd.f32 %v1970, %v2480
        %v2532 = vadd.f32 %v1971, %v2483
        %v2533 = vadd.f32 %v1972, %v2485
        %v2534 = vadd.f32 %v1973, %v2488
        %v2535 = vadd.f32 %v1974, %v2490
        %v2536 = vadd.f32 %v1975, %v2493
        %v2537 = vadd.f32 %v1976, %v2495
        %v2538 = vadd.f32 %v1977, %v2498
        %v2539 = vadd.f32 %v1978, %v2500
        %v2540 = vadd.f32 %v1979, %v2503
        %v2541 = vadd.f32 %v1980, %v2505
        %v2542 = vadd.f32 %v1981, %v2508
        %v2543 = vadd.f32 %v1982, %v2510
        %s2544 = scalar_lea.vmem [#allocation2], 1024
        %v2545 = vld [vmem:[%s2544] sm:$0xff]
        %v2546 = vld [vmem:[%s2544 + $0x8] sm:$0xff]
        %v2547 = vld [vmem:[%s2544 + $0x10] sm:$0xff]
        %v2548 = vld [vmem:[%s2544 + $0x18] sm:$0xff]
        %v2549 = vld [vmem:[%s2544 + $0x20] sm:$0xff]
        %v2550 = vld [vmem:[%s2544 + $0x28] sm:$0xff]
        %v2551 = vld [vmem:[%s2544 + $0x30] sm:$0xff]
        %v2552 = vld [vmem:[%s2544 + $0x38] sm:$0xff]
        %v2553 = vld [vmem:[%s2544 + $0x40] sm:$0xff]
        %v2554 = vld [vmem:[%s2544 + $0x48] sm:$0xff]
        %v2555 = vld [vmem:[%s2544 + $0x50] sm:$0xff]
        %v2556 = vld [vmem:[%s2544 + $0x58] sm:$0xff]
        %v2557 = vld [vmem:[%s2544 + $0x60] sm:$0xff]
        %v2558 = vld [vmem:[%s2544 + $0x68] sm:$0xff]
        %v2559 = vld [vmem:[%s2544 + $0x70] sm:$0xff]
        %v2560 = vld [vmem:[%s2544 + $0x78] sm:$0xff]
        %v2561 = vld [vmem:[%s2544 + $0x80] sm:$0xff]
        %v2562 = vld [vmem:[%s2544 + $0x88] sm:$0xff]
        %v2563 = vld [vmem:[%s2544 + $0x90] sm:$0xff]
        %v2564 = vld [vmem:[%s2544 + $0x98] sm:$0xff]
        %v2565 = vld [vmem:[%s2544 + $0xa0] sm:$0xff]
        %v2566 = vld [vmem:[%s2544 + $0xa8] sm:$0xff]
        %v2567 = vld [vmem:[%s2544 + $0xb0] sm:$0xff]
        %v2568 = vld [vmem:[%s2544 + $0xb8] sm:$0xff]
        %v2569 = vld [vmem:[%s2544 + $0xc0] sm:$0xff]
        %v2570 = vld [vmem:[%s2544 + $0xc8] sm:$0xff]
        %v2571 = vld [vmem:[%s2544 + $0xd0] sm:$0xff]
        %v2572 = vld [vmem:[%s2544 + $0xd8] sm:$0xff]
        %v2573 = vld [vmem:[%s2544 + $0xe0] sm:$0xff]
        %v2574 = vld [vmem:[%s2544 + $0xe8] sm:$0xff]
        %v2575 = vld [vmem:[%s2544 + $0xf0] sm:$0xff]
        %v2576 = vld [vmem:[%s2544 + $0xf8] sm:$0xff]
        %v2609 = vunpack.c.l.b16 %v2545
        %v2610 = vunpack.c.h.b16 %v2545
        %v2611 = vunpack.c.l.b16 %v2546
        %v2612 = vunpack.c.h.b16 %v2546
        %v2613 = vunpack.c.l.b16 %v2547
        %v2614 = vunpack.c.h.b16 %v2547
        %v2615 = vunpack.c.l.b16 %v2548
        %v2616 = vunpack.c.h.b16 %v2548
        %v2617 = vunpack.c.l.b16 %v2549
        %v2618 = vunpack.c.h.b16 %v2549
        %v2619 = vunpack.c.l.b16 %v2550
        %v2620 = vunpack.c.h.b16 %v2550
        %v2621 = vunpack.c.l.b16 %v2551
        %v2622 = vunpack.c.h.b16 %v2551
        %v2623 = vunpack.c.l.b16 %v2552
        %v2624 = vunpack.c.h.b16 %v2552
        %v2625 = vunpack.c.l.b16 %v2553
        %v2626 = vunpack.c.h.b16 %v2553
        %v2627 = vunpack.c.l.b16 %v2554
        %v2628 = vunpack.c.h.b16 %v2554
        %v2629 = vunpack.c.l.b16 %v2555
        %v2630 = vunpack.c.h.b16 %v2555
        %v2631 = vunpack.c.l.b16 %v2556
        %v2632 = vunpack.c.h.b16 %v2556
        %v2633 = vunpack.c.l.b16 %v2557
        %v2634 = vunpack.c.h.b16 %v2557
        %v2635 = vunpack.c.l.b16 %v2558
        %v2636 = vunpack.c.h.b16 %v2558
        %v2637 = vunpack.c.l.b16 %v2559
        %v2638 = vunpack.c.h.b16 %v2559
        %v2639 = vunpack.c.l.b16 %v2560
        %v2640 = vunpack.c.h.b16 %v2560
        %v2641 = vunpack.c.l.b16 %v2561
        %v2642 = vunpack.c.h.b16 %v2561
        %v2643 = vunpack.c.l.b16 %v2562
        %v2644 = vunpack.c.h.b16 %v2562
        %v2645 = vunpack.c.l.b16 %v2563
        %v2646 = vunpack.c.h.b16 %v2563
        %v2647 = vunpack.c.l.b16 %v2564
        %v2648 = vunpack.c.h.b16 %v2564
        %v2649 = vunpack.c.l.b16 %v2565
        %v2650 = vunpack.c.h.b16 %v2565
        %v2651 = vunpack.c.l.b16 %v2566
        %v2652 = vunpack.c.h.b16 %v2566
        %v2653 = vunpack.c.l.b16 %v2567
        %v2654 = vunpack.c.h.b16 %v2567
        %v2655 = vunpack.c.l.b16 %v2568
        %v2656 = vunpack.c.h.b16 %v2568
        %v2657 = vunpack.c.l.b16 %v2569
        %v2658 = vunpack.c.h.b16 %v2569
        %v2659 = vunpack.c.l.b16 %v2570
        %v2660 = vunpack.c.h.b16 %v2570
        %v2661 = vunpack.c.l.b16 %v2571
        %v2662 = vunpack.c.h.b16 %v2571
        %v2663 = vunpack.c.l.b16 %v2572
        %v2664 = vunpack.c.h.b16 %v2572
        %v2665 = vunpack.c.l.b16 %v2573
        %v2666 = vunpack.c.h.b16 %v2573
        %v2667 = vunpack.c.l.b16 %v2574
        %v2668 = vunpack.c.h.b16 %v2574
        %v2669 = vunpack.c.l.b16 %v2575
        %v2670 = vunpack.c.h.b16 %v2575
        %v2671 = vunpack.c.l.b16 %v2576
        %v2672 = vunpack.c.h.b16 %v2576
        %v2673 = vpack.c.b16 %v2611, %v2609
        %v2674 = vpack.c.b16 %v2612, %v2610
        %v2675 = vpack.c.b16 %v2615, %v2613
        %v2676 = vpack.c.b16 %v2616, %v2614
        %v2677 = vpack.c.b16 %v2619, %v2617
        %v2678 = vpack.c.b16 %v2620, %v2618
        %v2679 = vpack.c.b16 %v2623, %v2621
        %v2680 = vpack.c.b16 %v2624, %v2622
        %v2681 = vpack.c.b16 %v2627, %v2625
        %v2682 = vpack.c.b16 %v2628, %v2626
        %v2683 = vpack.c.b16 %v2631, %v2629
        %v2684 = vpack.c.b16 %v2632, %v2630
        %v2685 = vpack.c.b16 %v2635, %v2633
        %v2686 = vpack.c.b16 %v2636, %v2634
        %v2687 = vpack.c.b16 %v2639, %v2637
        %v2688 = vpack.c.b16 %v2640, %v2638
        %v2689 = vpack.c.b16 %v2643, %v2641
        %v2690 = vpack.c.b16 %v2644, %v2642
        %v2691 = vpack.c.b16 %v2647, %v2645
        %v2692 = vpack.c.b16 %v2648, %v2646
        %v2693 = vpack.c.b16 %v2651, %v2649
        %v2694 = vpack.c.b16 %v2652, %v2650
        %v2695 = vpack.c.b16 %v2655, %v2653
        %v2696 = vpack.c.b16 %v2656, %v2654
        %v2697 = vpack.c.b16 %v2659, %v2657
        %v2698 = vpack.c.b16 %v2660, %v2658
        %v2699 = vpack.c.b16 %v2663, %v2661
        %v2700 = vpack.c.b16 %v2664, %v2662
        %v2701 = vpack.c.b16 %v2667, %v2665
        %v2702 = vpack.c.b16 %v2668, %v2666
        %v2703 = vpack.c.b16 %v2671, %v2669
        %v2704 = vpack.c.b16 %v2672, %v2670
        %2737 = vmatpush.bf16.msra.mxu0 %v355
        %2738 = vmatpush.bf16.msra.mxu0 %v354
        %2739 = vmatpush.bf16.msra.mxu0 %v353
        %2740 = vmatpush.bf16.msra.mxu0 %v352
        %2741 = vmatpush.bf16.msra.mxu0 %v351
        %2742 = vmatpush.bf16.msra.mxu0 %v350
        %2743 = vmatpush.bf16.msra.mxu0 %v349
        %2744 = vmatpush.bf16.msra.mxu0 %v348
        %2745 = vmatmul.bf16.gmra.mxu0 %v2673
        %v2746 = vpop.f32.mrf.mxu0
        %v2747 = vadd.f32 0.0, %v2746
        %v2748 = vpop.f32.mrf.mxu0
        %v2749 = vadd.f32 0.0, %v2748
        %2750 = vmatmul.bf16.gmra.mxu0 %v2675
        %v2751 = vpop.f32.mrf.mxu0
        %v2752 = vadd.f32 0.0, %v2751
        %v2753 = vpop.f32.mrf.mxu0
        %v2754 = vadd.f32 0.0, %v2753
        %2755 = vmatmul.bf16.gmra.mxu0 %v2677
        %v2756 = vpop.f32.mrf.mxu0
        %v2757 = vadd.f32 0.0, %v2756
        %v2758 = vpop.f32.mrf.mxu0
        %v2759 = vadd.f32 0.0, %v2758
        %2760 = vmatmul.bf16.gmra.mxu0 %v2679
        %v2761 = vpop.f32.mrf.mxu0
        %v2762 = vadd.f32 0.0, %v2761
        %v2763 = vpop.f32.mrf.mxu0
        %v2764 = vadd.f32 0.0, %v2763
        %2765 = vmatmul.bf16.gmra.mxu0 %v2681
        %v2766 = vpop.f32.mrf.mxu0
        %v2767 = vadd.f32 0.0, %v2766
        %v2768 = vpop.f32.mrf.mxu0
        %v2769 = vadd.f32 0.0, %v2768
        %2770 = vmatmul.bf16.gmra.mxu0 %v2683
        %v2771 = vpop.f32.mrf.mxu0
        %v2772 = vadd.f32 0.0, %v2771
        %v2773 = vpop.f32.mrf.mxu0
        %v2774 = vadd.f32 0.0, %v2773
        %2775 = vmatmul.bf16.gmra.mxu0 %v2685
        %v2776 = vpop.f32.mrf.mxu0
        %v2777 = vadd.f32 0.0, %v2776
        %v2778 = vpop.f32.mrf.mxu0
        %v2779 = vadd.f32 0.0, %v2778
        %2780 = vmatmul.bf16.gmra.mxu0 %v2687
        %v2781 = vpop.f32.mrf.mxu0
        %v2782 = vadd.f32 0.0, %v2781
        %v2783 = vpop.f32.mrf.mxu0
        %v2784 = vadd.f32 0.0, %v2783
        %2785 = vmatmul.bf16.gmra.mxu0 %v2689
        %v2786 = vpop.f32.mrf.mxu0
        %v2787 = vadd.f32 0.0, %v2786
        %v2788 = vpop.f32.mrf.mxu0
        %v2789 = vadd.f32 0.0, %v2788
        %2790 = vmatmul.bf16.gmra.mxu0 %v2691
        %v2791 = vpop.f32.mrf.mxu0
        %v2792 = vadd.f32 0.0, %v2791
        %v2793 = vpop.f32.mrf.mxu0
        %v2794 = vadd.f32 0.0, %v2793
        %2795 = vmatmul.bf16.gmra.mxu0 %v2693
        %v2796 = vpop.f32.mrf.mxu0
        %v2797 = vadd.f32 0.0, %v2796
        %v2798 = vpop.f32.mrf.mxu0
        %v2799 = vadd.f32 0.0, %v2798
        %2800 = vmatmul.bf16.gmra.mxu0 %v2695
        %v2801 = vpop.f32.mrf.mxu0
        %v2802 = vadd.f32 0.0, %v2801
        %v2803 = vpop.f32.mrf.mxu0
        %v2804 = vadd.f32 0.0, %v2803
        %2805 = vmatmul.bf16.gmra.mxu0 %v2697
        %v2806 = vpop.f32.mrf.mxu0
        %v2807 = vadd.f32 0.0, %v2806
        %v2808 = vpop.f32.mrf.mxu0
        %v2809 = vadd.f32 0.0, %v2808
        %2810 = vmatmul.bf16.gmra.mxu0 %v2699
        %v2811 = vpop.f32.mrf.mxu0
        %v2812 = vadd.f32 0.0, %v2811
        %v2813 = vpop.f32.mrf.mxu0
        %v2814 = vadd.f32 0.0, %v2813
        %2815 = vmatmul.bf16.gmra.mxu0 %v2701
        %v2816 = vpop.f32.mrf.mxu0
        %v2817 = vadd.f32 0.0, %v2816
        %v2818 = vpop.f32.mrf.mxu0
        %v2819 = vadd.f32 0.0, %v2818
        %2820 = vmatmul.bf16.gmra.mxu0 %v2703
        %v2821 = vpop.f32.mrf.mxu0
        %v2822 = vadd.f32 0.0, %v2821
        %v2823 = vpop.f32.mrf.mxu0
        %v2824 = vadd.f32 0.0, %v2823
        %2825 = vdwg.mxu0
        %2826 = vmatpush.bf16.msra.mxu0 %v363
        %2827 = vmatpush.bf16.msra.mxu0 %v362
        %2828 = vmatpush.bf16.msra.mxu0 %v361
        %2829 = vmatpush.bf16.msra.mxu0 %v360
        %2830 = vmatpush.bf16.msra.mxu0 %v359
        %2831 = vmatpush.bf16.msra.mxu0 %v358
        %2832 = vmatpush.bf16.msra.mxu0 %v357
        %2833 = vmatpush.bf16.msra.mxu0 %v356
        %2834 = vmatmul.bf16.gmra.mxu0 %v2674
        %v2835 = vpop.f32.mrf.mxu0
        %v2836 = vadd.f32 %v2747, %v2835
        %v2837 = vpop.f32.mrf.mxu0
        %v2838 = vadd.f32 %v2749, %v2837
        %2839 = vmatmul.bf16.gmra.mxu0 %v2676
        %v2840 = vpop.f32.mrf.mxu0
        %v2841 = vadd.f32 %v2752, %v2840
        %v2842 = vpop.f32.mrf.mxu0
        %v2843 = vadd.f32 %v2754, %v2842
        %2844 = vmatmul.bf16.gmra.mxu0 %v2678
        %v2845 = vpop.f32.mrf.mxu0
        %v2846 = vadd.f32 %v2757, %v2845
        %v2847 = vpop.f32.mrf.mxu0
        %v2848 = vadd.f32 %v2759, %v2847
        %2849 = vmatmul.bf16.gmra.mxu0 %v2680
        %v2850 = vpop.f32.mrf.mxu0
        %v2851 = vadd.f32 %v2762, %v2850
        %v2852 = vpop.f32.mrf.mxu0
        %v2853 = vadd.f32 %v2764, %v2852
        %2854 = vmatmul.bf16.gmra.mxu0 %v2682
        %v2855 = vpop.f32.mrf.mxu0
        %v2856 = vadd.f32 %v2767, %v2855
        %v2857 = vpop.f32.mrf.mxu0
        %v2858 = vadd.f32 %v2769, %v2857
        %2859 = vmatmul.bf16.gmra.mxu0 %v2684
        %v2860 = vpop.f32.mrf.mxu0
        %v2861 = vadd.f32 %v2772, %v2860
        %v2862 = vpop.f32.mrf.mxu0
        %v2863 = vadd.f32 %v2774, %v2862
        %2864 = vmatmul.bf16.gmra.mxu0 %v2686
        %v2865 = vpop.f32.mrf.mxu0
        %v2866 = vadd.f32 %v2777, %v2865
        %v2867 = vpop.f32.mrf.mxu0
        %v2868 = vadd.f32 %v2779, %v2867
        %2869 = vmatmul.bf16.gmra.mxu0 %v2688
        %v2870 = vpop.f32.mrf.mxu0
        %v2871 = vadd.f32 %v2782, %v2870
        %v2872 = vpop.f32.mrf.mxu0
        %v2873 = vadd.f32 %v2784, %v2872
        %2874 = vmatmul.bf16.gmra.mxu0 %v2690
        %v2875 = vpop.f32.mrf.mxu0
        %v2876 = vadd.f32 %v2787, %v2875
        %v2877 = vpop.f32.mrf.mxu0
        %v2878 = vadd.f32 %v2789, %v2877
        %2879 = vmatmul.bf16.gmra.mxu0 %v2692
        %v2880 = vpop.f32.mrf.mxu0
        %v2881 = vadd.f32 %v2792, %v2880
        %v2882 = vpop.f32.mrf.mxu0
        %v2883 = vadd.f32 %v2794, %v2882
        %2884 = vmatmul.bf16.gmra.mxu0 %v2694
        %v2885 = vpop.f32.mrf.mxu0
        %v2886 = vadd.f32 %v2797, %v2885
        %v2887 = vpop.f32.mrf.mxu0
        %v2888 = vadd.f32 %v2799, %v2887
        %2889 = vmatmul.bf16.gmra.mxu0 %v2696
        %v2890 = vpop.f32.mrf.mxu0
        %v2891 = vadd.f32 %v2802, %v2890
        %v2892 = vpop.f32.mrf.mxu0
        %v2893 = vadd.f32 %v2804, %v2892
        %2894 = vmatmul.bf16.gmra.mxu0 %v2698
        %v2895 = vpop.f32.mrf.mxu0
        %v2896 = vadd.f32 %v2807, %v2895
        %v2897 = vpop.f32.mrf.mxu0
        %v2898 = vadd.f32 %v2809, %v2897
        %2899 = vmatmul.bf16.gmra.mxu0 %v2700
        %v2900 = vpop.f32.mrf.mxu0
        %v2901 = vadd.f32 %v2812, %v2900
        %v2902 = vpop.f32.mrf.mxu0
        %v2903 = vadd.f32 %v2814, %v2902
        %2904 = vmatmul.bf16.gmra.mxu0 %v2702
        %v2905 = vpop.f32.mrf.mxu0
        %v2906 = vadd.f32 %v2817, %v2905
        %v2907 = vpop.f32.mrf.mxu0
        %v2908 = vadd.f32 %v2819, %v2907
        %2909 = vmatmul.bf16.gmra.mxu0 %v2704
        %v2910 = vpop.f32.mrf.mxu0
        %v2911 = vadd.f32 %v2822, %v2910
        %v2912 = vpop.f32.mrf.mxu0
        %v2913 = vadd.f32 %v2824, %v2912
        %2914 = vdwg.mxu0
        %v2915 = vpack.c.bf16 %v2838, %v2836
        %v2916 = vpack.c.bf16 %v2843, %v2841
        %v2917 = vpack.c.bf16 %v2848, %v2846
        %v2918 = vpack.c.bf16 %v2853, %v2851
        %v2919 = vpack.c.bf16 %v2858, %v2856
        %v2920 = vpack.c.bf16 %v2863, %v2861
        %v2921 = vpack.c.bf16 %v2868, %v2866
        %v2922 = vpack.c.bf16 %v2873, %v2871
        %v2923 = vpack.c.bf16 %v2878, %v2876
        %v2924 = vpack.c.bf16 %v2883, %v2881
        %v2925 = vpack.c.bf16 %v2888, %v2886
        %v2926 = vpack.c.bf16 %v2893, %v2891
        %v2927 = vpack.c.bf16 %v2898, %v2896
        %v2928 = vpack.c.bf16 %v2903, %v2901
        %v2929 = vpack.c.bf16 %v2908, %v2906
        %v2930 = vpack.c.bf16 %v2913, %v2911
        %s2931 = scalar_lea.vmem %s2, 8
        %v2932 = vld [vmem:[%s2931] sm:$0x3]
        %v2934 = vsel %vm1140, %v2915, 0
        %v2937 = vsel %vm1140, %v2916, 0
        %v2940 = vsel %vm1140, %v2917, 0
        %v2943 = vsel %vm1140, %v2918, 0
        %v2946 = vsel %vm1140, %v2919, 0
        %v2949 = vsel %vm1140, %v2920, 0
        %v2952 = vsel %vm1140, %v2921, 0
        %v2955 = vsel %vm1140, %v2922, 0
        %v2958 = vsel %vm1140, %v2923, 0
        %v2961 = vsel %vm1140, %v2924, 0
        %v2964 = vsel %vm1140, %v2925, 0
        %v2967 = vsel %vm1140, %v2926, 0
        %v2970 = vsel %vm1140, %v2927, 0
        %v2973 = vsel %vm1140, %v2928, 0
        %v2976 = vsel %vm1140, %v2929, 0
        %v2979 = vsel %vm1140, %v2930, 0
        %v2982 = vsel %vm1189, %v2932, 0
        %2984 = vmatpush.bf16.msra.mxu0 0
        %2985 = vmatpush.bf16.msra.mxu0 0
        %2986 = vmatpush.bf16.msra.mxu0 0
        %2987 = vmatpush.bf16.msra.mxu0 0
        %2988 = vmatpush.bf16.msra.mxu0 0
        %2989 = vmatpush.bf16.msra.mxu0 0
        %2990 = vmatpush.bf16.msra.mxu0 0
        %2991 = vmatpush.bf16.msra.mxu0 %v2982
        %2992 = vmatmul.bf16.gmra.mxu0 %v2934
        %v2993 = vpop.f32.mrf.mxu0
        %v2994 = vadd.f32 0.0, %v2993
        %v2995 = vpop.f32.mrf.mxu0
        %v2996 = vadd.f32 0.0, %v2995
        %2997 = vmatmul.bf16.gmra.mxu0 %v2937
        %v2998 = vpop.f32.mrf.mxu0
        %v2999 = vadd.f32 0.0, %v2998
        %v3000 = vpop.f32.mrf.mxu0
        %v3001 = vadd.f32 0.0, %v3000
        %3002 = vmatmul.bf16.gmra.mxu0 %v2940
        %v3003 = vpop.f32.mrf.mxu0
        %v3004 = vadd.f32 0.0, %v3003
        %v3005 = vpop.f32.mrf.mxu0
        %v3006 = vadd.f32 0.0, %v3005
        %3007 = vmatmul.bf16.gmra.mxu0 %v2943
        %v3008 = vpop.f32.mrf.mxu0
        %v3009 = vadd.f32 0.0, %v3008
        %v3010 = vpop.f32.mrf.mxu0
        %v3011 = vadd.f32 0.0, %v3010
        %3012 = vmatmul.bf16.gmra.mxu0 %v2946
        %v3013 = vpop.f32.mrf.mxu0
        %v3014 = vadd.f32 0.0, %v3013
        %v3015 = vpop.f32.mrf.mxu0
        %v3016 = vadd.f32 0.0, %v3015
        %3017 = vmatmul.bf16.gmra.mxu0 %v2949
        %v3018 = vpop.f32.mrf.mxu0
        %v3019 = vadd.f32 0.0, %v3018
        %v3020 = vpop.f32.mrf.mxu0
        %v3021 = vadd.f32 0.0, %v3020
        %3022 = vmatmul.bf16.gmra.mxu0 %v2952
        %v3023 = vpop.f32.mrf.mxu0
        %v3024 = vadd.f32 0.0, %v3023
        %v3025 = vpop.f32.mrf.mxu0
        %v3026 = vadd.f32 0.0, %v3025
        %3027 = vmatmul.bf16.gmra.mxu0 %v2955
        %v3028 = vpop.f32.mrf.mxu0
        %v3029 = vadd.f32 0.0, %v3028
        %v3030 = vpop.f32.mrf.mxu0
        %v3031 = vadd.f32 0.0, %v3030
        %3032 = vmatmul.bf16.gmra.mxu0 %v2958
        %v3033 = vpop.f32.mrf.mxu0
        %v3034 = vadd.f32 0.0, %v3033
        %v3035 = vpop.f32.mrf.mxu0
        %v3036 = vadd.f32 0.0, %v3035
        %3037 = vmatmul.bf16.gmra.mxu0 %v2961
        %v3038 = vpop.f32.mrf.mxu0
        %v3039 = vadd.f32 0.0, %v3038
        %v3040 = vpop.f32.mrf.mxu0
        %v3041 = vadd.f32 0.0, %v3040
        %3042 = vmatmul.bf16.gmra.mxu0 %v2964
        %v3043 = vpop.f32.mrf.mxu0
        %v3044 = vadd.f32 0.0, %v3043
        %v3045 = vpop.f32.mrf.mxu0
        %v3046 = vadd.f32 0.0, %v3045
        %3047 = vmatmul.bf16.gmra.mxu0 %v2967
        %v3048 = vpop.f32.mrf.mxu0
        %v3049 = vadd.f32 0.0, %v3048
        %v3050 = vpop.f32.mrf.mxu0
        %v3051 = vadd.f32 0.0, %v3050
        %3052 = vmatmul.bf16.gmra.mxu0 %v2970
        %v3053 = vpop.f32.mrf.mxu0
        %v3054 = vadd.f32 0.0, %v3053
        %v3055 = vpop.f32.mrf.mxu0
        %v3056 = vadd.f32 0.0, %v3055
        %3057 = vmatmul.bf16.gmra.mxu0 %v2973
        %v3058 = vpop.f32.mrf.mxu0
        %v3059 = vadd.f32 0.0, %v3058
        %v3060 = vpop.f32.mrf.mxu0
        %v3061 = vadd.f32 0.0, %v3060
        %3062 = vmatmul.bf16.gmra.mxu0 %v2976
        %v3063 = vpop.f32.mrf.mxu0
        %v3064 = vadd.f32 0.0, %v3063
        %v3065 = vpop.f32.mrf.mxu0
        %v3066 = vadd.f32 0.0, %v3065
        %3067 = vmatmul.bf16.gmra.mxu0 %v2979
        %v3068 = vpop.f32.mrf.mxu0
        %v3069 = vadd.f32 0.0, %v3068
        %v3070 = vpop.f32.mrf.mxu0
        %v3071 = vadd.f32 0.0, %v3070
        %3072 = vdwg.mxu0
        %v3073 = vadd.f32 %v2512, %v2994
        %v3074 = vadd.f32 %v2513, %v2996
        %v3075 = vadd.f32 %v2514, %v2999
        %v3076 = vadd.f32 %v2515, %v3001
        %v3077 = vadd.f32 %v2516, %v3004
        %v3078 = vadd.f32 %v2517, %v3006
        %v3079 = vadd.f32 %v2518, %v3009
        %v3080 = vadd.f32 %v2519, %v3011
        %v3081 = vadd.f32 %v2520, %v3014
        %v3082 = vadd.f32 %v2521, %v3016
        %v3083 = vadd.f32 %v2522, %v3019
        %v3084 = vadd.f32 %v2523, %v3021
        %v3085 = vadd.f32 %v2524, %v3024
        %v3086 = vadd.f32 %v2525, %v3026
        %v3087 = vadd.f32 %v2526, %v3029
        %v3088 = vadd.f32 %v2527, %v3031
        %v3089 = vadd.f32 %v2528, %v3034
        %v3090 = vadd.f32 %v2529, %v3036
        %v3091 = vadd.f32 %v2530, %v3039
        %v3092 = vadd.f32 %v2531, %v3041
        %v3093 = vadd.f32 %v2532, %v3044
        %v3094 = vadd.f32 %v2533, %v3046
        %v3095 = vadd.f32 %v2534, %v3049
        %v3096 = vadd.f32 %v2535, %v3051
        %v3097 = vadd.f32 %v2536, %v3054
        %v3098 = vadd.f32 %v2537, %v3056
        %v3099 = vadd.f32 %v2538, %v3059
        %v3100 = vadd.f32 %v2539, %v3061
        %v3101 = vadd.f32 %v2540, %v3064
        %v3102 = vadd.f32 %v2541, %v3066
        %v3103 = vadd.f32 %v2542, %v3069
        %v3104 = vadd.f32 %v2543, %v3071
        %s3105 = scalar_lea.vmem [#allocation2], 1280
        %v3106 = vld [vmem:[%s3105] sm:$0xff]
        %v3107 = vld [vmem:[%s3105 + $0x8] sm:$0xff]
        %v3108 = vld [vmem:[%s3105 + $0x10] sm:$0xff]
        %v3109 = vld [vmem:[%s3105 + $0x18] sm:$0xff]
        %v3110 = vld [vmem:[%s3105 + $0x20] sm:$0xff]
        %v3111 = vld [vmem:[%s3105 + $0x28] sm:$0xff]
        %v3112 = vld [vmem:[%s3105 + $0x30] sm:$0xff]
        %v3113 = vld [vmem:[%s3105 + $0x38] sm:$0xff]
        %v3114 = vld [vmem:[%s3105 + $0x40] sm:$0xff]
        %v3115 = vld [vmem:[%s3105 + $0x48] sm:$0xff]
        %v3116 = vld [vmem:[%s3105 + $0x50] sm:$0xff]
        %v3117 = vld [vmem:[%s3105 + $0x58] sm:$0xff]
        %v3118 = vld [vmem:[%s3105 + $0x60] sm:$0xff]
        %v3119 = vld [vmem:[%s3105 + $0x68] sm:$0xff]
        %v3120 = vld [vmem:[%s3105 + $0x70] sm:$0xff]
        %v3121 = vld [vmem:[%s3105 + $0x78] sm:$0xff]
        %v3122 = vld [vmem:[%s3105 + $0x80] sm:$0xff]
        %v3123 = vld [vmem:[%s3105 + $0x88] sm:$0xff]
        %v3124 = vld [vmem:[%s3105 + $0x90] sm:$0xff]
        %v3125 = vld [vmem:[%s3105 + $0x98] sm:$0xff]
        %v3126 = vld [vmem:[%s3105 + $0xa0] sm:$0xff]
        %v3127 = vld [vmem:[%s3105 + $0xa8] sm:$0xff]
        %v3128 = vld [vmem:[%s3105 + $0xb0] sm:$0xff]
        %v3129 = vld [vmem:[%s3105 + $0xb8] sm:$0xff]
        %v3130 = vld [vmem:[%s3105 + $0xc0] sm:$0xff]
        %v3131 = vld [vmem:[%s3105 + $0xc8] sm:$0xff]
        %v3132 = vld [vmem:[%s3105 + $0xd0] sm:$0xff]
        %v3133 = vld [vmem:[%s3105 + $0xd8] sm:$0xff]
        %v3134 = vld [vmem:[%s3105 + $0xe0] sm:$0xff]
        %v3135 = vld [vmem:[%s3105 + $0xe8] sm:$0xff]
        %v3136 = vld [vmem:[%s3105 + $0xf0] sm:$0xff]
        %v3137 = vld [vmem:[%s3105 + $0xf8] sm:$0xff]
        %v3170 = vunpack.c.l.b16 %v3106
        %v3171 = vunpack.c.h.b16 %v3106
        %v3172 = vunpack.c.l.b16 %v3107
        %v3173 = vunpack.c.h.b16 %v3107
        %v3174 = vunpack.c.l.b16 %v3108
        %v3175 = vunpack.c.h.b16 %v3108
        %v3176 = vunpack.c.l.b16 %v3109
        %v3177 = vunpack.c.h.b16 %v3109
        %v3178 = vunpack.c.l.b16 %v3110
        %v3179 = vunpack.c.h.b16 %v3110
        %v3180 = vunpack.c.l.b16 %v3111
        %v3181 = vunpack.c.h.b16 %v3111
        %v3182 = vunpack.c.l.b16 %v3112
        %v3183 = vunpack.c.h.b16 %v3112
        %v3184 = vunpack.c.l.b16 %v3113
        %v3185 = vunpack.c.h.b16 %v3113
        %v3186 = vunpack.c.l.b16 %v3114
        %v3187 = vunpack.c.h.b16 %v3114
        %v3188 = vunpack.c.l.b16 %v3115
        %v3189 = vunpack.c.h.b16 %v3115
        %v3190 = vunpack.c.l.b16 %v3116
        %v3191 = vunpack.c.h.b16 %v3116
        %v3192 = vunpack.c.l.b16 %v3117
        %v3193 = vunpack.c.h.b16 %v3117
        %v3194 = vunpack.c.l.b16 %v3118
        %v3195 = vunpack.c.h.b16 %v3118
        %v3196 = vunpack.c.l.b16 %v3119
        %v3197 = vunpack.c.h.b16 %v3119
        %v3198 = vunpack.c.l.b16 %v3120
        %v3199 = vunpack.c.h.b16 %v3120
        %v3200 = vunpack.c.l.b16 %v3121
        %v3201 = vunpack.c.h.b16 %v3121
        %v3202 = vunpack.c.l.b16 %v3122
        %v3203 = vunpack.c.h.b16 %v3122
        %v3204 = vunpack.c.l.b16 %v3123
        %v3205 = vunpack.c.h.b16 %v3123
        %v3206 = vunpack.c.l.b16 %v3124
        %v3207 = vunpack.c.h.b16 %v3124
        %v3208 = vunpack.c.l.b16 %v3125
        %v3209 = vunpack.c.h.b16 %v3125
        %v3210 = vunpack.c.l.b16 %v3126
        %v3211 = vunpack.c.h.b16 %v3126
        %v3212 = vunpack.c.l.b16 %v3127
        %v3213 = vunpack.c.h.b16 %v3127
        %v3214 = vunpack.c.l.b16 %v3128
        %v3215 = vunpack.c.h.b16 %v3128
        %v3216 = vunpack.c.l.b16 %v3129
        %v3217 = vunpack.c.h.b16 %v3129
        %v3218 = vunpack.c.l.b16 %v3130
        %v3219 = vunpack.c.h.b16 %v3130
        %v3220 = vunpack.c.l.b16 %v3131
        %v3221 = vunpack.c.h.b16 %v3131
        %v3222 = vunpack.c.l.b16 %v3132
        %v3223 = vunpack.c.h.b16 %v3132
        %v3224 = vunpack.c.l.b16 %v3133
        %v3225 = vunpack.c.h.b16 %v3133
        %v3226 = vunpack.c.l.b16 %v3134
        %v3227 = vunpack.c.h.b16 %v3134
        %v3228 = vunpack.c.l.b16 %v3135
        %v3229 = vunpack.c.h.b16 %v3135
        %v3230 = vunpack.c.l.b16 %v3136
        %v3231 = vunpack.c.h.b16 %v3136
        %v3232 = vunpack.c.l.b16 %v3137
        %v3233 = vunpack.c.h.b16 %v3137
        %v3234 = vpack.c.b16 %v3172, %v3170
        %v3235 = vpack.c.b16 %v3173, %v3171
        %v3236 = vpack.c.b16 %v3176, %v3174
        %v3237 = vpack.c.b16 %v3177, %v3175
        %v3238 = vpack.c.b16 %v3180, %v3178
        %v3239 = vpack.c.b16 %v3181, %v3179
        %v3240 = vpack.c.b16 %v3184, %v3182
        %v3241 = vpack.c.b16 %v3185, %v3183
        %v3242 = vpack.c.b16 %v3188, %v3186
        %v3243 = vpack.c.b16 %v3189, %v3187
        %v3244 = vpack.c.b16 %v3192, %v3190
        %v3245 = vpack.c.b16 %v3193, %v3191
        %v3246 = vpack.c.b16 %v3196, %v3194
        %v3247 = vpack.c.b16 %v3197, %v3195
        %v3248 = vpack.c.b16 %v3200, %v3198
        %v3249 = vpack.c.b16 %v3201, %v3199
        %v3250 = vpack.c.b16 %v3204, %v3202
        %v3251 = vpack.c.b16 %v3205, %v3203
        %v3252 = vpack.c.b16 %v3208, %v3206
        %v3253 = vpack.c.b16 %v3209, %v3207
        %v3254 = vpack.c.b16 %v3212, %v3210
        %v3255 = vpack.c.b16 %v3213, %v3211
        %v3256 = vpack.c.b16 %v3216, %v3214
        %v3257 = vpack.c.b16 %v3217, %v3215
        %v3258 = vpack.c.b16 %v3220, %v3218
        %v3259 = vpack.c.b16 %v3221, %v3219
        %v3260 = vpack.c.b16 %v3224, %v3222
        %v3261 = vpack.c.b16 %v3225, %v3223
        %v3262 = vpack.c.b16 %v3228, %v3226
        %v3263 = vpack.c.b16 %v3229, %v3227
        %v3264 = vpack.c.b16 %v3232, %v3230
        %v3265 = vpack.c.b16 %v3233, %v3231
        %3298 = vmatpush.bf16.msra.mxu0 %v355
        %3299 = vmatpush.bf16.msra.mxu0 %v354
        %3300 = vmatpush.bf16.msra.mxu0 %v353
        %3301 = vmatpush.bf16.msra.mxu0 %v352
        %3302 = vmatpush.bf16.msra.mxu0 %v351
        %3303 = vmatpush.bf16.msra.mxu0 %v350
        %3304 = vmatpush.bf16.msra.mxu0 %v349
        %3305 = vmatpush.bf16.msra.mxu0 %v348
        %3306 = vmatmul.bf16.gmra.mxu0 %v3234
        %v3307 = vpop.f32.mrf.mxu0
        %v3308 = vadd.f32 0.0, %v3307
        %v3309 = vpop.f32.mrf.mxu0
        %v3310 = vadd.f32 0.0, %v3309
        %3311 = vmatmul.bf16.gmra.mxu0 %v3236
        %v3312 = vpop.f32.mrf.mxu0
        %v3313 = vadd.f32 0.0, %v3312
        %v3314 = vpop.f32.mrf.mxu0
        %v3315 = vadd.f32 0.0, %v3314
        %3316 = vmatmul.bf16.gmra.mxu0 %v3238
        %v3317 = vpop.f32.mrf.mxu0
        %v3318 = vadd.f32 0.0, %v3317
        %v3319 = vpop.f32.mrf.mxu0
        %v3320 = vadd.f32 0.0, %v3319
        %3321 = vmatmul.bf16.gmra.mxu0 %v3240
        %v3322 = vpop.f32.mrf.mxu0
        %v3323 = vadd.f32 0.0, %v3322
        %v3324 = vpop.f32.mrf.mxu0
        %v3325 = vadd.f32 0.0, %v3324
        %3326 = vmatmul.bf16.gmra.mxu0 %v3242
        %v3327 = vpop.f32.mrf.mxu0
        %v3328 = vadd.f32 0.0, %v3327
        %v3329 = vpop.f32.mrf.mxu0
        %v3330 = vadd.f32 0.0, %v3329
        %3331 = vmatmul.bf16.gmra.mxu0 %v3244
        %v3332 = vpop.f32.mrf.mxu0
        %v3333 = vadd.f32 0.0, %v3332
        %v3334 = vpop.f32.mrf.mxu0
        %v3335 = vadd.f32 0.0, %v3334
        %3336 = vmatmul.bf16.gmra.mxu0 %v3246
        %v3337 = vpop.f32.mrf.mxu0
        %v3338 = vadd.f32 0.0, %v3337
        %v3339 = vpop.f32.mrf.mxu0
        %v3340 = vadd.f32 0.0, %v3339
        %3341 = vmatmul.bf16.gmra.mxu0 %v3248
        %v3342 = vpop.f32.mrf.mxu0
        %v3343 = vadd.f32 0.0, %v3342
        %v3344 = vpop.f32.mrf.mxu0
        %v3345 = vadd.f32 0.0, %v3344
        %3346 = vmatmul.bf16.gmra.mxu0 %v3250
        %v3347 = vpop.f32.mrf.mxu0
        %v3348 = vadd.f32 0.0, %v3347
        %v3349 = vpop.f32.mrf.mxu0
        %v3350 = vadd.f32 0.0, %v3349
        %3351 = vmatmul.bf16.gmra.mxu0 %v3252
        %v3352 = vpop.f32.mrf.mxu0
        %v3353 = vadd.f32 0.0, %v3352
        %v3354 = vpop.f32.mrf.mxu0
        %v3355 = vadd.f32 0.0, %v3354
        %3356 = vmatmul.bf16.gmra.mxu0 %v3254
        %v3357 = vpop.f32.mrf.mxu0
        %v3358 = vadd.f32 0.0, %v3357
        %v3359 = vpop.f32.mrf.mxu0
        %v3360 = vadd.f32 0.0, %v3359
        %3361 = vmatmul.bf16.gmra.mxu0 %v3256
        %v3362 = vpop.f32.mrf.mxu0
        %v3363 = vadd.f32 0.0, %v3362
        %v3364 = vpop.f32.mrf.mxu0
        %v3365 = vadd.f32 0.0, %v3364
        %3366 = vmatmul.bf16.gmra.mxu0 %v3258
        %v3367 = vpop.f32.mrf.mxu0
        %v3368 = vadd.f32 0.0, %v3367
        %v3369 = vpop.f32.mrf.mxu0
        %v3370 = vadd.f32 0.0, %v3369
        %3371 = vmatmul.bf16.gmra.mxu0 %v3260
        %v3372 = vpop.f32.mrf.mxu0
        %v3373 = vadd.f32 0.0, %v3372
        %v3374 = vpop.f32.mrf.mxu0
        %v3375 = vadd.f32 0.0, %v3374
        %3376 = vmatmul.bf16.gmra.mxu0 %v3262
        %v3377 = vpop.f32.mrf.mxu0
        %v3378 = vadd.f32 0.0, %v3377
        %v3379 = vpop.f32.mrf.mxu0
        %v3380 = vadd.f32 0.0, %v3379
        %3381 = vmatmul.bf16.gmra.mxu0 %v3264
        %v3382 = vpop.f32.mrf.mxu0
        %v3383 = vadd.f32 0.0, %v3382
        %v3384 = vpop.f32.mrf.mxu0
        %v3385 = vadd.f32 0.0, %v3384
        %3386 = vdwg.mxu0
        %3387 = vmatpush.bf16.msra.mxu0 %v363
        %3388 = vmatpush.bf16.msra.mxu0 %v362
        %3389 = vmatpush.bf16.msra.mxu0 %v361
        %3390 = vmatpush.bf16.msra.mxu0 %v360
        %3391 = vmatpush.bf16.msra.mxu0 %v359
        %3392 = vmatpush.bf16.msra.mxu0 %v358
        %3393 = vmatpush.bf16.msra.mxu0 %v357
        %3394 = vmatpush.bf16.msra.mxu0 %v356
        %3395 = vmatmul.bf16.gmra.mxu0 %v3235
        %v3396 = vpop.f32.mrf.mxu0
        %v3397 = vadd.f32 %v3308, %v3396
        %v3398 = vpop.f32.mrf.mxu0
        %v3399 = vadd.f32 %v3310, %v3398
        %3400 = vmatmul.bf16.gmra.mxu0 %v3237
        %v3401 = vpop.f32.mrf.mxu0
        %v3402 = vadd.f32 %v3313, %v3401
        %v3403 = vpop.f32.mrf.mxu0
        %v3404 = vadd.f32 %v3315, %v3403
        %3405 = vmatmul.bf16.gmra.mxu0 %v3239
        %v3406 = vpop.f32.mrf.mxu0
        %v3407 = vadd.f32 %v3318, %v3406
        %v3408 = vpop.f32.mrf.mxu0
        %v3409 = vadd.f32 %v3320, %v3408
        %3410 = vmatmul.bf16.gmra.mxu0 %v3241
        %v3411 = vpop.f32.mrf.mxu0
        %v3412 = vadd.f32 %v3323, %v3411
        %v3413 = vpop.f32.mrf.mxu0
        %v3414 = vadd.f32 %v3325, %v3413
        %3415 = vmatmul.bf16.gmra.mxu0 %v3243
        %v3416 = vpop.f32.mrf.mxu0
        %v3417 = vadd.f32 %v3328, %v3416
        %v3418 = vpop.f32.mrf.mxu0
        %v3419 = vadd.f32 %v3330, %v3418
        %3420 = vmatmul.bf16.gmra.mxu0 %v3245
        %v3421 = vpop.f32.mrf.mxu0
        %v3422 = vadd.f32 %v3333, %v3421
        %v3423 = vpop.f32.mrf.mxu0
        %v3424 = vadd.f32 %v3335, %v3423
        %3425 = vmatmul.bf16.gmra.mxu0 %v3247
        %v3426 = vpop.f32.mrf.mxu0
        %v3427 = vadd.f32 %v3338, %v3426
        %v3428 = vpop.f32.mrf.mxu0
        %v3429 = vadd.f32 %v3340, %v3428
        %3430 = vmatmul.bf16.gmra.mxu0 %v3249
        %v3431 = vpop.f32.mrf.mxu0
        %v3432 = vadd.f32 %v3343, %v3431
        %v3433 = vpop.f32.mrf.mxu0
        %v3434 = vadd.f32 %v3345, %v3433
        %3435 = vmatmul.bf16.gmra.mxu0 %v3251
        %v3436 = vpop.f32.mrf.mxu0
        %v3437 = vadd.f32 %v3348, %v3436
        %v3438 = vpop.f32.mrf.mxu0
        %v3439 = vadd.f32 %v3350, %v3438
        %3440 = vmatmul.bf16.gmra.mxu0 %v3253
        %v3441 = vpop.f32.mrf.mxu0
        %v3442 = vadd.f32 %v3353, %v3441
        %v3443 = vpop.f32.mrf.mxu0
        %v3444 = vadd.f32 %v3355, %v3443
        %3445 = vmatmul.bf16.gmra.mxu0 %v3255
        %v3446 = vpop.f32.mrf.mxu0
        %v3447 = vadd.f32 %v3358, %v3446
        %v3448 = vpop.f32.mrf.mxu0
        %v3449 = vadd.f32 %v3360, %v3448
        %3450 = vmatmul.bf16.gmra.mxu0 %v3257
        %v3451 = vpop.f32.mrf.mxu0
        %v3452 = vadd.f32 %v3363, %v3451
        %v3453 = vpop.f32.mrf.mxu0
        %v3454 = vadd.f32 %v3365, %v3453
        %3455 = vmatmul.bf16.gmra.mxu0 %v3259
        %v3456 = vpop.f32.mrf.mxu0
        %v3457 = vadd.f32 %v3368, %v3456
        %v3458 = vpop.f32.mrf.mxu0
        %v3459 = vadd.f32 %v3370, %v3458
        %3460 = vmatmul.bf16.gmra.mxu0 %v3261
        %v3461 = vpop.f32.mrf.mxu0
        %v3462 = vadd.f32 %v3373, %v3461
        %v3463 = vpop.f32.mrf.mxu0
        %v3464 = vadd.f32 %v3375, %v3463
        %3465 = vmatmul.bf16.gmra.mxu0 %v3263
        %v3466 = vpop.f32.mrf.mxu0
        %v3467 = vadd.f32 %v3378, %v3466
        %v3468 = vpop.f32.mrf.mxu0
        %v3469 = vadd.f32 %v3380, %v3468
        %3470 = vmatmul.bf16.gmra.mxu0 %v3265
        %v3471 = vpop.f32.mrf.mxu0
        %v3472 = vadd.f32 %v3383, %v3471
        %v3473 = vpop.f32.mrf.mxu0
        %v3474 = vadd.f32 %v3385, %v3473
        %3475 = vdwg.mxu0
        %v3476 = vpack.c.bf16 %v3399, %v3397
        %v3477 = vpack.c.bf16 %v3404, %v3402
        %v3478 = vpack.c.bf16 %v3409, %v3407
        %v3479 = vpack.c.bf16 %v3414, %v3412
        %v3480 = vpack.c.bf16 %v3419, %v3417
        %v3481 = vpack.c.bf16 %v3424, %v3422
        %v3482 = vpack.c.bf16 %v3429, %v3427
        %v3483 = vpack.c.bf16 %v3434, %v3432
        %v3484 = vpack.c.bf16 %v3439, %v3437
        %v3485 = vpack.c.bf16 %v3444, %v3442
        %v3486 = vpack.c.bf16 %v3449, %v3447
        %v3487 = vpack.c.bf16 %v3454, %v3452
        %v3488 = vpack.c.bf16 %v3459, %v3457
        %v3489 = vpack.c.bf16 %v3464, %v3462
        %v3490 = vpack.c.bf16 %v3469, %v3467
        %v3491 = vpack.c.bf16 %v3474, %v3472
        %s3492 = scalar_lea.vmem %s2, 10
        %v3493 = vld [vmem:[%s3492] sm:$0x3]
        %v3495 = vsel %vm1140, %v3476, 0
        %v3498 = vsel %vm1140, %v3477, 0
        %v3501 = vsel %vm1140, %v3478, 0
        %v3504 = vsel %vm1140, %v3479, 0
        %v3507 = vsel %vm1140, %v3480, 0
        %v3510 = vsel %vm1140, %v3481, 0
        %v3513 = vsel %vm1140, %v3482, 0
        %v3516 = vsel %vm1140, %v3483, 0
        %v3519 = vsel %vm1140, %v3484, 0
        %v3522 = vsel %vm1140, %v3485, 0
        %v3525 = vsel %vm1140, %v3486, 0
        %v3528 = vsel %vm1140, %v3487, 0
        %v3531 = vsel %vm1140, %v3488, 0
        %v3534 = vsel %vm1140, %v3489, 0
        %v3537 = vsel %vm1140, %v3490, 0
        %v3540 = vsel %vm1140, %v3491, 0
        %v3543 = vsel %vm1189, %v3493, 0
        %3545 = vmatpush.bf16.msra.mxu0 0
        %3546 = vmatpush.bf16.msra.mxu0 0
        %3547 = vmatpush.bf16.msra.mxu0 0
        %3548 = vmatpush.bf16.msra.mxu0 0
        %3549 = vmatpush.bf16.msra.mxu0 0
        %3550 = vmatpush.bf16.msra.mxu0 0
        %3551 = vmatpush.bf16.msra.mxu0 0
        %3552 = vmatpush.bf16.msra.mxu0 %v3543
        %3553 = vmatmul.bf16.gmra.mxu0 %v3495
        %v3554 = vpop.f32.mrf.mxu0
        %v3555 = vadd.f32 0.0, %v3554
        %v3556 = vpop.f32.mrf.mxu0
        %v3557 = vadd.f32 0.0, %v3556
        %3558 = vmatmul.bf16.gmra.mxu0 %v3498
        %v3559 = vpop.f32.mrf.mxu0
        %v3560 = vadd.f32 0.0, %v3559
        %v3561 = vpop.f32.mrf.mxu0
        %v3562 = vadd.f32 0.0, %v3561
        %3563 = vmatmul.bf16.gmra.mxu0 %v3501
        %v3564 = vpop.f32.mrf.mxu0
        %v3565 = vadd.f32 0.0, %v3564
        %v3566 = vpop.f32.mrf.mxu0
        %v3567 = vadd.f32 0.0, %v3566
        %3568 = vmatmul.bf16.gmra.mxu0 %v3504
        %v3569 = vpop.f32.mrf.mxu0
        %v3570 = vadd.f32 0.0, %v3569
        %v3571 = vpop.f32.mrf.mxu0
        %v3572 = vadd.f32 0.0, %v3571
        %3573 = vmatmul.bf16.gmra.mxu0 %v3507
        %v3574 = vpop.f32.mrf.mxu0
        %v3575 = vadd.f32 0.0, %v3574
        %v3576 = vpop.f32.mrf.mxu0
        %v3577 = vadd.f32 0.0, %v3576
        %3578 = vmatmul.bf16.gmra.mxu0 %v3510
        %v3579 = vpop.f32.mrf.mxu0
        %v3580 = vadd.f32 0.0, %v3579
        %v3581 = vpop.f32.mrf.mxu0
        %v3582 = vadd.f32 0.0, %v3581
        %3583 = vmatmul.bf16.gmra.mxu0 %v3513
        %v3584 = vpop.f32.mrf.mxu0
        %v3585 = vadd.f32 0.0, %v3584
        %v3586 = vpop.f32.mrf.mxu0
        %v3587 = vadd.f32 0.0, %v3586
        %3588 = vmatmul.bf16.gmra.mxu0 %v3516
        %v3589 = vpop.f32.mrf.mxu0
        %v3590 = vadd.f32 0.0, %v3589
        %v3591 = vpop.f32.mrf.mxu0
        %v3592 = vadd.f32 0.0, %v3591
        %3593 = vmatmul.bf16.gmra.mxu0 %v3519
        %v3594 = vpop.f32.mrf.mxu0
        %v3595 = vadd.f32 0.0, %v3594
        %v3596 = vpop.f32.mrf.mxu0
        %v3597 = vadd.f32 0.0, %v3596
        %3598 = vmatmul.bf16.gmra.mxu0 %v3522
        %v3599 = vpop.f32.mrf.mxu0
        %v3600 = vadd.f32 0.0, %v3599
        %v3601 = vpop.f32.mrf.mxu0
        %v3602 = vadd.f32 0.0, %v3601
        %3603 = vmatmul.bf16.gmra.mxu0 %v3525
        %v3604 = vpop.f32.mrf.mxu0
        %v3605 = vadd.f32 0.0, %v3604
        %v3606 = vpop.f32.mrf.mxu0
        %v3607 = vadd.f32 0.0, %v3606
        %3608 = vmatmul.bf16.gmra.mxu0 %v3528
        %v3609 = vpop.f32.mrf.mxu0
        %v3610 = vadd.f32 0.0, %v3609
        %v3611 = vpop.f32.mrf.mxu0
        %v3612 = vadd.f32 0.0, %v3611
        %3613 = vmatmul.bf16.gmra.mxu0 %v3531
        %v3614 = vpop.f32.mrf.mxu0
        %v3615 = vadd.f32 0.0, %v3614
        %v3616 = vpop.f32.mrf.mxu0
        %v3617 = vadd.f32 0.0, %v3616
        %3618 = vmatmul.bf16.gmra.mxu0 %v3534
        %v3619 = vpop.f32.mrf.mxu0
        %v3620 = vadd.f32 0.0, %v3619
        %v3621 = vpop.f32.mrf.mxu0
        %v3622 = vadd.f32 0.0, %v3621
        %3623 = vmatmul.bf16.gmra.mxu0 %v3537
        %v3624 = vpop.f32.mrf.mxu0
        %v3625 = vadd.f32 0.0, %v3624
        %v3626 = vpop.f32.mrf.mxu0
        %v3627 = vadd.f32 0.0, %v3626
        %3628 = vmatmul.bf16.gmra.mxu0 %v3540
        %v3629 = vpop.f32.mrf.mxu0
        %v3630 = vadd.f32 0.0, %v3629
        %v3631 = vpop.f32.mrf.mxu0
        %v3632 = vadd.f32 0.0, %v3631
        %3633 = vdwg.mxu0
        %v3634 = vadd.f32 %v3073, %v3555
        %v3635 = vadd.f32 %v3074, %v3557
        %v3636 = vadd.f32 %v3075, %v3560
        %v3637 = vadd.f32 %v3076, %v3562
        %v3638 = vadd.f32 %v3077, %v3565
        %v3639 = vadd.f32 %v3078, %v3567
        %v3640 = vadd.f32 %v3079, %v3570
        %v3641 = vadd.f32 %v3080, %v3572
        %v3642 = vadd.f32 %v3081, %v3575
        %v3643 = vadd.f32 %v3082, %v3577
        %v3644 = vadd.f32 %v3083, %v3580
        %v3645 = vadd.f32 %v3084, %v3582
        %v3646 = vadd.f32 %v3085, %v3585
        %v3647 = vadd.f32 %v3086, %v3587
        %v3648 = vadd.f32 %v3087, %v3590
        %v3649 = vadd.f32 %v3088, %v3592
        %v3650 = vadd.f32 %v3089, %v3595
        %v3651 = vadd.f32 %v3090, %v3597
        %v3652 = vadd.f32 %v3091, %v3600
        %v3653 = vadd.f32 %v3092, %v3602
        %v3654 = vadd.f32 %v3093, %v3605
        %v3655 = vadd.f32 %v3094, %v3607
        %v3656 = vadd.f32 %v3095, %v3610
        %v3657 = vadd.f32 %v3096, %v3612
        %v3658 = vadd.f32 %v3097, %v3615
        %v3659 = vadd.f32 %v3098, %v3617
        %v3660 = vadd.f32 %v3099, %v3620
        %v3661 = vadd.f32 %v3100, %v3622
        %v3662 = vadd.f32 %v3101, %v3625
        %v3663 = vadd.f32 %v3102, %v3627
        %v3664 = vadd.f32 %v3103, %v3630
        %v3665 = vadd.f32 %v3104, %v3632
        %s3666 = scalar_lea.vmem [#allocation2], 1536
        %v3667 = vld [vmem:[%s3666] sm:$0xff]
        %v3668 = vld [vmem:[%s3666 + $0x8] sm:$0xff]
        %v3669 = vld [vmem:[%s3666 + $0x10] sm:$0xff]
        %v3670 = vld [vmem:[%s3666 + $0x18] sm:$0xff]
        %v3671 = vld [vmem:[%s3666 + $0x20] sm:$0xff]
        %v3672 = vld [vmem:[%s3666 + $0x28] sm:$0xff]
        %v3673 = vld [vmem:[%s3666 + $0x30] sm:$0xff]
        %v3674 = vld [vmem:[%s3666 + $0x38] sm:$0xff]
        %v3675 = vld [vmem:[%s3666 + $0x40] sm:$0xff]
        %v3676 = vld [vmem:[%s3666 + $0x48] sm:$0xff]
        %v3677 = vld [vmem:[%s3666 + $0x50] sm:$0xff]
        %v3678 = vld [vmem:[%s3666 + $0x58] sm:$0xff]
        %v3679 = vld [vmem:[%s3666 + $0x60] sm:$0xff]
        %v3680 = vld [vmem:[%s3666 + $0x68] sm:$0xff]
        %v3681 = vld [vmem:[%s3666 + $0x70] sm:$0xff]
        %v3682 = vld [vmem:[%s3666 + $0x78] sm:$0xff]
        %v3683 = vld [vmem:[%s3666 + $0x80] sm:$0xff]
        %v3684 = vld [vmem:[%s3666 + $0x88] sm:$0xff]
        %v3685 = vld [vmem:[%s3666 + $0x90] sm:$0xff]
        %v3686 = vld [vmem:[%s3666 + $0x98] sm:$0xff]
        %v3687 = vld [vmem:[%s3666 + $0xa0] sm:$0xff]
        %v3688 = vld [vmem:[%s3666 + $0xa8] sm:$0xff]
        %v3689 = vld [vmem:[%s3666 + $0xb0] sm:$0xff]
        %v3690 = vld [vmem:[%s3666 + $0xb8] sm:$0xff]
        %v3691 = vld [vmem:[%s3666 + $0xc0] sm:$0xff]
        %v3692 = vld [vmem:[%s3666 + $0xc8] sm:$0xff]
        %v3693 = vld [vmem:[%s3666 + $0xd0] sm:$0xff]
        %v3694 = vld [vmem:[%s3666 + $0xd8] sm:$0xff]
        %v3695 = vld [vmem:[%s3666 + $0xe0] sm:$0xff]
        %v3696 = vld [vmem:[%s3666 + $0xe8] sm:$0xff]
        %v3697 = vld [vmem:[%s3666 + $0xf0] sm:$0xff]
        %v3698 = vld [vmem:[%s3666 + $0xf8] sm:$0xff]
        %v3731 = vunpack.c.l.b16 %v3667
        %v3732 = vunpack.c.h.b16 %v3667
        %v3733 = vunpack.c.l.b16 %v3668
        %v3734 = vunpack.c.h.b16 %v3668
        %v3735 = vunpack.c.l.b16 %v3669
        %v3736 = vunpack.c.h.b16 %v3669
        %v3737 = vunpack.c.l.b16 %v3670
        %v3738 = vunpack.c.h.b16 %v3670
        %v3739 = vunpack.c.l.b16 %v3671
        %v3740 = vunpack.c.h.b16 %v3671
        %v3741 = vunpack.c.l.b16 %v3672
        %v3742 = vunpack.c.h.b16 %v3672
        %v3743 = vunpack.c.l.b16 %v3673
        %v3744 = vunpack.c.h.b16 %v3673
        %v3745 = vunpack.c.l.b16 %v3674
        %v3746 = vunpack.c.h.b16 %v3674
        %v3747 = vunpack.c.l.b16 %v3675
        %v3748 = vunpack.c.h.b16 %v3675
        %v3749 = vunpack.c.l.b16 %v3676
        %v3750 = vunpack.c.h.b16 %v3676
        %v3751 = vunpack.c.l.b16 %v3677
        %v3752 = vunpack.c.h.b16 %v3677
        %v3753 = vunpack.c.l.b16 %v3678
        %v3754 = vunpack.c.h.b16 %v3678
        %v3755 = vunpack.c.l.b16 %v3679
        %v3756 = vunpack.c.h.b16 %v3679
        %v3757 = vunpack.c.l.b16 %v3680
        %v3758 = vunpack.c.h.b16 %v3680
        %v3759 = vunpack.c.l.b16 %v3681
        %v3760 = vunpack.c.h.b16 %v3681
        %v3761 = vunpack.c.l.b16 %v3682
        %v3762 = vunpack.c.h.b16 %v3682
        %v3763 = vunpack.c.l.b16 %v3683
        %v3764 = vunpack.c.h.b16 %v3683
        %v3765 = vunpack.c.l.b16 %v3684
        %v3766 = vunpack.c.h.b16 %v3684
        %v3767 = vunpack.c.l.b16 %v3685
        %v3768 = vunpack.c.h.b16 %v3685
        %v3769 = vunpack.c.l.b16 %v3686
        %v3770 = vunpack.c.h.b16 %v3686
        %v3771 = vunpack.c.l.b16 %v3687
        %v3772 = vunpack.c.h.b16 %v3687
        %v3773 = vunpack.c.l.b16 %v3688
        %v3774 = vunpack.c.h.b16 %v3688
        %v3775 = vunpack.c.l.b16 %v3689
        %v3776 = vunpack.c.h.b16 %v3689
        %v3777 = vunpack.c.l.b16 %v3690
        %v3778 = vunpack.c.h.b16 %v3690
        %v3779 = vunpack.c.l.b16 %v3691
        %v3780 = vunpack.c.h.b16 %v3691
        %v3781 = vunpack.c.l.b16 %v3692
        %v3782 = vunpack.c.h.b16 %v3692
        %v3783 = vunpack.c.l.b16 %v3693
        %v3784 = vunpack.c.h.b16 %v3693
        %v3785 = vunpack.c.l.b16 %v3694
        %v3786 = vunpack.c.h.b16 %v3694
        %v3787 = vunpack.c.l.b16 %v3695
        %v3788 = vunpack.c.h.b16 %v3695
        %v3789 = vunpack.c.l.b16 %v3696
        %v3790 = vunpack.c.h.b16 %v3696
        %v3791 = vunpack.c.l.b16 %v3697
        %v3792 = vunpack.c.h.b16 %v3697
        %v3793 = vunpack.c.l.b16 %v3698
        %v3794 = vunpack.c.h.b16 %v3698
        %v3795 = vpack.c.b16 %v3733, %v3731
        %v3796 = vpack.c.b16 %v3734, %v3732
        %v3797 = vpack.c.b16 %v3737, %v3735
        %v3798 = vpack.c.b16 %v3738, %v3736
        %v3799 = vpack.c.b16 %v3741, %v3739
        %v3800 = vpack.c.b16 %v3742, %v3740
        %v3801 = vpack.c.b16 %v3745, %v3743
        %v3802 = vpack.c.b16 %v3746, %v3744
        %v3803 = vpack.c.b16 %v3749, %v3747
        %v3804 = vpack.c.b16 %v3750, %v3748
        %v3805 = vpack.c.b16 %v3753, %v3751
        %v3806 = vpack.c.b16 %v3754, %v3752
        %v3807 = vpack.c.b16 %v3757, %v3755
        %v3808 = vpack.c.b16 %v3758, %v3756
        %v3809 = vpack.c.b16 %v3761, %v3759
        %v3810 = vpack.c.b16 %v3762, %v3760
        %v3811 = vpack.c.b16 %v3765, %v3763
        %v3812 = vpack.c.b16 %v3766, %v3764
        %v3813 = vpack.c.b16 %v3769, %v3767
        %v3814 = vpack.c.b16 %v3770, %v3768
        %v3815 = vpack.c.b16 %v3773, %v3771
        %v3816 = vpack.c.b16 %v3774, %v3772
        %v3817 = vpack.c.b16 %v3777, %v3775
        %v3818 = vpack.c.b16 %v3778, %v3776
        %v3819 = vpack.c.b16 %v3781, %v3779
        %v3820 = vpack.c.b16 %v3782, %v3780
        %v3821 = vpack.c.b16 %v3785, %v3783
        %v3822 = vpack.c.b16 %v3786, %v3784
        %v3823 = vpack.c.b16 %v3789, %v3787
        %v3824 = vpack.c.b16 %v3790, %v3788
        %v3825 = vpack.c.b16 %v3793, %v3791
        %v3826 = vpack.c.b16 %v3794, %v3792
        %3859 = vmatpush.bf16.msra.mxu0 %v355
        %3860 = vmatpush.bf16.msra.mxu0 %v354
        %3861 = vmatpush.bf16.msra.mxu0 %v353
        %3862 = vmatpush.bf16.msra.mxu0 %v352
        %3863 = vmatpush.bf16.msra.mxu0 %v351
        %3864 = vmatpush.bf16.msra.mxu0 %v350
        %3865 = vmatpush.bf16.msra.mxu0 %v349
        %3866 = vmatpush.bf16.msra.mxu0 %v348
        %3867 = vmatmul.bf16.gmra.mxu0 %v3795
        %v3868 = vpop.f32.mrf.mxu0
        %v3869 = vadd.f32 0.0, %v3868
        %v3870 = vpop.f32.mrf.mxu0
        %v3871 = vadd.f32 0.0, %v3870
        %3872 = vmatmul.bf16.gmra.mxu0 %v3797
        %v3873 = vpop.f32.mrf.mxu0
        %v3874 = vadd.f32 0.0, %v3873
        %v3875 = vpop.f32.mrf.mxu0
        %v3876 = vadd.f32 0.0, %v3875
        %3877 = vmatmul.bf16.gmra.mxu0 %v3799
        %v3878 = vpop.f32.mrf.mxu0
        %v3879 = vadd.f32 0.0, %v3878
        %v3880 = vpop.f32.mrf.mxu0
        %v3881 = vadd.f32 0.0, %v3880
        %3882 = vmatmul.bf16.gmra.mxu0 %v3801
        %v3883 = vpop.f32.mrf.mxu0
        %v3884 = vadd.f32 0.0, %v3883
        %v3885 = vpop.f32.mrf.mxu0
        %v3886 = vadd.f32 0.0, %v3885
        %3887 = vmatmul.bf16.gmra.mxu0 %v3803
        %v3888 = vpop.f32.mrf.mxu0
        %v3889 = vadd.f32 0.0, %v3888
        %v3890 = vpop.f32.mrf.mxu0
        %v3891 = vadd.f32 0.0, %v3890
        %3892 = vmatmul.bf16.gmra.mxu0 %v3805
        %v3893 = vpop.f32.mrf.mxu0
        %v3894 = vadd.f32 0.0, %v3893
        %v3895 = vpop.f32.mrf.mxu0
        %v3896 = vadd.f32 0.0, %v3895
        %3897 = vmatmul.bf16.gmra.mxu0 %v3807
        %v3898 = vpop.f32.mrf.mxu0
        %v3899 = vadd.f32 0.0, %v3898
        %v3900 = vpop.f32.mrf.mxu0
        %v3901 = vadd.f32 0.0, %v3900
        %3902 = vmatmul.bf16.gmra.mxu0 %v3809
        %v3903 = vpop.f32.mrf.mxu0
        %v3904 = vadd.f32 0.0, %v3903
        %v3905 = vpop.f32.mrf.mxu0
        %v3906 = vadd.f32 0.0, %v3905
        %3907 = vmatmul.bf16.gmra.mxu0 %v3811
        %v3908 = vpop.f32.mrf.mxu0
        %v3909 = vadd.f32 0.0, %v3908
        %v3910 = vpop.f32.mrf.mxu0
        %v3911 = vadd.f32 0.0, %v3910
        %3912 = vmatmul.bf16.gmra.mxu0 %v3813
        %v3913 = vpop.f32.mrf.mxu0
        %v3914 = vadd.f32 0.0, %v3913
        %v3915 = vpop.f32.mrf.mxu0
        %v3916 = vadd.f32 0.0, %v3915
        %3917 = vmatmul.bf16.gmra.mxu0 %v3815
        %v3918 = vpop.f32.mrf.mxu0
        %v3919 = vadd.f32 0.0, %v3918
        %v3920 = vpop.f32.mrf.mxu0
        %v3921 = vadd.f32 0.0, %v3920
        %3922 = vmatmul.bf16.gmra.mxu0 %v3817
        %v3923 = vpop.f32.mrf.mxu0
        %v3924 = vadd.f32 0.0, %v3923
        %v3925 = vpop.f32.mrf.mxu0
        %v3926 = vadd.f32 0.0, %v3925
        %3927 = vmatmul.bf16.gmra.mxu0 %v3819
        %v3928 = vpop.f32.mrf.mxu0
        %v3929 = vadd.f32 0.0, %v3928
        %v3930 = vpop.f32.mrf.mxu0
        %v3931 = vadd.f32 0.0, %v3930
        %3932 = vmatmul.bf16.gmra.mxu0 %v3821
        %v3933 = vpop.f32.mrf.mxu0
        %v3934 = vadd.f32 0.0, %v3933
        %v3935 = vpop.f32.mrf.mxu0
        %v3936 = vadd.f32 0.0, %v3935
        %3937 = vmatmul.bf16.gmra.mxu0 %v3823
        %v3938 = vpop.f32.mrf.mxu0
        %v3939 = vadd.f32 0.0, %v3938
        %v3940 = vpop.f32.mrf.mxu0
        %v3941 = vadd.f32 0.0, %v3940
        %3942 = vmatmul.bf16.gmra.mxu0 %v3825
        %v3943 = vpop.f32.mrf.mxu0
        %v3944 = vadd.f32 0.0, %v3943
        %v3945 = vpop.f32.mrf.mxu0
        %v3946 = vadd.f32 0.0, %v3945
        %3947 = vdwg.mxu0
        %3948 = vmatpush.bf16.msra.mxu0 %v363
        %3949 = vmatpush.bf16.msra.mxu0 %v362
        %3950 = vmatpush.bf16.msra.mxu0 %v361
        %3951 = vmatpush.bf16.msra.mxu0 %v360
        %3952 = vmatpush.bf16.msra.mxu0 %v359
        %3953 = vmatpush.bf16.msra.mxu0 %v358
        %3954 = vmatpush.bf16.msra.mxu0 %v357
        %3955 = vmatpush.bf16.msra.mxu0 %v356
        %3956 = vmatmul.bf16.gmra.mxu0 %v3796
        %v3957 = vpop.f32.mrf.mxu0
        %v3958 = vadd.f32 %v3869, %v3957
        %v3959 = vpop.f32.mrf.mxu0
        %v3960 = vadd.f32 %v3871, %v3959
        %3961 = vmatmul.bf16.gmra.mxu0 %v3798
        %v3962 = vpop.f32.mrf.mxu0
        %v3963 = vadd.f32 %v3874, %v3962
        %v3964 = vpop.f32.mrf.mxu0
        %v3965 = vadd.f32 %v3876, %v3964
        %3966 = vmatmul.bf16.gmra.mxu0 %v3800
        %v3967 = vpop.f32.mrf.mxu0
        %v3968 = vadd.f32 %v3879, %v3967
        %v3969 = vpop.f32.mrf.mxu0
        %v3970 = vadd.f32 %v3881, %v3969
        %3971 = vmatmul.bf16.gmra.mxu0 %v3802
        %v3972 = vpop.f32.mrf.mxu0
        %v3973 = vadd.f32 %v3884, %v3972
        %v3974 = vpop.f32.mrf.mxu0
        %v3975 = vadd.f32 %v3886, %v3974
        %3976 = vmatmul.bf16.gmra.mxu0 %v3804
        %v3977 = vpop.f32.mrf.mxu0
        %v3978 = vadd.f32 %v3889, %v3977
        %v3979 = vpop.f32.mrf.mxu0
        %v3980 = vadd.f32 %v3891, %v3979
        %3981 = vmatmul.bf16.gmra.mxu0 %v3806
        %v3982 = vpop.f32.mrf.mxu0
        %v3983 = vadd.f32 %v3894, %v3982
        %v3984 = vpop.f32.mrf.mxu0
        %v3985 = vadd.f32 %v3896, %v3984
        %3986 = vmatmul.bf16.gmra.mxu0 %v3808
        %v3987 = vpop.f32.mrf.mxu0
        %v3988 = vadd.f32 %v3899, %v3987
        %v3989 = vpop.f32.mrf.mxu0
        %v3990 = vadd.f32 %v3901, %v3989
        %3991 = vmatmul.bf16.gmra.mxu0 %v3810
        %v3992 = vpop.f32.mrf.mxu0
        %v3993 = vadd.f32 %v3904, %v3992
        %v3994 = vpop.f32.mrf.mxu0
        %v3995 = vadd.f32 %v3906, %v3994
        %3996 = vmatmul.bf16.gmra.mxu0 %v3812
        %v3997 = vpop.f32.mrf.mxu0
        %v3998 = vadd.f32 %v3909, %v3997
        %v3999 = vpop.f32.mrf.mxu0
        %v4000 = vadd.f32 %v3911, %v3999
        %4001 = vmatmul.bf16.gmra.mxu0 %v3814
        %v4002 = vpop.f32.mrf.mxu0
        %v4003 = vadd.f32 %v3914, %v4002
        %v4004 = vpop.f32.mrf.mxu0
        %v4005 = vadd.f32 %v3916, %v4004
        %4006 = vmatmul.bf16.gmra.mxu0 %v3816
        %v4007 = vpop.f32.mrf.mxu0
        %v4008 = vadd.f32 %v3919, %v4007
        %v4009 = vpop.f32.mrf.mxu0
        %v4010 = vadd.f32 %v3921, %v4009
        %4011 = vmatmul.bf16.gmra.mxu0 %v3818
        %v4012 = vpop.f32.mrf.mxu0
        %v4013 = vadd.f32 %v3924, %v4012
        %v4014 = vpop.f32.mrf.mxu0
        %v4015 = vadd.f32 %v3926, %v4014
        %4016 = vmatmul.bf16.gmra.mxu0 %v3820
        %v4017 = vpop.f32.mrf.mxu0
        %v4018 = vadd.f32 %v3929, %v4017
        %v4019 = vpop.f32.mrf.mxu0
        %v4020 = vadd.f32 %v3931, %v4019
        %4021 = vmatmul.bf16.gmra.mxu0 %v3822
        %v4022 = vpop.f32.mrf.mxu0
        %v4023 = vadd.f32 %v3934, %v4022
        %v4024 = vpop.f32.mrf.mxu0
        %v4025 = vadd.f32 %v3936, %v4024
        %4026 = vmatmul.bf16.gmra.mxu0 %v3824
        %v4027 = vpop.f32.mrf.mxu0
        %v4028 = vadd.f32 %v3939, %v4027
        %v4029 = vpop.f32.mrf.mxu0
        %v4030 = vadd.f32 %v3941, %v4029
        %4031 = vmatmul.bf16.gmra.mxu0 %v3826
        %v4032 = vpop.f32.mrf.mxu0
        %v4033 = vadd.f32 %v3944, %v4032
        %v4034 = vpop.f32.mrf.mxu0
        %v4035 = vadd.f32 %v3946, %v4034
        %4036 = vdwg.mxu0
        %v4037 = vpack.c.bf16 %v3960, %v3958
        %v4038 = vpack.c.bf16 %v3965, %v3963
        %v4039 = vpack.c.bf16 %v3970, %v3968
        %v4040 = vpack.c.bf16 %v3975, %v3973
        %v4041 = vpack.c.bf16 %v3980, %v3978
        %v4042 = vpack.c.bf16 %v3985, %v3983
        %v4043 = vpack.c.bf16 %v3990, %v3988
        %v4044 = vpack.c.bf16 %v3995, %v3993
        %v4045 = vpack.c.bf16 %v4000, %v3998
        %v4046 = vpack.c.bf16 %v4005, %v4003
        %v4047 = vpack.c.bf16 %v4010, %v4008
        %v4048 = vpack.c.bf16 %v4015, %v4013
        %v4049 = vpack.c.bf16 %v4020, %v4018
        %v4050 = vpack.c.bf16 %v4025, %v4023
        %v4051 = vpack.c.bf16 %v4030, %v4028
        %v4052 = vpack.c.bf16 %v4035, %v4033
        %s4053 = scalar_lea.vmem %s2, 12
        %v4054 = vld [vmem:[%s4053] sm:$0x3]
        %v4056 = vsel %vm1140, %v4037, 0
        %v4059 = vsel %vm1140, %v4038, 0
        %v4062 = vsel %vm1140, %v4039, 0
        %v4065 = vsel %vm1140, %v4040, 0
        %v4068 = vsel %vm1140, %v4041, 0
        %v4071 = vsel %vm1140, %v4042, 0
        %v4074 = vsel %vm1140, %v4043, 0
        %v4077 = vsel %vm1140, %v4044, 0
        %v4080 = vsel %vm1140, %v4045, 0
        %v4083 = vsel %vm1140, %v4046, 0
        %v4086 = vsel %vm1140, %v4047, 0
        %v4089 = vsel %vm1140, %v4048, 0
        %v4092 = vsel %vm1140, %v4049, 0
        %v4095 = vsel %vm1140, %v4050, 0
        %v4098 = vsel %vm1140, %v4051, 0
        %v4101 = vsel %vm1140, %v4052, 0
        %v4104 = vsel %vm1189, %v4054, 0
        %4106 = vmatpush.bf16.msra.mxu0 0
        %4107 = vmatpush.bf16.msra.mxu0 0
        %4108 = vmatpush.bf16.msra.mxu0 0
        %4109 = vmatpush.bf16.msra.mxu0 0
        %4110 = vmatpush.bf16.msra.mxu0 0
        %4111 = vmatpush.bf16.msra.mxu0 0
        %4112 = vmatpush.bf16.msra.mxu0 0
        %4113 = vmatpush.bf16.msra.mxu0 %v4104
        %4114 = vmatmul.bf16.gmra.mxu0 %v4056
        %v4115 = vpop.f32.mrf.mxu0
        %v4116 = vadd.f32 0.0, %v4115
        %v4117 = vpop.f32.mrf.mxu0
        %v4118 = vadd.f32 0.0, %v4117
        %4119 = vmatmul.bf16.gmra.mxu0 %v4059
        %v4120 = vpop.f32.mrf.mxu0
        %v4121 = vadd.f32 0.0, %v4120
        %v4122 = vpop.f32.mrf.mxu0
        %v4123 = vadd.f32 0.0, %v4122
        %4124 = vmatmul.bf16.gmra.mxu0 %v4062
        %v4125 = vpop.f32.mrf.mxu0
        %v4126 = vadd.f32 0.0, %v4125
        %v4127 = vpop.f32.mrf.mxu0
        %v4128 = vadd.f32 0.0, %v4127
        %4129 = vmatmul.bf16.gmra.mxu0 %v4065
        %v4130 = vpop.f32.mrf.mxu0
        %v4131 = vadd.f32 0.0, %v4130
        %v4132 = vpop.f32.mrf.mxu0
        %v4133 = vadd.f32 0.0, %v4132
        %4134 = vmatmul.bf16.gmra.mxu0 %v4068
        %v4135 = vpop.f32.mrf.mxu0
        %v4136 = vadd.f32 0.0, %v4135
        %v4137 = vpop.f32.mrf.mxu0
        %v4138 = vadd.f32 0.0, %v4137
        %4139 = vmatmul.bf16.gmra.mxu0 %v4071
        %v4140 = vpop.f32.mrf.mxu0
        %v4141 = vadd.f32 0.0, %v4140
        %v4142 = vpop.f32.mrf.mxu0
        %v4143 = vadd.f32 0.0, %v4142
        %4144 = vmatmul.bf16.gmra.mxu0 %v4074
        %v4145 = vpop.f32.mrf.mxu0
        %v4146 = vadd.f32 0.0, %v4145
        %v4147 = vpop.f32.mrf.mxu0
        %v4148 = vadd.f32 0.0, %v4147
        %4149 = vmatmul.bf16.gmra.mxu0 %v4077
        %v4150 = vpop.f32.mrf.mxu0
        %v4151 = vadd.f32 0.0, %v4150
        %v4152 = vpop.f32.mrf.mxu0
        %v4153 = vadd.f32 0.0, %v4152
        %4154 = vmatmul.bf16.gmra.mxu0 %v4080
        %v4155 = vpop.f32.mrf.mxu0
        %v4156 = vadd.f32 0.0, %v4155
        %v4157 = vpop.f32.mrf.mxu0
        %v4158 = vadd.f32 0.0, %v4157
        %4159 = vmatmul.bf16.gmra.mxu0 %v4083
        %v4160 = vpop.f32.mrf.mxu0
        %v4161 = vadd.f32 0.0, %v4160
        %v4162 = vpop.f32.mrf.mxu0
        %v4163 = vadd.f32 0.0, %v4162
        %4164 = vmatmul.bf16.gmra.mxu0 %v4086
        %v4165 = vpop.f32.mrf.mxu0
        %v4166 = vadd.f32 0.0, %v4165
        %v4167 = vpop.f32.mrf.mxu0
        %v4168 = vadd.f32 0.0, %v4167
        %4169 = vmatmul.bf16.gmra.mxu0 %v4089
        %v4170 = vpop.f32.mrf.mxu0
        %v4171 = vadd.f32 0.0, %v4170
        %v4172 = vpop.f32.mrf.mxu0
        %v4173 = vadd.f32 0.0, %v4172
        %4174 = vmatmul.bf16.gmra.mxu0 %v4092
        %v4175 = vpop.f32.mrf.mxu0
        %v4176 = vadd.f32 0.0, %v4175
        %v4177 = vpop.f32.mrf.mxu0
        %v4178 = vadd.f32 0.0, %v4177
        %4179 = vmatmul.bf16.gmra.mxu0 %v4095
        %v4180 = vpop.f32.mrf.mxu0
        %v4181 = vadd.f32 0.0, %v4180
        %v4182 = vpop.f32.mrf.mxu0
        %v4183 = vadd.f32 0.0, %v4182
        %4184 = vmatmul.bf16.gmra.mxu0 %v4098
        %v4185 = vpop.f32.mrf.mxu0
        %v4186 = vadd.f32 0.0, %v4185
        %v4187 = vpop.f32.mrf.mxu0
        %v4188 = vadd.f32 0.0, %v4187
        %4189 = vmatmul.bf16.gmra.mxu0 %v4101
        %v4190 = vpop.f32.mrf.mxu0
        %v4191 = vadd.f32 0.0, %v4190
        %v4192 = vpop.f32.mrf.mxu0
        %v4193 = vadd.f32 0.0, %v4192
        %4194 = vdwg.mxu0
        %v4195 = vadd.f32 %v3634, %v4116
        %v4196 = vadd.f32 %v3635, %v4118
        %v4197 = vadd.f32 %v3636, %v4121
        %v4198 = vadd.f32 %v3637, %v4123
        %v4199 = vadd.f32 %v3638, %v4126
        %v4200 = vadd.f32 %v3639, %v4128
        %v4201 = vadd.f32 %v3640, %v4131
        %v4202 = vadd.f32 %v3641, %v4133
        %v4203 = vadd.f32 %v3642, %v4136
        %v4204 = vadd.f32 %v3643, %v4138
        %v4205 = vadd.f32 %v3644, %v4141
        %v4206 = vadd.f32 %v3645, %v4143
        %v4207 = vadd.f32 %v3646, %v4146
        %v4208 = vadd.f32 %v3647, %v4148
        %v4209 = vadd.f32 %v3648, %v4151
        %v4210 = vadd.f32 %v3649, %v4153
        %v4211 = vadd.f32 %v3650, %v4156
        %v4212 = vadd.f32 %v3651, %v4158
        %v4213 = vadd.f32 %v3652, %v4161
        %v4214 = vadd.f32 %v3653, %v4163
        %v4215 = vadd.f32 %v3654, %v4166
        %v4216 = vadd.f32 %v3655, %v4168
        %v4217 = vadd.f32 %v3656, %v4171
        %v4218 = vadd.f32 %v3657, %v4173
        %v4219 = vadd.f32 %v3658, %v4176
        %v4220 = vadd.f32 %v3659, %v4178
        %v4221 = vadd.f32 %v3660, %v4181
        %v4222 = vadd.f32 %v3661, %v4183
        %v4223 = vadd.f32 %v3662, %v4186
        %v4224 = vadd.f32 %v3663, %v4188
        %v4225 = vadd.f32 %v3664, %v4191
        %v4226 = vadd.f32 %v3665, %v4193
        %s4227 = scalar_lea.vmem [#allocation2], 1792
        %v4228 = vld [vmem:[%s4227] sm:$0xff]
        %v4229 = vld [vmem:[%s4227 + $0x8] sm:$0xff]
        %v4230 = vld [vmem:[%s4227 + $0x10] sm:$0xff]
        %v4231 = vld [vmem:[%s4227 + $0x18] sm:$0xff]
        %v4232 = vld [vmem:[%s4227 + $0x20] sm:$0xff]
        %v4233 = vld [vmem:[%s4227 + $0x28] sm:$0xff]
        %v4234 = vld [vmem:[%s4227 + $0x30] sm:$0xff]
        %v4235 = vld [vmem:[%s4227 + $0x38] sm:$0xff]
        %v4236 = vld [vmem:[%s4227 + $0x40] sm:$0xff]
        %v4237 = vld [vmem:[%s4227 + $0x48] sm:$0xff]
        %v4238 = vld [vmem:[%s4227 + $0x50] sm:$0xff]
        %v4239 = vld [vmem:[%s4227 + $0x58] sm:$0xff]
        %v4240 = vld [vmem:[%s4227 + $0x60] sm:$0xff]
        %v4241 = vld [vmem:[%s4227 + $0x68] sm:$0xff]
        %v4242 = vld [vmem:[%s4227 + $0x70] sm:$0xff]
        %v4243 = vld [vmem:[%s4227 + $0x78] sm:$0xff]
        %v4244 = vld [vmem:[%s4227 + $0x80] sm:$0xff]
        %v4245 = vld [vmem:[%s4227 + $0x88] sm:$0xff]
        %v4246 = vld [vmem:[%s4227 + $0x90] sm:$0xff]
        %v4247 = vld [vmem:[%s4227 + $0x98] sm:$0xff]
        %v4248 = vld [vmem:[%s4227 + $0xa0] sm:$0xff]
        %v4249 = vld [vmem:[%s4227 + $0xa8] sm:$0xff]
        %v4250 = vld [vmem:[%s4227 + $0xb0] sm:$0xff]
        %v4251 = vld [vmem:[%s4227 + $0xb8] sm:$0xff]
        %v4252 = vld [vmem:[%s4227 + $0xc0] sm:$0xff]
        %v4253 = vld [vmem:[%s4227 + $0xc8] sm:$0xff]
        %v4254 = vld [vmem:[%s4227 + $0xd0] sm:$0xff]
        %v4255 = vld [vmem:[%s4227 + $0xd8] sm:$0xff]
        %v4256 = vld [vmem:[%s4227 + $0xe0] sm:$0xff]
        %v4257 = vld [vmem:[%s4227 + $0xe8] sm:$0xff]
        %v4258 = vld [vmem:[%s4227 + $0xf0] sm:$0xff]
        %v4259 = vld [vmem:[%s4227 + $0xf8] sm:$0xff]
        %v4292 = vunpack.c.l.b16 %v4228
        %v4293 = vunpack.c.h.b16 %v4228
        %v4294 = vunpack.c.l.b16 %v4229
        %v4295 = vunpack.c.h.b16 %v4229
        %v4296 = vunpack.c.l.b16 %v4230
        %v4297 = vunpack.c.h.b16 %v4230
        %v4298 = vunpack.c.l.b16 %v4231
        %v4299 = vunpack.c.h.b16 %v4231
        %v4300 = vunpack.c.l.b16 %v4232
        %v4301 = vunpack.c.h.b16 %v4232
        %v4302 = vunpack.c.l.b16 %v4233
        %v4303 = vunpack.c.h.b16 %v4233
        %v4304 = vunpack.c.l.b16 %v4234
        %v4305 = vunpack.c.h.b16 %v4234
        %v4306 = vunpack.c.l.b16 %v4235
        %v4307 = vunpack.c.h.b16 %v4235
        %v4308 = vunpack.c.l.b16 %v4236
        %v4309 = vunpack.c.h.b16 %v4236
        %v4310 = vunpack.c.l.b16 %v4237
        %v4311 = vunpack.c.h.b16 %v4237
        %v4312 = vunpack.c.l.b16 %v4238
        %v4313 = vunpack.c.h.b16 %v4238
        %v4314 = vunpack.c.l.b16 %v4239
        %v4315 = vunpack.c.h.b16 %v4239
        %v4316 = vunpack.c.l.b16 %v4240
        %v4317 = vunpack.c.h.b16 %v4240
        %v4318 = vunpack.c.l.b16 %v4241
        %v4319 = vunpack.c.h.b16 %v4241
        %v4320 = vunpack.c.l.b16 %v4242
        %v4321 = vunpack.c.h.b16 %v4242
        %v4322 = vunpack.c.l.b16 %v4243
        %v4323 = vunpack.c.h.b16 %v4243
        %v4324 = vunpack.c.l.b16 %v4244
        %v4325 = vunpack.c.h.b16 %v4244
        %v4326 = vunpack.c.l.b16 %v4245
        %v4327 = vunpack.c.h.b16 %v4245
        %v4328 = vunpack.c.l.b16 %v4246
        %v4329 = vunpack.c.h.b16 %v4246
        %v4330 = vunpack.c.l.b16 %v4247
        %v4331 = vunpack.c.h.b16 %v4247
        %v4332 = vunpack.c.l.b16 %v4248
        %v4333 = vunpack.c.h.b16 %v4248
        %v4334 = vunpack.c.l.b16 %v4249
        %v4335 = vunpack.c.h.b16 %v4249
        %v4336 = vunpack.c.l.b16 %v4250
        %v4337 = vunpack.c.h.b16 %v4250
        %v4338 = vunpack.c.l.b16 %v4251
        %v4339 = vunpack.c.h.b16 %v4251
        %v4340 = vunpack.c.l.b16 %v4252
        %v4341 = vunpack.c.h.b16 %v4252
        %v4342 = vunpack.c.l.b16 %v4253
        %v4343 = vunpack.c.h.b16 %v4253
        %v4344 = vunpack.c.l.b16 %v4254
        %v4345 = vunpack.c.h.b16 %v4254
        %v4346 = vunpack.c.l.b16 %v4255
        %v4347 = vunpack.c.h.b16 %v4255
        %v4348 = vunpack.c.l.b16 %v4256
        %v4349 = vunpack.c.h.b16 %v4256
        %v4350 = vunpack.c.l.b16 %v4257
        %v4351 = vunpack.c.h.b16 %v4257
        %v4352 = vunpack.c.l.b16 %v4258
        %v4353 = vunpack.c.h.b16 %v4258
        %v4354 = vunpack.c.l.b16 %v4259
        %v4355 = vunpack.c.h.b16 %v4259
        %v4356 = vpack.c.b16 %v4294, %v4292
        %v4357 = vpack.c.b16 %v4295, %v4293
        %v4358 = vpack.c.b16 %v4298, %v4296
        %v4359 = vpack.c.b16 %v4299, %v4297
        %v4360 = vpack.c.b16 %v4302, %v4300
        %v4361 = vpack.c.b16 %v4303, %v4301
        %v4362 = vpack.c.b16 %v4306, %v4304
        %v4363 = vpack.c.b16 %v4307, %v4305
        %v4364 = vpack.c.b16 %v4310, %v4308
        %v4365 = vpack.c.b16 %v4311, %v4309
        %v4366 = vpack.c.b16 %v4314, %v4312
        %v4367 = vpack.c.b16 %v4315, %v4313
        %v4368 = vpack.c.b16 %v4318, %v4316
        %v4369 = vpack.c.b16 %v4319, %v4317
        %v4370 = vpack.c.b16 %v4322, %v4320
        %v4371 = vpack.c.b16 %v4323, %v4321
        %v4372 = vpack.c.b16 %v4326, %v4324
        %v4373 = vpack.c.b16 %v4327, %v4325
        %v4374 = vpack.c.b16 %v4330, %v4328
        %v4375 = vpack.c.b16 %v4331, %v4329
        %v4376 = vpack.c.b16 %v4334, %v4332
        %v4377 = vpack.c.b16 %v4335, %v4333
        %v4378 = vpack.c.b16 %v4338, %v4336
        %v4379 = vpack.c.b16 %v4339, %v4337
        %v4380 = vpack.c.b16 %v4342, %v4340
        %v4381 = vpack.c.b16 %v4343, %v4341
        %v4382 = vpack.c.b16 %v4346, %v4344
        %v4383 = vpack.c.b16 %v4347, %v4345
        %v4384 = vpack.c.b16 %v4350, %v4348
        %v4385 = vpack.c.b16 %v4351, %v4349
        %v4386 = vpack.c.b16 %v4354, %v4352
        %v4387 = vpack.c.b16 %v4355, %v4353
        %4420 = vmatpush.bf16.msra.mxu0 %v355
        %4421 = vmatpush.bf16.msra.mxu0 %v354
        %4422 = vmatpush.bf16.msra.mxu0 %v353
        %4423 = vmatpush.bf16.msra.mxu0 %v352
        %4424 = vmatpush.bf16.msra.mxu0 %v351
        %4425 = vmatpush.bf16.msra.mxu0 %v350
        %4426 = vmatpush.bf16.msra.mxu0 %v349
        %4427 = vmatpush.bf16.msra.mxu0 %v348
        %4428 = vmatmul.bf16.gmra.mxu0 %v4356
        %v4429 = vpop.f32.mrf.mxu0
        %v4430 = vadd.f32 0.0, %v4429
        %v4431 = vpop.f32.mrf.mxu0
        %v4432 = vadd.f32 0.0, %v4431
        %4433 = vmatmul.bf16.gmra.mxu0 %v4358
        %v4434 = vpop.f32.mrf.mxu0
        %v4435 = vadd.f32 0.0, %v4434
        %v4436 = vpop.f32.mrf.mxu0
        %v4437 = vadd.f32 0.0, %v4436
        %4438 = vmatmul.bf16.gmra.mxu0 %v4360
        %v4439 = vpop.f32.mrf.mxu0
        %v4440 = vadd.f32 0.0, %v4439
        %v4441 = vpop.f32.mrf.mxu0
        %v4442 = vadd.f32 0.0, %v4441
        %4443 = vmatmul.bf16.gmra.mxu0 %v4362
        %v4444 = vpop.f32.mrf.mxu0
        %v4445 = vadd.f32 0.0, %v4444
        %v4446 = vpop.f32.mrf.mxu0
        %v4447 = vadd.f32 0.0, %v4446
        %4448 = vmatmul.bf16.gmra.mxu0 %v4364
        %v4449 = vpop.f32.mrf.mxu0
        %v4450 = vadd.f32 0.0, %v4449
        %v4451 = vpop.f32.mrf.mxu0
        %v4452 = vadd.f32 0.0, %v4451
        %4453 = vmatmul.bf16.gmra.mxu0 %v4366
        %v4454 = vpop.f32.mrf.mxu0
        %v4455 = vadd.f32 0.0, %v4454
        %v4456 = vpop.f32.mrf.mxu0
        %v4457 = vadd.f32 0.0, %v4456
        %4458 = vmatmul.bf16.gmra.mxu0 %v4368
        %v4459 = vpop.f32.mrf.mxu0
        %v4460 = vadd.f32 0.0, %v4459
        %v4461 = vpop.f32.mrf.mxu0
        %v4462 = vadd.f32 0.0, %v4461
        %4463 = vmatmul.bf16.gmra.mxu0 %v4370
        %v4464 = vpop.f32.mrf.mxu0
        %v4465 = vadd.f32 0.0, %v4464
        %v4466 = vpop.f32.mrf.mxu0
        %v4467 = vadd.f32 0.0, %v4466
        %4468 = vmatmul.bf16.gmra.mxu0 %v4372
        %v4469 = vpop.f32.mrf.mxu0
        %v4470 = vadd.f32 0.0, %v4469
        %v4471 = vpop.f32.mrf.mxu0
        %v4472 = vadd.f32 0.0, %v4471
        %4473 = vmatmul.bf16.gmra.mxu0 %v4374
        %v4474 = vpop.f32.mrf.mxu0
        %v4475 = vadd.f32 0.0, %v4474
        %v4476 = vpop.f32.mrf.mxu0
        %v4477 = vadd.f32 0.0, %v4476
        %4478 = vmatmul.bf16.gmra.mxu0 %v4376
        %v4479 = vpop.f32.mrf.mxu0
        %v4480 = vadd.f32 0.0, %v4479
        %v4481 = vpop.f32.mrf.mxu0
        %v4482 = vadd.f32 0.0, %v4481
        %4483 = vmatmul.bf16.gmra.mxu0 %v4378
        %v4484 = vpop.f32.mrf.mxu0
        %v4485 = vadd.f32 0.0, %v4484
        %v4486 = vpop.f32.mrf.mxu0
        %v4487 = vadd.f32 0.0, %v4486
        %4488 = vmatmul.bf16.gmra.mxu0 %v4380
        %v4489 = vpop.f32.mrf.mxu0
        %v4490 = vadd.f32 0.0, %v4489
        %v4491 = vpop.f32.mrf.mxu0
        %v4492 = vadd.f32 0.0, %v4491
        %4493 = vmatmul.bf16.gmra.mxu0 %v4382
        %v4494 = vpop.f32.mrf.mxu0
        %v4495 = vadd.f32 0.0, %v4494
        %v4496 = vpop.f32.mrf.mxu0
        %v4497 = vadd.f32 0.0, %v4496
        %4498 = vmatmul.bf16.gmra.mxu0 %v4384
        %v4499 = vpop.f32.mrf.mxu0
        %v4500 = vadd.f32 0.0, %v4499
        %v4501 = vpop.f32.mrf.mxu0
        %v4502 = vadd.f32 0.0, %v4501
        %4503 = vmatmul.bf16.gmra.mxu0 %v4386
        %v4504 = vpop.f32.mrf.mxu0
        %v4505 = vadd.f32 0.0, %v4504
        %v4506 = vpop.f32.mrf.mxu0
        %v4507 = vadd.f32 0.0, %v4506
        %4508 = vdwg.mxu0
        %4509 = vmatpush.bf16.msra.mxu0 %v363
        %4510 = vmatpush.bf16.msra.mxu0 %v362
        %4511 = vmatpush.bf16.msra.mxu0 %v361
        %4512 = vmatpush.bf16.msra.mxu0 %v360
        %4513 = vmatpush.bf16.msra.mxu0 %v359
        %4514 = vmatpush.bf16.msra.mxu0 %v358
        %4515 = vmatpush.bf16.msra.mxu0 %v357
        %4516 = vmatpush.bf16.msra.mxu0 %v356
        %4517 = vmatmul.bf16.gmra.mxu0 %v4357
        %v4518 = vpop.f32.mrf.mxu0
        %v4519 = vadd.f32 %v4430, %v4518
        %v4520 = vpop.f32.mrf.mxu0
        %v4521 = vadd.f32 %v4432, %v4520
        %4522 = vmatmul.bf16.gmra.mxu0 %v4359
        %v4523 = vpop.f32.mrf.mxu0
        %v4524 = vadd.f32 %v4435, %v4523
        %v4525 = vpop.f32.mrf.mxu0
        %v4526 = vadd.f32 %v4437, %v4525
        %4527 = vmatmul.bf16.gmra.mxu0 %v4361
        %v4528 = vpop.f32.mrf.mxu0
        %v4529 = vadd.f32 %v4440, %v4528
        %v4530 = vpop.f32.mrf.mxu0
        %v4531 = vadd.f32 %v4442, %v4530
        %4532 = vmatmul.bf16.gmra.mxu0 %v4363
        %v4533 = vpop.f32.mrf.mxu0
        %v4534 = vadd.f32 %v4445, %v4533
        %v4535 = vpop.f32.mrf.mxu0
        %v4536 = vadd.f32 %v4447, %v4535
        %4537 = vmatmul.bf16.gmra.mxu0 %v4365
        %v4538 = vpop.f32.mrf.mxu0
        %v4539 = vadd.f32 %v4450, %v4538
        %v4540 = vpop.f32.mrf.mxu0
        %v4541 = vadd.f32 %v4452, %v4540
        %4542 = vmatmul.bf16.gmra.mxu0 %v4367
        %v4543 = vpop.f32.mrf.mxu0
        %v4544 = vadd.f32 %v4455, %v4543
        %v4545 = vpop.f32.mrf.mxu0
        %v4546 = vadd.f32 %v4457, %v4545
        %4547 = vmatmul.bf16.gmra.mxu0 %v4369
        %v4548 = vpop.f32.mrf.mxu0
        %v4549 = vadd.f32 %v4460, %v4548
        %v4550 = vpop.f32.mrf.mxu0
        %v4551 = vadd.f32 %v4462, %v4550
        %4552 = vmatmul.bf16.gmra.mxu0 %v4371
        %v4553 = vpop.f32.mrf.mxu0
        %v4554 = vadd.f32 %v4465, %v4553
        %v4555 = vpop.f32.mrf.mxu0
        %v4556 = vadd.f32 %v4467, %v4555
        %4557 = vmatmul.bf16.gmra.mxu0 %v4373
        %v4558 = vpop.f32.mrf.mxu0
        %v4559 = vadd.f32 %v4470, %v4558
        %v4560 = vpop.f32.mrf.mxu0
        %v4561 = vadd.f32 %v4472, %v4560
        %4562 = vmatmul.bf16.gmra.mxu0 %v4375
        %v4563 = vpop.f32.mrf.mxu0
        %v4564 = vadd.f32 %v4475, %v4563
        %v4565 = vpop.f32.mrf.mxu0
        %v4566 = vadd.f32 %v4477, %v4565
        %4567 = vmatmul.bf16.gmra.mxu0 %v4377
        %v4568 = vpop.f32.mrf.mxu0
        %v4569 = vadd.f32 %v4480, %v4568
        %v4570 = vpop.f32.mrf.mxu0
        %v4571 = vadd.f32 %v4482, %v4570
        %4572 = vmatmul.bf16.gmra.mxu0 %v4379
        %v4573 = vpop.f32.mrf.mxu0
        %v4574 = vadd.f32 %v4485, %v4573
        %v4575 = vpop.f32.mrf.mxu0
        %v4576 = vadd.f32 %v4487, %v4575
        %4577 = vmatmul.bf16.gmra.mxu0 %v4381
        %v4578 = vpop.f32.mrf.mxu0
        %v4579 = vadd.f32 %v4490, %v4578
        %v4580 = vpop.f32.mrf.mxu0
        %v4581 = vadd.f32 %v4492, %v4580
        %4582 = vmatmul.bf16.gmra.mxu0 %v4383
        %v4583 = vpop.f32.mrf.mxu0
        %v4584 = vadd.f32 %v4495, %v4583
        %v4585 = vpop.f32.mrf.mxu0
        %v4586 = vadd.f32 %v4497, %v4585
        %4587 = vmatmul.bf16.gmra.mxu0 %v4385
        %v4588 = vpop.f32.mrf.mxu0
        %v4589 = vadd.f32 %v4500, %v4588
        %v4590 = vpop.f32.mrf.mxu0
        %v4591 = vadd.f32 %v4502, %v4590
        %4592 = vmatmul.bf16.gmra.mxu0 %v4387
        %v4593 = vpop.f32.mrf.mxu0
        %v4594 = vadd.f32 %v4505, %v4593
        %v4595 = vpop.f32.mrf.mxu0
        %v4596 = vadd.f32 %v4507, %v4595
        %4597 = vdwg.mxu0
        %v4598 = vpack.c.bf16 %v4521, %v4519
        %v4599 = vpack.c.bf16 %v4526, %v4524
        %v4600 = vpack.c.bf16 %v4531, %v4529
        %v4601 = vpack.c.bf16 %v4536, %v4534
        %v4602 = vpack.c.bf16 %v4541, %v4539
        %v4603 = vpack.c.bf16 %v4546, %v4544
        %v4604 = vpack.c.bf16 %v4551, %v4549
        %v4605 = vpack.c.bf16 %v4556, %v4554
        %v4606 = vpack.c.bf16 %v4561, %v4559
        %v4607 = vpack.c.bf16 %v4566, %v4564
        %v4608 = vpack.c.bf16 %v4571, %v4569
        %v4609 = vpack.c.bf16 %v4576, %v4574
        %v4610 = vpack.c.bf16 %v4581, %v4579
        %v4611 = vpack.c.bf16 %v4586, %v4584
        %v4612 = vpack.c.bf16 %v4591, %v4589
        %v4613 = vpack.c.bf16 %v4596, %v4594
        %s4614 = scalar_lea.vmem %s2, 14
        %v4615 = vld [vmem:[%s4614] sm:$0x3]
        %v4617 = vsel %vm1140, %v4598, 0
        %v4620 = vsel %vm1140, %v4599, 0
        %v4623 = vsel %vm1140, %v4600, 0
        %v4626 = vsel %vm1140, %v4601, 0
        %v4629 = vsel %vm1140, %v4602, 0
        %v4632 = vsel %vm1140, %v4603, 0
        %v4635 = vsel %vm1140, %v4604, 0
        %v4638 = vsel %vm1140, %v4605, 0
        %v4641 = vsel %vm1140, %v4606, 0
        %v4644 = vsel %vm1140, %v4607, 0
        %v4647 = vsel %vm1140, %v4608, 0
        %v4650 = vsel %vm1140, %v4609, 0
        %v4653 = vsel %vm1140, %v4610, 0
        %v4656 = vsel %vm1140, %v4611, 0
        %v4659 = vsel %vm1140, %v4612, 0
        %v4662 = vsel %vm1140, %v4613, 0
        %v4665 = vsel %vm1189, %v4615, 0
        %4667 = vmatpush.bf16.msra.mxu0 0
        %4668 = vmatpush.bf16.msra.mxu0 0
        %4669 = vmatpush.bf16.msra.mxu0 0
        %4670 = vmatpush.bf16.msra.mxu0 0
        %4671 = vmatpush.bf16.msra.mxu0 0
        %4672 = vmatpush.bf16.msra.mxu0 0
        %4673 = vmatpush.bf16.msra.mxu0 0
        %4674 = vmatpush.bf16.msra.mxu0 %v4665
        %4675 = vmatmul.bf16.gmra.mxu0 %v4617
        %v4676 = vpop.f32.mrf.mxu0
        %v4677 = vadd.f32 0.0, %v4676
        %v4678 = vpop.f32.mrf.mxu0
        %v4679 = vadd.f32 0.0, %v4678
        %4680 = vmatmul.bf16.gmra.mxu0 %v4620
        %v4681 = vpop.f32.mrf.mxu0
        %v4682 = vadd.f32 0.0, %v4681
        %v4683 = vpop.f32.mrf.mxu0
        %v4684 = vadd.f32 0.0, %v4683
        %4685 = vmatmul.bf16.gmra.mxu0 %v4623
        %v4686 = vpop.f32.mrf.mxu0
        %v4687 = vadd.f32 0.0, %v4686
        %v4688 = vpop.f32.mrf.mxu0
        %v4689 = vadd.f32 0.0, %v4688
        %4690 = vmatmul.bf16.gmra.mxu0 %v4626
        %v4691 = vpop.f32.mrf.mxu0
        %v4692 = vadd.f32 0.0, %v4691
        %v4693 = vpop.f32.mrf.mxu0
        %v4694 = vadd.f32 0.0, %v4693
        %4695 = vmatmul.bf16.gmra.mxu0 %v4629
        %v4696 = vpop.f32.mrf.mxu0
        %v4697 = vadd.f32 0.0, %v4696
        %v4698 = vpop.f32.mrf.mxu0
        %v4699 = vadd.f32 0.0, %v4698
        %4700 = vmatmul.bf16.gmra.mxu0 %v4632
        %v4701 = vpop.f32.mrf.mxu0
        %v4702 = vadd.f32 0.0, %v4701
        %v4703 = vpop.f32.mrf.mxu0
        %v4704 = vadd.f32 0.0, %v4703
        %4705 = vmatmul.bf16.gmra.mxu0 %v4635
        %v4706 = vpop.f32.mrf.mxu0
        %v4707 = vadd.f32 0.0, %v4706
        %v4708 = vpop.f32.mrf.mxu0
        %v4709 = vadd.f32 0.0, %v4708
        %4710 = vmatmul.bf16.gmra.mxu0 %v4638
        %v4711 = vpop.f32.mrf.mxu0
        %v4712 = vadd.f32 0.0, %v4711
        %v4713 = vpop.f32.mrf.mxu0
        %v4714 = vadd.f32 0.0, %v4713
        %4715 = vmatmul.bf16.gmra.mxu0 %v4641
        %v4716 = vpop.f32.mrf.mxu0
        %v4717 = vadd.f32 0.0, %v4716
        %v4718 = vpop.f32.mrf.mxu0
        %v4719 = vadd.f32 0.0, %v4718
        %4720 = vmatmul.bf16.gmra.mxu0 %v4644
        %v4721 = vpop.f32.mrf.mxu0
        %v4722 = vadd.f32 0.0, %v4721
        %v4723 = vpop.f32.mrf.mxu0
        %v4724 = vadd.f32 0.0, %v4723
        %4725 = vmatmul.bf16.gmra.mxu0 %v4647
        %v4726 = vpop.f32.mrf.mxu0
        %v4727 = vadd.f32 0.0, %v4726
        %v4728 = vpop.f32.mrf.mxu0
        %v4729 = vadd.f32 0.0, %v4728
        %4730 = vmatmul.bf16.gmra.mxu0 %v4650
        %v4731 = vpop.f32.mrf.mxu0
        %v4732 = vadd.f32 0.0, %v4731
        %v4733 = vpop.f32.mrf.mxu0
        %v4734 = vadd.f32 0.0, %v4733
        %4735 = vmatmul.bf16.gmra.mxu0 %v4653
        %v4736 = vpop.f32.mrf.mxu0
        %v4737 = vadd.f32 0.0, %v4736
        %v4738 = vpop.f32.mrf.mxu0
        %v4739 = vadd.f32 0.0, %v4738
        %4740 = vmatmul.bf16.gmra.mxu0 %v4656
        %v4741 = vpop.f32.mrf.mxu0
        %v4742 = vadd.f32 0.0, %v4741
        %v4743 = vpop.f32.mrf.mxu0
        %v4744 = vadd.f32 0.0, %v4743
        %4745 = vmatmul.bf16.gmra.mxu0 %v4659
        %v4746 = vpop.f32.mrf.mxu0
        %v4747 = vadd.f32 0.0, %v4746
        %v4748 = vpop.f32.mrf.mxu0
        %v4749 = vadd.f32 0.0, %v4748
        %4750 = vmatmul.bf16.gmra.mxu0 %v4662
        %v4751 = vpop.f32.mrf.mxu0
        %v4752 = vadd.f32 0.0, %v4751
        %v4753 = vpop.f32.mrf.mxu0
        %v4754 = vadd.f32 0.0, %v4753
        %4755 = vdwg.mxu0
        %v4756 = vadd.f32 %v4195, %v4677
        %v4757 = vadd.f32 %v4196, %v4679
        %v4758 = vadd.f32 %v4197, %v4682
        %v4759 = vadd.f32 %v4198, %v4684
        %v4760 = vadd.f32 %v4199, %v4687
        %v4761 = vadd.f32 %v4200, %v4689
        %v4762 = vadd.f32 %v4201, %v4692
        %v4763 = vadd.f32 %v4202, %v4694
        %v4764 = vadd.f32 %v4203, %v4697
        %v4765 = vadd.f32 %v4204, %v4699
        %v4766 = vadd.f32 %v4205, %v4702
        %v4767 = vadd.f32 %v4206, %v4704
        %v4768 = vadd.f32 %v4207, %v4707
        %v4769 = vadd.f32 %v4208, %v4709
        %v4770 = vadd.f32 %v4209, %v4712
        %v4771 = vadd.f32 %v4210, %v4714
        %v4772 = vadd.f32 %v4211, %v4717
        %v4773 = vadd.f32 %v4212, %v4719
        %v4774 = vadd.f32 %v4213, %v4722
        %v4775 = vadd.f32 %v4214, %v4724
        %v4776 = vadd.f32 %v4215, %v4727
        %v4777 = vadd.f32 %v4216, %v4729
        %v4778 = vadd.f32 %v4217, %v4732
        %v4779 = vadd.f32 %v4218, %v4734
        %v4780 = vadd.f32 %v4219, %v4737
        %v4781 = vadd.f32 %v4220, %v4739
        %v4782 = vadd.f32 %v4221, %v4742
        %v4783 = vadd.f32 %v4222, %v4744
        %v4784 = vadd.f32 %v4223, %v4747
        %v4785 = vadd.f32 %v4224, %v4749
        %v4786 = vadd.f32 %v4225, %v4752
        %v4787 = vadd.f32 %v4226, %v4754
        %s4788 = scalar_lea.vmem [#allocation2], 2048
        %v4789 = vld [vmem:[%s4788] sm:$0xff]
        %v4790 = vld [vmem:[%s4788 + $0x8] sm:$0xff]
        %v4791 = vld [vmem:[%s4788 + $0x10] sm:$0xff]
        %v4792 = vld [vmem:[%s4788 + $0x18] sm:$0xff]
        %v4793 = vld [vmem:[%s4788 + $0x20] sm:$0xff]
        %v4794 = vld [vmem:[%s4788 + $0x28] sm:$0xff]
        %v4795 = vld [vmem:[%s4788 + $0x30] sm:$0xff]
        %v4796 = vld [vmem:[%s4788 + $0x38] sm:$0xff]
        %v4797 = vld [vmem:[%s4788 + $0x40] sm:$0xff]
        %v4798 = vld [vmem:[%s4788 + $0x48] sm:$0xff]
        %v4799 = vld [vmem:[%s4788 + $0x50] sm:$0xff]
        %v4800 = vld [vmem:[%s4788 + $0x58] sm:$0xff]
        %v4801 = vld [vmem:[%s4788 + $0x60] sm:$0xff]
        %v4802 = vld [vmem:[%s4788 + $0x68] sm:$0xff]
        %v4803 = vld [vmem:[%s4788 + $0x70] sm:$0xff]
        %v4804 = vld [vmem:[%s4788 + $0x78] sm:$0xff]
        %v4805 = vld [vmem:[%s4788 + $0x80] sm:$0xff]
        %v4806 = vld [vmem:[%s4788 + $0x88] sm:$0xff]
        %v4807 = vld [vmem:[%s4788 + $0x90] sm:$0xff]
        %v4808 = vld [vmem:[%s4788 + $0x98] sm:$0xff]
        %v4809 = vld [vmem:[%s4788 + $0xa0] sm:$0xff]
        %v4810 = vld [vmem:[%s4788 + $0xa8] sm:$0xff]
        %v4811 = vld [vmem:[%s4788 + $0xb0] sm:$0xff]
        %v4812 = vld [vmem:[%s4788 + $0xb8] sm:$0xff]
        %v4813 = vld [vmem:[%s4788 + $0xc0] sm:$0xff]
        %v4814 = vld [vmem:[%s4788 + $0xc8] sm:$0xff]
        %v4815 = vld [vmem:[%s4788 + $0xd0] sm:$0xff]
        %v4816 = vld [vmem:[%s4788 + $0xd8] sm:$0xff]
        %v4817 = vld [vmem:[%s4788 + $0xe0] sm:$0xff]
        %v4818 = vld [vmem:[%s4788 + $0xe8] sm:$0xff]
        %v4819 = vld [vmem:[%s4788 + $0xf0] sm:$0xff]
        %v4820 = vld [vmem:[%s4788 + $0xf8] sm:$0xff]
        %v4853 = vunpack.c.l.b16 %v4789
        %v4854 = vunpack.c.h.b16 %v4789
        %v4855 = vunpack.c.l.b16 %v4790
        %v4856 = vunpack.c.h.b16 %v4790
        %v4857 = vunpack.c.l.b16 %v4791
        %v4858 = vunpack.c.h.b16 %v4791
        %v4859 = vunpack.c.l.b16 %v4792
        %v4860 = vunpack.c.h.b16 %v4792
        %v4861 = vunpack.c.l.b16 %v4793
        %v4862 = vunpack.c.h.b16 %v4793
        %v4863 = vunpack.c.l.b16 %v4794
        %v4864 = vunpack.c.h.b16 %v4794
        %v4865 = vunpack.c.l.b16 %v4795
        %v4866 = vunpack.c.h.b16 %v4795
        %v4867 = vunpack.c.l.b16 %v4796
        %v4868 = vunpack.c.h.b16 %v4796
        %v4869 = vunpack.c.l.b16 %v4797
        %v4870 = vunpack.c.h.b16 %v4797
        %v4871 = vunpack.c.l.b16 %v4798
        %v4872 = vunpack.c.h.b16 %v4798
        %v4873 = vunpack.c.l.b16 %v4799
        %v4874 = vunpack.c.h.b16 %v4799
        %v4875 = vunpack.c.l.b16 %v4800
        %v4876 = vunpack.c.h.b16 %v4800
        %v4877 = vunpack.c.l.b16 %v4801
        %v4878 = vunpack.c.h.b16 %v4801
        %v4879 = vunpack.c.l.b16 %v4802
        %v4880 = vunpack.c.h.b16 %v4802
        %v4881 = vunpack.c.l.b16 %v4803
        %v4882 = vunpack.c.h.b16 %v4803
        %v4883 = vunpack.c.l.b16 %v4804
        %v4884 = vunpack.c.h.b16 %v4804
        %v4885 = vunpack.c.l.b16 %v4805
        %v4886 = vunpack.c.h.b16 %v4805
        %v4887 = vunpack.c.l.b16 %v4806
        %v4888 = vunpack.c.h.b16 %v4806
        %v4889 = vunpack.c.l.b16 %v4807
        %v4890 = vunpack.c.h.b16 %v4807
        %v4891 = vunpack.c.l.b16 %v4808
        %v4892 = vunpack.c.h.b16 %v4808
        %v4893 = vunpack.c.l.b16 %v4809
        %v4894 = vunpack.c.h.b16 %v4809
        %v4895 = vunpack.c.l.b16 %v4810
        %v4896 = vunpack.c.h.b16 %v4810
        %v4897 = vunpack.c.l.b16 %v4811
        %v4898 = vunpack.c.h.b16 %v4811
        %v4899 = vunpack.c.l.b16 %v4812
        %v4900 = vunpack.c.h.b16 %v4812
        %v4901 = vunpack.c.l.b16 %v4813
        %v4902 = vunpack.c.h.b16 %v4813
        %v4903 = vunpack.c.l.b16 %v4814
        %v4904 = vunpack.c.h.b16 %v4814
        %v4905 = vunpack.c.l.b16 %v4815
        %v4906 = vunpack.c.h.b16 %v4815
        %v4907 = vunpack.c.l.b16 %v4816
        %v4908 = vunpack.c.h.b16 %v4816
        %v4909 = vunpack.c.l.b16 %v4817
        %v4910 = vunpack.c.h.b16 %v4817
        %v4911 = vunpack.c.l.b16 %v4818
        %v4912 = vunpack.c.h.b16 %v4818
        %v4913 = vunpack.c.l.b16 %v4819
        %v4914 = vunpack.c.h.b16 %v4819
        %v4915 = vunpack.c.l.b16 %v4820
        %v4916 = vunpack.c.h.b16 %v4820
        %v4917 = vpack.c.b16 %v4855, %v4853
        %v4918 = vpack.c.b16 %v4856, %v4854
        %v4919 = vpack.c.b16 %v4859, %v4857
        %v4920 = vpack.c.b16 %v4860, %v4858
        %v4921 = vpack.c.b16 %v4863, %v4861
        %v4922 = vpack.c.b16 %v4864, %v4862
        %v4923 = vpack.c.b16 %v4867, %v4865
        %v4924 = vpack.c.b16 %v4868, %v4866
        %v4925 = vpack.c.b16 %v4871, %v4869
        %v4926 = vpack.c.b16 %v4872, %v4870
        %v4927 = vpack.c.b16 %v4875, %v4873
        %v4928 = vpack.c.b16 %v4876, %v4874
        %v4929 = vpack.c.b16 %v4879, %v4877
        %v4930 = vpack.c.b16 %v4880, %v4878
        %v4931 = vpack.c.b16 %v4883, %v4881
        %v4932 = vpack.c.b16 %v4884, %v4882
        %v4933 = vpack.c.b16 %v4887, %v4885
        %v4934 = vpack.c.b16 %v4888, %v4886
        %v4935 = vpack.c.b16 %v4891, %v4889
        %v4936 = vpack.c.b16 %v4892, %v4890
        %v4937 = vpack.c.b16 %v4895, %v4893
        %v4938 = vpack.c.b16 %v4896, %v4894
        %v4939 = vpack.c.b16 %v4899, %v4897
        %v4940 = vpack.c.b16 %v4900, %v4898
        %v4941 = vpack.c.b16 %v4903, %v4901
        %v4942 = vpack.c.b16 %v4904, %v4902
        %v4943 = vpack.c.b16 %v4907, %v4905
        %v4944 = vpack.c.b16 %v4908, %v4906
        %v4945 = vpack.c.b16 %v4911, %v4909
        %v4946 = vpack.c.b16 %v4912, %v4910
        %v4947 = vpack.c.b16 %v4915, %v4913
        %v4948 = vpack.c.b16 %v4916, %v4914
        %4981 = vmatpush.bf16.msra.mxu0 %v355
        %4982 = vmatpush.bf16.msra.mxu0 %v354
        %4983 = vmatpush.bf16.msra.mxu0 %v353
        %4984 = vmatpush.bf16.msra.mxu0 %v352
        %4985 = vmatpush.bf16.msra.mxu0 %v351
        %4986 = vmatpush.bf16.msra.mxu0 %v350
        %4987 = vmatpush.bf16.msra.mxu0 %v349
        %4988 = vmatpush.bf16.msra.mxu0 %v348
        %4989 = vmatmul.bf16.gmra.mxu0 %v4917
        %v4990 = vpop.f32.mrf.mxu0
        %v4991 = vadd.f32 0.0, %v4990
        %v4992 = vpop.f32.mrf.mxu0
        %v4993 = vadd.f32 0.0, %v4992
        %4994 = vmatmul.bf16.gmra.mxu0 %v4919
        %v4995 = vpop.f32.mrf.mxu0
        %v4996 = vadd.f32 0.0, %v4995
        %v4997 = vpop.f32.mrf.mxu0
        %v4998 = vadd.f32 0.0, %v4997
        %4999 = vmatmul.bf16.gmra.mxu0 %v4921
        %v5000 = vpop.f32.mrf.mxu0
        %v5001 = vadd.f32 0.0, %v5000
        %v5002 = vpop.f32.mrf.mxu0
        %v5003 = vadd.f32 0.0, %v5002
        %5004 = vmatmul.bf16.gmra.mxu0 %v4923
        %v5005 = vpop.f32.mrf.mxu0
        %v5006 = vadd.f32 0.0, %v5005
        %v5007 = vpop.f32.mrf.mxu0
        %v5008 = vadd.f32 0.0, %v5007
        %5009 = vmatmul.bf16.gmra.mxu0 %v4925
        %v5010 = vpop.f32.mrf.mxu0
        %v5011 = vadd.f32 0.0, %v5010
        %v5012 = vpop.f32.mrf.mxu0
        %v5013 = vadd.f32 0.0, %v5012
        %5014 = vmatmul.bf16.gmra.mxu0 %v4927
        %v5015 = vpop.f32.mrf.mxu0
        %v5016 = vadd.f32 0.0, %v5015
        %v5017 = vpop.f32.mrf.mxu0
        %v5018 = vadd.f32 0.0, %v5017
        %5019 = vmatmul.bf16.gmra.mxu0 %v4929
        %v5020 = vpop.f32.mrf.mxu0
        %v5021 = vadd.f32 0.0, %v5020
        %v5022 = vpop.f32.mrf.mxu0
        %v5023 = vadd.f32 0.0, %v5022
        %5024 = vmatmul.bf16.gmra.mxu0 %v4931
        %v5025 = vpop.f32.mrf.mxu0
        %v5026 = vadd.f32 0.0, %v5025
        %v5027 = vpop.f32.mrf.mxu0
        %v5028 = vadd.f32 0.0, %v5027
        %5029 = vmatmul.bf16.gmra.mxu0 %v4933
        %v5030 = vpop.f32.mrf.mxu0
        %v5031 = vadd.f32 0.0, %v5030
        %v5032 = vpop.f32.mrf.mxu0
        %v5033 = vadd.f32 0.0, %v5032
        %5034 = vmatmul.bf16.gmra.mxu0 %v4935
        %v5035 = vpop.f32.mrf.mxu0
        %v5036 = vadd.f32 0.0, %v5035
        %v5037 = vpop.f32.mrf.mxu0
        %v5038 = vadd.f32 0.0, %v5037
        %5039 = vmatmul.bf16.gmra.mxu0 %v4937
        %v5040 = vpop.f32.mrf.mxu0
        %v5041 = vadd.f32 0.0, %v5040
        %v5042 = vpop.f32.mrf.mxu0
        %v5043 = vadd.f32 0.0, %v5042
        %5044 = vmatmul.bf16.gmra.mxu0 %v4939
        %v5045 = vpop.f32.mrf.mxu0
        %v5046 = vadd.f32 0.0, %v5045
        %v5047 = vpop.f32.mrf.mxu0
        %v5048 = vadd.f32 0.0, %v5047
        %5049 = vmatmul.bf16.gmra.mxu0 %v4941
        %v5050 = vpop.f32.mrf.mxu0
        %v5051 = vadd.f32 0.0, %v5050
        %v5052 = vpop.f32.mrf.mxu0
        %v5053 = vadd.f32 0.0, %v5052
        %5054 = vmatmul.bf16.gmra.mxu0 %v4943
        %v5055 = vpop.f32.mrf.mxu0
        %v5056 = vadd.f32 0.0, %v5055
        %v5057 = vpop.f32.mrf.mxu0
        %v5058 = vadd.f32 0.0, %v5057
        %5059 = vmatmul.bf16.gmra.mxu0 %v4945
        %v5060 = vpop.f32.mrf.mxu0
        %v5061 = vadd.f32 0.0, %v5060
        %v5062 = vpop.f32.mrf.mxu0
        %v5063 = vadd.f32 0.0, %v5062
        %5064 = vmatmul.bf16.gmra.mxu0 %v4947
        %v5065 = vpop.f32.mrf.mxu0
        %v5066 = vadd.f32 0.0, %v5065
        %v5067 = vpop.f32.mrf.mxu0
        %v5068 = vadd.f32 0.0, %v5067
        %5069 = vdwg.mxu0
        %5070 = vmatpush.bf16.msra.mxu0 %v363
        %5071 = vmatpush.bf16.msra.mxu0 %v362
        %5072 = vmatpush.bf16.msra.mxu0 %v361
        %5073 = vmatpush.bf16.msra.mxu0 %v360
        %5074 = vmatpush.bf16.msra.mxu0 %v359
        %5075 = vmatpush.bf16.msra.mxu0 %v358
        %5076 = vmatpush.bf16.msra.mxu0 %v357
        %5077 = vmatpush.bf16.msra.mxu0 %v356
        %5078 = vmatmul.bf16.gmra.mxu0 %v4918
        %v5079 = vpop.f32.mrf.mxu0
        %v5080 = vadd.f32 %v4991, %v5079
        %v5081 = vpop.f32.mrf.mxu0
        %v5082 = vadd.f32 %v4993, %v5081
        %5083 = vmatmul.bf16.gmra.mxu0 %v4920
        %v5084 = vpop.f32.mrf.mxu0
        %v5085 = vadd.f32 %v4996, %v5084
        %v5086 = vpop.f32.mrf.mxu0
        %v5087 = vadd.f32 %v4998, %v5086
        %5088 = vmatmul.bf16.gmra.mxu0 %v4922
        %v5089 = vpop.f32.mrf.mxu0
        %v5090 = vadd.f32 %v5001, %v5089
        %v5091 = vpop.f32.mrf.mxu0
        %v5092 = vadd.f32 %v5003, %v5091
        %5093 = vmatmul.bf16.gmra.mxu0 %v4924
        %v5094 = vpop.f32.mrf.mxu0
        %v5095 = vadd.f32 %v5006, %v5094
        %v5096 = vpop.f32.mrf.mxu0
        %v5097 = vadd.f32 %v5008, %v5096
        %5098 = vmatmul.bf16.gmra.mxu0 %v4926
        %v5099 = vpop.f32.mrf.mxu0
        %v5100 = vadd.f32 %v5011, %v5099
        %v5101 = vpop.f32.mrf.mxu0
        %v5102 = vadd.f32 %v5013, %v5101
        %5103 = vmatmul.bf16.gmra.mxu0 %v4928
        %v5104 = vpop.f32.mrf.mxu0
        %v5105 = vadd.f32 %v5016, %v5104
        %v5106 = vpop.f32.mrf.mxu0
        %v5107 = vadd.f32 %v5018, %v5106
        %5108 = vmatmul.bf16.gmra.mxu0 %v4930
        %v5109 = vpop.f32.mrf.mxu0
        %v5110 = vadd.f32 %v5021, %v5109
        %v5111 = vpop.f32.mrf.mxu0
        %v5112 = vadd.f32 %v5023, %v5111
        %5113 = vmatmul.bf16.gmra.mxu0 %v4932
        %v5114 = vpop.f32.mrf.mxu0
        %v5115 = vadd.f32 %v5026, %v5114
        %v5116 = vpop.f32.mrf.mxu0
        %v5117 = vadd.f32 %v5028, %v5116
        %5118 = vmatmul.bf16.gmra.mxu0 %v4934
        %v5119 = vpop.f32.mrf.mxu0
        %v5120 = vadd.f32 %v5031, %v5119
        %v5121 = vpop.f32.mrf.mxu0
        %v5122 = vadd.f32 %v5033, %v5121
        %5123 = vmatmul.bf16.gmra.mxu0 %v4936
        %v5124 = vpop.f32.mrf.mxu0
        %v5125 = vadd.f32 %v5036, %v5124
        %v5126 = vpop.f32.mrf.mxu0
        %v5127 = vadd.f32 %v5038, %v5126
        %5128 = vmatmul.bf16.gmra.mxu0 %v4938
        %v5129 = vpop.f32.mrf.mxu0
        %v5130 = vadd.f32 %v5041, %v5129
        %v5131 = vpop.f32.mrf.mxu0
        %v5132 = vadd.f32 %v5043, %v5131
        %5133 = vmatmul.bf16.gmra.mxu0 %v4940
        %v5134 = vpop.f32.mrf.mxu0
        %v5135 = vadd.f32 %v5046, %v5134
        %v5136 = vpop.f32.mrf.mxu0
        %v5137 = vadd.f32 %v5048, %v5136
        %5138 = vmatmul.bf16.gmra.mxu0 %v4942
        %v5139 = vpop.f32.mrf.mxu0
        %v5140 = vadd.f32 %v5051, %v5139
        %v5141 = vpop.f32.mrf.mxu0
        %v5142 = vadd.f32 %v5053, %v5141
        %5143 = vmatmul.bf16.gmra.mxu0 %v4944
        %v5144 = vpop.f32.mrf.mxu0
        %v5145 = vadd.f32 %v5056, %v5144
        %v5146 = vpop.f32.mrf.mxu0
        %v5147 = vadd.f32 %v5058, %v5146
        %5148 = vmatmul.bf16.gmra.mxu0 %v4946
        %v5149 = vpop.f32.mrf.mxu0
        %v5150 = vadd.f32 %v5061, %v5149
        %v5151 = vpop.f32.mrf.mxu0
        %v5152 = vadd.f32 %v5063, %v5151
        %5153 = vmatmul.bf16.gmra.mxu0 %v4948
        %v5154 = vpop.f32.mrf.mxu0
        %v5155 = vadd.f32 %v5066, %v5154
        %v5156 = vpop.f32.mrf.mxu0
        %v5157 = vadd.f32 %v5068, %v5156
        %5158 = vdwg.mxu0
        %v5159 = vpack.c.bf16 %v5082, %v5080
        %v5160 = vpack.c.bf16 %v5087, %v5085
        %v5161 = vpack.c.bf16 %v5092, %v5090
        %v5162 = vpack.c.bf16 %v5097, %v5095
        %v5163 = vpack.c.bf16 %v5102, %v5100
        %v5164 = vpack.c.bf16 %v5107, %v5105
        %v5165 = vpack.c.bf16 %v5112, %v5110
        %v5166 = vpack.c.bf16 %v5117, %v5115
        %v5167 = vpack.c.bf16 %v5122, %v5120
        %v5168 = vpack.c.bf16 %v5127, %v5125
        %v5169 = vpack.c.bf16 %v5132, %v5130
        %v5170 = vpack.c.bf16 %v5137, %v5135
        %v5171 = vpack.c.bf16 %v5142, %v5140
        %v5172 = vpack.c.bf16 %v5147, %v5145
        %v5173 = vpack.c.bf16 %v5152, %v5150
        %v5174 = vpack.c.bf16 %v5157, %v5155
        %s5175 = scalar_lea.vmem %s2, 16
        %v5176 = vld [vmem:[%s5175] sm:$0x3]
        %v5178 = vsel %vm1140, %v5159, 0
        %v5181 = vsel %vm1140, %v5160, 0
        %v5184 = vsel %vm1140, %v5161, 0
        %v5187 = vsel %vm1140, %v5162, 0
        %v5190 = vsel %vm1140, %v5163, 0
        %v5193 = vsel %vm1140, %v5164, 0
        %v5196 = vsel %vm1140, %v5165, 0
        %v5199 = vsel %vm1140, %v5166, 0
        %v5202 = vsel %vm1140, %v5167, 0
        %v5205 = vsel %vm1140, %v5168, 0
        %v5208 = vsel %vm1140, %v5169, 0
        %v5211 = vsel %vm1140, %v5170, 0
        %v5214 = vsel %vm1140, %v5171, 0
        %v5217 = vsel %vm1140, %v5172, 0
        %v5220 = vsel %vm1140, %v5173, 0
        %v5223 = vsel %vm1140, %v5174, 0
        %v5226 = vsel %vm1189, %v5176, 0
        %5228 = vmatpush.bf16.msra.mxu0 0
        %5229 = vmatpush.bf16.msra.mxu0 0
        %5230 = vmatpush.bf16.msra.mxu0 0
        %5231 = vmatpush.bf16.msra.mxu0 0
        %5232 = vmatpush.bf16.msra.mxu0 0
        %5233 = vmatpush.bf16.msra.mxu0 0
        %5234 = vmatpush.bf16.msra.mxu0 0
        %5235 = vmatpush.bf16.msra.mxu0 %v5226
        %5236 = vmatmul.bf16.gmra.mxu0 %v5178
        %v5237 = vpop.f32.mrf.mxu0
        %v5238 = vadd.f32 0.0, %v5237
        %v5239 = vpop.f32.mrf.mxu0
        %v5240 = vadd.f32 0.0, %v5239
        %5241 = vmatmul.bf16.gmra.mxu0 %v5181
        %v5242 = vpop.f32.mrf.mxu0
        %v5243 = vadd.f32 0.0, %v5242
        %v5244 = vpop.f32.mrf.mxu0
        %v5245 = vadd.f32 0.0, %v5244
        %5246 = vmatmul.bf16.gmra.mxu0 %v5184
        %v5247 = vpop.f32.mrf.mxu0
        %v5248 = vadd.f32 0.0, %v5247
        %v5249 = vpop.f32.mrf.mxu0
        %v5250 = vadd.f32 0.0, %v5249
        %5251 = vmatmul.bf16.gmra.mxu0 %v5187
        %v5252 = vpop.f32.mrf.mxu0
        %v5253 = vadd.f32 0.0, %v5252
        %v5254 = vpop.f32.mrf.mxu0
        %v5255 = vadd.f32 0.0, %v5254
        %5256 = vmatmul.bf16.gmra.mxu0 %v5190
        %v5257 = vpop.f32.mrf.mxu0
        %v5258 = vadd.f32 0.0, %v5257
        %v5259 = vpop.f32.mrf.mxu0
        %v5260 = vadd.f32 0.0, %v5259
        %5261 = vmatmul.bf16.gmra.mxu0 %v5193
        %v5262 = vpop.f32.mrf.mxu0
        %v5263 = vadd.f32 0.0, %v5262
        %v5264 = vpop.f32.mrf.mxu0
        %v5265 = vadd.f32 0.0, %v5264
        %5266 = vmatmul.bf16.gmra.mxu0 %v5196
        %v5267 = vpop.f32.mrf.mxu0
        %v5268 = vadd.f32 0.0, %v5267
        %v5269 = vpop.f32.mrf.mxu0
        %v5270 = vadd.f32 0.0, %v5269
        %5271 = vmatmul.bf16.gmra.mxu0 %v5199
        %v5272 = vpop.f32.mrf.mxu0
        %v5273 = vadd.f32 0.0, %v5272
        %v5274 = vpop.f32.mrf.mxu0
        %v5275 = vadd.f32 0.0, %v5274
        %5276 = vmatmul.bf16.gmra.mxu0 %v5202
        %v5277 = vpop.f32.mrf.mxu0
        %v5278 = vadd.f32 0.0, %v5277
        %v5279 = vpop.f32.mrf.mxu0
        %v5280 = vadd.f32 0.0, %v5279
        %5281 = vmatmul.bf16.gmra.mxu0 %v5205
        %v5282 = vpop.f32.mrf.mxu0
        %v5283 = vadd.f32 0.0, %v5282
        %v5284 = vpop.f32.mrf.mxu0
        %v5285 = vadd.f32 0.0, %v5284
        %5286 = vmatmul.bf16.gmra.mxu0 %v5208
        %v5287 = vpop.f32.mrf.mxu0
        %v5288 = vadd.f32 0.0, %v5287
        %v5289 = vpop.f32.mrf.mxu0
        %v5290 = vadd.f32 0.0, %v5289
        %5291 = vmatmul.bf16.gmra.mxu0 %v5211
        %v5292 = vpop.f32.mrf.mxu0
        %v5293 = vadd.f32 0.0, %v5292
        %v5294 = vpop.f32.mrf.mxu0
        %v5295 = vadd.f32 0.0, %v5294
        %5296 = vmatmul.bf16.gmra.mxu0 %v5214
        %v5297 = vpop.f32.mrf.mxu0
        %v5298 = vadd.f32 0.0, %v5297
        %v5299 = vpop.f32.mrf.mxu0
        %v5300 = vadd.f32 0.0, %v5299
        %5301 = vmatmul.bf16.gmra.mxu0 %v5217
        %v5302 = vpop.f32.mrf.mxu0
        %v5303 = vadd.f32 0.0, %v5302
        %v5304 = vpop.f32.mrf.mxu0
        %v5305 = vadd.f32 0.0, %v5304
        %5306 = vmatmul.bf16.gmra.mxu0 %v5220
        %v5307 = vpop.f32.mrf.mxu0
        %v5308 = vadd.f32 0.0, %v5307
        %v5309 = vpop.f32.mrf.mxu0
        %v5310 = vadd.f32 0.0, %v5309
        %5311 = vmatmul.bf16.gmra.mxu0 %v5223
        %v5312 = vpop.f32.mrf.mxu0
        %v5313 = vadd.f32 0.0, %v5312
        %v5314 = vpop.f32.mrf.mxu0
        %v5315 = vadd.f32 0.0, %v5314
        %5316 = vdwg.mxu0
        %v5317 = vadd.f32 %v4756, %v5238
        %v5318 = vadd.f32 %v4757, %v5240
        %v5319 = vadd.f32 %v4758, %v5243
        %v5320 = vadd.f32 %v4759, %v5245
        %v5321 = vadd.f32 %v4760, %v5248
        %v5322 = vadd.f32 %v4761, %v5250
        %v5323 = vadd.f32 %v4762, %v5253
        %v5324 = vadd.f32 %v4763, %v5255
        %v5325 = vadd.f32 %v4764, %v5258
        %v5326 = vadd.f32 %v4765, %v5260
        %v5327 = vadd.f32 %v4766, %v5263
        %v5328 = vadd.f32 %v4767, %v5265
        %v5329 = vadd.f32 %v4768, %v5268
        %v5330 = vadd.f32 %v4769, %v5270
        %v5331 = vadd.f32 %v4770, %v5273
        %v5332 = vadd.f32 %v4771, %v5275
        %v5333 = vadd.f32 %v4772, %v5278
        %v5334 = vadd.f32 %v4773, %v5280
        %v5335 = vadd.f32 %v4774, %v5283
        %v5336 = vadd.f32 %v4775, %v5285
        %v5337 = vadd.f32 %v4776, %v5288
        %v5338 = vadd.f32 %v4777, %v5290
        %v5339 = vadd.f32 %v4778, %v5293
        %v5340 = vadd.f32 %v4779, %v5295
        %v5341 = vadd.f32 %v4780, %v5298
        %v5342 = vadd.f32 %v4781, %v5300
        %v5343 = vadd.f32 %v4782, %v5303
        %v5344 = vadd.f32 %v4783, %v5305
        %v5345 = vadd.f32 %v4784, %v5308
        %v5346 = vadd.f32 %v4785, %v5310
        %v5347 = vadd.f32 %v4786, %v5313
        %v5348 = vadd.f32 %v4787, %v5315
        %v5349 = vld [vmem:[#allocation4] sm:$0x1]
        %v5351 = vperm.slane %v5349, 0
        %v5353 = vadd.f32 %v5317, %v5351
        %v5354 = vadd.f32 %v5318, %v5351
        %v5355 = vadd.f32 %v5319, %v5351
        %v5356 = vadd.f32 %v5320, %v5351
        %v5357 = vadd.f32 %v5321, %v5351
        %v5358 = vadd.f32 %v5322, %v5351
        %v5359 = vadd.f32 %v5323, %v5351
        %v5360 = vadd.f32 %v5324, %v5351
        %v5361 = vadd.f32 %v5325, %v5351
        %v5362 = vadd.f32 %v5326, %v5351
        %v5363 = vadd.f32 %v5327, %v5351
        %v5364 = vadd.f32 %v5328, %v5351
        %v5365 = vadd.f32 %v5329, %v5351
        %v5366 = vadd.f32 %v5330, %v5351
        %v5367 = vadd.f32 %v5331, %v5351
        %v5368 = vadd.f32 %v5332, %v5351
        %v5369 = vadd.f32 %v5333, %v5351
        %v5370 = vadd.f32 %v5334, %v5351
        %v5371 = vadd.f32 %v5335, %v5351
        %v5372 = vadd.f32 %v5336, %v5351
        %v5373 = vadd.f32 %v5337, %v5351
        %v5374 = vadd.f32 %v5338, %v5351
        %v5375 = vadd.f32 %v5339, %v5351
        %v5376 = vadd.f32 %v5340, %v5351
        %v5377 = vadd.f32 %v5341, %v5351
        %v5378 = vadd.f32 %v5342, %v5351
        %v5379 = vadd.f32 %v5343, %v5351
        %v5380 = vadd.f32 %v5344, %v5351
        %v5381 = vadd.f32 %v5345, %v5351
        %v5382 = vadd.f32 %v5346, %v5351
        %v5383 = vadd.f32 %v5347, %v5351
        %v5384 = vadd.f32 %v5348, %v5351
        %vm5385 = vcmp.gt.f32.partialorder %v5353, 0.0
        %vm5386 = vcmp.gt.f32.partialorder %v5354, 0.0
        %vm5387 = vcmp.gt.f32.partialorder %v5355, 0.0
        %vm5388 = vcmp.gt.f32.partialorder %v5356, 0.0
        %vm5389 = vcmp.gt.f32.partialorder %v5357, 0.0
        %vm5390 = vcmp.gt.f32.partialorder %v5358, 0.0
        %vm5391 = vcmp.gt.f32.partialorder %v5359, 0.0
        %vm5392 = vcmp.gt.f32.partialorder %v5360, 0.0
        %vm5393 = vcmp.gt.f32.partialorder %v5361, 0.0
        %vm5394 = vcmp.gt.f32.partialorder %v5362, 0.0
        %vm5395 = vcmp.gt.f32.partialorder %v5363, 0.0
        %vm5396 = vcmp.gt.f32.partialorder %v5364, 0.0
        %vm5397 = vcmp.gt.f32.partialorder %v5365, 0.0
        %vm5398 = vcmp.gt.f32.partialorder %v5366, 0.0
        %vm5399 = vcmp.gt.f32.partialorder %v5367, 0.0
        %vm5400 = vcmp.gt.f32.partialorder %v5368, 0.0
        %vm5401 = vcmp.gt.f32.partialorder %v5369, 0.0
        %vm5402 = vcmp.gt.f32.partialorder %v5370, 0.0
        %vm5403 = vcmp.gt.f32.partialorder %v5371, 0.0
        %vm5404 = vcmp.gt.f32.partialorder %v5372, 0.0
        %vm5405 = vcmp.gt.f32.partialorder %v5373, 0.0
        %vm5406 = vcmp.gt.f32.partialorder %v5374, 0.0
        %vm5407 = vcmp.gt.f32.partialorder %v5375, 0.0
        %vm5408 = vcmp.gt.f32.partialorder %v5376, 0.0
        %vm5409 = vcmp.gt.f32.partialorder %v5377, 0.0
        %vm5410 = vcmp.gt.f32.partialorder %v5378, 0.0
        %vm5411 = vcmp.gt.f32.partialorder %v5379, 0.0
        %vm5412 = vcmp.gt.f32.partialorder %v5380, 0.0
        %vm5413 = vcmp.gt.f32.partialorder %v5381, 0.0
        %vm5414 = vcmp.gt.f32.partialorder %v5382, 0.0
        %vm5415 = vcmp.gt.f32.partialorder %v5383, 0.0
        %vm5416 = vcmp.gt.f32.partialorder %v5384, 0.0
        %v5417 = vmin.f32 %v5353, 0.0
        %v5418 = vmin.f32 %v5354, 0.0
        %v5419 = vmin.f32 %v5355, 0.0
        %v5420 = vmin.f32 %v5356, 0.0
        %v5421 = vmin.f32 %v5357, 0.0
        %v5422 = vmin.f32 %v5358, 0.0
        %v5423 = vmin.f32 %v5359, 0.0
        %v5424 = vmin.f32 %v5360, 0.0
        %v5425 = vmin.f32 %v5361, 0.0
        %v5426 = vmin.f32 %v5362, 0.0
        %v5427 = vmin.f32 %v5363, 0.0
        %v5428 = vmin.f32 %v5364, 0.0
        %v5429 = vmin.f32 %v5365, 0.0
        %v5430 = vmin.f32 %v5366, 0.0
        %v5431 = vmin.f32 %v5367, 0.0
        %v5432 = vmin.f32 %v5368, 0.0
        %v5433 = vmin.f32 %v5369, 0.0
        %v5434 = vmin.f32 %v5370, 0.0
        %v5435 = vmin.f32 %v5371, 0.0
        %v5436 = vmin.f32 %v5372, 0.0
        %v5437 = vmin.f32 %v5373, 0.0
        %v5438 = vmin.f32 %v5374, 0.0
        %v5439 = vmin.f32 %v5375, 0.0
        %v5440 = vmin.f32 %v5376, 0.0
        %v5441 = vmin.f32 %v5377, 0.0
        %v5442 = vmin.f32 %v5378, 0.0
        %v5443 = vmin.f32 %v5379, 0.0
        %v5444 = vmin.f32 %v5380, 0.0
        %v5445 = vmin.f32 %v5381, 0.0
        %v5446 = vmin.f32 %v5382, 0.0
        %v5447 = vmin.f32 %v5383, 0.0
        %v5448 = vmin.f32 %v5384, 0.0
        %v5449 = vmul.f32 %v5417, 1.442695
        %v5450 = vpow.pop %v5449
        %v5451 = vmul.f32 %v5418, 1.442695
        %v5452 = vpow.pop %v5451
        %v5453 = vmul.f32 %v5419, 1.442695
        %v5454 = vpow.pop %v5453
        %v5455 = vmul.f32 %v5420, 1.442695
        %v5456 = vpow.pop %v5455
        %v5457 = vmul.f32 %v5421, 1.442695
        %v5458 = vpow.pop %v5457
        %v5459 = vmul.f32 %v5422, 1.442695
        %v5460 = vpow.pop %v5459
        %v5461 = vmul.f32 %v5423, 1.442695
        %v5462 = vpow.pop %v5461
        %v5463 = vmul.f32 %v5424, 1.442695
        %v5464 = vpow.pop %v5463
        %v5465 = vmul.f32 %v5425, 1.442695
        %v5466 = vpow.pop %v5465
        %v5467 = vmul.f32 %v5426, 1.442695
        %v5468 = vpow.pop %v5467
        %v5469 = vmul.f32 %v5427, 1.442695
        %v5470 = vpow.pop %v5469
        %v5471 = vmul.f32 %v5428, 1.442695
        %v5472 = vpow.pop %v5471
        %v5473 = vmul.f32 %v5429, 1.442695
        %v5474 = vpow.pop %v5473
        %v5475 = vmul.f32 %v5430, 1.442695
        %v5476 = vpow.pop %v5475
        %v5477 = vmul.f32 %v5431, 1.442695
        %v5478 = vpow.pop %v5477
        %v5479 = vmul.f32 %v5432, 1.442695
        %v5480 = vpow.pop %v5479
        %v5481 = vmul.f32 %v5433, 1.442695
        %v5482 = vpow.pop %v5481
        %v5483 = vmul.f32 %v5434, 1.442695
        %v5484 = vpow.pop %v5483
        %v5485 = vmul.f32 %v5435, 1.442695
        %v5486 = vpow.pop %v5485
        %v5487 = vmul.f32 %v5436, 1.442695
        %v5488 = vpow.pop %v5487
        %v5489 = vmul.f32 %v5437, 1.442695
        %v5490 = vpow.pop %v5489
        %v5491 = vmul.f32 %v5438, 1.442695
        %v5492 = vpow.pop %v5491
        %v5493 = vmul.f32 %v5439, 1.442695
        %v5494 = vpow.pop %v5493
        %v5495 = vmul.f32 %v5440, 1.442695
        %v5496 = vpow.pop %v5495
        %v5497 = vmul.f32 %v5441, 1.442695
        %v5498 = vpow.pop %v5497
        %v5499 = vmul.f32 %v5442, 1.442695
        %v5500 = vpow.pop %v5499
        %v5501 = vmul.f32 %v5443, 1.442695
        %v5502 = vpow.pop %v5501
        %v5503 = vmul.f32 %v5444, 1.442695
        %v5504 = vpow.pop %v5503
        %v5505 = vmul.f32 %v5445, 1.442695
        %v5506 = vpow.pop %v5505
        %v5507 = vmul.f32 %v5446, 1.442695
        %v5508 = vpow.pop %v5507
        %v5509 = vmul.f32 %v5447, 1.442695
        %v5510 = vpow.pop %v5509
        %v5511 = vmul.f32 %v5448, 1.442695
        %v5512 = vpow.pop %v5511
        %v5513 = vsub.f32 %v5450, 1.0
        %v5514 = vsub.f32 %v5452, 1.0
        %v5515 = vsub.f32 %v5454, 1.0
        %v5516 = vsub.f32 %v5456, 1.0
        %v5517 = vsub.f32 %v5458, 1.0
        %v5518 = vsub.f32 %v5460, 1.0
        %v5519 = vsub.f32 %v5462, 1.0
        %v5520 = vsub.f32 %v5464, 1.0
        %v5521 = vsub.f32 %v5466, 1.0
        %v5522 = vsub.f32 %v5468, 1.0
        %v5523 = vsub.f32 %v5470, 1.0
        %v5524 = vsub.f32 %v5472, 1.0
        %v5525 = vsub.f32 %v5474, 1.0
        %v5526 = vsub.f32 %v5476, 1.0
        %v5527 = vsub.f32 %v5478, 1.0
        %v5528 = vsub.f32 %v5480, 1.0
        %v5529 = vsub.f32 %v5482, 1.0
        %v5530 = vsub.f32 %v5484, 1.0
        %v5531 = vsub.f32 %v5486, 1.0
        %v5532 = vsub.f32 %v5488, 1.0
        %v5533 = vsub.f32 %v5490, 1.0
        %v5534 = vsub.f32 %v5492, 1.0
        %v5535 = vsub.f32 %v5494, 1.0
        %v5536 = vsub.f32 %v5496, 1.0
        %v5537 = vsub.f32 %v5498, 1.0
        %v5538 = vsub.f32 %v5500, 1.0
        %v5539 = vsub.f32 %v5502, 1.0
        %v5540 = vsub.f32 %v5504, 1.0
        %v5541 = vsub.f32 %v5506, 1.0
        %v5542 = vsub.f32 %v5508, 1.0
        %v5543 = vsub.f32 %v5510, 1.0
        %v5544 = vsub.f32 %v5512, 1.0
        %v5545 = vsel %vm5385, %v5353, %v5513
        %v5546 = vsel %vm5386, %v5354, %v5514
        %v5547 = vsel %vm5387, %v5355, %v5515
        %v5548 = vsel %vm5388, %v5356, %v5516
        %v5549 = vsel %vm5389, %v5357, %v5517
        %v5550 = vsel %vm5390, %v5358, %v5518
        %v5551 = vsel %vm5391, %v5359, %v5519
        %v5552 = vsel %vm5392, %v5360, %v5520
        %v5553 = vsel %vm5393, %v5361, %v5521
        %v5554 = vsel %vm5394, %v5362, %v5522
        %v5555 = vsel %vm5395, %v5363, %v5523
        %v5556 = vsel %vm5396, %v5364, %v5524
        %v5557 = vsel %vm5397, %v5365, %v5525
        %v5558 = vsel %vm5398, %v5366, %v5526
        %v5559 = vsel %vm5399, %v5367, %v5527
        %v5560 = vsel %vm5400, %v5368, %v5528
        %v5561 = vsel %vm5401, %v5369, %v5529
        %v5562 = vsel %vm5402, %v5370, %v5530
        %v5563 = vsel %vm5403, %v5371, %v5531
        %v5564 = vsel %vm5404, %v5372, %v5532
        %v5565 = vsel %vm5405, %v5373, %v5533
        %v5566 = vsel %vm5406, %v5374, %v5534
        %v5567 = vsel %vm5407, %v5375, %v5535
        %v5568 = vsel %vm5408, %v5376, %v5536
        %v5569 = vsel %vm5409, %v5377, %v5537
        %v5570 = vsel %vm5410, %v5378, %v5538
        %v5571 = vsel %vm5411, %v5379, %v5539
        %v5572 = vsel %vm5412, %v5380, %v5540
        %v5573 = vsel %vm5413, %v5381, %v5541
        %v5574 = vsel %vm5414, %v5382, %v5542
        %v5575 = vsel %vm5415, %v5383, %v5543
        %v5576 = vsel %vm5416, %v5384, %v5544
        %v5577 = vpack.c.bf16 %v5546, %v5545
        %v5578 = vpack.c.bf16 %v5548, %v5547
        %v5579 = vpack.c.bf16 %v5550, %v5549
        %v5580 = vpack.c.bf16 %v5552, %v5551
        %v5581 = vpack.c.bf16 %v5554, %v5553
        %v5582 = vpack.c.bf16 %v5556, %v5555
        %v5583 = vpack.c.bf16 %v5558, %v5557
        %v5584 = vpack.c.bf16 %v5560, %v5559
        %v5585 = vpack.c.bf16 %v5562, %v5561
        %v5586 = vpack.c.bf16 %v5564, %v5563
        %v5587 = vpack.c.bf16 %v5566, %v5565
        %v5588 = vpack.c.bf16 %v5568, %v5567
        %v5589 = vpack.c.bf16 %v5570, %v5569
        %v5590 = vpack.c.bf16 %v5572, %v5571
        %v5591 = vpack.c.bf16 %v5574, %v5573
        %v5592 = vpack.c.bf16 %v5576, %v5575
        %5593 = vmatpush.bf16.msra.mxu0 %v5584
        %5594 = vmatpush.bf16.msra.mxu0 %v5583
        %5595 = vmatpush.bf16.msra.mxu0 %v5582
        %5596 = vmatpush.bf16.msra.mxu0 %v5581
        %5597 = vmatpush.bf16.msra.mxu0 %v5580
        %5598 = vmatpush.bf16.msra.mxu0 %v5579
        %5599 = vmatpush.bf16.msra.mxu0 %v5578
        %5600 = vmatpush.bf16.msra.mxu0 %v5577
        %5601 = vmatmul.bf16.gmra.mxu0 %v492
        %v5602 = vpop.f32.mrf.mxu0
        %v5603 = vadd.f32 0.0, %v5602
        %v5604 = vpop.f32.mrf.mxu0
        %v5605 = vadd.f32 0.0, %v5604
        %5606 = vmatmul.bf16.gmra.mxu0 %v494
        %v5607 = vpop.f32.mrf.mxu0
        %v5608 = vadd.f32 0.0, %v5607
        %v5609 = vpop.f32.mrf.mxu0
        %v5610 = vadd.f32 0.0, %v5609
        %5611 = vmatmul.bf16.gmra.mxu0 %v496
        %v5612 = vpop.f32.mrf.mxu0
        %v5613 = vadd.f32 0.0, %v5612
        %v5614 = vpop.f32.mrf.mxu0
        %v5615 = vadd.f32 0.0, %v5614
        %5616 = vmatmul.bf16.gmra.mxu0 %v498
        %v5617 = vpop.f32.mrf.mxu0
        %v5618 = vadd.f32 0.0, %v5617
        %v5619 = vpop.f32.mrf.mxu0
        %v5620 = vadd.f32 0.0, %v5619
        %5621 = vmatmul.bf16.gmra.mxu0 %v500
        %v5622 = vpop.f32.mrf.mxu0
        %v5623 = vadd.f32 0.0, %v5622
        %v5624 = vpop.f32.mrf.mxu0
        %v5625 = vadd.f32 0.0, %v5624
        %5626 = vmatmul.bf16.gmra.mxu0 %v502
        %v5627 = vpop.f32.mrf.mxu0
        %v5628 = vadd.f32 0.0, %v5627
        %v5629 = vpop.f32.mrf.mxu0
        %v5630 = vadd.f32 0.0, %v5629
        %5631 = vmatmul.bf16.gmra.mxu0 %v504
        %v5632 = vpop.f32.mrf.mxu0
        %v5633 = vadd.f32 0.0, %v5632
        %v5634 = vpop.f32.mrf.mxu0
        %v5635 = vadd.f32 0.0, %v5634
        %5636 = vmatmul.bf16.gmra.mxu0 %v506
        %v5637 = vpop.f32.mrf.mxu0
        %v5638 = vadd.f32 0.0, %v5637
        %v5639 = vpop.f32.mrf.mxu0
        %v5640 = vadd.f32 0.0, %v5639
        %5641 = vmatmul.bf16.gmra.mxu0 %v508
        %v5642 = vpop.f32.mrf.mxu0
        %v5643 = vadd.f32 0.0, %v5642
        %v5644 = vpop.f32.mrf.mxu0
        %v5645 = vadd.f32 0.0, %v5644
        %5646 = vmatmul.bf16.gmra.mxu0 %v510
        %v5647 = vpop.f32.mrf.mxu0
        %v5648 = vadd.f32 0.0, %v5647
        %v5649 = vpop.f32.mrf.mxu0
        %v5650 = vadd.f32 0.0, %v5649
        %5651 = vmatmul.bf16.gmra.mxu0 %v512
        %v5652 = vpop.f32.mrf.mxu0
        %v5653 = vadd.f32 0.0, %v5652
        %v5654 = vpop.f32.mrf.mxu0
        %v5655 = vadd.f32 0.0, %v5654
        %5656 = vmatmul.bf16.gmra.mxu0 %v514
        %v5657 = vpop.f32.mrf.mxu0
        %v5658 = vadd.f32 0.0, %v5657
        %v5659 = vpop.f32.mrf.mxu0
        %v5660 = vadd.f32 0.0, %v5659
        %5661 = vmatmul.bf16.gmra.mxu0 %v516
        %v5662 = vpop.f32.mrf.mxu0
        %v5663 = vadd.f32 0.0, %v5662
        %v5664 = vpop.f32.mrf.mxu0
        %v5665 = vadd.f32 0.0, %v5664
        %5666 = vmatmul.bf16.gmra.mxu0 %v518
        %v5667 = vpop.f32.mrf.mxu0
        %v5668 = vadd.f32 0.0, %v5667
        %v5669 = vpop.f32.mrf.mxu0
        %v5670 = vadd.f32 0.0, %v5669
        %5671 = vmatmul.bf16.gmra.mxu0 %v520
        %v5672 = vpop.f32.mrf.mxu0
        %v5673 = vadd.f32 0.0, %v5672
        %v5674 = vpop.f32.mrf.mxu0
        %v5675 = vadd.f32 0.0, %v5674
        %5676 = vmatmul.bf16.gmra.mxu0 %v522
        %v5677 = vpop.f32.mrf.mxu0
        %v5678 = vadd.f32 0.0, %v5677
        %v5679 = vpop.f32.mrf.mxu0
        %v5680 = vadd.f32 0.0, %v5679
        %5681 = vdwg.mxu0
        %5682 = vmatpush.bf16.msra.mxu0 %v5592
        %5683 = vmatpush.bf16.msra.mxu0 %v5591
        %5684 = vmatpush.bf16.msra.mxu0 %v5590
        %5685 = vmatpush.bf16.msra.mxu0 %v5589
        %5686 = vmatpush.bf16.msra.mxu0 %v5588
        %5687 = vmatpush.bf16.msra.mxu0 %v5587
        %5688 = vmatpush.bf16.msra.mxu0 %v5586
        %5689 = vmatpush.bf16.msra.mxu0 %v5585
        %5690 = vmatmul.bf16.gmra.mxu0 %v493
        %v5691 = vpop.f32.mrf.mxu0
        %v5692 = vadd.f32 %v5603, %v5691
        %v5693 = vpop.f32.mrf.mxu0
        %v5694 = vadd.f32 %v5605, %v5693
        %5695 = vmatmul.bf16.gmra.mxu0 %v495
        %v5696 = vpop.f32.mrf.mxu0
        %v5697 = vadd.f32 %v5608, %v5696
        %v5698 = vpop.f32.mrf.mxu0
        %v5699 = vadd.f32 %v5610, %v5698
        %5700 = vmatmul.bf16.gmra.mxu0 %v497
        %v5701 = vpop.f32.mrf.mxu0
        %v5702 = vadd.f32 %v5613, %v5701
        %v5703 = vpop.f32.mrf.mxu0
        %v5704 = vadd.f32 %v5615, %v5703
        %5705 = vmatmul.bf16.gmra.mxu0 %v499
        %v5706 = vpop.f32.mrf.mxu0
        %v5707 = vadd.f32 %v5618, %v5706
        %v5708 = vpop.f32.mrf.mxu0
        %v5709 = vadd.f32 %v5620, %v5708
        %5710 = vmatmul.bf16.gmra.mxu0 %v501
        %v5711 = vpop.f32.mrf.mxu0
        %v5712 = vadd.f32 %v5623, %v5711
        %v5713 = vpop.f32.mrf.mxu0
        %v5714 = vadd.f32 %v5625, %v5713
        %5715 = vmatmul.bf16.gmra.mxu0 %v503
        %v5716 = vpop.f32.mrf.mxu0
        %v5717 = vadd.f32 %v5628, %v5716
        %v5718 = vpop.f32.mrf.mxu0
        %v5719 = vadd.f32 %v5630, %v5718
        %5720 = vmatmul.bf16.gmra.mxu0 %v505
        %v5721 = vpop.f32.mrf.mxu0
        %v5722 = vadd.f32 %v5633, %v5721
        %v5723 = vpop.f32.mrf.mxu0
        %v5724 = vadd.f32 %v5635, %v5723
        %5725 = vmatmul.bf16.gmra.mxu0 %v507
        %v5726 = vpop.f32.mrf.mxu0
        %v5727 = vadd.f32 %v5638, %v5726
        %v5728 = vpop.f32.mrf.mxu0
        %v5729 = vadd.f32 %v5640, %v5728
        %5730 = vmatmul.bf16.gmra.mxu0 %v509
        %v5731 = vpop.f32.mrf.mxu0
        %v5732 = vadd.f32 %v5643, %v5731
        %v5733 = vpop.f32.mrf.mxu0
        %v5734 = vadd.f32 %v5645, %v5733
        %5735 = vmatmul.bf16.gmra.mxu0 %v511
        %v5736 = vpop.f32.mrf.mxu0
        %v5737 = vadd.f32 %v5648, %v5736
        %v5738 = vpop.f32.mrf.mxu0
        %v5739 = vadd.f32 %v5650, %v5738
        %5740 = vmatmul.bf16.gmra.mxu0 %v513
        %v5741 = vpop.f32.mrf.mxu0
        %v5742 = vadd.f32 %v5653, %v5741
        %v5743 = vpop.f32.mrf.mxu0
        %v5744 = vadd.f32 %v5655, %v5743
        %5745 = vmatmul.bf16.gmra.mxu0 %v515
        %v5746 = vpop.f32.mrf.mxu0
        %v5747 = vadd.f32 %v5658, %v5746
        %v5748 = vpop.f32.mrf.mxu0
        %v5749 = vadd.f32 %v5660, %v5748
        %5750 = vmatmul.bf16.gmra.mxu0 %v517
        %v5751 = vpop.f32.mrf.mxu0
        %v5752 = vadd.f32 %v5663, %v5751
        %v5753 = vpop.f32.mrf.mxu0
        %v5754 = vadd.f32 %v5665, %v5753
        %5755 = vmatmul.bf16.gmra.mxu0 %v519
        %v5756 = vpop.f32.mrf.mxu0
        %v5757 = vadd.f32 %v5668, %v5756
        %v5758 = vpop.f32.mrf.mxu0
        %v5759 = vadd.f32 %v5670, %v5758
        %5760 = vmatmul.bf16.gmra.mxu0 %v521
        %v5761 = vpop.f32.mrf.mxu0
        %v5762 = vadd.f32 %v5673, %v5761
        %v5763 = vpop.f32.mrf.mxu0
        %v5764 = vadd.f32 %v5675, %v5763
        %5765 = vmatmul.bf16.gmra.mxu0 %v523
        %v5766 = vpop.f32.mrf.mxu0
        %v5767 = vadd.f32 %v5678, %v5766
        %v5768 = vpop.f32.mrf.mxu0
        %v5769 = vadd.f32 %v5680, %v5768
        %5770 = vdwg.mxu0
        %v5771 = vpack.c.bf16 %v5694, %v5692
        %v5772 = vpack.c.bf16 %v5699, %v5697
        %v5773 = vpack.c.bf16 %v5704, %v5702
        %v5774 = vpack.c.bf16 %v5709, %v5707
        %v5775 = vpack.c.bf16 %v5714, %v5712
        %v5776 = vpack.c.bf16 %v5719, %v5717
        %v5777 = vpack.c.bf16 %v5724, %v5722
        %v5778 = vpack.c.bf16 %v5729, %v5727
        %v5779 = vpack.c.bf16 %v5734, %v5732
        %v5780 = vpack.c.bf16 %v5739, %v5737
        %v5781 = vpack.c.bf16 %v5744, %v5742
        %v5782 = vpack.c.bf16 %v5749, %v5747
        %v5783 = vpack.c.bf16 %v5754, %v5752
        %v5784 = vpack.c.bf16 %v5759, %v5757
        %v5785 = vpack.c.bf16 %v5764, %v5762
        %v5786 = vpack.c.bf16 %v5769, %v5767
        %v5787 = vld [vmem:[#allocation6] sm:$0xf]
        %5788 = vmatpush.bf16.msra.mxu0 %v5584
        %5789 = vmatpush.bf16.msra.mxu0 %v5583
        %5790 = vmatpush.bf16.msra.mxu0 %v5582
        %5791 = vmatpush.bf16.msra.mxu0 %v5581
        %5792 = vmatpush.bf16.msra.mxu0 %v5580
        %5793 = vmatpush.bf16.msra.mxu0 %v5579
        %5794 = vmatpush.bf16.msra.mxu0 %v5578
        %5795 = vmatpush.bf16.msra.mxu0 %v5577
        %5796 = vmatmul.bf16.gmra.mxu0 %v880
        %v5797 = vpop.f32.mrf.mxu0
        %v5798 = vadd.f32 0.0, %v5797
        %v5799 = vpop.f32.mrf.mxu0
        %v5800 = vadd.f32 0.0, %v5799
        %5801 = vmatmul.bf16.gmra.mxu0 %v882
        %v5802 = vpop.f32.mrf.mxu0
        %v5803 = vadd.f32 0.0, %v5802
        %v5804 = vpop.f32.mrf.mxu0
        %v5805 = vadd.f32 0.0, %v5804
        %5806 = vmatmul.bf16.gmra.mxu0 %v884
        %v5807 = vpop.f32.mrf.mxu0
        %v5808 = vadd.f32 0.0, %v5807
        %v5809 = vpop.f32.mrf.mxu0
        %v5810 = vadd.f32 0.0, %v5809
        %5811 = vmatmul.bf16.gmra.mxu0 %v886
        %v5812 = vpop.f32.mrf.mxu0
        %v5813 = vadd.f32 0.0, %v5812
        %v5814 = vpop.f32.mrf.mxu0
        %v5815 = vadd.f32 0.0, %v5814
        %5816 = vmatmul.bf16.gmra.mxu0 %v888
        %v5817 = vpop.f32.mrf.mxu0
        %v5818 = vadd.f32 0.0, %v5817
        %v5819 = vpop.f32.mrf.mxu0
        %v5820 = vadd.f32 0.0, %v5819
        %5821 = vmatmul.bf16.gmra.mxu0 %v890
        %v5822 = vpop.f32.mrf.mxu0
        %v5823 = vadd.f32 0.0, %v5822
        %v5824 = vpop.f32.mrf.mxu0
        %v5825 = vadd.f32 0.0, %v5824
        %5826 = vmatmul.bf16.gmra.mxu0 %v892
        %v5827 = vpop.f32.mrf.mxu0
        %v5828 = vadd.f32 0.0, %v5827
        %v5829 = vpop.f32.mrf.mxu0
        %v5830 = vadd.f32 0.0, %v5829
        %5831 = vmatmul.bf16.gmra.mxu0 %v894
        %v5832 = vpop.f32.mrf.mxu0
        %v5833 = vadd.f32 0.0, %v5832
        %v5834 = vpop.f32.mrf.mxu0
        %v5835 = vadd.f32 0.0, %v5834
        %5836 = vmatmul.bf16.gmra.mxu0 %v896
        %v5837 = vpop.f32.mrf.mxu0
        %v5838 = vadd.f32 0.0, %v5837
        %v5839 = vpop.f32.mrf.mxu0
        %v5840 = vadd.f32 0.0, %v5839
        %5841 = vmatmul.bf16.gmra.mxu0 %v898
        %v5842 = vpop.f32.mrf.mxu0
        %v5843 = vadd.f32 0.0, %v5842
        %v5844 = vpop.f32.mrf.mxu0
        %v5845 = vadd.f32 0.0, %v5844
        %5846 = vmatmul.bf16.gmra.mxu0 %v900
        %v5847 = vpop.f32.mrf.mxu0
        %v5848 = vadd.f32 0.0, %v5847
        %v5849 = vpop.f32.mrf.mxu0
        %v5850 = vadd.f32 0.0, %v5849
        %5851 = vmatmul.bf16.gmra.mxu0 %v902
        %v5852 = vpop.f32.mrf.mxu0
        %v5853 = vadd.f32 0.0, %v5852
        %v5854 = vpop.f32.mrf.mxu0
        %v5855 = vadd.f32 0.0, %v5854
        %5856 = vmatmul.bf16.gmra.mxu0 %v904
        %v5857 = vpop.f32.mrf.mxu0
        %v5858 = vadd.f32 0.0, %v5857
        %v5859 = vpop.f32.mrf.mxu0
        %v5860 = vadd.f32 0.0, %v5859
        %5861 = vmatmul.bf16.gmra.mxu0 %v906
        %v5862 = vpop.f32.mrf.mxu0
        %v5863 = vadd.f32 0.0, %v5862
        %v5864 = vpop.f32.mrf.mxu0
        %v5865 = vadd.f32 0.0, %v5864
        %5866 = vmatmul.bf16.gmra.mxu0 %v908
        %v5867 = vpop.f32.mrf.mxu0
        %v5868 = vadd.f32 0.0, %v5867
        %v5869 = vpop.f32.mrf.mxu0
        %v5870 = vadd.f32 0.0, %v5869
        %5871 = vmatmul.bf16.gmra.mxu0 %v910
        %v5872 = vpop.f32.mrf.mxu0
        %v5873 = vadd.f32 0.0, %v5872
        %v5874 = vpop.f32.mrf.mxu0
        %v5875 = vadd.f32 0.0, %v5874
        %5876 = vdwg.mxu0
        %5877 = vmatpush.bf16.msra.mxu0 %v5592
        %5878 = vmatpush.bf16.msra.mxu0 %v5591
        %5879 = vmatpush.bf16.msra.mxu0 %v5590
        %5880 = vmatpush.bf16.msra.mxu0 %v5589
        %5881 = vmatpush.bf16.msra.mxu0 %v5588
        %5882 = vmatpush.bf16.msra.mxu0 %v5587
        %5883 = vmatpush.bf16.msra.mxu0 %v5586
        %5884 = vmatpush.bf16.msra.mxu0 %v5585
        %5885 = vmatmul.bf16.gmra.mxu0 %v881
        %v5886 = vpop.f32.mrf.mxu0
        %v5887 = vadd.f32 %v5798, %v5886
        %v5888 = vpop.f32.mrf.mxu0
        %v5889 = vadd.f32 %v5800, %v5888
        %5890 = vmatmul.bf16.gmra.mxu0 %v883
        %v5891 = vpop.f32.mrf.mxu0
        %v5892 = vadd.f32 %v5803, %v5891
        %v5893 = vpop.f32.mrf.mxu0
        %v5894 = vadd.f32 %v5805, %v5893
        %5895 = vmatmul.bf16.gmra.mxu0 %v885
        %v5896 = vpop.f32.mrf.mxu0
        %v5897 = vadd.f32 %v5808, %v5896
        %v5898 = vpop.f32.mrf.mxu0
        %v5899 = vadd.f32 %v5810, %v5898
        %5900 = vmatmul.bf16.gmra.mxu0 %v887
        %v5901 = vpop.f32.mrf.mxu0
        %v5902 = vadd.f32 %v5813, %v5901
        %v5903 = vpop.f32.mrf.mxu0
        %v5904 = vadd.f32 %v5815, %v5903
        %5905 = vmatmul.bf16.gmra.mxu0 %v889
        %v5906 = vpop.f32.mrf.mxu0
        %v5907 = vadd.f32 %v5818, %v5906
        %v5908 = vpop.f32.mrf.mxu0
        %v5909 = vadd.f32 %v5820, %v5908
        %5910 = vmatmul.bf16.gmra.mxu0 %v891
        %v5911 = vpop.f32.mrf.mxu0
        %v5912 = vadd.f32 %v5823, %v5911
        %v5913 = vpop.f32.mrf.mxu0
        %v5914 = vadd.f32 %v5825, %v5913
        %5915 = vmatmul.bf16.gmra.mxu0 %v893
        %v5916 = vpop.f32.mrf.mxu0
        %v5917 = vadd.f32 %v5828, %v5916
        %v5918 = vpop.f32.mrf.mxu0
        %v5919 = vadd.f32 %v5830, %v5918
        %5920 = vmatmul.bf16.gmra.mxu0 %v895
        %v5921 = vpop.f32.mrf.mxu0
        %v5922 = vadd.f32 %v5833, %v5921
        %v5923 = vpop.f32.mrf.mxu0
        %v5924 = vadd.f32 %v5835, %v5923
        %5925 = vmatmul.bf16.gmra.mxu0 %v897
        %v5926 = vpop.f32.mrf.mxu0
        %v5927 = vadd.f32 %v5838, %v5926
        %v5928 = vpop.f32.mrf.mxu0
        %v5929 = vadd.f32 %v5840, %v5928
        %5930 = vmatmul.bf16.gmra.mxu0 %v899
        %v5931 = vpop.f32.mrf.mxu0
        %v5932 = vadd.f32 %v5843, %v5931
        %v5933 = vpop.f32.mrf.mxu0
        %v5934 = vadd.f32 %v5845, %v5933
        %5935 = vmatmul.bf16.gmra.mxu0 %v901
        %v5936 = vpop.f32.mrf.mxu0
        %v5937 = vadd.f32 %v5848, %v5936
        %v5938 = vpop.f32.mrf.mxu0
        %v5939 = vadd.f32 %v5850, %v5938
        %5940 = vmatmul.bf16.gmra.mxu0 %v903
        %v5941 = vpop.f32.mrf.mxu0
        %v5942 = vadd.f32 %v5853, %v5941
        %v5943 = vpop.f32.mrf.mxu0
        %v5944 = vadd.f32 %v5855, %v5943
        %5945 = vmatmul.bf16.gmra.mxu0 %v905
        %v5946 = vpop.f32.mrf.mxu0
        %v5947 = vadd.f32 %v5858, %v5946
        %v5948 = vpop.f32.mrf.mxu0
        %v5949 = vadd.f32 %v5860, %v5948
        %5950 = vmatmul.bf16.gmra.mxu0 %v907
        %v5951 = vpop.f32.mrf.mxu0
        %v5952 = vadd.f32 %v5863, %v5951
        %v5953 = vpop.f32.mrf.mxu0
        %v5954 = vadd.f32 %v5865, %v5953
        %5955 = vmatmul.bf16.gmra.mxu0 %v909
        %v5956 = vpop.f32.mrf.mxu0
        %v5957 = vadd.f32 %v5868, %v5956
        %v5958 = vpop.f32.mrf.mxu0
        %v5959 = vadd.f32 %v5870, %v5958
        %5960 = vmatmul.bf16.gmra.mxu0 %v911
        %v5961 = vpop.f32.mrf.mxu0
        %v5962 = vadd.f32 %v5873, %v5961
        %v5963 = vpop.f32.mrf.mxu0
        %v5964 = vadd.f32 %v5875, %v5963
        %5965 = vdwg.mxu0
        %v5966 = vpack.c.bf16 %v5889, %v5887
        %v5967 = vpack.c.bf16 %v5894, %v5892
        %v5968 = vpack.c.bf16 %v5899, %v5897
        %v5969 = vpack.c.bf16 %v5904, %v5902
        %v5970 = vpack.c.bf16 %v5909, %v5907
        %v5971 = vpack.c.bf16 %v5914, %v5912
        %v5972 = vpack.c.bf16 %v5919, %v5917
        %v5973 = vpack.c.bf16 %v5924, %v5922
        %v5974 = vpack.c.bf16 %v5929, %v5927
        %v5975 = vpack.c.bf16 %v5934, %v5932
        %v5976 = vpack.c.bf16 %v5939, %v5937
        %v5977 = vpack.c.bf16 %v5944, %v5942
        %v5978 = vpack.c.bf16 %v5949, %v5947
        %v5979 = vpack.c.bf16 %v5954, %v5952
        %v5980 = vpack.c.bf16 %v5959, %v5957
        %v5981 = vpack.c.bf16 %v5964, %v5962
        %s5982 = scalar_lea.vmem [#allocation6], 4
        %v5983 = vld [vmem:[%s5982] sm:$0xf]
        %vm5984 = vcmask 64512
        %v5986 = vsel %vm5984, %v5966, 0
        %v5989 = vsel %vm5984, %v5967, 0
        %v5992 = vsel %vm5984, %v5968, 0
        %v5995 = vsel %vm5984, %v5969, 0
        %v5998 = vsel %vm5984, %v5970, 0
        %v6001 = vsel %vm5984, %v5971, 0
        %v6004 = vsel %vm5984, %v5972, 0
        %v6007 = vsel %vm5984, %v5973, 0
        %v6010 = vsel %vm5984, %v5974, 0
        %v6013 = vsel %vm5984, %v5975, 0
        %v6016 = vsel %vm5984, %v5976, 0
        %v6019 = vsel %vm5984, %v5977, 0
        %v6022 = vsel %vm5984, %v5978, 0
        %v6025 = vsel %vm5984, %v5979, 0
        %v6028 = vsel %vm5984, %v5980, 0
        %v6031 = vsel %vm5984, %v5981, 0
        %vm6033 = vcmask 1043456
        %v6035 = vsel %vm6033, %v5983, 0
        %6037 = vmatpush.bf16.msra.mxu0 0
        %6038 = vmatpush.bf16.msra.mxu0 0
        %6039 = vmatpush.bf16.msra.mxu0 0
        %6040 = vmatpush.bf16.msra.mxu0 0
        %6041 = vmatpush.bf16.msra.mxu0 0
        %6042 = vmatpush.bf16.msra.mxu0 0
        %6043 = vmatpush.bf16.msra.mxu0 0
        %6044 = vmatpush.bf16.msra.mxu0 %v6035
        %6045 = vmatmul.bf16.gmra.mxu0 %v5986
        %v6046 = vpop.f32.mrf.mxu0
        %v6047 = vadd.f32 0.0, %v6046
        %v6048 = vpop.f32.mrf.mxu0
        %v6049 = vadd.f32 0.0, %v6048
        %6050 = vmatmul.bf16.gmra.mxu0 %v5989
        %v6051 = vpop.f32.mrf.mxu0
        %v6052 = vadd.f32 0.0, %v6051
        %v6053 = vpop.f32.mrf.mxu0
        %v6054 = vadd.f32 0.0, %v6053
        %6055 = vmatmul.bf16.gmra.mxu0 %v5992
        %v6056 = vpop.f32.mrf.mxu0
        %v6057 = vadd.f32 0.0, %v6056
        %v6058 = vpop.f32.mrf.mxu0
        %v6059 = vadd.f32 0.0, %v6058
        %6060 = vmatmul.bf16.gmra.mxu0 %v5995
        %v6061 = vpop.f32.mrf.mxu0
        %v6062 = vadd.f32 0.0, %v6061
        %v6063 = vpop.f32.mrf.mxu0
        %v6064 = vadd.f32 0.0, %v6063
        %6065 = vmatmul.bf16.gmra.mxu0 %v5998
        %v6066 = vpop.f32.mrf.mxu0
        %v6067 = vadd.f32 0.0, %v6066
        %v6068 = vpop.f32.mrf.mxu0
        %v6069 = vadd.f32 0.0, %v6068
        %6070 = vmatmul.bf16.gmra.mxu0 %v6001
        %v6071 = vpop.f32.mrf.mxu0
        %v6072 = vadd.f32 0.0, %v6071
        %v6073 = vpop.f32.mrf.mxu0
        %v6074 = vadd.f32 0.0, %v6073
        %6075 = vmatmul.bf16.gmra.mxu0 %v6004
        %v6076 = vpop.f32.mrf.mxu0
        %v6077 = vadd.f32 0.0, %v6076
        %v6078 = vpop.f32.mrf.mxu0
        %v6079 = vadd.f32 0.0, %v6078
        %6080 = vmatmul.bf16.gmra.mxu0 %v6007
        %v6081 = vpop.f32.mrf.mxu0
        %v6082 = vadd.f32 0.0, %v6081
        %v6083 = vpop.f32.mrf.mxu0
        %v6084 = vadd.f32 0.0, %v6083
        %6085 = vmatmul.bf16.gmra.mxu0 %v6010
        %v6086 = vpop.f32.mrf.mxu0
        %v6087 = vadd.f32 0.0, %v6086
        %v6088 = vpop.f32.mrf.mxu0
        %v6089 = vadd.f32 0.0, %v6088
        %6090 = vmatmul.bf16.gmra.mxu0 %v6013
        %v6091 = vpop.f32.mrf.mxu0
        %v6092 = vadd.f32 0.0, %v6091
        %v6093 = vpop.f32.mrf.mxu0
        %v6094 = vadd.f32 0.0, %v6093
        %6095 = vmatmul.bf16.gmra.mxu0 %v6016
        %v6096 = vpop.f32.mrf.mxu0
        %v6097 = vadd.f32 0.0, %v6096
        %v6098 = vpop.f32.mrf.mxu0
        %v6099 = vadd.f32 0.0, %v6098
        %6100 = vmatmul.bf16.gmra.mxu0 %v6019
        %v6101 = vpop.f32.mrf.mxu0
        %v6102 = vadd.f32 0.0, %v6101
        %v6103 = vpop.f32.mrf.mxu0
        %v6104 = vadd.f32 0.0, %v6103
        %6105 = vmatmul.bf16.gmra.mxu0 %v6022
        %v6106 = vpop.f32.mrf.mxu0
        %v6107 = vadd.f32 0.0, %v6106
        %v6108 = vpop.f32.mrf.mxu0
        %v6109 = vadd.f32 0.0, %v6108
        %6110 = vmatmul.bf16.gmra.mxu0 %v6025
        %v6111 = vpop.f32.mrf.mxu0
        %v6112 = vadd.f32 0.0, %v6111
        %v6113 = vpop.f32.mrf.mxu0
        %v6114 = vadd.f32 0.0, %v6113
        %6115 = vmatmul.bf16.gmra.mxu0 %v6028
        %v6116 = vpop.f32.mrf.mxu0
        %v6117 = vadd.f32 0.0, %v6116
        %v6118 = vpop.f32.mrf.mxu0
        %v6119 = vadd.f32 0.0, %v6118
        %6120 = vmatmul.bf16.gmra.mxu0 %v6031
        %v6121 = vpop.f32.mrf.mxu0
        %v6122 = vadd.f32 0.0, %v6121
        %v6123 = vpop.f32.mrf.mxu0
        %v6124 = vadd.f32 0.0, %v6123
        %6125 = vdwg.mxu0
        %v6127 = vsel %vm5984, %v5771, 0
        %v6130 = vsel %vm5984, %v5772, 0
        %v6133 = vsel %vm5984, %v5773, 0
        %v6136 = vsel %vm5984, %v5774, 0
        %v6139 = vsel %vm5984, %v5775, 0
        %v6142 = vsel %vm5984, %v5776, 0
        %v6145 = vsel %vm5984, %v5777, 0
        %v6148 = vsel %vm5984, %v5778, 0
        %v6151 = vsel %vm5984, %v5779, 0
        %v6154 = vsel %vm5984, %v5780, 0
        %v6157 = vsel %vm5984, %v5781, 0
        %v6160 = vsel %vm5984, %v5782, 0
        %v6163 = vsel %vm5984, %v5783, 0
        %v6166 = vsel %vm5984, %v5784, 0
        %v6169 = vsel %vm5984, %v5785, 0
        %v6172 = vsel %vm5984, %v5786, 0
        %v6175 = vsel %vm6033, %v5787, 0
        %6177 = vmatpush.bf16.msra.mxu0 0
        %6178 = vmatpush.bf16.msra.mxu0 0
        %6179 = vmatpush.bf16.msra.mxu0 0
        %6180 = vmatpush.bf16.msra.mxu0 0
        %6181 = vmatpush.bf16.msra.mxu0 0
        %6182 = vmatpush.bf16.msra.mxu0 0
        %6183 = vmatpush.bf16.msra.mxu0 0
        %6184 = vmatpush.bf16.msra.mxu0 %v6175
        %6185 = vmatmul.bf16.gmra.mxu0 %v6127
        %v6186 = vpop.f32.mrf.mxu0
        %v6187 = vadd.f32 %v6047, %v6186
        %v6188 = vpop.f32.mrf.mxu0
        %v6189 = vadd.f32 %v6049, %v6188
        %6190 = vmatmul.bf16.gmra.mxu0 %v6130
        %v6191 = vpop.f32.mrf.mxu0
        %v6192 = vadd.f32 %v6052, %v6191
        %v6193 = vpop.f32.mrf.mxu0
        %v6194 = vadd.f32 %v6054, %v6193
        %6195 = vmatmul.bf16.gmra.mxu0 %v6133
        %v6196 = vpop.f32.mrf.mxu0
        %v6197 = vadd.f32 %v6057, %v6196
        %v6198 = vpop.f32.mrf.mxu0
        %v6199 = vadd.f32 %v6059, %v6198
        %6200 = vmatmul.bf16.gmra.mxu0 %v6136
        %v6201 = vpop.f32.mrf.mxu0
        %v6202 = vadd.f32 %v6062, %v6201
        %v6203 = vpop.f32.mrf.mxu0
        %v6204 = vadd.f32 %v6064, %v6203
        %6205 = vmatmul.bf16.gmra.mxu0 %v6139
        %v6206 = vpop.f32.mrf.mxu0
        %v6207 = vadd.f32 %v6067, %v6206
        %v6208 = vpop.f32.mrf.mxu0
        %v6209 = vadd.f32 %v6069, %v6208
        %6210 = vmatmul.bf16.gmra.mxu0 %v6142
        %v6211 = vpop.f32.mrf.mxu0
        %v6212 = vadd.f32 %v6072, %v6211
        %v6213 = vpop.f32.mrf.mxu0
        %v6214 = vadd.f32 %v6074, %v6213
        %6215 = vmatmul.bf16.gmra.mxu0 %v6145
        %v6216 = vpop.f32.mrf.mxu0
        %v6217 = vadd.f32 %v6077, %v6216
        %v6218 = vpop.f32.mrf.mxu0
        %v6219 = vadd.f32 %v6079, %v6218
        %6220 = vmatmul.bf16.gmra.mxu0 %v6148
        %v6221 = vpop.f32.mrf.mxu0
        %v6222 = vadd.f32 %v6082, %v6221
        %v6223 = vpop.f32.mrf.mxu0
        %v6224 = vadd.f32 %v6084, %v6223
        %6225 = vmatmul.bf16.gmra.mxu0 %v6151
        %v6226 = vpop.f32.mrf.mxu0
        %v6227 = vadd.f32 %v6087, %v6226
        %v6228 = vpop.f32.mrf.mxu0
        %v6229 = vadd.f32 %v6089, %v6228
        %6230 = vmatmul.bf16.gmra.mxu0 %v6154
        %v6231 = vpop.f32.mrf.mxu0
        %v6232 = vadd.f32 %v6092, %v6231
        %v6233 = vpop.f32.mrf.mxu0
        %v6234 = vadd.f32 %v6094, %v6233
        %6235 = vmatmul.bf16.gmra.mxu0 %v6157
        %v6236 = vpop.f32.mrf.mxu0
        %v6237 = vadd.f32 %v6097, %v6236
        %v6238 = vpop.f32.mrf.mxu0
        %v6239 = vadd.f32 %v6099, %v6238
        %6240 = vmatmul.bf16.gmra.mxu0 %v6160
        %v6241 = vpop.f32.mrf.mxu0
        %v6242 = vadd.f32 %v6102, %v6241
        %v6243 = vpop.f32.mrf.mxu0
        %v6244 = vadd.f32 %v6104, %v6243
        %6245 = vmatmul.bf16.gmra.mxu0 %v6163
        %v6246 = vpop.f32.mrf.mxu0
        %v6247 = vadd.f32 %v6107, %v6246
        %v6248 = vpop.f32.mrf.mxu0
        %v6249 = vadd.f32 %v6109, %v6248
        %6250 = vmatmul.bf16.gmra.mxu0 %v6166
        %v6251 = vpop.f32.mrf.mxu0
        %v6252 = vadd.f32 %v6112, %v6251
        %v6253 = vpop.f32.mrf.mxu0
        %v6254 = vadd.f32 %v6114, %v6253
        %6255 = vmatmul.bf16.gmra.mxu0 %v6169
        %v6256 = vpop.f32.mrf.mxu0
        %v6257 = vadd.f32 %v6117, %v6256
        %v6258 = vpop.f32.mrf.mxu0
        %v6259 = vadd.f32 %v6119, %v6258
        %6260 = vmatmul.bf16.gmra.mxu0 %v6172
        %v6261 = vpop.f32.mrf.mxu0
        %v6262 = vadd.f32 %v6122, %v6261
        %v6263 = vpop.f32.mrf.mxu0
        %v6264 = vadd.f32 %v6124, %v6263
        %6265 = vdwg.mxu0
        %6266 = vmatpush.bf16.msra.mxu0 %v5584
        %6267 = vmatpush.bf16.msra.mxu0 %v5583
        %6268 = vmatpush.bf16.msra.mxu0 %v5582
        %6269 = vmatpush.bf16.msra.mxu0 %v5581
        %6270 = vmatpush.bf16.msra.mxu0 %v5580
        %6271 = vmatpush.bf16.msra.mxu0 %v5579
        %6272 = vmatpush.bf16.msra.mxu0 %v5578
        %6273 = vmatpush.bf16.msra.mxu0 %v5577
        %6274 = vmatmul.bf16.gmra.mxu0 %v1551
        %v6275 = vpop.f32.mrf.mxu0
        %v6276 = vadd.f32 0.0, %v6275
        %v6277 = vpop.f32.mrf.mxu0
        %v6278 = vadd.f32 0.0, %v6277
        %6279 = vmatmul.bf16.gmra.mxu0 %v1553
        %v6280 = vpop.f32.mrf.mxu0
        %v6281 = vadd.f32 0.0, %v6280
        %v6282 = vpop.f32.mrf.mxu0
        %v6283 = vadd.f32 0.0, %v6282
        %6284 = vmatmul.bf16.gmra.mxu0 %v1555
        %v6285 = vpop.f32.mrf.mxu0
        %v6286 = vadd.f32 0.0, %v6285
        %v6287 = vpop.f32.mrf.mxu0
        %v6288 = vadd.f32 0.0, %v6287
        %6289 = vmatmul.bf16.gmra.mxu0 %v1557
        %v6290 = vpop.f32.mrf.mxu0
        %v6291 = vadd.f32 0.0, %v6290
        %v6292 = vpop.f32.mrf.mxu0
        %v6293 = vadd.f32 0.0, %v6292
        %6294 = vmatmul.bf16.gmra.mxu0 %v1559
        %v6295 = vpop.f32.mrf.mxu0
        %v6296 = vadd.f32 0.0, %v6295
        %v6297 = vpop.f32.mrf.mxu0
        %v6298 = vadd.f32 0.0, %v6297
        %6299 = vmatmul.bf16.gmra.mxu0 %v1561
        %v6300 = vpop.f32.mrf.mxu0
        %v6301 = vadd.f32 0.0, %v6300
        %v6302 = vpop.f32.mrf.mxu0
        %v6303 = vadd.f32 0.0, %v6302
        %6304 = vmatmul.bf16.gmra.mxu0 %v1563
        %v6305 = vpop.f32.mrf.mxu0
        %v6306 = vadd.f32 0.0, %v6305
        %v6307 = vpop.f32.mrf.mxu0
        %v6308 = vadd.f32 0.0, %v6307
        %6309 = vmatmul.bf16.gmra.mxu0 %v1565
        %v6310 = vpop.f32.mrf.mxu0
        %v6311 = vadd.f32 0.0, %v6310
        %v6312 = vpop.f32.mrf.mxu0
        %v6313 = vadd.f32 0.0, %v6312
        %6314 = vmatmul.bf16.gmra.mxu0 %v1567
        %v6315 = vpop.f32.mrf.mxu0
        %v6316 = vadd.f32 0.0, %v6315
        %v6317 = vpop.f32.mrf.mxu0
        %v6318 = vadd.f32 0.0, %v6317
        %6319 = vmatmul.bf16.gmra.mxu0 %v1569
        %v6320 = vpop.f32.mrf.mxu0
        %v6321 = vadd.f32 0.0, %v6320
        %v6322 = vpop.f32.mrf.mxu0
        %v6323 = vadd.f32 0.0, %v6322
        %6324 = vmatmul.bf16.gmra.mxu0 %v1571
        %v6325 = vpop.f32.mrf.mxu0
        %v6326 = vadd.f32 0.0, %v6325
        %v6327 = vpop.f32.mrf.mxu0
        %v6328 = vadd.f32 0.0, %v6327
        %6329 = vmatmul.bf16.gmra.mxu0 %v1573
        %v6330 = vpop.f32.mrf.mxu0
        %v6331 = vadd.f32 0.0, %v6330
        %v6332 = vpop.f32.mrf.mxu0
        %v6333 = vadd.f32 0.0, %v6332
        %6334 = vmatmul.bf16.gmra.mxu0 %v1575
        %v6335 = vpop.f32.mrf.mxu0
        %v6336 = vadd.f32 0.0, %v6335
        %v6337 = vpop.f32.mrf.mxu0
        %v6338 = vadd.f32 0.0, %v6337
        %6339 = vmatmul.bf16.gmra.mxu0 %v1577
        %v6340 = vpop.f32.mrf.mxu0
        %v6341 = vadd.f32 0.0, %v6340
        %v6342 = vpop.f32.mrf.mxu0
        %v6343 = vadd.f32 0.0, %v6342
        %6344 = vmatmul.bf16.gmra.mxu0 %v1579
        %v6345 = vpop.f32.mrf.mxu0
        %v6346 = vadd.f32 0.0, %v6345
        %v6347 = vpop.f32.mrf.mxu0
        %v6348 = vadd.f32 0.0, %v6347
        %6349 = vmatmul.bf16.gmra.mxu0 %v1581
        %v6350 = vpop.f32.mrf.mxu0
        %v6351 = vadd.f32 0.0, %v6350
        %v6352 = vpop.f32.mrf.mxu0
        %v6353 = vadd.f32 0.0, %v6352
        %6354 = vdwg.mxu0
        %6355 = vmatpush.bf16.msra.mxu0 %v5592
        %6356 = vmatpush.bf16.msra.mxu0 %v5591
        %6357 = vmatpush.bf16.msra.mxu0 %v5590
        %6358 = vmatpush.bf16.msra.mxu0 %v5589
        %6359 = vmatpush.bf16.msra.mxu0 %v5588
        %6360 = vmatpush.bf16.msra.mxu0 %v5587
        %6361 = vmatpush.bf16.msra.mxu0 %v5586
        %6362 = vmatpush.bf16.msra.mxu0 %v5585
        %6363 = vmatmul.bf16.gmra.mxu0 %v1552
        %v6364 = vpop.f32.mrf.mxu0
        %v6365 = vadd.f32 %v6276, %v6364
        %v6366 = vpop.f32.mrf.mxu0
        %v6367 = vadd.f32 %v6278, %v6366
        %6368 = vmatmul.bf16.gmra.mxu0 %v1554
        %v6369 = vpop.f32.mrf.mxu0
        %v6370 = vadd.f32 %v6281, %v6369
        %v6371 = vpop.f32.mrf.mxu0
        %v6372 = vadd.f32 %v6283, %v6371
        %6373 = vmatmul.bf16.gmra.mxu0 %v1556
        %v6374 = vpop.f32.mrf.mxu0
        %v6375 = vadd.f32 %v6286, %v6374
        %v6376 = vpop.f32.mrf.mxu0
        %v6377 = vadd.f32 %v6288, %v6376
        %6378 = vmatmul.bf16.gmra.mxu0 %v1558
        %v6379 = vpop.f32.mrf.mxu0
        %v6380 = vadd.f32 %v6291, %v6379
        %v6381 = vpop.f32.mrf.mxu0
        %v6382 = vadd.f32 %v6293, %v6381
        %6383 = vmatmul.bf16.gmra.mxu0 %v1560
        %v6384 = vpop.f32.mrf.mxu0
        %v6385 = vadd.f32 %v6296, %v6384
        %v6386 = vpop.f32.mrf.mxu0
        %v6387 = vadd.f32 %v6298, %v6386
        %6388 = vmatmul.bf16.gmra.mxu0 %v1562
        %v6389 = vpop.f32.mrf.mxu0
        %v6390 = vadd.f32 %v6301, %v6389
        %v6391 = vpop.f32.mrf.mxu0
        %v6392 = vadd.f32 %v6303, %v6391
        %6393 = vmatmul.bf16.gmra.mxu0 %v1564
        %v6394 = vpop.f32.mrf.mxu0
        %v6395 = vadd.f32 %v6306, %v6394
        %v6396 = vpop.f32.mrf.mxu0
        %v6397 = vadd.f32 %v6308, %v6396
        %6398 = vmatmul.bf16.gmra.mxu0 %v1566
        %v6399 = vpop.f32.mrf.mxu0
        %v6400 = vadd.f32 %v6311, %v6399
        %v6401 = vpop.f32.mrf.mxu0
        %v6402 = vadd.f32 %v6313, %v6401
        %6403 = vmatmul.bf16.gmra.mxu0 %v1568
        %v6404 = vpop.f32.mrf.mxu0
        %v6405 = vadd.f32 %v6316, %v6404
        %v6406 = vpop.f32.mrf.mxu0
        %v6407 = vadd.f32 %v6318, %v6406
        %6408 = vmatmul.bf16.gmra.mxu0 %v1570
        %v6409 = vpop.f32.mrf.mxu0
        %v6410 = vadd.f32 %v6321, %v6409
        %v6411 = vpop.f32.mrf.mxu0
        %v6412 = vadd.f32 %v6323, %v6411
        %6413 = vmatmul.bf16.gmra.mxu0 %v1572
        %v6414 = vpop.f32.mrf.mxu0
        %v6415 = vadd.f32 %v6326, %v6414
        %v6416 = vpop.f32.mrf.mxu0
        %v6417 = vadd.f32 %v6328, %v6416
        %6418 = vmatmul.bf16.gmra.mxu0 %v1574
        %v6419 = vpop.f32.mrf.mxu0
        %v6420 = vadd.f32 %v6331, %v6419
        %v6421 = vpop.f32.mrf.mxu0
        %v6422 = vadd.f32 %v6333, %v6421
        %6423 = vmatmul.bf16.gmra.mxu0 %v1576
        %v6424 = vpop.f32.mrf.mxu0
        %v6425 = vadd.f32 %v6336, %v6424
        %v6426 = vpop.f32.mrf.mxu0
        %v6427 = vadd.f32 %v6338, %v6426
        %6428 = vmatmul.bf16.gmra.mxu0 %v1578
        %v6429 = vpop.f32.mrf.mxu0
        %v6430 = vadd.f32 %v6341, %v6429
        %v6431 = vpop.f32.mrf.mxu0
        %v6432 = vadd.f32 %v6343, %v6431
        %6433 = vmatmul.bf16.gmra.mxu0 %v1580
        %v6434 = vpop.f32.mrf.mxu0
        %v6435 = vadd.f32 %v6346, %v6434
        %v6436 = vpop.f32.mrf.mxu0
        %v6437 = vadd.f32 %v6348, %v6436
        %6438 = vmatmul.bf16.gmra.mxu0 %v1582
        %v6439 = vpop.f32.mrf.mxu0
        %v6440 = vadd.f32 %v6351, %v6439
        %v6441 = vpop.f32.mrf.mxu0
        %v6442 = vadd.f32 %v6353, %v6441
        %6443 = vdwg.mxu0
        %v6444 = vpack.c.bf16 %v6367, %v6365
        %v6445 = vpack.c.bf16 %v6372, %v6370
        %v6446 = vpack.c.bf16 %v6377, %v6375
        %v6447 = vpack.c.bf16 %v6382, %v6380
        %v6448 = vpack.c.bf16 %v6387, %v6385
        %v6449 = vpack.c.bf16 %v6392, %v6390
        %v6450 = vpack.c.bf16 %v6397, %v6395
        %v6451 = vpack.c.bf16 %v6402, %v6400
        %v6452 = vpack.c.bf16 %v6407, %v6405
        %v6453 = vpack.c.bf16 %v6412, %v6410
        %v6454 = vpack.c.bf16 %v6417, %v6415
        %v6455 = vpack.c.bf16 %v6422, %v6420
        %v6456 = vpack.c.bf16 %v6427, %v6425
        %v6457 = vpack.c.bf16 %v6432, %v6430
        %v6458 = vpack.c.bf16 %v6437, %v6435
        %v6459 = vpack.c.bf16 %v6442, %v6440
        %s6460 = scalar_lea.vmem [#allocation6], 8
        %v6461 = vld [vmem:[%s6460] sm:$0xf]
        %v6463 = vsel %vm5984, %v6444, 0
        %v6466 = vsel %vm5984, %v6445, 0
        %v6469 = vsel %vm5984, %v6446, 0
        %v6472 = vsel %vm5984, %v6447, 0
        %v6475 = vsel %vm5984, %v6448, 0
        %v6478 = vsel %vm5984, %v6449, 0
        %v6481 = vsel %vm5984, %v6450, 0
        %v6484 = vsel %vm5984, %v6451, 0
        %v6487 = vsel %vm5984, %v6452, 0
        %v6490 = vsel %vm5984, %v6453, 0
        %v6493 = vsel %vm5984, %v6454, 0
        %v6496 = vsel %vm5984, %v6455, 0
        %v6499 = vsel %vm5984, %v6456, 0
        %v6502 = vsel %vm5984, %v6457, 0
        %v6505 = vsel %vm5984, %v6458, 0
        %v6508 = vsel %vm5984, %v6459, 0
        %v6511 = vsel %vm6033, %v6461, 0
        %6513 = vmatpush.bf16.msra.mxu0 0
        %6514 = vmatpush.bf16.msra.mxu0 0
        %6515 = vmatpush.bf16.msra.mxu0 0
        %6516 = vmatpush.bf16.msra.mxu0 0
        %6517 = vmatpush.bf16.msra.mxu0 0
        %6518 = vmatpush.bf16.msra.mxu0 0
        %6519 = vmatpush.bf16.msra.mxu0 0
        %6520 = vmatpush.bf16.msra.mxu0 %v6511
        %6521 = vmatmul.bf16.gmra.mxu0 %v6463
        %v6522 = vpop.f32.mrf.mxu0
        %v6523 = vadd.f32 0.0, %v6522
        %v6524 = vpop.f32.mrf.mxu0
        %v6525 = vadd.f32 0.0, %v6524
        %6526 = vmatmul.bf16.gmra.mxu0 %v6466
        %v6527 = vpop.f32.mrf.mxu0
        %v6528 = vadd.f32 0.0, %v6527
        %v6529 = vpop.f32.mrf.mxu0
        %v6530 = vadd.f32 0.0, %v6529
        %6531 = vmatmul.bf16.gmra.mxu0 %v6469
        %v6532 = vpop.f32.mrf.mxu0
        %v6533 = vadd.f32 0.0, %v6532
        %v6534 = vpop.f32.mrf.mxu0
        %v6535 = vadd.f32 0.0, %v6534
        %6536 = vmatmul.bf16.gmra.mxu0 %v6472
        %v6537 = vpop.f32.mrf.mxu0
        %v6538 = vadd.f32 0.0, %v6537
        %v6539 = vpop.f32.mrf.mxu0
        %v6540 = vadd.f32 0.0, %v6539
        %6541 = vmatmul.bf16.gmra.mxu0 %v6475
        %v6542 = vpop.f32.mrf.mxu0
        %v6543 = vadd.f32 0.0, %v6542
        %v6544 = vpop.f32.mrf.mxu0
        %v6545 = vadd.f32 0.0, %v6544
        %6546 = vmatmul.bf16.gmra.mxu0 %v6478
        %v6547 = vpop.f32.mrf.mxu0
        %v6548 = vadd.f32 0.0, %v6547
        %v6549 = vpop.f32.mrf.mxu0
        %v6550 = vadd.f32 0.0, %v6549
        %6551 = vmatmul.bf16.gmra.mxu0 %v6481
        %v6552 = vpop.f32.mrf.mxu0
        %v6553 = vadd.f32 0.0, %v6552
        %v6554 = vpop.f32.mrf.mxu0
        %v6555 = vadd.f32 0.0, %v6554
        %6556 = vmatmul.bf16.gmra.mxu0 %v6484
        %v6557 = vpop.f32.mrf.mxu0
        %v6558 = vadd.f32 0.0, %v6557
        %v6559 = vpop.f32.mrf.mxu0
        %v6560 = vadd.f32 0.0, %v6559
        %6561 = vmatmul.bf16.gmra.mxu0 %v6487
        %v6562 = vpop.f32.mrf.mxu0
        %v6563 = vadd.f32 0.0, %v6562
        %v6564 = vpop.f32.mrf.mxu0
        %v6565 = vadd.f32 0.0, %v6564
        %6566 = vmatmul.bf16.gmra.mxu0 %v6490
        %v6567 = vpop.f32.mrf.mxu0
        %v6568 = vadd.f32 0.0, %v6567
        %v6569 = vpop.f32.mrf.mxu0
        %v6570 = vadd.f32 0.0, %v6569
        %6571 = vmatmul.bf16.gmra.mxu0 %v6493
        %v6572 = vpop.f32.mrf.mxu0
        %v6573 = vadd.f32 0.0, %v6572
        %v6574 = vpop.f32.mrf.mxu0
        %v6575 = vadd.f32 0.0, %v6574
        %6576 = vmatmul.bf16.gmra.mxu0 %v6496
        %v6577 = vpop.f32.mrf.mxu0
        %v6578 = vadd.f32 0.0, %v6577
        %v6579 = vpop.f32.mrf.mxu0
        %v6580 = vadd.f32 0.0, %v6579
        %6581 = vmatmul.bf16.gmra.mxu0 %v6499
        %v6582 = vpop.f32.mrf.mxu0
        %v6583 = vadd.f32 0.0, %v6582
        %v6584 = vpop.f32.mrf.mxu0
        %v6585 = vadd.f32 0.0, %v6584
        %6586 = vmatmul.bf16.gmra.mxu0 %v6502
        %v6587 = vpop.f32.mrf.mxu0
        %v6588 = vadd.f32 0.0, %v6587
        %v6589 = vpop.f32.mrf.mxu0
        %v6590 = vadd.f32 0.0, %v6589
        %6591 = vmatmul.bf16.gmra.mxu0 %v6505
        %v6592 = vpop.f32.mrf.mxu0
        %v6593 = vadd.f32 0.0, %v6592
        %v6594 = vpop.f32.mrf.mxu0
        %v6595 = vadd.f32 0.0, %v6594
        %6596 = vmatmul.bf16.gmra.mxu0 %v6508
        %v6597 = vpop.f32.mrf.mxu0
        %v6598 = vadd.f32 0.0, %v6597
        %v6599 = vpop.f32.mrf.mxu0
        %v6600 = vadd.f32 0.0, %v6599
        %6601 = vdwg.mxu0
        %v6602 = vadd.f32 %v6187, %v6523
        %v6603 = vadd.f32 %v6189, %v6525
        %v6604 = vadd.f32 %v6192, %v6528
        %v6605 = vadd.f32 %v6194, %v6530
        %v6606 = vadd.f32 %v6197, %v6533
        %v6607 = vadd.f32 %v6199, %v6535
        %v6608 = vadd.f32 %v6202, %v6538
        %v6609 = vadd.f32 %v6204, %v6540
        %v6610 = vadd.f32 %v6207, %v6543
        %v6611 = vadd.f32 %v6209, %v6545
        %v6612 = vadd.f32 %v6212, %v6548
        %v6613 = vadd.f32 %v6214, %v6550
        %v6614 = vadd.f32 %v6217, %v6553
        %v6615 = vadd.f32 %v6219, %v6555
        %v6616 = vadd.f32 %v6222, %v6558
        %v6617 = vadd.f32 %v6224, %v6560
        %v6618 = vadd.f32 %v6227, %v6563
        %v6619 = vadd.f32 %v6229, %v6565
        %v6620 = vadd.f32 %v6232, %v6568
        %v6621 = vadd.f32 %v6234, %v6570
        %v6622 = vadd.f32 %v6237, %v6573
        %v6623 = vadd.f32 %v6239, %v6575
        %v6624 = vadd.f32 %v6242, %v6578
        %v6625 = vadd.f32 %v6244, %v6580
        %v6626 = vadd.f32 %v6247, %v6583
        %v6627 = vadd.f32 %v6249, %v6585
        %v6628 = vadd.f32 %v6252, %v6588
        %v6629 = vadd.f32 %v6254, %v6590
        %v6630 = vadd.f32 %v6257, %v6593
        %v6631 = vadd.f32 %v6259, %v6595
        %v6632 = vadd.f32 %v6262, %v6598
        %v6633 = vadd.f32 %v6264, %v6600
        %6634 = vmatpush.bf16.msra.mxu0 %v5584
        %6635 = vmatpush.bf16.msra.mxu0 %v5583
        %6636 = vmatpush.bf16.msra.mxu0 %v5582
        %6637 = vmatpush.bf16.msra.mxu0 %v5581
        %6638 = vmatpush.bf16.msra.mxu0 %v5580
        %6639 = vmatpush.bf16.msra.mxu0 %v5579
        %6640 = vmatpush.bf16.msra.mxu0 %v5578
        %6641 = vmatpush.bf16.msra.mxu0 %v5577
        %6642 = vmatmul.bf16.gmra.mxu0 %v2112
        %v6643 = vpop.f32.mrf.mxu0
        %v6644 = vadd.f32 0.0, %v6643
        %v6645 = vpop.f32.mrf.mxu0
        %v6646 = vadd.f32 0.0, %v6645
        %6647 = vmatmul.bf16.gmra.mxu0 %v2114
        %v6648 = vpop.f32.mrf.mxu0
        %v6649 = vadd.f32 0.0, %v6648
        %v6650 = vpop.f32.mrf.mxu0
        %v6651 = vadd.f32 0.0, %v6650
        %6652 = vmatmul.bf16.gmra.mxu0 %v2116
        %v6653 = vpop.f32.mrf.mxu0
        %v6654 = vadd.f32 0.0, %v6653
        %v6655 = vpop.f32.mrf.mxu0
        %v6656 = vadd.f32 0.0, %v6655
        %6657 = vmatmul.bf16.gmra.mxu0 %v2118
        %v6658 = vpop.f32.mrf.mxu0
        %v6659 = vadd.f32 0.0, %v6658
        %v6660 = vpop.f32.mrf.mxu0
        %v6661 = vadd.f32 0.0, %v6660
        %6662 = vmatmul.bf16.gmra.mxu0 %v2120
        %v6663 = vpop.f32.mrf.mxu0
        %v6664 = vadd.f32 0.0, %v6663
        %v6665 = vpop.f32.mrf.mxu0
        %v6666 = vadd.f32 0.0, %v6665
        %6667 = vmatmul.bf16.gmra.mxu0 %v2122
        %v6668 = vpop.f32.mrf.mxu0
        %v6669 = vadd.f32 0.0, %v6668
        %v6670 = vpop.f32.mrf.mxu0
        %v6671 = vadd.f32 0.0, %v6670
        %6672 = vmatmul.bf16.gmra.mxu0 %v2124
        %v6673 = vpop.f32.mrf.mxu0
        %v6674 = vadd.f32 0.0, %v6673
        %v6675 = vpop.f32.mrf.mxu0
        %v6676 = vadd.f32 0.0, %v6675
        %6677 = vmatmul.bf16.gmra.mxu0 %v2126
        %v6678 = vpop.f32.mrf.mxu0
        %v6679 = vadd.f32 0.0, %v6678
        %v6680 = vpop.f32.mrf.mxu0
        %v6681 = vadd.f32 0.0, %v6680
        %6682 = vmatmul.bf16.gmra.mxu0 %v2128
        %v6683 = vpop.f32.mrf.mxu0
        %v6684 = vadd.f32 0.0, %v6683
        %v6685 = vpop.f32.mrf.mxu0
        %v6686 = vadd.f32 0.0, %v6685
        %6687 = vmatmul.bf16.gmra.mxu0 %v2130
        %v6688 = vpop.f32.mrf.mxu0
        %v6689 = vadd.f32 0.0, %v6688
        %v6690 = vpop.f32.mrf.mxu0
        %v6691 = vadd.f32 0.0, %v6690
        %6692 = vmatmul.bf16.gmra.mxu0 %v2132
        %v6693 = vpop.f32.mrf.mxu0
        %v6694 = vadd.f32 0.0, %v6693
        %v6695 = vpop.f32.mrf.mxu0
        %v6696 = vadd.f32 0.0, %v6695
        %6697 = vmatmul.bf16.gmra.mxu0 %v2134
        %v6698 = vpop.f32.mrf.mxu0
        %v6699 = vadd.f32 0.0, %v6698
        %v6700 = vpop.f32.mrf.mxu0
        %v6701 = vadd.f32 0.0, %v6700
        %6702 = vmatmul.bf16.gmra.mxu0 %v2136
        %v6703 = vpop.f32.mrf.mxu0
        %v6704 = vadd.f32 0.0, %v6703
        %v6705 = vpop.f32.mrf.mxu0
        %v6706 = vadd.f32 0.0, %v6705
        %6707 = vmatmul.bf16.gmra.mxu0 %v2138
        %v6708 = vpop.f32.mrf.mxu0
        %v6709 = vadd.f32 0.0, %v6708
        %v6710 = vpop.f32.mrf.mxu0
        %v6711 = vadd.f32 0.0, %v6710
        %6712 = vmatmul.bf16.gmra.mxu0 %v2140
        %v6713 = vpop.f32.mrf.mxu0
        %v6714 = vadd.f32 0.0, %v6713
        %v6715 = vpop.f32.mrf.mxu0
        %v6716 = vadd.f32 0.0, %v6715
        %6717 = vmatmul.bf16.gmra.mxu0 %v2142
        %v6718 = vpop.f32.mrf.mxu0
        %v6719 = vadd.f32 0.0, %v6718
        %v6720 = vpop.f32.mrf.mxu0
        %v6721 = vadd.f32 0.0, %v6720
        %6722 = vdwg.mxu0
        %6723 = vmatpush.bf16.msra.mxu0 %v5592
        %6724 = vmatpush.bf16.msra.mxu0 %v5591
        %6725 = vmatpush.bf16.msra.mxu0 %v5590
        %6726 = vmatpush.bf16.msra.mxu0 %v5589
        %6727 = vmatpush.bf16.msra.mxu0 %v5588
        %6728 = vmatpush.bf16.msra.mxu0 %v5587
        %6729 = vmatpush.bf16.msra.mxu0 %v5586
        %6730 = vmatpush.bf16.msra.mxu0 %v5585
        %6731 = vmatmul.bf16.gmra.mxu0 %v2113
        %v6732 = vpop.f32.mrf.mxu0
        %v6733 = vadd.f32 %v6644, %v6732
        %v6734 = vpop.f32.mrf.mxu0
        %v6735 = vadd.f32 %v6646, %v6734
        %6736 = vmatmul.bf16.gmra.mxu0 %v2115
        %v6737 = vpop.f32.mrf.mxu0
        %v6738 = vadd.f32 %v6649, %v6737
        %v6739 = vpop.f32.mrf.mxu0
        %v6740 = vadd.f32 %v6651, %v6739
        %6741 = vmatmul.bf16.gmra.mxu0 %v2117
        %v6742 = vpop.f32.mrf.mxu0
        %v6743 = vadd.f32 %v6654, %v6742
        %v6744 = vpop.f32.mrf.mxu0
        %v6745 = vadd.f32 %v6656, %v6744
        %6746 = vmatmul.bf16.gmra.mxu0 %v2119
        %v6747 = vpop.f32.mrf.mxu0
        %v6748 = vadd.f32 %v6659, %v6747
        %v6749 = vpop.f32.mrf.mxu0
        %v6750 = vadd.f32 %v6661, %v6749
        %6751 = vmatmul.bf16.gmra.mxu0 %v2121
        %v6752 = vpop.f32.mrf.mxu0
        %v6753 = vadd.f32 %v6664, %v6752
        %v6754 = vpop.f32.mrf.mxu0
        %v6755 = vadd.f32 %v6666, %v6754
        %6756 = vmatmul.bf16.gmra.mxu0 %v2123
        %v6757 = vpop.f32.mrf.mxu0
        %v6758 = vadd.f32 %v6669, %v6757
        %v6759 = vpop.f32.mrf.mxu0
        %v6760 = vadd.f32 %v6671, %v6759
        %6761 = vmatmul.bf16.gmra.mxu0 %v2125
        %v6762 = vpop.f32.mrf.mxu0
        %v6763 = vadd.f32 %v6674, %v6762
        %v6764 = vpop.f32.mrf.mxu0
        %v6765 = vadd.f32 %v6676, %v6764
        %6766 = vmatmul.bf16.gmra.mxu0 %v2127
        %v6767 = vpop.f32.mrf.mxu0
        %v6768 = vadd.f32 %v6679, %v6767
        %v6769 = vpop.f32.mrf.mxu0
        %v6770 = vadd.f32 %v6681, %v6769
        %6771 = vmatmul.bf16.gmra.mxu0 %v2129
        %v6772 = vpop.f32.mrf.mxu0
        %v6773 = vadd.f32 %v6684, %v6772
        %v6774 = vpop.f32.mrf.mxu0
        %v6775 = vadd.f32 %v6686, %v6774
        %6776 = vmatmul.bf16.gmra.mxu0 %v2131
        %v6777 = vpop.f32.mrf.mxu0
        %v6778 = vadd.f32 %v6689, %v6777
        %v6779 = vpop.f32.mrf.mxu0
        %v6780 = vadd.f32 %v6691, %v6779
        %6781 = vmatmul.bf16.gmra.mxu0 %v2133
        %v6782 = vpop.f32.mrf.mxu0
        %v6783 = vadd.f32 %v6694, %v6782
        %v6784 = vpop.f32.mrf.mxu0
        %v6785 = vadd.f32 %v6696, %v6784
        %6786 = vmatmul.bf16.gmra.mxu0 %v2135
        %v6787 = vpop.f32.mrf.mxu0
        %v6788 = vadd.f32 %v6699, %v6787
        %v6789 = vpop.f32.mrf.mxu0
        %v6790 = vadd.f32 %v6701, %v6789
        %6791 = vmatmul.bf16.gmra.mxu0 %v2137
        %v6792 = vpop.f32.mrf.mxu0
        %v6793 = vadd.f32 %v6704, %v6792
        %v6794 = vpop.f32.mrf.mxu0
        %v6795 = vadd.f32 %v6706, %v6794
        %6796 = vmatmul.bf16.gmra.mxu0 %v2139
        %v6797 = vpop.f32.mrf.mxu0
        %v6798 = vadd.f32 %v6709, %v6797
        %v6799 = vpop.f32.mrf.mxu0
        %v6800 = vadd.f32 %v6711, %v6799
        %6801 = vmatmul.bf16.gmra.mxu0 %v2141
        %v6802 = vpop.f32.mrf.mxu0
        %v6803 = vadd.f32 %v6714, %v6802
        %v6804 = vpop.f32.mrf.mxu0
        %v6805 = vadd.f32 %v6716, %v6804
        %6806 = vmatmul.bf16.gmra.mxu0 %v2143
        %v6807 = vpop.f32.mrf.mxu0
        %v6808 = vadd.f32 %v6719, %v6807
        %v6809 = vpop.f32.mrf.mxu0
        %v6810 = vadd.f32 %v6721, %v6809
        %6811 = vdwg.mxu0
        %v6812 = vpack.c.bf16 %v6735, %v6733
        %v6813 = vpack.c.bf16 %v6740, %v6738
        %v6814 = vpack.c.bf16 %v6745, %v6743
        %v6815 = vpack.c.bf16 %v6750, %v6748
        %v6816 = vpack.c.bf16 %v6755, %v6753
        %v6817 = vpack.c.bf16 %v6760, %v6758
        %v6818 = vpack.c.bf16 %v6765, %v6763
        %v6819 = vpack.c.bf16 %v6770, %v6768
        %v6820 = vpack.c.bf16 %v6775, %v6773
        %v6821 = vpack.c.bf16 %v6780, %v6778
        %v6822 = vpack.c.bf16 %v6785, %v6783
        %v6823 = vpack.c.bf16 %v6790, %v6788
        %v6824 = vpack.c.bf16 %v6795, %v6793
        %v6825 = vpack.c.bf16 %v6800, %v6798
        %v6826 = vpack.c.bf16 %v6805, %v6803
        %v6827 = vpack.c.bf16 %v6810, %v6808
        %s6828 = scalar_lea.vmem [#allocation6], 12
        %v6829 = vld [vmem:[%s6828] sm:$0xf]
        %v6831 = vsel %vm5984, %v6812, 0
        %v6834 = vsel %vm5984, %v6813, 0
        %v6837 = vsel %vm5984, %v6814, 0
        %v6840 = vsel %vm5984, %v6815, 0
        %v6843 = vsel %vm5984, %v6816, 0
        %v6846 = vsel %vm5984, %v6817, 0
        %v6849 = vsel %vm5984, %v6818, 0
        %v6852 = vsel %vm5984, %v6819, 0
        %v6855 = vsel %vm5984, %v6820, 0
        %v6858 = vsel %vm5984, %v6821, 0
        %v6861 = vsel %vm5984, %v6822, 0
        %v6864 = vsel %vm5984, %v6823, 0
        %v6867 = vsel %vm5984, %v6824, 0
        %v6870 = vsel %vm5984, %v6825, 0
        %v6873 = vsel %vm5984, %v6826, 0
        %v6876 = vsel %vm5984, %v6827, 0
        %v6879 = vsel %vm6033, %v6829, 0
        %6881 = vmatpush.bf16.msra.mxu0 0
        %6882 = vmatpush.bf16.msra.mxu0 0
        %6883 = vmatpush.bf16.msra.mxu0 0
        %6884 = vmatpush.bf16.msra.mxu0 0
        %6885 = vmatpush.bf16.msra.mxu0 0
        %6886 = vmatpush.bf16.msra.mxu0 0
        %6887 = vmatpush.bf16.msra.mxu0 0
        %6888 = vmatpush.bf16.msra.mxu0 %v6879
        %6889 = vmatmul.bf16.gmra.mxu0 %v6831
        %v6890 = vpop.f32.mrf.mxu0
        %v6891 = vadd.f32 0.0, %v6890
        %v6892 = vpop.f32.mrf.mxu0
        %v6893 = vadd.f32 0.0, %v6892
        %6894 = vmatmul.bf16.gmra.mxu0 %v6834
        %v6895 = vpop.f32.mrf.mxu0
        %v6896 = vadd.f32 0.0, %v6895
        %v6897 = vpop.f32.mrf.mxu0
        %v6898 = vadd.f32 0.0, %v6897
        %6899 = vmatmul.bf16.gmra.mxu0 %v6837
        %v6900 = vpop.f32.mrf.mxu0
        %v6901 = vadd.f32 0.0, %v6900
        %v6902 = vpop.f32.mrf.mxu0
        %v6903 = vadd.f32 0.0, %v6902
        %6904 = vmatmul.bf16.gmra.mxu0 %v6840
        %v6905 = vpop.f32.mrf.mxu0
        %v6906 = vadd.f32 0.0, %v6905
        %v6907 = vpop.f32.mrf.mxu0
        %v6908 = vadd.f32 0.0, %v6907
        %6909 = vmatmul.bf16.gmra.mxu0 %v6843
        %v6910 = vpop.f32.mrf.mxu0
        %v6911 = vadd.f32 0.0, %v6910
        %v6912 = vpop.f32.mrf.mxu0
        %v6913 = vadd.f32 0.0, %v6912
        %6914 = vmatmul.bf16.gmra.mxu0 %v6846
        %v6915 = vpop.f32.mrf.mxu0
        %v6916 = vadd.f32 0.0, %v6915
        %v6917 = vpop.f32.mrf.mxu0
        %v6918 = vadd.f32 0.0, %v6917
        %6919 = vmatmul.bf16.gmra.mxu0 %v6849
        %v6920 = vpop.f32.mrf.mxu0
        %v6921 = vadd.f32 0.0, %v6920
        %v6922 = vpop.f32.mrf.mxu0
        %v6923 = vadd.f32 0.0, %v6922
        %6924 = vmatmul.bf16.gmra.mxu0 %v6852
        %v6925 = vpop.f32.mrf.mxu0
        %v6926 = vadd.f32 0.0, %v6925
        %v6927 = vpop.f32.mrf.mxu0
        %v6928 = vadd.f32 0.0, %v6927
        %6929 = vmatmul.bf16.gmra.mxu0 %v6855
        %v6930 = vpop.f32.mrf.mxu0
        %v6931 = vadd.f32 0.0, %v6930
        %v6932 = vpop.f32.mrf.mxu0
        %v6933 = vadd.f32 0.0, %v6932
        %6934 = vmatmul.bf16.gmra.mxu0 %v6858
        %v6935 = vpop.f32.mrf.mxu0
        %v6936 = vadd.f32 0.0, %v6935
        %v6937 = vpop.f32.mrf.mxu0
        %v6938 = vadd.f32 0.0, %v6937
        %6939 = vmatmul.bf16.gmra.mxu0 %v6861
        %v6940 = vpop.f32.mrf.mxu0
        %v6941 = vadd.f32 0.0, %v6940
        %v6942 = vpop.f32.mrf.mxu0
        %v6943 = vadd.f32 0.0, %v6942
        %6944 = vmatmul.bf16.gmra.mxu0 %v6864
        %v6945 = vpop.f32.mrf.mxu0
        %v6946 = vadd.f32 0.0, %v6945
        %v6947 = vpop.f32.mrf.mxu0
        %v6948 = vadd.f32 0.0, %v6947
        %6949 = vmatmul.bf16.gmra.mxu0 %v6867
        %v6950 = vpop.f32.mrf.mxu0
        %v6951 = vadd.f32 0.0, %v6950
        %v6952 = vpop.f32.mrf.mxu0
        %v6953 = vadd.f32 0.0, %v6952
        %6954 = vmatmul.bf16.gmra.mxu0 %v6870
        %v6955 = vpop.f32.mrf.mxu0
        %v6956 = vadd.f32 0.0, %v6955
        %v6957 = vpop.f32.mrf.mxu0
        %v6958 = vadd.f32 0.0, %v6957
        %6959 = vmatmul.bf16.gmra.mxu0 %v6873
        %v6960 = vpop.f32.mrf.mxu0
        %v6961 = vadd.f32 0.0, %v6960
        %v6962 = vpop.f32.mrf.mxu0
        %v6963 = vadd.f32 0.0, %v6962
        %6964 = vmatmul.bf16.gmra.mxu0 %v6876
        %v6965 = vpop.f32.mrf.mxu0
        %v6966 = vadd.f32 0.0, %v6965
        %v6967 = vpop.f32.mrf.mxu0
        %v6968 = vadd.f32 0.0, %v6967
        %6969 = vdwg.mxu0
        %v6970 = vadd.f32 %v6602, %v6891
        %v6971 = vadd.f32 %v6603, %v6893
        %v6972 = vadd.f32 %v6604, %v6896
        %v6973 = vadd.f32 %v6605, %v6898
        %v6974 = vadd.f32 %v6606, %v6901
        %v6975 = vadd.f32 %v6607, %v6903
        %v6976 = vadd.f32 %v6608, %v6906
        %v6977 = vadd.f32 %v6609, %v6908
        %v6978 = vadd.f32 %v6610, %v6911
        %v6979 = vadd.f32 %v6611, %v6913
        %v6980 = vadd.f32 %v6612, %v6916
        %v6981 = vadd.f32 %v6613, %v6918
        %v6982 = vadd.f32 %v6614, %v6921
        %v6983 = vadd.f32 %v6615, %v6923
        %v6984 = vadd.f32 %v6616, %v6926
        %v6985 = vadd.f32 %v6617, %v6928
        %v6986 = vadd.f32 %v6618, %v6931
        %v6987 = vadd.f32 %v6619, %v6933
        %v6988 = vadd.f32 %v6620, %v6936
        %v6989 = vadd.f32 %v6621, %v6938
        %v6990 = vadd.f32 %v6622, %v6941
        %v6991 = vadd.f32 %v6623, %v6943
        %v6992 = vadd.f32 %v6624, %v6946
        %v6993 = vadd.f32 %v6625, %v6948
        %v6994 = vadd.f32 %v6626, %v6951
        %v6995 = vadd.f32 %v6627, %v6953
        %v6996 = vadd.f32 %v6628, %v6956
        %v6997 = vadd.f32 %v6629, %v6958
        %v6998 = vadd.f32 %v6630, %v6961
        %v6999 = vadd.f32 %v6631, %v6963
        %v7000 = vadd.f32 %v6632, %v6966
        %v7001 = vadd.f32 %v6633, %v6968
        %7002 = vmatpush.bf16.msra.mxu0 %v5584
        %7003 = vmatpush.bf16.msra.mxu0 %v5583
        %7004 = vmatpush.bf16.msra.mxu0 %v5582
        %7005 = vmatpush.bf16.msra.mxu0 %v5581
        %7006 = vmatpush.bf16.msra.mxu0 %v5580
        %7007 = vmatpush.bf16.msra.mxu0 %v5579
        %7008 = vmatpush.bf16.msra.mxu0 %v5578
        %7009 = vmatpush.bf16.msra.mxu0 %v5577
        %7010 = vmatmul.bf16.gmra.mxu0 %v2673
        %v7011 = vpop.f32.mrf.mxu0
        %v7012 = vadd.f32 0.0, %v7011
        %v7013 = vpop.f32.mrf.mxu0
        %v7014 = vadd.f32 0.0, %v7013
        %7015 = vmatmul.bf16.gmra.mxu0 %v2675
        %v7016 = vpop.f32.mrf.mxu0
        %v7017 = vadd.f32 0.0, %v7016
        %v7018 = vpop.f32.mrf.mxu0
        %v7019 = vadd.f32 0.0, %v7018
        %7020 = vmatmul.bf16.gmra.mxu0 %v2677
        %v7021 = vpop.f32.mrf.mxu0
        %v7022 = vadd.f32 0.0, %v7021
        %v7023 = vpop.f32.mrf.mxu0
        %v7024 = vadd.f32 0.0, %v7023
        %7025 = vmatmul.bf16.gmra.mxu0 %v2679
        %v7026 = vpop.f32.mrf.mxu0
        %v7027 = vadd.f32 0.0, %v7026
        %v7028 = vpop.f32.mrf.mxu0
        %v7029 = vadd.f32 0.0, %v7028
        %7030 = vmatmul.bf16.gmra.mxu0 %v2681
        %v7031 = vpop.f32.mrf.mxu0
        %v7032 = vadd.f32 0.0, %v7031
        %v7033 = vpop.f32.mrf.mxu0
        %v7034 = vadd.f32 0.0, %v7033
        %7035 = vmatmul.bf16.gmra.mxu0 %v2683
        %v7036 = vpop.f32.mrf.mxu0
        %v7037 = vadd.f32 0.0, %v7036
        %v7038 = vpop.f32.mrf.mxu0
        %v7039 = vadd.f32 0.0, %v7038
        %7040 = vmatmul.bf16.gmra.mxu0 %v2685
        %v7041 = vpop.f32.mrf.mxu0
        %v7042 = vadd.f32 0.0, %v7041
        %v7043 = vpop.f32.mrf.mxu0
        %v7044 = vadd.f32 0.0, %v7043
        %7045 = vmatmul.bf16.gmra.mxu0 %v2687
        %v7046 = vpop.f32.mrf.mxu0
        %v7047 = vadd.f32 0.0, %v7046
        %v7048 = vpop.f32.mrf.mxu0
        %v7049 = vadd.f32 0.0, %v7048
        %7050 = vmatmul.bf16.gmra.mxu0 %v2689
        %v7051 = vpop.f32.mrf.mxu0
        %v7052 = vadd.f32 0.0, %v7051
        %v7053 = vpop.f32.mrf.mxu0
        %v7054 = vadd.f32 0.0, %v7053
        %7055 = vmatmul.bf16.gmra.mxu0 %v2691
        %v7056 = vpop.f32.mrf.mxu0
        %v7057 = vadd.f32 0.0, %v7056
        %v7058 = vpop.f32.mrf.mxu0
        %v7059 = vadd.f32 0.0, %v7058
        %7060 = vmatmul.bf16.gmra.mxu0 %v2693
        %v7061 = vpop.f32.mrf.mxu0
        %v7062 = vadd.f32 0.0, %v7061
        %v7063 = vpop.f32.mrf.mxu0
        %v7064 = vadd.f32 0.0, %v7063
        %7065 = vmatmul.bf16.gmra.mxu0 %v2695
        %v7066 = vpop.f32.mrf.mxu0
        %v7067 = vadd.f32 0.0, %v7066
        %v7068 = vpop.f32.mrf.mxu0
        %v7069 = vadd.f32 0.0, %v7068
        %7070 = vmatmul.bf16.gmra.mxu0 %v2697
        %v7071 = vpop.f32.mrf.mxu0
        %v7072 = vadd.f32 0.0, %v7071
        %v7073 = vpop.f32.mrf.mxu0
        %v7074 = vadd.f32 0.0, %v7073
        %7075 = vmatmul.bf16.gmra.mxu0 %v2699
        %v7076 = vpop.f32.mrf.mxu0
        %v7077 = vadd.f32 0.0, %v7076
        %v7078 = vpop.f32.mrf.mxu0
        %v7079 = vadd.f32 0.0, %v7078
        %7080 = vmatmul.bf16.gmra.mxu0 %v2701
        %v7081 = vpop.f32.mrf.mxu0
        %v7082 = vadd.f32 0.0, %v7081
        %v7083 = vpop.f32.mrf.mxu0
        %v7084 = vadd.f32 0.0, %v7083
        %7085 = vmatmul.bf16.gmra.mxu0 %v2703
        %v7086 = vpop.f32.mrf.mxu0
        %v7087 = vadd.f32 0.0, %v7086
        %v7088 = vpop.f32.mrf.mxu0
        %v7089 = vadd.f32 0.0, %v7088
        %7090 = vdwg.mxu0
        %7091 = vmatpush.bf16.msra.mxu0 %v5592
        %7092 = vmatpush.bf16.msra.mxu0 %v5591
        %7093 = vmatpush.bf16.msra.mxu0 %v5590
        %7094 = vmatpush.bf16.msra.mxu0 %v5589
        %7095 = vmatpush.bf16.msra.mxu0 %v5588
        %7096 = vmatpush.bf16.msra.mxu0 %v5587
        %7097 = vmatpush.bf16.msra.mxu0 %v5586
        %7098 = vmatpush.bf16.msra.mxu0 %v5585
        %7099 = vmatmul.bf16.gmra.mxu0 %v2674
        %v7100 = vpop.f32.mrf.mxu0
        %v7101 = vadd.f32 %v7012, %v7100
        %v7102 = vpop.f32.mrf.mxu0
        %v7103 = vadd.f32 %v7014, %v7102
        %7104 = vmatmul.bf16.gmra.mxu0 %v2676
        %v7105 = vpop.f32.mrf.mxu0
        %v7106 = vadd.f32 %v7017, %v7105
        %v7107 = vpop.f32.mrf.mxu0
        %v7108 = vadd.f32 %v7019, %v7107
        %7109 = vmatmul.bf16.gmra.mxu0 %v2678
        %v7110 = vpop.f32.mrf.mxu0
        %v7111 = vadd.f32 %v7022, %v7110
        %v7112 = vpop.f32.mrf.mxu0
        %v7113 = vadd.f32 %v7024, %v7112
        %7114 = vmatmul.bf16.gmra.mxu0 %v2680
        %v7115 = vpop.f32.mrf.mxu0
        %v7116 = vadd.f32 %v7027, %v7115
        %v7117 = vpop.f32.mrf.mxu0
        %v7118 = vadd.f32 %v7029, %v7117
        %7119 = vmatmul.bf16.gmra.mxu0 %v2682
        %v7120 = vpop.f32.mrf.mxu0
        %v7121 = vadd.f32 %v7032, %v7120
        %v7122 = vpop.f32.mrf.mxu0
        %v7123 = vadd.f32 %v7034, %v7122
        %7124 = vmatmul.bf16.gmra.mxu0 %v2684
        %v7125 = vpop.f32.mrf.mxu0
        %v7126 = vadd.f32 %v7037, %v7125
        %v7127 = vpop.f32.mrf.mxu0
        %v7128 = vadd.f32 %v7039, %v7127
        %7129 = vmatmul.bf16.gmra.mxu0 %v2686
        %v7130 = vpop.f32.mrf.mxu0
        %v7131 = vadd.f32 %v7042, %v7130
        %v7132 = vpop.f32.mrf.mxu0
        %v7133 = vadd.f32 %v7044, %v7132
        %7134 = vmatmul.bf16.gmra.mxu0 %v2688
        %v7135 = vpop.f32.mrf.mxu0
        %v7136 = vadd.f32 %v7047, %v7135
        %v7137 = vpop.f32.mrf.mxu0
        %v7138 = vadd.f32 %v7049, %v7137
        %7139 = vmatmul.bf16.gmra.mxu0 %v2690
        %v7140 = vpop.f32.mrf.mxu0
        %v7141 = vadd.f32 %v7052, %v7140
        %v7142 = vpop.f32.mrf.mxu0
        %v7143 = vadd.f32 %v7054, %v7142
        %7144 = vmatmul.bf16.gmra.mxu0 %v2692
        %v7145 = vpop.f32.mrf.mxu0
        %v7146 = vadd.f32 %v7057, %v7145
        %v7147 = vpop.f32.mrf.mxu0
        %v7148 = vadd.f32 %v7059, %v7147
        %7149 = vmatmul.bf16.gmra.mxu0 %v2694
        %v7150 = vpop.f32.mrf.mxu0
        %v7151 = vadd.f32 %v7062, %v7150
        %v7152 = vpop.f32.mrf.mxu0
        %v7153 = vadd.f32 %v7064, %v7152
        %7154 = vmatmul.bf16.gmra.mxu0 %v2696
        %v7155 = vpop.f32.mrf.mxu0
        %v7156 = vadd.f32 %v7067, %v7155
        %v7157 = vpop.f32.mrf.mxu0
        %v7158 = vadd.f32 %v7069, %v7157
        %7159 = vmatmul.bf16.gmra.mxu0 %v2698
        %v7160 = vpop.f32.mrf.mxu0
        %v7161 = vadd.f32 %v7072, %v7160
        %v7162 = vpop.f32.mrf.mxu0
        %v7163 = vadd.f32 %v7074, %v7162
        %7164 = vmatmul.bf16.gmra.mxu0 %v2700
        %v7165 = vpop.f32.mrf.mxu0
        %v7166 = vadd.f32 %v7077, %v7165
        %v7167 = vpop.f32.mrf.mxu0
        %v7168 = vadd.f32 %v7079, %v7167
        %7169 = vmatmul.bf16.gmra.mxu0 %v2702
        %v7170 = vpop.f32.mrf.mxu0
        %v7171 = vadd.f32 %v7082, %v7170
        %v7172 = vpop.f32.mrf.mxu0
        %v7173 = vadd.f32 %v7084, %v7172
        %7174 = vmatmul.bf16.gmra.mxu0 %v2704
        %v7175 = vpop.f32.mrf.mxu0
        %v7176 = vadd.f32 %v7087, %v7175
        %v7177 = vpop.f32.mrf.mxu0
        %v7178 = vadd.f32 %v7089, %v7177
        %7179 = vdwg.mxu0
        %v7180 = vpack.c.bf16 %v7103, %v7101
        %v7181 = vpack.c.bf16 %v7108, %v7106
        %v7182 = vpack.c.bf16 %v7113, %v7111
        %v7183 = vpack.c.bf16 %v7118, %v7116
        %v7184 = vpack.c.bf16 %v7123, %v7121
        %v7185 = vpack.c.bf16 %v7128, %v7126
        %v7186 = vpack.c.bf16 %v7133, %v7131
        %v7187 = vpack.c.bf16 %v7138, %v7136
        %v7188 = vpack.c.bf16 %v7143, %v7141
        %v7189 = vpack.c.bf16 %v7148, %v7146
        %v7190 = vpack.c.bf16 %v7153, %v7151
        %v7191 = vpack.c.bf16 %v7158, %v7156
        %v7192 = vpack.c.bf16 %v7163, %v7161
        %v7193 = vpack.c.bf16 %v7168, %v7166
        %v7194 = vpack.c.bf16 %v7173, %v7171
        %v7195 = vpack.c.bf16 %v7178, %v7176
        %s7196 = scalar_lea.vmem [#allocation6], 16
        %v7197 = vld [vmem:[%s7196] sm:$0xf]
        %v7199 = vsel %vm5984, %v7180, 0
        %v7202 = vsel %vm5984, %v7181, 0
        %v7205 = vsel %vm5984, %v7182, 0
        %v7208 = vsel %vm5984, %v7183, 0
        %v7211 = vsel %vm5984, %v7184, 0
        %v7214 = vsel %vm5984, %v7185, 0
        %v7217 = vsel %vm5984, %v7186, 0
        %v7220 = vsel %vm5984, %v7187, 0
        %v7223 = vsel %vm5984, %v7188, 0
        %v7226 = vsel %vm5984, %v7189, 0
        %v7229 = vsel %vm5984, %v7190, 0
        %v7232 = vsel %vm5984, %v7191, 0
        %v7235 = vsel %vm5984, %v7192, 0
        %v7238 = vsel %vm5984, %v7193, 0
        %v7241 = vsel %vm5984, %v7194, 0
        %v7244 = vsel %vm5984, %v7195, 0
        %v7247 = vsel %vm6033, %v7197, 0
        %7249 = vmatpush.bf16.msra.mxu0 0
        %7250 = vmatpush.bf16.msra.mxu0 0
        %7251 = vmatpush.bf16.msra.mxu0 0
        %7252 = vmatpush.bf16.msra.mxu0 0
        %7253 = vmatpush.bf16.msra.mxu0 0
        %7254 = vmatpush.bf16.msra.mxu0 0
        %7255 = vmatpush.bf16.msra.mxu0 0
        %7256 = vmatpush.bf16.msra.mxu0 %v7247
        %7257 = vmatmul.bf16.gmra.mxu0 %v7199
        %v7258 = vpop.f32.mrf.mxu0
        %v7259 = vadd.f32 0.0, %v7258
        %v7260 = vpop.f32.mrf.mxu0
        %v7261 = vadd.f32 0.0, %v7260
        %7262 = vmatmul.bf16.gmra.mxu0 %v7202
        %v7263 = vpop.f32.mrf.mxu0
        %v7264 = vadd.f32 0.0, %v7263
        %v7265 = vpop.f32.mrf.mxu0
        %v7266 = vadd.f32 0.0, %v7265
        %7267 = vmatmul.bf16.gmra.mxu0 %v7205
        %v7268 = vpop.f32.mrf.mxu0
        %v7269 = vadd.f32 0.0, %v7268
        %v7270 = vpop.f32.mrf.mxu0
        %v7271 = vadd.f32 0.0, %v7270
        %7272 = vmatmul.bf16.gmra.mxu0 %v7208
        %v7273 = vpop.f32.mrf.mxu0
        %v7274 = vadd.f32 0.0, %v7273
        %v7275 = vpop.f32.mrf.mxu0
        %v7276 = vadd.f32 0.0, %v7275
        %7277 = vmatmul.bf16.gmra.mxu0 %v7211
        %v7278 = vpop.f32.mrf.mxu0
        %v7279 = vadd.f32 0.0, %v7278
        %v7280 = vpop.f32.mrf.mxu0
        %v7281 = vadd.f32 0.0, %v7280
        %7282 = vmatmul.bf16.gmra.mxu0 %v7214
        %v7283 = vpop.f32.mrf.mxu0
        %v7284 = vadd.f32 0.0, %v7283
        %v7285 = vpop.f32.mrf.mxu0
        %v7286 = vadd.f32 0.0, %v7285
        %7287 = vmatmul.bf16.gmra.mxu0 %v7217
        %v7288 = vpop.f32.mrf.mxu0
        %v7289 = vadd.f32 0.0, %v7288
        %v7290 = vpop.f32.mrf.mxu0
        %v7291 = vadd.f32 0.0, %v7290
        %7292 = vmatmul.bf16.gmra.mxu0 %v7220
        %v7293 = vpop.f32.mrf.mxu0
        %v7294 = vadd.f32 0.0, %v7293
        %v7295 = vpop.f32.mrf.mxu0
        %v7296 = vadd.f32 0.0, %v7295
        %7297 = vmatmul.bf16.gmra.mxu0 %v7223
        %v7298 = vpop.f32.mrf.mxu0
        %v7299 = vadd.f32 0.0, %v7298
        %v7300 = vpop.f32.mrf.mxu0
        %v7301 = vadd.f32 0.0, %v7300
        %7302 = vmatmul.bf16.gmra.mxu0 %v7226
        %v7303 = vpop.f32.mrf.mxu0
        %v7304 = vadd.f32 0.0, %v7303
        %v7305 = vpop.f32.mrf.mxu0
        %v7306 = vadd.f32 0.0, %v7305
        %7307 = vmatmul.bf16.gmra.mxu0 %v7229
        %v7308 = vpop.f32.mrf.mxu0
        %v7309 = vadd.f32 0.0, %v7308
        %v7310 = vpop.f32.mrf.mxu0
        %v7311 = vadd.f32 0.0, %v7310
        %7312 = vmatmul.bf16.gmra.mxu0 %v7232
        %v7313 = vpop.f32.mrf.mxu0
        %v7314 = vadd.f32 0.0, %v7313
        %v7315 = vpop.f32.mrf.mxu0
        %v7316 = vadd.f32 0.0, %v7315
        %7317 = vmatmul.bf16.gmra.mxu0 %v7235
        %v7318 = vpop.f32.mrf.mxu0
        %v7319 = vadd.f32 0.0, %v7318
        %v7320 = vpop.f32.mrf.mxu0
        %v7321 = vadd.f32 0.0, %v7320
        %7322 = vmatmul.bf16.gmra.mxu0 %v7238
        %v7323 = vpop.f32.mrf.mxu0
        %v7324 = vadd.f32 0.0, %v7323
        %v7325 = vpop.f32.mrf.mxu0
        %v7326 = vadd.f32 0.0, %v7325
        %7327 = vmatmul.bf16.gmra.mxu0 %v7241
        %v7328 = vpop.f32.mrf.mxu0
        %v7329 = vadd.f32 0.0, %v7328
        %v7330 = vpop.f32.mrf.mxu0
        %v7331 = vadd.f32 0.0, %v7330
        %7332 = vmatmul.bf16.gmra.mxu0 %v7244
        %v7333 = vpop.f32.mrf.mxu0
        %v7334 = vadd.f32 0.0, %v7333
        %v7335 = vpop.f32.mrf.mxu0
        %v7336 = vadd.f32 0.0, %v7335
        %7337 = vdwg.mxu0
        %v7338 = vadd.f32 %v6970, %v7259
        %v7339 = vadd.f32 %v6971, %v7261
        %v7340 = vadd.f32 %v6972, %v7264
        %v7341 = vadd.f32 %v6973, %v7266
        %v7342 = vadd.f32 %v6974, %v7269
        %v7343 = vadd.f32 %v6975, %v7271
        %v7344 = vadd.f32 %v6976, %v7274
        %v7345 = vadd.f32 %v6977, %v7276
        %v7346 = vadd.f32 %v6978, %v7279
        %v7347 = vadd.f32 %v6979, %v7281
        %v7348 = vadd.f32 %v6980, %v7284
        %v7349 = vadd.f32 %v6981, %v7286
        %v7350 = vadd.f32 %v6982, %v7289
        %v7351 = vadd.f32 %v6983, %v7291
        %v7352 = vadd.f32 %v6984, %v7294
        %v7353 = vadd.f32 %v6985, %v7296
        %v7354 = vadd.f32 %v6986, %v7299
        %v7355 = vadd.f32 %v6987, %v7301
        %v7356 = vadd.f32 %v6988, %v7304
        %v7357 = vadd.f32 %v6989, %v7306
        %v7358 = vadd.f32 %v6990, %v7309
        %v7359 = vadd.f32 %v6991, %v7311
        %v7360 = vadd.f32 %v6992, %v7314
        %v7361 = vadd.f32 %v6993, %v7316
        %v7362 = vadd.f32 %v6994, %v7319
        %v7363 = vadd.f32 %v6995, %v7321
        %v7364 = vadd.f32 %v6996, %v7324
        %v7365 = vadd.f32 %v6997, %v7326
        %v7366 = vadd.f32 %v6998, %v7329
        %v7367 = vadd.f32 %v6999, %v7331
        %v7368 = vadd.f32 %v7000, %v7334
        %v7369 = vadd.f32 %v7001, %v7336
        %7370 = vmatpush.bf16.msra.mxu0 %v5584
        %7371 = vmatpush.bf16.msra.mxu0 %v5583
        %7372 = vmatpush.bf16.msra.mxu0 %v5582
        %7373 = vmatpush.bf16.msra.mxu0 %v5581
        %7374 = vmatpush.bf16.msra.mxu0 %v5580
        %7375 = vmatpush.bf16.msra.mxu0 %v5579
        %7376 = vmatpush.bf16.msra.mxu0 %v5578
        %7377 = vmatpush.bf16.msra.mxu0 %v5577
        %7378 = vmatmul.bf16.gmra.mxu0 %v3234
        %v7379 = vpop.f32.mrf.mxu0
        %v7380 = vadd.f32 0.0, %v7379
        %v7381 = vpop.f32.mrf.mxu0
        %v7382 = vadd.f32 0.0, %v7381
        %7383 = vmatmul.bf16.gmra.mxu0 %v3236
        %v7384 = vpop.f32.mrf.mxu0
        %v7385 = vadd.f32 0.0, %v7384
        %v7386 = vpop.f32.mrf.mxu0
        %v7387 = vadd.f32 0.0, %v7386
        %7388 = vmatmul.bf16.gmra.mxu0 %v3238
        %v7389 = vpop.f32.mrf.mxu0
        %v7390 = vadd.f32 0.0, %v7389
        %v7391 = vpop.f32.mrf.mxu0
        %v7392 = vadd.f32 0.0, %v7391
        %7393 = vmatmul.bf16.gmra.mxu0 %v3240
        %v7394 = vpop.f32.mrf.mxu0
        %v7395 = vadd.f32 0.0, %v7394
        %v7396 = vpop.f32.mrf.mxu0
        %v7397 = vadd.f32 0.0, %v7396
        %7398 = vmatmul.bf16.gmra.mxu0 %v3242
        %v7399 = vpop.f32.mrf.mxu0
        %v7400 = vadd.f32 0.0, %v7399
        %v7401 = vpop.f32.mrf.mxu0
        %v7402 = vadd.f32 0.0, %v7401
        %7403 = vmatmul.bf16.gmra.mxu0 %v3244
        %v7404 = vpop.f32.mrf.mxu0
        %v7405 = vadd.f32 0.0, %v7404
        %v7406 = vpop.f32.mrf.mxu0
        %v7407 = vadd.f32 0.0, %v7406
        %7408 = vmatmul.bf16.gmra.mxu0 %v3246
        %v7409 = vpop.f32.mrf.mxu0
        %v7410 = vadd.f32 0.0, %v7409
        %v7411 = vpop.f32.mrf.mxu0
        %v7412 = vadd.f32 0.0, %v7411
        %7413 = vmatmul.bf16.gmra.mxu0 %v3248
        %v7414 = vpop.f32.mrf.mxu0
        %v7415 = vadd.f32 0.0, %v7414
        %v7416 = vpop.f32.mrf.mxu0
        %v7417 = vadd.f32 0.0, %v7416
        %7418 = vmatmul.bf16.gmra.mxu0 %v3250
        %v7419 = vpop.f32.mrf.mxu0
        %v7420 = vadd.f32 0.0, %v7419
        %v7421 = vpop.f32.mrf.mxu0
        %v7422 = vadd.f32 0.0, %v7421
        %7423 = vmatmul.bf16.gmra.mxu0 %v3252
        %v7424 = vpop.f32.mrf.mxu0
        %v7425 = vadd.f32 0.0, %v7424
        %v7426 = vpop.f32.mrf.mxu0
        %v7427 = vadd.f32 0.0, %v7426
        %7428 = vmatmul.bf16.gmra.mxu0 %v3254
        %v7429 = vpop.f32.mrf.mxu0
        %v7430 = vadd.f32 0.0, %v7429
        %v7431 = vpop.f32.mrf.mxu0
        %v7432 = vadd.f32 0.0, %v7431
        %7433 = vmatmul.bf16.gmra.mxu0 %v3256
        %v7434 = vpop.f32.mrf.mxu0
        %v7435 = vadd.f32 0.0, %v7434
        %v7436 = vpop.f32.mrf.mxu0
        %v7437 = vadd.f32 0.0, %v7436
        %7438 = vmatmul.bf16.gmra.mxu0 %v3258
        %v7439 = vpop.f32.mrf.mxu0
        %v7440 = vadd.f32 0.0, %v7439
        %v7441 = vpop.f32.mrf.mxu0
        %v7442 = vadd.f32 0.0, %v7441
        %7443 = vmatmul.bf16.gmra.mxu0 %v3260
        %v7444 = vpop.f32.mrf.mxu0
        %v7445 = vadd.f32 0.0, %v7444
        %v7446 = vpop.f32.mrf.mxu0
        %v7447 = vadd.f32 0.0, %v7446
        %7448 = vmatmul.bf16.gmra.mxu0 %v3262
        %v7449 = vpop.f32.mrf.mxu0
        %v7450 = vadd.f32 0.0, %v7449
        %v7451 = vpop.f32.mrf.mxu0
        %v7452 = vadd.f32 0.0, %v7451
        %7453 = vmatmul.bf16.gmra.mxu0 %v3264
        %v7454 = vpop.f32.mrf.mxu0
        %v7455 = vadd.f32 0.0, %v7454
        %v7456 = vpop.f32.mrf.mxu0
        %v7457 = vadd.f32 0.0, %v7456
        %7458 = vdwg.mxu0
        %7459 = vmatpush.bf16.msra.mxu0 %v5592
        %7460 = vmatpush.bf16.msra.mxu0 %v5591
        %7461 = vmatpush.bf16.msra.mxu0 %v5590
        %7462 = vmatpush.bf16.msra.mxu0 %v5589
        %7463 = vmatpush.bf16.msra.mxu0 %v5588
        %7464 = vmatpush.bf16.msra.mxu0 %v5587
        %7465 = vmatpush.bf16.msra.mxu0 %v5586
        %7466 = vmatpush.bf16.msra.mxu0 %v5585
        %7467 = vmatmul.bf16.gmra.mxu0 %v3235
        %v7468 = vpop.f32.mrf.mxu0
        %v7469 = vadd.f32 %v7380, %v7468
        %v7470 = vpop.f32.mrf.mxu0
        %v7471 = vadd.f32 %v7382, %v7470
        %7472 = vmatmul.bf16.gmra.mxu0 %v3237
        %v7473 = vpop.f32.mrf.mxu0
        %v7474 = vadd.f32 %v7385, %v7473
        %v7475 = vpop.f32.mrf.mxu0
        %v7476 = vadd.f32 %v7387, %v7475
        %7477 = vmatmul.bf16.gmra.mxu0 %v3239
        %v7478 = vpop.f32.mrf.mxu0
        %v7479 = vadd.f32 %v7390, %v7478
        %v7480 = vpop.f32.mrf.mxu0
        %v7481 = vadd.f32 %v7392, %v7480
        %7482 = vmatmul.bf16.gmra.mxu0 %v3241
        %v7483 = vpop.f32.mrf.mxu0
        %v7484 = vadd.f32 %v7395, %v7483
        %v7485 = vpop.f32.mrf.mxu0
        %v7486 = vadd.f32 %v7397, %v7485
        %7487 = vmatmul.bf16.gmra.mxu0 %v3243
        %v7488 = vpop.f32.mrf.mxu0
        %v7489 = vadd.f32 %v7400, %v7488
        %v7490 = vpop.f32.mrf.mxu0
        %v7491 = vadd.f32 %v7402, %v7490
        %7492 = vmatmul.bf16.gmra.mxu0 %v3245
        %v7493 = vpop.f32.mrf.mxu0
        %v7494 = vadd.f32 %v7405, %v7493
        %v7495 = vpop.f32.mrf.mxu0
        %v7496 = vadd.f32 %v7407, %v7495
        %7497 = vmatmul.bf16.gmra.mxu0 %v3247
        %v7498 = vpop.f32.mrf.mxu0
        %v7499 = vadd.f32 %v7410, %v7498
        %v7500 = vpop.f32.mrf.mxu0
        %v7501 = vadd.f32 %v7412, %v7500
        %7502 = vmatmul.bf16.gmra.mxu0 %v3249
        %v7503 = vpop.f32.mrf.mxu0
        %v7504 = vadd.f32 %v7415, %v7503
        %v7505 = vpop.f32.mrf.mxu0
        %v7506 = vadd.f32 %v7417, %v7505
        %7507 = vmatmul.bf16.gmra.mxu0 %v3251
        %v7508 = vpop.f32.mrf.mxu0
        %v7509 = vadd.f32 %v7420, %v7508
        %v7510 = vpop.f32.mrf.mxu0
        %v7511 = vadd.f32 %v7422, %v7510
        %7512 = vmatmul.bf16.gmra.mxu0 %v3253
        %v7513 = vpop.f32.mrf.mxu0
        %v7514 = vadd.f32 %v7425, %v7513
        %v7515 = vpop.f32.mrf.mxu0
        %v7516 = vadd.f32 %v7427, %v7515
        %7517 = vmatmul.bf16.gmra.mxu0 %v3255
        %v7518 = vpop.f32.mrf.mxu0
        %v7519 = vadd.f32 %v7430, %v7518
        %v7520 = vpop.f32.mrf.mxu0
        %v7521 = vadd.f32 %v7432, %v7520
        %7522 = vmatmul.bf16.gmra.mxu0 %v3257
        %v7523 = vpop.f32.mrf.mxu0
        %v7524 = vadd.f32 %v7435, %v7523
        %v7525 = vpop.f32.mrf.mxu0
        %v7526 = vadd.f32 %v7437, %v7525
        %7527 = vmatmul.bf16.gmra.mxu0 %v3259
        %v7528 = vpop.f32.mrf.mxu0
        %v7529 = vadd.f32 %v7440, %v7528
        %v7530 = vpop.f32.mrf.mxu0
        %v7531 = vadd.f32 %v7442, %v7530
        %7532 = vmatmul.bf16.gmra.mxu0 %v3261
        %v7533 = vpop.f32.mrf.mxu0
        %v7534 = vadd.f32 %v7445, %v7533
        %v7535 = vpop.f32.mrf.mxu0
        %v7536 = vadd.f32 %v7447, %v7535
        %7537 = vmatmul.bf16.gmra.mxu0 %v3263
        %v7538 = vpop.f32.mrf.mxu0
        %v7539 = vadd.f32 %v7450, %v7538
        %v7540 = vpop.f32.mrf.mxu0
        %v7541 = vadd.f32 %v7452, %v7540
        %7542 = vmatmul.bf16.gmra.mxu0 %v3265
        %v7543 = vpop.f32.mrf.mxu0
        %v7544 = vadd.f32 %v7455, %v7543
        %v7545 = vpop.f32.mrf.mxu0
        %v7546 = vadd.f32 %v7457, %v7545
        %7547 = vdwg.mxu0
        %v7548 = vpack.c.bf16 %v7471, %v7469
        %v7549 = vpack.c.bf16 %v7476, %v7474
        %v7550 = vpack.c.bf16 %v7481, %v7479
        %v7551 = vpack.c.bf16 %v7486, %v7484
        %v7552 = vpack.c.bf16 %v7491, %v7489
        %v7553 = vpack.c.bf16 %v7496, %v7494
        %v7554 = vpack.c.bf16 %v7501, %v7499
        %v7555 = vpack.c.bf16 %v7506, %v7504
        %v7556 = vpack.c.bf16 %v7511, %v7509
        %v7557 = vpack.c.bf16 %v7516, %v7514
        %v7558 = vpack.c.bf16 %v7521, %v7519
        %v7559 = vpack.c.bf16 %v7526, %v7524
        %v7560 = vpack.c.bf16 %v7531, %v7529
        %v7561 = vpack.c.bf16 %v7536, %v7534
        %v7562 = vpack.c.bf16 %v7541, %v7539
        %v7563 = vpack.c.bf16 %v7546, %v7544
        %s7564 = scalar_lea.vmem [#allocation6], 20
        %v7565 = vld [vmem:[%s7564] sm:$0xf]
        %v7567 = vsel %vm5984, %v7548, 0
        %v7570 = vsel %vm5984, %v7549, 0
        %v7573 = vsel %vm5984, %v7550, 0
        %v7576 = vsel %vm5984, %v7551, 0
        %v7579 = vsel %vm5984, %v7552, 0
        %v7582 = vsel %vm5984, %v7553, 0
        %v7585 = vsel %vm5984, %v7554, 0
        %v7588 = vsel %vm5984, %v7555, 0
        %v7591 = vsel %vm5984, %v7556, 0
        %v7594 = vsel %vm5984, %v7557, 0
        %v7597 = vsel %vm5984, %v7558, 0
        %v7600 = vsel %vm5984, %v7559, 0
        %v7603 = vsel %vm5984, %v7560, 0
        %v7606 = vsel %vm5984, %v7561, 0
        %v7609 = vsel %vm5984, %v7562, 0
        %v7612 = vsel %vm5984, %v7563, 0
        %v7615 = vsel %vm6033, %v7565, 0
        %7617 = vmatpush.bf16.msra.mxu0 0
        %7618 = vmatpush.bf16.msra.mxu0 0
        %7619 = vmatpush.bf16.msra.mxu0 0
        %7620 = vmatpush.bf16.msra.mxu0 0
        %7621 = vmatpush.bf16.msra.mxu0 0
        %7622 = vmatpush.bf16.msra.mxu0 0
        %7623 = vmatpush.bf16.msra.mxu0 0
        %7624 = vmatpush.bf16.msra.mxu0 %v7615
        %7625 = vmatmul.bf16.gmra.mxu0 %v7567
        %v7626 = vpop.f32.mrf.mxu0
        %v7627 = vadd.f32 0.0, %v7626
        %v7628 = vpop.f32.mrf.mxu0
        %v7629 = vadd.f32 0.0, %v7628
        %7630 = vmatmul.bf16.gmra.mxu0 %v7570
        %v7631 = vpop.f32.mrf.mxu0
        %v7632 = vadd.f32 0.0, %v7631
        %v7633 = vpop.f32.mrf.mxu0
        %v7634 = vadd.f32 0.0, %v7633
        %7635 = vmatmul.bf16.gmra.mxu0 %v7573
        %v7636 = vpop.f32.mrf.mxu0
        %v7637 = vadd.f32 0.0, %v7636
        %v7638 = vpop.f32.mrf.mxu0
        %v7639 = vadd.f32 0.0, %v7638
        %7640 = vmatmul.bf16.gmra.mxu0 %v7576
        %v7641 = vpop.f32.mrf.mxu0
        %v7642 = vadd.f32 0.0, %v7641
        %v7643 = vpop.f32.mrf.mxu0
        %v7644 = vadd.f32 0.0, %v7643
        %7645 = vmatmul.bf16.gmra.mxu0 %v7579
        %v7646 = vpop.f32.mrf.mxu0
        %v7647 = vadd.f32 0.0, %v7646
        %v7648 = vpop.f32.mrf.mxu0
        %v7649 = vadd.f32 0.0, %v7648
        %7650 = vmatmul.bf16.gmra.mxu0 %v7582
        %v7651 = vpop.f32.mrf.mxu0
        %v7652 = vadd.f32 0.0, %v7651
        %v7653 = vpop.f32.mrf.mxu0
        %v7654 = vadd.f32 0.0, %v7653
        %7655 = vmatmul.bf16.gmra.mxu0 %v7585
        %v7656 = vpop.f32.mrf.mxu0
        %v7657 = vadd.f32 0.0, %v7656
        %v7658 = vpop.f32.mrf.mxu0
        %v7659 = vadd.f32 0.0, %v7658
        %7660 = vmatmul.bf16.gmra.mxu0 %v7588
        %v7661 = vpop.f32.mrf.mxu0
        %v7662 = vadd.f32 0.0, %v7661
        %v7663 = vpop.f32.mrf.mxu0
        %v7664 = vadd.f32 0.0, %v7663
        %7665 = vmatmul.bf16.gmra.mxu0 %v7591
        %v7666 = vpop.f32.mrf.mxu0
        %v7667 = vadd.f32 0.0, %v7666
        %v7668 = vpop.f32.mrf.mxu0
        %v7669 = vadd.f32 0.0, %v7668
        %7670 = vmatmul.bf16.gmra.mxu0 %v7594
        %v7671 = vpop.f32.mrf.mxu0
        %v7672 = vadd.f32 0.0, %v7671
        %v7673 = vpop.f32.mrf.mxu0
        %v7674 = vadd.f32 0.0, %v7673
        %7675 = vmatmul.bf16.gmra.mxu0 %v7597
        %v7676 = vpop.f32.mrf.mxu0
        %v7677 = vadd.f32 0.0, %v7676
        %v7678 = vpop.f32.mrf.mxu0
        %v7679 = vadd.f32 0.0, %v7678
        %7680 = vmatmul.bf16.gmra.mxu0 %v7600
        %v7681 = vpop.f32.mrf.mxu0
        %v7682 = vadd.f32 0.0, %v7681
        %v7683 = vpop.f32.mrf.mxu0
        %v7684 = vadd.f32 0.0, %v7683
        %7685 = vmatmul.bf16.gmra.mxu0 %v7603
        %v7686 = vpop.f32.mrf.mxu0
        %v7687 = vadd.f32 0.0, %v7686
        %v7688 = vpop.f32.mrf.mxu0
        %v7689 = vadd.f32 0.0, %v7688
        %7690 = vmatmul.bf16.gmra.mxu0 %v7606
        %v7691 = vpop.f32.mrf.mxu0
        %v7692 = vadd.f32 0.0, %v7691
        %v7693 = vpop.f32.mrf.mxu0
        %v7694 = vadd.f32 0.0, %v7693
        %7695 = vmatmul.bf16.gmra.mxu0 %v7609
        %v7696 = vpop.f32.mrf.mxu0
        %v7697 = vadd.f32 0.0, %v7696
        %v7698 = vpop.f32.mrf.mxu0
        %v7699 = vadd.f32 0.0, %v7698
        %7700 = vmatmul.bf16.gmra.mxu0 %v7612
        %v7701 = vpop.f32.mrf.mxu0
        %v7702 = vadd.f32 0.0, %v7701
        %v7703 = vpop.f32.mrf.mxu0
        %v7704 = vadd.f32 0.0, %v7703
        %7705 = vdwg.mxu0
        %v7706 = vadd.f32 %v7338, %v7627
        %v7707 = vadd.f32 %v7339, %v7629
        %v7708 = vadd.f32 %v7340, %v7632
        %v7709 = vadd.f32 %v7341, %v7634
        %v7710 = vadd.f32 %v7342, %v7637
        %v7711 = vadd.f32 %v7343, %v7639
        %v7712 = vadd.f32 %v7344, %v7642
        %v7713 = vadd.f32 %v7345, %v7644
        %v7714 = vadd.f32 %v7346, %v7647
        %v7715 = vadd.f32 %v7347, %v7649
        %v7716 = vadd.f32 %v7348, %v7652
        %v7717 = vadd.f32 %v7349, %v7654
        %v7718 = vadd.f32 %v7350, %v7657
        %v7719 = vadd.f32 %v7351, %v7659
        %v7720 = vadd.f32 %v7352, %v7662
        %v7721 = vadd.f32 %v7353, %v7664
        %v7722 = vadd.f32 %v7354, %v7667
        %v7723 = vadd.f32 %v7355, %v7669
        %v7724 = vadd.f32 %v7356, %v7672
        %v7725 = vadd.f32 %v7357, %v7674
        %v7726 = vadd.f32 %v7358, %v7677
        %v7727 = vadd.f32 %v7359, %v7679
        %v7728 = vadd.f32 %v7360, %v7682
        %v7729 = vadd.f32 %v7361, %v7684
        %v7730 = vadd.f32 %v7362, %v7687
        %v7731 = vadd.f32 %v7363, %v7689
        %v7732 = vadd.f32 %v7364, %v7692
        %v7733 = vadd.f32 %v7365, %v7694
        %v7734 = vadd.f32 %v7366, %v7697
        %v7735 = vadd.f32 %v7367, %v7699
        %v7736 = vadd.f32 %v7368, %v7702
        %v7737 = vadd.f32 %v7369, %v7704
        %7738 = vmatpush.bf16.msra.mxu0 %v5584
        %7739 = vmatpush.bf16.msra.mxu0 %v5583
        %7740 = vmatpush.bf16.msra.mxu0 %v5582
        %7741 = vmatpush.bf16.msra.mxu0 %v5581
        %7742 = vmatpush.bf16.msra.mxu0 %v5580
        %7743 = vmatpush.bf16.msra.mxu0 %v5579
        %7744 = vmatpush.bf16.msra.mxu0 %v5578
        %7745 = vmatpush.bf16.msra.mxu0 %v5577
        %7746 = vmatmul.bf16.gmra.mxu0 %v3795
        %v7747 = vpop.f32.mrf.mxu0
        %v7748 = vadd.f32 0.0, %v7747
        %v7749 = vpop.f32.mrf.mxu0
        %v7750 = vadd.f32 0.0, %v7749
        %7751 = vmatmul.bf16.gmra.mxu0 %v3797
        %v7752 = vpop.f32.mrf.mxu0
        %v7753 = vadd.f32 0.0, %v7752
        %v7754 = vpop.f32.mrf.mxu0
        %v7755 = vadd.f32 0.0, %v7754
        %7756 = vmatmul.bf16.gmra.mxu0 %v3799
        %v7757 = vpop.f32.mrf.mxu0
        %v7758 = vadd.f32 0.0, %v7757
        %v7759 = vpop.f32.mrf.mxu0
        %v7760 = vadd.f32 0.0, %v7759
        %7761 = vmatmul.bf16.gmra.mxu0 %v3801
        %v7762 = vpop.f32.mrf.mxu0
        %v7763 = vadd.f32 0.0, %v7762
        %v7764 = vpop.f32.mrf.mxu0
        %v7765 = vadd.f32 0.0, %v7764
        %7766 = vmatmul.bf16.gmra.mxu0 %v3803
        %v7767 = vpop.f32.mrf.mxu0
        %v7768 = vadd.f32 0.0, %v7767
        %v7769 = vpop.f32.mrf.mxu0
        %v7770 = vadd.f32 0.0, %v7769
        %7771 = vmatmul.bf16.gmra.mxu0 %v3805
        %v7772 = vpop.f32.mrf.mxu0
        %v7773 = vadd.f32 0.0, %v7772
        %v7774 = vpop.f32.mrf.mxu0
        %v7775 = vadd.f32 0.0, %v7774
        %7776 = vmatmul.bf16.gmra.mxu0 %v3807
        %v7777 = vpop.f32.mrf.mxu0
        %v7778 = vadd.f32 0.0, %v7777
        %v7779 = vpop.f32.mrf.mxu0
        %v7780 = vadd.f32 0.0, %v7779
        %7781 = vmatmul.bf16.gmra.mxu0 %v3809
        %v7782 = vpop.f32.mrf.mxu0
        %v7783 = vadd.f32 0.0, %v7782
        %v7784 = vpop.f32.mrf.mxu0
        %v7785 = vadd.f32 0.0, %v7784
        %7786 = vmatmul.bf16.gmra.mxu0 %v3811
        %v7787 = vpop.f32.mrf.mxu0
        %v7788 = vadd.f32 0.0, %v7787
        %v7789 = vpop.f32.mrf.mxu0
        %v7790 = vadd.f32 0.0, %v7789
        %7791 = vmatmul.bf16.gmra.mxu0 %v3813
        %v7792 = vpop.f32.mrf.mxu0
        %v7793 = vadd.f32 0.0, %v7792
        %v7794 = vpop.f32.mrf.mxu0
        %v7795 = vadd.f32 0.0, %v7794
        %7796 = vmatmul.bf16.gmra.mxu0 %v3815
        %v7797 = vpop.f32.mrf.mxu0
        %v7798 = vadd.f32 0.0, %v7797
        %v7799 = vpop.f32.mrf.mxu0
        %v7800 = vadd.f32 0.0, %v7799
        %7801 = vmatmul.bf16.gmra.mxu0 %v3817
        %v7802 = vpop.f32.mrf.mxu0
        %v7803 = vadd.f32 0.0, %v7802
        %v7804 = vpop.f32.mrf.mxu0
        %v7805 = vadd.f32 0.0, %v7804
        %7806 = vmatmul.bf16.gmra.mxu0 %v3819
        %v7807 = vpop.f32.mrf.mxu0
        %v7808 = vadd.f32 0.0, %v7807
        %v7809 = vpop.f32.mrf.mxu0
        %v7810 = vadd.f32 0.0, %v7809
        %7811 = vmatmul.bf16.gmra.mxu0 %v3821
        %v7812 = vpop.f32.mrf.mxu0
        %v7813 = vadd.f32 0.0, %v7812
        %v7814 = vpop.f32.mrf.mxu0
        %v7815 = vadd.f32 0.0, %v7814
        %7816 = vmatmul.bf16.gmra.mxu0 %v3823
        %v7817 = vpop.f32.mrf.mxu0
        %v7818 = vadd.f32 0.0, %v7817
        %v7819 = vpop.f32.mrf.mxu0
        %v7820 = vadd.f32 0.0, %v7819
        %7821 = vmatmul.bf16.gmra.mxu0 %v3825
        %v7822 = vpop.f32.mrf.mxu0
        %v7823 = vadd.f32 0.0, %v7822
        %v7824 = vpop.f32.mrf.mxu0
        %v7825 = vadd.f32 0.0, %v7824
        %7826 = vdwg.mxu0
        %7827 = vmatpush.bf16.msra.mxu0 %v5592
        %7828 = vmatpush.bf16.msra.mxu0 %v5591
        %7829 = vmatpush.bf16.msra.mxu0 %v5590
        %7830 = vmatpush.bf16.msra.mxu0 %v5589
        %7831 = vmatpush.bf16.msra.mxu0 %v5588
        %7832 = vmatpush.bf16.msra.mxu0 %v5587
        %7833 = vmatpush.bf16.msra.mxu0 %v5586
        %7834 = vmatpush.bf16.msra.mxu0 %v5585
        %7835 = vmatmul.bf16.gmra.mxu0 %v3796
        %v7836 = vpop.f32.mrf.mxu0
        %v7837 = vadd.f32 %v7748, %v7836
        %v7838 = vpop.f32.mrf.mxu0
        %v7839 = vadd.f32 %v7750, %v7838
        %7840 = vmatmul.bf16.gmra.mxu0 %v3798
        %v7841 = vpop.f32.mrf.mxu0
        %v7842 = vadd.f32 %v7753, %v7841
        %v7843 = vpop.f32.mrf.mxu0
        %v7844 = vadd.f32 %v7755, %v7843
        %7845 = vmatmul.bf16.gmra.mxu0 %v3800
        %v7846 = vpop.f32.mrf.mxu0
        %v7847 = vadd.f32 %v7758, %v7846
        %v7848 = vpop.f32.mrf.mxu0
        %v7849 = vadd.f32 %v7760, %v7848
        %7850 = vmatmul.bf16.gmra.mxu0 %v3802
        %v7851 = vpop.f32.mrf.mxu0
        %v7852 = vadd.f32 %v7763, %v7851
        %v7853 = vpop.f32.mrf.mxu0
        %v7854 = vadd.f32 %v7765, %v7853
        %7855 = vmatmul.bf16.gmra.mxu0 %v3804
        %v7856 = vpop.f32.mrf.mxu0
        %v7857 = vadd.f32 %v7768, %v7856
        %v7858 = vpop.f32.mrf.mxu0
        %v7859 = vadd.f32 %v7770, %v7858
        %7860 = vmatmul.bf16.gmra.mxu0 %v3806
        %v7861 = vpop.f32.mrf.mxu0
        %v7862 = vadd.f32 %v7773, %v7861
        %v7863 = vpop.f32.mrf.mxu0
        %v7864 = vadd.f32 %v7775, %v7863
        %7865 = vmatmul.bf16.gmra.mxu0 %v3808
        %v7866 = vpop.f32.mrf.mxu0
        %v7867 = vadd.f32 %v7778, %v7866
        %v7868 = vpop.f32.mrf.mxu0
        %v7869 = vadd.f32 %v7780, %v7868
        %7870 = vmatmul.bf16.gmra.mxu0 %v3810
        %v7871 = vpop.f32.mrf.mxu0
        %v7872 = vadd.f32 %v7783, %v7871
        %v7873 = vpop.f32.mrf.mxu0
        %v7874 = vadd.f32 %v7785, %v7873
        %7875 = vmatmul.bf16.gmra.mxu0 %v3812
        %v7876 = vpop.f32.mrf.mxu0
        %v7877 = vadd.f32 %v7788, %v7876
        %v7878 = vpop.f32.mrf.mxu0
        %v7879 = vadd.f32 %v7790, %v7878
        %7880 = vmatmul.bf16.gmra.mxu0 %v3814
        %v7881 = vpop.f32.mrf.mxu0
        %v7882 = vadd.f32 %v7793, %v7881
        %v7883 = vpop.f32.mrf.mxu0
        %v7884 = vadd.f32 %v7795, %v7883
        %7885 = vmatmul.bf16.gmra.mxu0 %v3816
        %v7886 = vpop.f32.mrf.mxu0
        %v7887 = vadd.f32 %v7798, %v7886
        %v7888 = vpop.f32.mrf.mxu0
        %v7889 = vadd.f32 %v7800, %v7888
        %7890 = vmatmul.bf16.gmra.mxu0 %v3818
        %v7891 = vpop.f32.mrf.mxu0
        %v7892 = vadd.f32 %v7803, %v7891
        %v7893 = vpop.f32.mrf.mxu0
        %v7894 = vadd.f32 %v7805, %v7893
        %7895 = vmatmul.bf16.gmra.mxu0 %v3820
        %v7896 = vpop.f32.mrf.mxu0
        %v7897 = vadd.f32 %v7808, %v7896
        %v7898 = vpop.f32.mrf.mxu0
        %v7899 = vadd.f32 %v7810, %v7898
        %7900 = vmatmul.bf16.gmra.mxu0 %v3822
        %v7901 = vpop.f32.mrf.mxu0
        %v7902 = vadd.f32 %v7813, %v7901
        %v7903 = vpop.f32.mrf.mxu0
        %v7904 = vadd.f32 %v7815, %v7903
        %7905 = vmatmul.bf16.gmra.mxu0 %v3824
        %v7906 = vpop.f32.mrf.mxu0
        %v7907 = vadd.f32 %v7818, %v7906
        %v7908 = vpop.f32.mrf.mxu0
        %v7909 = vadd.f32 %v7820, %v7908
        %7910 = vmatmul.bf16.gmra.mxu0 %v3826
        %v7911 = vpop.f32.mrf.mxu0
        %v7912 = vadd.f32 %v7823, %v7911
        %v7913 = vpop.f32.mrf.mxu0
        %v7914 = vadd.f32 %v7825, %v7913
        %7915 = vdwg.mxu0
        %v7916 = vpack.c.bf16 %v7839, %v7837
        %v7917 = vpack.c.bf16 %v7844, %v7842
        %v7918 = vpack.c.bf16 %v7849, %v7847
        %v7919 = vpack.c.bf16 %v7854, %v7852
        %v7920 = vpack.c.bf16 %v7859, %v7857
        %v7921 = vpack.c.bf16 %v7864, %v7862
        %v7922 = vpack.c.bf16 %v7869, %v7867
        %v7923 = vpack.c.bf16 %v7874, %v7872
        %v7924 = vpack.c.bf16 %v7879, %v7877
        %v7925 = vpack.c.bf16 %v7884, %v7882
        %v7926 = vpack.c.bf16 %v7889, %v7887
        %v7927 = vpack.c.bf16 %v7894, %v7892
        %v7928 = vpack.c.bf16 %v7899, %v7897
        %v7929 = vpack.c.bf16 %v7904, %v7902
        %v7930 = vpack.c.bf16 %v7909, %v7907
        %v7931 = vpack.c.bf16 %v7914, %v7912
        %s7932 = scalar_lea.vmem [#allocation6], 24
        %v7933 = vld [vmem:[%s7932] sm:$0xf]
        %v7935 = vsel %vm5984, %v7916, 0
        %v7938 = vsel %vm5984, %v7917, 0
        %v7941 = vsel %vm5984, %v7918, 0
        %v7944 = vsel %vm5984, %v7919, 0
        %v7947 = vsel %vm5984, %v7920, 0
        %v7950 = vsel %vm5984, %v7921, 0
        %v7953 = vsel %vm5984, %v7922, 0
        %v7956 = vsel %vm5984, %v7923, 0
        %v7959 = vsel %vm5984, %v7924, 0
        %v7962 = vsel %vm5984, %v7925, 0
        %v7965 = vsel %vm5984, %v7926, 0
        %v7968 = vsel %vm5984, %v7927, 0
        %v7971 = vsel %vm5984, %v7928, 0
        %v7974 = vsel %vm5984, %v7929, 0
        %v7977 = vsel %vm5984, %v7930, 0
        %v7980 = vsel %vm5984, %v7931, 0
        %v7983 = vsel %vm6033, %v7933, 0
        %7985 = vmatpush.bf16.msra.mxu0 0
        %7986 = vmatpush.bf16.msra.mxu0 0
        %7987 = vmatpush.bf16.msra.mxu0 0
        %7988 = vmatpush.bf16.msra.mxu0 0
        %7989 = vmatpush.bf16.msra.mxu0 0
        %7990 = vmatpush.bf16.msra.mxu0 0
        %7991 = vmatpush.bf16.msra.mxu0 0
        %7992 = vmatpush.bf16.msra.mxu0 %v7983
        %7993 = vmatmul.bf16.gmra.mxu0 %v7935
        %v7994 = vpop.f32.mrf.mxu0
        %v7995 = vadd.f32 0.0, %v7994
        %v7996 = vpop.f32.mrf.mxu0
        %v7997 = vadd.f32 0.0, %v7996
        %7998 = vmatmul.bf16.gmra.mxu0 %v7938
        %v7999 = vpop.f32.mrf.mxu0
        %v8000 = vadd.f32 0.0, %v7999
        %v8001 = vpop.f32.mrf.mxu0
        %v8002 = vadd.f32 0.0, %v8001
        %8003 = vmatmul.bf16.gmra.mxu0 %v7941
        %v8004 = vpop.f32.mrf.mxu0
        %v8005 = vadd.f32 0.0, %v8004
        %v8006 = vpop.f32.mrf.mxu0
        %v8007 = vadd.f32 0.0, %v8006
        %8008 = vmatmul.bf16.gmra.mxu0 %v7944
        %v8009 = vpop.f32.mrf.mxu0
        %v8010 = vadd.f32 0.0, %v8009
        %v8011 = vpop.f32.mrf.mxu0
        %v8012 = vadd.f32 0.0, %v8011
        %8013 = vmatmul.bf16.gmra.mxu0 %v7947
        %v8014 = vpop.f32.mrf.mxu0
        %v8015 = vadd.f32 0.0, %v8014
        %v8016 = vpop.f32.mrf.mxu0
        %v8017 = vadd.f32 0.0, %v8016
        %8018 = vmatmul.bf16.gmra.mxu0 %v7950
        %v8019 = vpop.f32.mrf.mxu0
        %v8020 = vadd.f32 0.0, %v8019
        %v8021 = vpop.f32.mrf.mxu0
        %v8022 = vadd.f32 0.0, %v8021
        %8023 = vmatmul.bf16.gmra.mxu0 %v7953
        %v8024 = vpop.f32.mrf.mxu0
        %v8025 = vadd.f32 0.0, %v8024
        %v8026 = vpop.f32.mrf.mxu0
        %v8027 = vadd.f32 0.0, %v8026
        %8028 = vmatmul.bf16.gmra.mxu0 %v7956
        %v8029 = vpop.f32.mrf.mxu0
        %v8030 = vadd.f32 0.0, %v8029
        %v8031 = vpop.f32.mrf.mxu0
        %v8032 = vadd.f32 0.0, %v8031
        %8033 = vmatmul.bf16.gmra.mxu0 %v7959
        %v8034 = vpop.f32.mrf.mxu0
        %v8035 = vadd.f32 0.0, %v8034
        %v8036 = vpop.f32.mrf.mxu0
        %v8037 = vadd.f32 0.0, %v8036
        %8038 = vmatmul.bf16.gmra.mxu0 %v7962
        %v8039 = vpop.f32.mrf.mxu0
        %v8040 = vadd.f32 0.0, %v8039
        %v8041 = vpop.f32.mrf.mxu0
        %v8042 = vadd.f32 0.0, %v8041
        %8043 = vmatmul.bf16.gmra.mxu0 %v7965
        %v8044 = vpop.f32.mrf.mxu0
        %v8045 = vadd.f32 0.0, %v8044
        %v8046 = vpop.f32.mrf.mxu0
        %v8047 = vadd.f32 0.0, %v8046
        %8048 = vmatmul.bf16.gmra.mxu0 %v7968
        %v8049 = vpop.f32.mrf.mxu0
        %v8050 = vadd.f32 0.0, %v8049
        %v8051 = vpop.f32.mrf.mxu0
        %v8052 = vadd.f32 0.0, %v8051
        %8053 = vmatmul.bf16.gmra.mxu0 %v7971
        %v8054 = vpop.f32.mrf.mxu0
        %v8055 = vadd.f32 0.0, %v8054
        %v8056 = vpop.f32.mrf.mxu0
        %v8057 = vadd.f32 0.0, %v8056
        %8058 = vmatmul.bf16.gmra.mxu0 %v7974
        %v8059 = vpop.f32.mrf.mxu0
        %v8060 = vadd.f32 0.0, %v8059
        %v8061 = vpop.f32.mrf.mxu0
        %v8062 = vadd.f32 0.0, %v8061
        %8063 = vmatmul.bf16.gmra.mxu0 %v7977
        %v8064 = vpop.f32.mrf.mxu0
        %v8065 = vadd.f32 0.0, %v8064
        %v8066 = vpop.f32.mrf.mxu0
        %v8067 = vadd.f32 0.0, %v8066
        %8068 = vmatmul.bf16.gmra.mxu0 %v7980
        %v8069 = vpop.f32.mrf.mxu0
        %v8070 = vadd.f32 0.0, %v8069
        %v8071 = vpop.f32.mrf.mxu0
        %v8072 = vadd.f32 0.0, %v8071
        %8073 = vdwg.mxu0
        %v8074 = vadd.f32 %v7706, %v7995
        %v8075 = vadd.f32 %v7707, %v7997
        %v8076 = vadd.f32 %v7708, %v8000
        %v8077 = vadd.f32 %v7709, %v8002
        %v8078 = vadd.f32 %v7710, %v8005
        %v8079 = vadd.f32 %v7711, %v8007
        %v8080 = vadd.f32 %v7712, %v8010
        %v8081 = vadd.f32 %v7713, %v8012
        %v8082 = vadd.f32 %v7714, %v8015
        %v8083 = vadd.f32 %v7715, %v8017
        %v8084 = vadd.f32 %v7716, %v8020
        %v8085 = vadd.f32 %v7717, %v8022
        %v8086 = vadd.f32 %v7718, %v8025
        %v8087 = vadd.f32 %v7719, %v8027
        %v8088 = vadd.f32 %v7720, %v8030
        %v8089 = vadd.f32 %v7721, %v8032
        %v8090 = vadd.f32 %v7722, %v8035
        %v8091 = vadd.f32 %v7723, %v8037
        %v8092 = vadd.f32 %v7724, %v8040
        %v8093 = vadd.f32 %v7725, %v8042
        %v8094 = vadd.f32 %v7726, %v8045
        %v8095 = vadd.f32 %v7727, %v8047
        %v8096 = vadd.f32 %v7728, %v8050
        %v8097 = vadd.f32 %v7729, %v8052
        %v8098 = vadd.f32 %v7730, %v8055
        %v8099 = vadd.f32 %v7731, %v8057
        %v8100 = vadd.f32 %v7732, %v8060
        %v8101 = vadd.f32 %v7733, %v8062
        %v8102 = vadd.f32 %v7734, %v8065
        %v8103 = vadd.f32 %v7735, %v8067
        %v8104 = vadd.f32 %v7736, %v8070
        %v8105 = vadd.f32 %v7737, %v8072
        %8106 = vmatpush.bf16.msra.mxu0 %v5584
        %8107 = vmatpush.bf16.msra.mxu0 %v5583
        %8108 = vmatpush.bf16.msra.mxu0 %v5582
        %8109 = vmatpush.bf16.msra.mxu0 %v5581
        %8110 = vmatpush.bf16.msra.mxu0 %v5580
        %8111 = vmatpush.bf16.msra.mxu0 %v5579
        %8112 = vmatpush.bf16.msra.mxu0 %v5578
        %8113 = vmatpush.bf16.msra.mxu0 %v5577
        %8114 = vmatmul.bf16.gmra.mxu0 %v4356
        %v8115 = vpop.f32.mrf.mxu0
        %v8116 = vadd.f32 0.0, %v8115
        %v8117 = vpop.f32.mrf.mxu0
        %v8118 = vadd.f32 0.0, %v8117
        %8119 = vmatmul.bf16.gmra.mxu0 %v4358
        %v8120 = vpop.f32.mrf.mxu0
        %v8121 = vadd.f32 0.0, %v8120
        %v8122 = vpop.f32.mrf.mxu0
        %v8123 = vadd.f32 0.0, %v8122
        %8124 = vmatmul.bf16.gmra.mxu0 %v4360
        %v8125 = vpop.f32.mrf.mxu0
        %v8126 = vadd.f32 0.0, %v8125
        %v8127 = vpop.f32.mrf.mxu0
        %v8128 = vadd.f32 0.0, %v8127
        %8129 = vmatmul.bf16.gmra.mxu0 %v4362
        %v8130 = vpop.f32.mrf.mxu0
        %v8131 = vadd.f32 0.0, %v8130
        %v8132 = vpop.f32.mrf.mxu0
        %v8133 = vadd.f32 0.0, %v8132
        %8134 = vmatmul.bf16.gmra.mxu0 %v4364
        %v8135 = vpop.f32.mrf.mxu0
        %v8136 = vadd.f32 0.0, %v8135
        %v8137 = vpop.f32.mrf.mxu0
        %v8138 = vadd.f32 0.0, %v8137
        %8139 = vmatmul.bf16.gmra.mxu0 %v4366
        %v8140 = vpop.f32.mrf.mxu0
        %v8141 = vadd.f32 0.0, %v8140
        %v8142 = vpop.f32.mrf.mxu0
        %v8143 = vadd.f32 0.0, %v8142
        %8144 = vmatmul.bf16.gmra.mxu0 %v4368
        %v8145 = vpop.f32.mrf.mxu0
        %v8146 = vadd.f32 0.0, %v8145
        %v8147 = vpop.f32.mrf.mxu0
        %v8148 = vadd.f32 0.0, %v8147
        %8149 = vmatmul.bf16.gmra.mxu0 %v4370
        %v8150 = vpop.f32.mrf.mxu0
        %v8151 = vadd.f32 0.0, %v8150
        %v8152 = vpop.f32.mrf.mxu0
        %v8153 = vadd.f32 0.0, %v8152
        %8154 = vmatmul.bf16.gmra.mxu0 %v4372
        %v8155 = vpop.f32.mrf.mxu0
        %v8156 = vadd.f32 0.0, %v8155
        %v8157 = vpop.f32.mrf.mxu0
        %v8158 = vadd.f32 0.0, %v8157
        %8159 = vmatmul.bf16.gmra.mxu0 %v4374
        %v8160 = vpop.f32.mrf.mxu0
        %v8161 = vadd.f32 0.0, %v8160
        %v8162 = vpop.f32.mrf.mxu0
        %v8163 = vadd.f32 0.0, %v8162
        %8164 = vmatmul.bf16.gmra.mxu0 %v4376
        %v8165 = vpop.f32.mrf.mxu0
        %v8166 = vadd.f32 0.0, %v8165
        %v8167 = vpop.f32.mrf.mxu0
        %v8168 = vadd.f32 0.0, %v8167
        %8169 = vmatmul.bf16.gmra.mxu0 %v4378
        %v8170 = vpop.f32.mrf.mxu0
        %v8171 = vadd.f32 0.0, %v8170
        %v8172 = vpop.f32.mrf.mxu0
        %v8173 = vadd.f32 0.0, %v8172
        %8174 = vmatmul.bf16.gmra.mxu0 %v4380
        %v8175 = vpop.f32.mrf.mxu0
        %v8176 = vadd.f32 0.0, %v8175
        %v8177 = vpop.f32.mrf.mxu0
        %v8178 = vadd.f32 0.0, %v8177
        %8179 = vmatmul.bf16.gmra.mxu0 %v4382
        %v8180 = vpop.f32.mrf.mxu0
        %v8181 = vadd.f32 0.0, %v8180
        %v8182 = vpop.f32.mrf.mxu0
        %v8183 = vadd.f32 0.0, %v8182
        %8184 = vmatmul.bf16.gmra.mxu0 %v4384
        %v8185 = vpop.f32.mrf.mxu0
        %v8186 = vadd.f32 0.0, %v8185
        %v8187 = vpop.f32.mrf.mxu0
        %v8188 = vadd.f32 0.0, %v8187
        %8189 = vmatmul.bf16.gmra.mxu0 %v4386
        %v8190 = vpop.f32.mrf.mxu0
        %v8191 = vadd.f32 0.0, %v8190
        %v8192 = vpop.f32.mrf.mxu0
        %v8193 = vadd.f32 0.0, %v8192
        %8194 = vdwg.mxu0
        %8195 = vmatpush.bf16.msra.mxu0 %v5592
        %8196 = vmatpush.bf16.msra.mxu0 %v5591
        %8197 = vmatpush.bf16.msra.mxu0 %v5590
        %8198 = vmatpush.bf16.msra.mxu0 %v5589
        %8199 = vmatpush.bf16.msra.mxu0 %v5588
        %8200 = vmatpush.bf16.msra.mxu0 %v5587
        %8201 = vmatpush.bf16.msra.mxu0 %v5586
        %8202 = vmatpush.bf16.msra.mxu0 %v5585
        %8203 = vmatmul.bf16.gmra.mxu0 %v4357
        %v8204 = vpop.f32.mrf.mxu0
        %v8205 = vadd.f32 %v8116, %v8204
        %v8206 = vpop.f32.mrf.mxu0
        %v8207 = vadd.f32 %v8118, %v8206
        %8208 = vmatmul.bf16.gmra.mxu0 %v4359
        %v8209 = vpop.f32.mrf.mxu0
        %v8210 = vadd.f32 %v8121, %v8209
        %v8211 = vpop.f32.mrf.mxu0
        %v8212 = vadd.f32 %v8123, %v8211
        %8213 = vmatmul.bf16.gmra.mxu0 %v4361
        %v8214 = vpop.f32.mrf.mxu0
        %v8215 = vadd.f32 %v8126, %v8214
        %v8216 = vpop.f32.mrf.mxu0
        %v8217 = vadd.f32 %v8128, %v8216
        %8218 = vmatmul.bf16.gmra.mxu0 %v4363
        %v8219 = vpop.f32.mrf.mxu0
        %v8220 = vadd.f32 %v8131, %v8219
        %v8221 = vpop.f32.mrf.mxu0
        %v8222 = vadd.f32 %v8133, %v8221
        %8223 = vmatmul.bf16.gmra.mxu0 %v4365
        %v8224 = vpop.f32.mrf.mxu0
        %v8225 = vadd.f32 %v8136, %v8224
        %v8226 = vpop.f32.mrf.mxu0
        %v8227 = vadd.f32 %v8138, %v8226
        %8228 = vmatmul.bf16.gmra.mxu0 %v4367
        %v8229 = vpop.f32.mrf.mxu0
        %v8230 = vadd.f32 %v8141, %v8229
        %v8231 = vpop.f32.mrf.mxu0
        %v8232 = vadd.f32 %v8143, %v8231
        %8233 = vmatmul.bf16.gmra.mxu0 %v4369
        %v8234 = vpop.f32.mrf.mxu0
        %v8235 = vadd.f32 %v8146, %v8234
        %v8236 = vpop.f32.mrf.mxu0
        %v8237 = vadd.f32 %v8148, %v8236
        %8238 = vmatmul.bf16.gmra.mxu0 %v4371
        %v8239 = vpop.f32.mrf.mxu0
        %v8240 = vadd.f32 %v8151, %v8239
        %v8241 = vpop.f32.mrf.mxu0
        %v8242 = vadd.f32 %v8153, %v8241
        %8243 = vmatmul.bf16.gmra.mxu0 %v4373
        %v8244 = vpop.f32.mrf.mxu0
        %v8245 = vadd.f32 %v8156, %v8244
        %v8246 = vpop.f32.mrf.mxu0
        %v8247 = vadd.f32 %v8158, %v8246
        %8248 = vmatmul.bf16.gmra.mxu0 %v4375
        %v8249 = vpop.f32.mrf.mxu0
        %v8250 = vadd.f32 %v8161, %v8249
        %v8251 = vpop.f32.mrf.mxu0
        %v8252 = vadd.f32 %v8163, %v8251
        %8253 = vmatmul.bf16.gmra.mxu0 %v4377
        %v8254 = vpop.f32.mrf.mxu0
        %v8255 = vadd.f32 %v8166, %v8254
        %v8256 = vpop.f32.mrf.mxu0
        %v8257 = vadd.f32 %v8168, %v8256
        %8258 = vmatmul.bf16.gmra.mxu0 %v4379
        %v8259 = vpop.f32.mrf.mxu0
        %v8260 = vadd.f32 %v8171, %v8259
        %v8261 = vpop.f32.mrf.mxu0
        %v8262 = vadd.f32 %v8173, %v8261
        %8263 = vmatmul.bf16.gmra.mxu0 %v4381
        %v8264 = vpop.f32.mrf.mxu0
        %v8265 = vadd.f32 %v8176, %v8264
        %v8266 = vpop.f32.mrf.mxu0
        %v8267 = vadd.f32 %v8178, %v8266
        %8268 = vmatmul.bf16.gmra.mxu0 %v4383
        %v8269 = vpop.f32.mrf.mxu0
        %v8270 = vadd.f32 %v8181, %v8269
        %v8271 = vpop.f32.mrf.mxu0
        %v8272 = vadd.f32 %v8183, %v8271
        %8273 = vmatmul.bf16.gmra.mxu0 %v4385
        %v8274 = vpop.f32.mrf.mxu0
        %v8275 = vadd.f32 %v8186, %v8274
        %v8276 = vpop.f32.mrf.mxu0
        %v8277 = vadd.f32 %v8188, %v8276
        %8278 = vmatmul.bf16.gmra.mxu0 %v4387
        %v8279 = vpop.f32.mrf.mxu0
        %v8280 = vadd.f32 %v8191, %v8279
        %v8281 = vpop.f32.mrf.mxu0
        %v8282 = vadd.f32 %v8193, %v8281
        %8283 = vdwg.mxu0
        %v8284 = vpack.c.bf16 %v8207, %v8205
        %v8285 = vpack.c.bf16 %v8212, %v8210
        %v8286 = vpack.c.bf16 %v8217, %v8215
        %v8287 = vpack.c.bf16 %v8222, %v8220
        %v8288 = vpack.c.bf16 %v8227, %v8225
        %v8289 = vpack.c.bf16 %v8232, %v8230
        %v8290 = vpack.c.bf16 %v8237, %v8235
        %v8291 = vpack.c.bf16 %v8242, %v8240
        %v8292 = vpack.c.bf16 %v8247, %v8245
        %v8293 = vpack.c.bf16 %v8252, %v8250
        %v8294 = vpack.c.bf16 %v8257, %v8255
        %v8295 = vpack.c.bf16 %v8262, %v8260
        %v8296 = vpack.c.bf16 %v8267, %v8265
        %v8297 = vpack.c.bf16 %v8272, %v8270
        %v8298 = vpack.c.bf16 %v8277, %v8275
        %v8299 = vpack.c.bf16 %v8282, %v8280
        %s8300 = scalar_lea.vmem [#allocation6], 28
        %v8301 = vld [vmem:[%s8300] sm:$0xf]
        %v8303 = vsel %vm5984, %v8284, 0
        %v8306 = vsel %vm5984, %v8285, 0
        %v8309 = vsel %vm5984, %v8286, 0
        %v8312 = vsel %vm5984, %v8287, 0
        %v8315 = vsel %vm5984, %v8288, 0
        %v8318 = vsel %vm5984, %v8289, 0
        %v8321 = vsel %vm5984, %v8290, 0
        %v8324 = vsel %vm5984, %v8291, 0
        %v8327 = vsel %vm5984, %v8292, 0
        %v8330 = vsel %vm5984, %v8293, 0
        %v8333 = vsel %vm5984, %v8294, 0
        %v8336 = vsel %vm5984, %v8295, 0
        %v8339 = vsel %vm5984, %v8296, 0
        %v8342 = vsel %vm5984, %v8297, 0
        %v8345 = vsel %vm5984, %v8298, 0
        %v8348 = vsel %vm5984, %v8299, 0
        %v8351 = vsel %vm6033, %v8301, 0
        %8353 = vmatpush.bf16.msra.mxu0 0
        %8354 = vmatpush.bf16.msra.mxu0 0
        %8355 = vmatpush.bf16.msra.mxu0 0
        %8356 = vmatpush.bf16.msra.mxu0 0
        %8357 = vmatpush.bf16.msra.mxu0 0
        %8358 = vmatpush.bf16.msra.mxu0 0
        %8359 = vmatpush.bf16.msra.mxu0 0
        %8360 = vmatpush.bf16.msra.mxu0 %v8351
        %8361 = vmatmul.bf16.gmra.mxu0 %v8303
        %v8362 = vpop.f32.mrf.mxu0
        %v8363 = vadd.f32 0.0, %v8362
        %v8364 = vpop.f32.mrf.mxu0
        %v8365 = vadd.f32 0.0, %v8364
        %8366 = vmatmul.bf16.gmra.mxu0 %v8306
        %v8367 = vpop.f32.mrf.mxu0
        %v8368 = vadd.f32 0.0, %v8367
        %v8369 = vpop.f32.mrf.mxu0
        %v8370 = vadd.f32 0.0, %v8369
        %8371 = vmatmul.bf16.gmra.mxu0 %v8309
        %v8372 = vpop.f32.mrf.mxu0
        %v8373 = vadd.f32 0.0, %v8372
        %v8374 = vpop.f32.mrf.mxu0
        %v8375 = vadd.f32 0.0, %v8374
        %8376 = vmatmul.bf16.gmra.mxu0 %v8312
        %v8377 = vpop.f32.mrf.mxu0
        %v8378 = vadd.f32 0.0, %v8377
        %v8379 = vpop.f32.mrf.mxu0
        %v8380 = vadd.f32 0.0, %v8379
        %8381 = vmatmul.bf16.gmra.mxu0 %v8315
        %v8382 = vpop.f32.mrf.mxu0
        %v8383 = vadd.f32 0.0, %v8382
        %v8384 = vpop.f32.mrf.mxu0
        %v8385 = vadd.f32 0.0, %v8384
        %8386 = vmatmul.bf16.gmra.mxu0 %v8318
        %v8387 = vpop.f32.mrf.mxu0
        %v8388 = vadd.f32 0.0, %v8387
        %v8389 = vpop.f32.mrf.mxu0
        %v8390 = vadd.f32 0.0, %v8389
        %8391 = vmatmul.bf16.gmra.mxu0 %v8321
        %v8392 = vpop.f32.mrf.mxu0
        %v8393 = vadd.f32 0.0, %v8392
        %v8394 = vpop.f32.mrf.mxu0
        %v8395 = vadd.f32 0.0, %v8394
        %8396 = vmatmul.bf16.gmra.mxu0 %v8324
        %v8397 = vpop.f32.mrf.mxu0
        %v8398 = vadd.f32 0.0, %v8397
        %v8399 = vpop.f32.mrf.mxu0
        %v8400 = vadd.f32 0.0, %v8399
        %8401 = vmatmul.bf16.gmra.mxu0 %v8327
        %v8402 = vpop.f32.mrf.mxu0
        %v8403 = vadd.f32 0.0, %v8402
        %v8404 = vpop.f32.mrf.mxu0
        %v8405 = vadd.f32 0.0, %v8404
        %8406 = vmatmul.bf16.gmra.mxu0 %v8330
        %v8407 = vpop.f32.mrf.mxu0
        %v8408 = vadd.f32 0.0, %v8407
        %v8409 = vpop.f32.mrf.mxu0
        %v8410 = vadd.f32 0.0, %v8409
        %8411 = vmatmul.bf16.gmra.mxu0 %v8333
        %v8412 = vpop.f32.mrf.mxu0
        %v8413 = vadd.f32 0.0, %v8412
        %v8414 = vpop.f32.mrf.mxu0
        %v8415 = vadd.f32 0.0, %v8414
        %8416 = vmatmul.bf16.gmra.mxu0 %v8336
        %v8417 = vpop.f32.mrf.mxu0
        %v8418 = vadd.f32 0.0, %v8417
        %v8419 = vpop.f32.mrf.mxu0
        %v8420 = vadd.f32 0.0, %v8419
        %8421 = vmatmul.bf16.gmra.mxu0 %v8339
        %v8422 = vpop.f32.mrf.mxu0
        %v8423 = vadd.f32 0.0, %v8422
        %v8424 = vpop.f32.mrf.mxu0
        %v8425 = vadd.f32 0.0, %v8424
        %8426 = vmatmul.bf16.gmra.mxu0 %v8342
        %v8427 = vpop.f32.mrf.mxu0
        %v8428 = vadd.f32 0.0, %v8427
        %v8429 = vpop.f32.mrf.mxu0
        %v8430 = vadd.f32 0.0, %v8429
        %8431 = vmatmul.bf16.gmra.mxu0 %v8345
        %v8432 = vpop.f32.mrf.mxu0
        %v8433 = vadd.f32 0.0, %v8432
        %v8434 = vpop.f32.mrf.mxu0
        %v8435 = vadd.f32 0.0, %v8434
        %8436 = vmatmul.bf16.gmra.mxu0 %v8348
        %v8437 = vpop.f32.mrf.mxu0
        %v8438 = vadd.f32 0.0, %v8437
        %v8439 = vpop.f32.mrf.mxu0
        %v8440 = vadd.f32 0.0, %v8439
        %8441 = vdwg.mxu0
        %v8442 = vadd.f32 %v8074, %v8363
        %v8443 = vadd.f32 %v8075, %v8365
        %v8444 = vadd.f32 %v8076, %v8368
        %v8445 = vadd.f32 %v8077, %v8370
        %v8446 = vadd.f32 %v8078, %v8373
        %v8447 = vadd.f32 %v8079, %v8375
        %v8448 = vadd.f32 %v8080, %v8378
        %v8449 = vadd.f32 %v8081, %v8380
        %v8450 = vadd.f32 %v8082, %v8383
        %v8451 = vadd.f32 %v8083, %v8385
        %v8452 = vadd.f32 %v8084, %v8388
        %v8453 = vadd.f32 %v8085, %v8390
        %v8454 = vadd.f32 %v8086, %v8393
        %v8455 = vadd.f32 %v8087, %v8395
        %v8456 = vadd.f32 %v8088, %v8398
        %v8457 = vadd.f32 %v8089, %v8400
        %v8458 = vadd.f32 %v8090, %v8403
        %v8459 = vadd.f32 %v8091, %v8405
        %v8460 = vadd.f32 %v8092, %v8408
        %v8461 = vadd.f32 %v8093, %v8410
        %v8462 = vadd.f32 %v8094, %v8413
        %v8463 = vadd.f32 %v8095, %v8415
        %v8464 = vadd.f32 %v8096, %v8418
        %v8465 = vadd.f32 %v8097, %v8420
        %v8466 = vadd.f32 %v8098, %v8423
        %v8467 = vadd.f32 %v8099, %v8425
        %v8468 = vadd.f32 %v8100, %v8428
        %v8469 = vadd.f32 %v8101, %v8430
        %v8470 = vadd.f32 %v8102, %v8433
        %v8471 = vadd.f32 %v8103, %v8435
        %v8472 = vadd.f32 %v8104, %v8438
        %v8473 = vadd.f32 %v8105, %v8440
        %8474 = vmatpush.bf16.msra.mxu0 %v5584
        %8475 = vmatpush.bf16.msra.mxu0 %v5583
        %8476 = vmatpush.bf16.msra.mxu0 %v5582
        %8477 = vmatpush.bf16.msra.mxu0 %v5581
        %8478 = vmatpush.bf16.msra.mxu0 %v5580
        %8479 = vmatpush.bf16.msra.mxu0 %v5579
        %8480 = vmatpush.bf16.msra.mxu0 %v5578
        %8481 = vmatpush.bf16.msra.mxu0 %v5577
        %8482 = vmatmul.bf16.gmra.mxu0 %v4917
        %v8483 = vpop.f32.mrf.mxu0
        %v8484 = vadd.f32 0.0, %v8483
        %v8485 = vpop.f32.mrf.mxu0
        %v8486 = vadd.f32 0.0, %v8485
        %8487 = vmatmul.bf16.gmra.mxu0 %v4919
        %v8488 = vpop.f32.mrf.mxu0
        %v8489 = vadd.f32 0.0, %v8488
        %v8490 = vpop.f32.mrf.mxu0
        %v8491 = vadd.f32 0.0, %v8490
        %8492 = vmatmul.bf16.gmra.mxu0 %v4921
        %v8493 = vpop.f32.mrf.mxu0
        %v8494 = vadd.f32 0.0, %v8493
        %v8495 = vpop.f32.mrf.mxu0
        %v8496 = vadd.f32 0.0, %v8495
        %8497 = vmatmul.bf16.gmra.mxu0 %v4923
        %v8498 = vpop.f32.mrf.mxu0
        %v8499 = vadd.f32 0.0, %v8498
        %v8500 = vpop.f32.mrf.mxu0
        %v8501 = vadd.f32 0.0, %v8500
        %8502 = vmatmul.bf16.gmra.mxu0 %v4925
        %v8503 = vpop.f32.mrf.mxu0
        %v8504 = vadd.f32 0.0, %v8503
        %v8505 = vpop.f32.mrf.mxu0
        %v8506 = vadd.f32 0.0, %v8505
        %8507 = vmatmul.bf16.gmra.mxu0 %v4927
        %v8508 = vpop.f32.mrf.mxu0
        %v8509 = vadd.f32 0.0, %v8508
        %v8510 = vpop.f32.mrf.mxu0
        %v8511 = vadd.f32 0.0, %v8510
        %8512 = vmatmul.bf16.gmra.mxu0 %v4929
        %v8513 = vpop.f32.mrf.mxu0
        %v8514 = vadd.f32 0.0, %v8513
        %v8515 = vpop.f32.mrf.mxu0
        %v8516 = vadd.f32 0.0, %v8515
        %8517 = vmatmul.bf16.gmra.mxu0 %v4931
        %v8518 = vpop.f32.mrf.mxu0
        %v8519 = vadd.f32 0.0, %v8518
        %v8520 = vpop.f32.mrf.mxu0
        %v8521 = vadd.f32 0.0, %v8520
        %8522 = vmatmul.bf16.gmra.mxu0 %v4933
        %v8523 = vpop.f32.mrf.mxu0
        %v8524 = vadd.f32 0.0, %v8523
        %v8525 = vpop.f32.mrf.mxu0
        %v8526 = vadd.f32 0.0, %v8525
        %8527 = vmatmul.bf16.gmra.mxu0 %v4935
        %v8528 = vpop.f32.mrf.mxu0
        %v8529 = vadd.f32 0.0, %v8528
        %v8530 = vpop.f32.mrf.mxu0
        %v8531 = vadd.f32 0.0, %v8530
        %8532 = vmatmul.bf16.gmra.mxu0 %v4937
        %v8533 = vpop.f32.mrf.mxu0
        %v8534 = vadd.f32 0.0, %v8533
        %v8535 = vpop.f32.mrf.mxu0
        %v8536 = vadd.f32 0.0, %v8535
        %8537 = vmatmul.bf16.gmra.mxu0 %v4939
        %v8538 = vpop.f32.mrf.mxu0
        %v8539 = vadd.f32 0.0, %v8538
        %v8540 = vpop.f32.mrf.mxu0
        %v8541 = vadd.f32 0.0, %v8540
        %8542 = vmatmul.bf16.gmra.mxu0 %v4941
        %v8543 = vpop.f32.mrf.mxu0
        %v8544 = vadd.f32 0.0, %v8543
        %v8545 = vpop.f32.mrf.mxu0
        %v8546 = vadd.f32 0.0, %v8545
        %8547 = vmatmul.bf16.gmra.mxu0 %v4943
        %v8548 = vpop.f32.mrf.mxu0
        %v8549 = vadd.f32 0.0, %v8548
        %v8550 = vpop.f32.mrf.mxu0
        %v8551 = vadd.f32 0.0, %v8550
        %8552 = vmatmul.bf16.gmra.mxu0 %v4945
        %v8553 = vpop.f32.mrf.mxu0
        %v8554 = vadd.f32 0.0, %v8553
        %v8555 = vpop.f32.mrf.mxu0
        %v8556 = vadd.f32 0.0, %v8555
        %8557 = vmatmul.bf16.gmra.mxu0 %v4947
        %v8558 = vpop.f32.mrf.mxu0
        %v8559 = vadd.f32 0.0, %v8558
        %v8560 = vpop.f32.mrf.mxu0
        %v8561 = vadd.f32 0.0, %v8560
        %8562 = vdwg.mxu0
        %8563 = vmatpush.bf16.msra.mxu0 %v5592
        %8564 = vmatpush.bf16.msra.mxu0 %v5591
        %8565 = vmatpush.bf16.msra.mxu0 %v5590
        %8566 = vmatpush.bf16.msra.mxu0 %v5589
        %8567 = vmatpush.bf16.msra.mxu0 %v5588
        %8568 = vmatpush.bf16.msra.mxu0 %v5587
        %8569 = vmatpush.bf16.msra.mxu0 %v5586
        %8570 = vmatpush.bf16.msra.mxu0 %v5585
        %8571 = vmatmul.bf16.gmra.mxu0 %v4918
        %v8572 = vpop.f32.mrf.mxu0
        %v8573 = vadd.f32 %v8484, %v8572
        %v8574 = vpop.f32.mrf.mxu0
        %v8575 = vadd.f32 %v8486, %v8574
        %8576 = vmatmul.bf16.gmra.mxu0 %v4920
        %v8577 = vpop.f32.mrf.mxu0
        %v8578 = vadd.f32 %v8489, %v8577
        %v8579 = vpop.f32.mrf.mxu0
        %v8580 = vadd.f32 %v8491, %v8579
        %8581 = vmatmul.bf16.gmra.mxu0 %v4922
        %v8582 = vpop.f32.mrf.mxu0
        %v8583 = vadd.f32 %v8494, %v8582
        %v8584 = vpop.f32.mrf.mxu0
        %v8585 = vadd.f32 %v8496, %v8584
        %8586 = vmatmul.bf16.gmra.mxu0 %v4924
        %v8587 = vpop.f32.mrf.mxu0
        %v8588 = vadd.f32 %v8499, %v8587
        %v8589 = vpop.f32.mrf.mxu0
        %v8590 = vadd.f32 %v8501, %v8589
        %8591 = vmatmul.bf16.gmra.mxu0 %v4926
        %v8592 = vpop.f32.mrf.mxu0
        %v8593 = vadd.f32 %v8504, %v8592
        %v8594 = vpop.f32.mrf.mxu0
        %v8595 = vadd.f32 %v8506, %v8594
        %8596 = vmatmul.bf16.gmra.mxu0 %v4928
        %v8597 = vpop.f32.mrf.mxu0
        %v8598 = vadd.f32 %v8509, %v8597
        %v8599 = vpop.f32.mrf.mxu0
        %v8600 = vadd.f32 %v8511, %v8599
        %8601 = vmatmul.bf16.gmra.mxu0 %v4930
        %v8602 = vpop.f32.mrf.mxu0
        %v8603 = vadd.f32 %v8514, %v8602
        %v8604 = vpop.f32.mrf.mxu0
        %v8605 = vadd.f32 %v8516, %v8604
        %8606 = vmatmul.bf16.gmra.mxu0 %v4932
        %v8607 = vpop.f32.mrf.mxu0
        %v8608 = vadd.f32 %v8519, %v8607
        %v8609 = vpop.f32.mrf.mxu0
        %v8610 = vadd.f32 %v8521, %v8609
        %8611 = vmatmul.bf16.gmra.mxu0 %v4934
        %v8612 = vpop.f32.mrf.mxu0
        %v8613 = vadd.f32 %v8524, %v8612
        %v8614 = vpop.f32.mrf.mxu0
        %v8615 = vadd.f32 %v8526, %v8614
        %8616 = vmatmul.bf16.gmra.mxu0 %v4936
        %v8617 = vpop.f32.mrf.mxu0
        %v8618 = vadd.f32 %v8529, %v8617
        %v8619 = vpop.f32.mrf.mxu0
        %v8620 = vadd.f32 %v8531, %v8619
        %8621 = vmatmul.bf16.gmra.mxu0 %v4938
        %v8622 = vpop.f32.mrf.mxu0
        %v8623 = vadd.f32 %v8534, %v8622
        %v8624 = vpop.f32.mrf.mxu0
        %v8625 = vadd.f32 %v8536, %v8624
        %8626 = vmatmul.bf16.gmra.mxu0 %v4940
        %v8627 = vpop.f32.mrf.mxu0
        %v8628 = vadd.f32 %v8539, %v8627
        %v8629 = vpop.f32.mrf.mxu0
        %v8630 = vadd.f32 %v8541, %v8629
        %8631 = vmatmul.bf16.gmra.mxu0 %v4942
        %v8632 = vpop.f32.mrf.mxu0
        %v8633 = vadd.f32 %v8544, %v8632
        %v8634 = vpop.f32.mrf.mxu0
        %v8635 = vadd.f32 %v8546, %v8634
        %8636 = vmatmul.bf16.gmra.mxu0 %v4944
        %v8637 = vpop.f32.mrf.mxu0
        %v8638 = vadd.f32 %v8549, %v8637
        %v8639 = vpop.f32.mrf.mxu0
        %v8640 = vadd.f32 %v8551, %v8639
        %8641 = vmatmul.bf16.gmra.mxu0 %v4946
        %v8642 = vpop.f32.mrf.mxu0
        %v8643 = vadd.f32 %v8554, %v8642
        %v8644 = vpop.f32.mrf.mxu0
        %v8645 = vadd.f32 %v8556, %v8644
        %8646 = vmatmul.bf16.gmra.mxu0 %v4948
        %v8647 = vpop.f32.mrf.mxu0
        %v8648 = vadd.f32 %v8559, %v8647
        %v8649 = vpop.f32.mrf.mxu0
        %v8650 = vadd.f32 %v8561, %v8649
        %8651 = vdwg.mxu0
        %v8652 = vpack.c.bf16 %v8575, %v8573
        %v8653 = vpack.c.bf16 %v8580, %v8578
        %v8654 = vpack.c.bf16 %v8585, %v8583
        %v8655 = vpack.c.bf16 %v8590, %v8588
        %v8656 = vpack.c.bf16 %v8595, %v8593
        %v8657 = vpack.c.bf16 %v8600, %v8598
        %v8658 = vpack.c.bf16 %v8605, %v8603
        %v8659 = vpack.c.bf16 %v8610, %v8608
        %v8660 = vpack.c.bf16 %v8615, %v8613
        %v8661 = vpack.c.bf16 %v8620, %v8618
        %v8662 = vpack.c.bf16 %v8625, %v8623
        %v8663 = vpack.c.bf16 %v8630, %v8628
        %v8664 = vpack.c.bf16 %v8635, %v8633
        %v8665 = vpack.c.bf16 %v8640, %v8638
        %v8666 = vpack.c.bf16 %v8645, %v8643
        %v8667 = vpack.c.bf16 %v8650, %v8648
        %s8668 = scalar_lea.vmem [#allocation6], 32
        %v8669 = vld [vmem:[%s8668] sm:$0xf]
        %v8671 = vsel %vm5984, %v8652, 0
        %v8674 = vsel %vm5984, %v8653, 0
        %v8677 = vsel %vm5984, %v8654, 0
        %v8680 = vsel %vm5984, %v8655, 0
        %v8683 = vsel %vm5984, %v8656, 0
        %v8686 = vsel %vm5984, %v8657, 0
        %v8689 = vsel %vm5984, %v8658, 0
        %v8692 = vsel %vm5984, %v8659, 0
        %v8695 = vsel %vm5984, %v8660, 0
        %v8698 = vsel %vm5984, %v8661, 0
        %v8701 = vsel %vm5984, %v8662, 0
        %v8704 = vsel %vm5984, %v8663, 0
        %v8707 = vsel %vm5984, %v8664, 0
        %v8710 = vsel %vm5984, %v8665, 0
        %v8713 = vsel %vm5984, %v8666, 0
        %v8716 = vsel %vm5984, %v8667, 0
        %v8719 = vsel %vm6033, %v8669, 0
        %8721 = vmatpush.bf16.msra.mxu0 0
        %8722 = vmatpush.bf16.msra.mxu0 0
        %8723 = vmatpush.bf16.msra.mxu0 0
        %8724 = vmatpush.bf16.msra.mxu0 0
        %8725 = vmatpush.bf16.msra.mxu0 0
        %8726 = vmatpush.bf16.msra.mxu0 0
        %8727 = vmatpush.bf16.msra.mxu0 0
        %8728 = vmatpush.bf16.msra.mxu0 %v8719
        %8729 = vmatmul.bf16.gmra.mxu0 %v8671
        %v8730 = vpop.f32.mrf.mxu0
        %v8731 = vadd.f32 0.0, %v8730
        %v8732 = vpop.f32.mrf.mxu0
        %v8733 = vadd.f32 0.0, %v8732
        %8734 = vmatmul.bf16.gmra.mxu0 %v8674
        %v8735 = vpop.f32.mrf.mxu0
        %v8736 = vadd.f32 0.0, %v8735
        %v8737 = vpop.f32.mrf.mxu0
        %v8738 = vadd.f32 0.0, %v8737
        %8739 = vmatmul.bf16.gmra.mxu0 %v8677
        %v8740 = vpop.f32.mrf.mxu0
        %v8741 = vadd.f32 0.0, %v8740
        %v8742 = vpop.f32.mrf.mxu0
        %v8743 = vadd.f32 0.0, %v8742
        %8744 = vmatmul.bf16.gmra.mxu0 %v8680
        %v8745 = vpop.f32.mrf.mxu0
        %v8746 = vadd.f32 0.0, %v8745
        %v8747 = vpop.f32.mrf.mxu0
        %v8748 = vadd.f32 0.0, %v8747
        %8749 = vmatmul.bf16.gmra.mxu0 %v8683
        %v8750 = vpop.f32.mrf.mxu0
        %v8751 = vadd.f32 0.0, %v8750
        %v8752 = vpop.f32.mrf.mxu0
        %v8753 = vadd.f32 0.0, %v8752
        %8754 = vmatmul.bf16.gmra.mxu0 %v8686
        %v8755 = vpop.f32.mrf.mxu0
        %v8756 = vadd.f32 0.0, %v8755
        %v8757 = vpop.f32.mrf.mxu0
        %v8758 = vadd.f32 0.0, %v8757
        %8759 = vmatmul.bf16.gmra.mxu0 %v8689
        %v8760 = vpop.f32.mrf.mxu0
        %v8761 = vadd.f32 0.0, %v8760
        %v8762 = vpop.f32.mrf.mxu0
        %v8763 = vadd.f32 0.0, %v8762
        %8764 = vmatmul.bf16.gmra.mxu0 %v8692
        %v8765 = vpop.f32.mrf.mxu0
        %v8766 = vadd.f32 0.0, %v8765
        %v8767 = vpop.f32.mrf.mxu0
        %v8768 = vadd.f32 0.0, %v8767
        %8769 = vmatmul.bf16.gmra.mxu0 %v8695
        %v8770 = vpop.f32.mrf.mxu0
        %v8771 = vadd.f32 0.0, %v8770
        %v8772 = vpop.f32.mrf.mxu0
        %v8773 = vadd.f32 0.0, %v8772
        %8774 = vmatmul.bf16.gmra.mxu0 %v8698
        %v8775 = vpop.f32.mrf.mxu0
        %v8776 = vadd.f32 0.0, %v8775
        %v8777 = vpop.f32.mrf.mxu0
        %v8778 = vadd.f32 0.0, %v8777
        %8779 = vmatmul.bf16.gmra.mxu0 %v8701
        %v8780 = vpop.f32.mrf.mxu0
        %v8781 = vadd.f32 0.0, %v8780
        %v8782 = vpop.f32.mrf.mxu0
        %v8783 = vadd.f32 0.0, %v8782
        %8784 = vmatmul.bf16.gmra.mxu0 %v8704
        %v8785 = vpop.f32.mrf.mxu0
        %v8786 = vadd.f32 0.0, %v8785
        %v8787 = vpop.f32.mrf.mxu0
        %v8788 = vadd.f32 0.0, %v8787
        %8789 = vmatmul.bf16.gmra.mxu0 %v8707
        %v8790 = vpop.f32.mrf.mxu0
        %v8791 = vadd.f32 0.0, %v8790
        %v8792 = vpop.f32.mrf.mxu0
        %v8793 = vadd.f32 0.0, %v8792
        %8794 = vmatmul.bf16.gmra.mxu0 %v8710
        %v8795 = vpop.f32.mrf.mxu0
        %v8796 = vadd.f32 0.0, %v8795
        %v8797 = vpop.f32.mrf.mxu0
        %v8798 = vadd.f32 0.0, %v8797
        %8799 = vmatmul.bf16.gmra.mxu0 %v8713
        %v8800 = vpop.f32.mrf.mxu0
        %v8801 = vadd.f32 0.0, %v8800
        %v8802 = vpop.f32.mrf.mxu0
        %v8803 = vadd.f32 0.0, %v8802
        %8804 = vmatmul.bf16.gmra.mxu0 %v8716
        %v8805 = vpop.f32.mrf.mxu0
        %v8806 = vadd.f32 0.0, %v8805
        %v8807 = vpop.f32.mrf.mxu0
        %v8808 = vadd.f32 0.0, %v8807
        %8809 = vdwg.mxu0
        %v8810 = vadd.f32 %v8442, %v8731
        %v8811 = vadd.f32 %v8443, %v8733
        %v8812 = vadd.f32 %v8444, %v8736
        %v8813 = vadd.f32 %v8445, %v8738
        %v8814 = vadd.f32 %v8446, %v8741
        %v8815 = vadd.f32 %v8447, %v8743
        %v8816 = vadd.f32 %v8448, %v8746
        %v8817 = vadd.f32 %v8449, %v8748
        %v8818 = vadd.f32 %v8450, %v8751
        %v8819 = vadd.f32 %v8451, %v8753
        %v8820 = vadd.f32 %v8452, %v8756
        %v8821 = vadd.f32 %v8453, %v8758
        %v8822 = vadd.f32 %v8454, %v8761
        %v8823 = vadd.f32 %v8455, %v8763
        %v8824 = vadd.f32 %v8456, %v8766
        %v8825 = vadd.f32 %v8457, %v8768
        %v8826 = vadd.f32 %v8458, %v8771
        %v8827 = vadd.f32 %v8459, %v8773
        %v8828 = vadd.f32 %v8460, %v8776
        %v8829 = vadd.f32 %v8461, %v8778
        %v8830 = vadd.f32 %v8462, %v8781
        %v8831 = vadd.f32 %v8463, %v8783
        %v8832 = vadd.f32 %v8464, %v8786
        %v8833 = vadd.f32 %v8465, %v8788
        %v8834 = vadd.f32 %v8466, %v8791
        %v8835 = vadd.f32 %v8467, %v8793
        %v8836 = vadd.f32 %v8468, %v8796
        %v8837 = vadd.f32 %v8469, %v8798
        %v8838 = vadd.f32 %v8470, %v8801
        %v8839 = vadd.f32 %v8471, %v8803
        %v8840 = vadd.f32 %v8472, %v8806
        %v8841 = vadd.f32 %v8473, %v8808
        %v8842 = vld [vmem:[#allocation7] sm:$0x1]
        %v8844 = vperm.slane %v8842, 0
        %v8846 = vadd.f32 %v8810, %v8844
        %v8847 = vadd.f32 %v8811, %v8844
        %v8848 = vadd.f32 %v8812, %v8844
        %v8849 = vadd.f32 %v8813, %v8844
        %v8850 = vadd.f32 %v8814, %v8844
        %v8851 = vadd.f32 %v8815, %v8844
        %v8852 = vadd.f32 %v8816, %v8844
        %v8853 = vadd.f32 %v8817, %v8844
        %v8854 = vadd.f32 %v8818, %v8844
        %v8855 = vadd.f32 %v8819, %v8844
        %v8856 = vadd.f32 %v8820, %v8844
        %v8857 = vadd.f32 %v8821, %v8844
        %v8858 = vadd.f32 %v8822, %v8844
        %v8859 = vadd.f32 %v8823, %v8844
        %v8860 = vadd.f32 %v8824, %v8844
        %v8861 = vadd.f32 %v8825, %v8844
        %v8862 = vadd.f32 %v8826, %v8844
        %v8863 = vadd.f32 %v8827, %v8844
        %v8864 = vadd.f32 %v8828, %v8844
        %v8865 = vadd.f32 %v8829, %v8844
        %v8866 = vadd.f32 %v8830, %v8844
        %v8867 = vadd.f32 %v8831, %v8844
        %v8868 = vadd.f32 %v8832, %v8844
        %v8869 = vadd.f32 %v8833, %v8844
        %v8870 = vadd.f32 %v8834, %v8844
        %v8871 = vadd.f32 %v8835, %v8844
        %v8872 = vadd.f32 %v8836, %v8844
        %v8873 = vadd.f32 %v8837, %v8844
        %v8874 = vadd.f32 %v8838, %v8844
        %v8875 = vadd.f32 %v8839, %v8844
        %v8876 = vadd.f32 %v8840, %v8844
        %v8877 = vadd.f32 %v8841, %v8844
        %vm8878 = vcmp.gt.f32.partialorder %v8846, 0.0
        %vm8879 = vcmp.gt.f32.partialorder %v8847, 0.0
        %vm8880 = vcmp.gt.f32.partialorder %v8848, 0.0
        %vm8881 = vcmp.gt.f32.partialorder %v8849, 0.0
        %vm8882 = vcmp.gt.f32.partialorder %v8850, 0.0
        %vm8883 = vcmp.gt.f32.partialorder %v8851, 0.0
        %vm8884 = vcmp.gt.f32.partialorder %v8852, 0.0
        %vm8885 = vcmp.gt.f32.partialorder %v8853, 0.0
        %vm8886 = vcmp.gt.f32.partialorder %v8854, 0.0
        %vm8887 = vcmp.gt.f32.partialorder %v8855, 0.0
        %vm8888 = vcmp.gt.f32.partialorder %v8856, 0.0
        %vm8889 = vcmp.gt.f32.partialorder %v8857, 0.0
        %vm8890 = vcmp.gt.f32.partialorder %v8858, 0.0
        %vm8891 = vcmp.gt.f32.partialorder %v8859, 0.0
        %vm8892 = vcmp.gt.f32.partialorder %v8860, 0.0
        %vm8893 = vcmp.gt.f32.partialorder %v8861, 0.0
        %vm8894 = vcmp.gt.f32.partialorder %v8862, 0.0
        %vm8895 = vcmp.gt.f32.partialorder %v8863, 0.0
        %vm8896 = vcmp.gt.f32.partialorder %v8864, 0.0
        %vm8897 = vcmp.gt.f32.partialorder %v8865, 0.0
        %vm8898 = vcmp.gt.f32.partialorder %v8866, 0.0
        %vm8899 = vcmp.gt.f32.partialorder %v8867, 0.0
        %vm8900 = vcmp.gt.f32.partialorder %v8868, 0.0
        %vm8901 = vcmp.gt.f32.partialorder %v8869, 0.0
        %vm8902 = vcmp.gt.f32.partialorder %v8870, 0.0
        %vm8903 = vcmp.gt.f32.partialorder %v8871, 0.0
        %vm8904 = vcmp.gt.f32.partialorder %v8872, 0.0
        %vm8905 = vcmp.gt.f32.partialorder %v8873, 0.0
        %vm8906 = vcmp.gt.f32.partialorder %v8874, 0.0
        %vm8907 = vcmp.gt.f32.partialorder %v8875, 0.0
        %vm8908 = vcmp.gt.f32.partialorder %v8876, 0.0
        %vm8909 = vcmp.gt.f32.partialorder %v8877, 0.0
        %v8910 = vmin.f32 %v8846, 0.0
        %v8911 = vmin.f32 %v8847, 0.0
        %v8912 = vmin.f32 %v8848, 0.0
        %v8913 = vmin.f32 %v8849, 0.0
        %v8914 = vmin.f32 %v8850, 0.0
        %v8915 = vmin.f32 %v8851, 0.0
        %v8916 = vmin.f32 %v8852, 0.0
        %v8917 = vmin.f32 %v8853, 0.0
        %v8918 = vmin.f32 %v8854, 0.0
        %v8919 = vmin.f32 %v8855, 0.0
        %v8920 = vmin.f32 %v8856, 0.0
        %v8921 = vmin.f32 %v8857, 0.0
        %v8922 = vmin.f32 %v8858, 0.0
        %v8923 = vmin.f32 %v8859, 0.0
        %v8924 = vmin.f32 %v8860, 0.0
        %v8925 = vmin.f32 %v8861, 0.0
        %v8926 = vmin.f32 %v8862, 0.0
        %v8927 = vmin.f32 %v8863, 0.0
        %v8928 = vmin.f32 %v8864, 0.0
        %v8929 = vmin.f32 %v8865, 0.0
        %v8930 = vmin.f32 %v8866, 0.0
        %v8931 = vmin.f32 %v8867, 0.0
        %v8932 = vmin.f32 %v8868, 0.0
        %v8933 = vmin.f32 %v8869, 0.0
        %v8934 = vmin.f32 %v8870, 0.0
        %v8935 = vmin.f32 %v8871, 0.0
        %v8936 = vmin.f32 %v8872, 0.0
        %v8937 = vmin.f32 %v8873, 0.0
        %v8938 = vmin.f32 %v8874, 0.0
        %v8939 = vmin.f32 %v8875, 0.0
        %v8940 = vmin.f32 %v8876, 0.0
        %v8941 = vmin.f32 %v8877, 0.0
        %v8942 = vmul.f32 %v8910, 1.442695
        %v8943 = vpow.pop %v8942
        %v8944 = vmul.f32 %v8911, 1.442695
        %v8945 = vpow.pop %v8944
        %v8946 = vmul.f32 %v8912, 1.442695
        %v8947 = vpow.pop %v8946
        %v8948 = vmul.f32 %v8913, 1.442695
        %v8949 = vpow.pop %v8948
        %v8950 = vmul.f32 %v8914, 1.442695
        %v8951 = vpow.pop %v8950
        %v8952 = vmul.f32 %v8915, 1.442695
        %v8953 = vpow.pop %v8952
        %v8954 = vmul.f32 %v8916, 1.442695
        %v8955 = vpow.pop %v8954
        %v8956 = vmul.f32 %v8917, 1.442695
        %v8957 = vpow.pop %v8956
        %v8958 = vmul.f32 %v8918, 1.442695
        %v8959 = vpow.pop %v8958
        %v8960 = vmul.f32 %v8919, 1.442695
        %v8961 = vpow.pop %v8960
        %v8962 = vmul.f32 %v8920, 1.442695
        %v8963 = vpow.pop %v8962
        %v8964 = vmul.f32 %v8921, 1.442695
        %v8965 = vpow.pop %v8964
        %v8966 = vmul.f32 %v8922, 1.442695
        %v8967 = vpow.pop %v8966
        %v8968 = vmul.f32 %v8923, 1.442695
        %v8969 = vpow.pop %v8968
        %v8970 = vmul.f32 %v8924, 1.442695
        %v8971 = vpow.pop %v8970
        %v8972 = vmul.f32 %v8925, 1.442695
        %v8973 = vpow.pop %v8972
        %v8974 = vmul.f32 %v8926, 1.442695
        %v8975 = vpow.pop %v8974
        %v8976 = vmul.f32 %v8927, 1.442695
        %v8977 = vpow.pop %v8976
        %v8978 = vmul.f32 %v8928, 1.442695
        %v8979 = vpow.pop %v8978
        %v8980 = vmul.f32 %v8929, 1.442695
        %v8981 = vpow.pop %v8980
        %v8982 = vmul.f32 %v8930, 1.442695
        %v8983 = vpow.pop %v8982
        %v8984 = vmul.f32 %v8931, 1.442695
        %v8985 = vpow.pop %v8984
        %v8986 = vmul.f32 %v8932, 1.442695
        %v8987 = vpow.pop %v8986
        %v8988 = vmul.f32 %v8933, 1.442695
        %v8989 = vpow.pop %v8988
        %v8990 = vmul.f32 %v8934, 1.442695
        %v8991 = vpow.pop %v8990
        %v8992 = vmul.f32 %v8935, 1.442695
        %v8993 = vpow.pop %v8992
        %v8994 = vmul.f32 %v8936, 1.442695
        %v8995 = vpow.pop %v8994
        %v8996 = vmul.f32 %v8937, 1.442695
        %v8997 = vpow.pop %v8996
        %v8998 = vmul.f32 %v8938, 1.442695
        %v8999 = vpow.pop %v8998
        %v9000 = vmul.f32 %v8939, 1.442695
        %v9001 = vpow.pop %v9000
        %v9002 = vmul.f32 %v8940, 1.442695
        %v9003 = vpow.pop %v9002
        %v9004 = vmul.f32 %v8941, 1.442695
        %v9005 = vpow.pop %v9004
        %v9006 = vsub.f32 %v8943, 1.0
        %v9007 = vsub.f32 %v8945, 1.0
        %v9008 = vsub.f32 %v8947, 1.0
        %v9009 = vsub.f32 %v8949, 1.0
        %v9010 = vsub.f32 %v8951, 1.0
        %v9011 = vsub.f32 %v8953, 1.0
        %v9012 = vsub.f32 %v8955, 1.0
        %v9013 = vsub.f32 %v8957, 1.0
        %v9014 = vsub.f32 %v8959, 1.0
        %v9015 = vsub.f32 %v8961, 1.0
        %v9016 = vsub.f32 %v8963, 1.0
        %v9017 = vsub.f32 %v8965, 1.0
        %v9018 = vsub.f32 %v8967, 1.0
        %v9019 = vsub.f32 %v8969, 1.0
        %v9020 = vsub.f32 %v8971, 1.0
        %v9021 = vsub.f32 %v8973, 1.0
        %v9022 = vsub.f32 %v8975, 1.0
        %v9023 = vsub.f32 %v8977, 1.0
        %v9024 = vsub.f32 %v8979, 1.0
        %v9025 = vsub.f32 %v8981, 1.0
        %v9026 = vsub.f32 %v8983, 1.0
        %v9027 = vsub.f32 %v8985, 1.0
        %v9028 = vsub.f32 %v8987, 1.0
        %v9029 = vsub.f32 %v8989, 1.0
        %v9030 = vsub.f32 %v8991, 1.0
        %v9031 = vsub.f32 %v8993, 1.0
        %v9032 = vsub.f32 %v8995, 1.0
        %v9033 = vsub.f32 %v8997, 1.0
        %v9034 = vsub.f32 %v8999, 1.0
        %v9035 = vsub.f32 %v9001, 1.0
        %v9036 = vsub.f32 %v9003, 1.0
        %v9037 = vsub.f32 %v9005, 1.0
        %v9038 = vsel %vm8878, %v8846, %v9006
        %v9039 = vsel %vm8879, %v8847, %v9007
        %v9040 = vsel %vm8880, %v8848, %v9008
        %v9041 = vsel %vm8881, %v8849, %v9009
        %v9042 = vsel %vm8882, %v8850, %v9010
        %v9043 = vsel %vm8883, %v8851, %v9011
        %v9044 = vsel %vm8884, %v8852, %v9012
        %v9045 = vsel %vm8885, %v8853, %v9013
        %v9046 = vsel %vm8886, %v8854, %v9014
        %v9047 = vsel %vm8887, %v8855, %v9015
        %v9048 = vsel %vm8888, %v8856, %v9016
        %v9049 = vsel %vm8889, %v8857, %v9017
        %v9050 = vsel %vm8890, %v8858, %v9018
        %v9051 = vsel %vm8891, %v8859, %v9019
        %v9052 = vsel %vm8892, %v8860, %v9020
        %v9053 = vsel %vm8893, %v8861, %v9021
        %v9054 = vsel %vm8894, %v8862, %v9022
        %v9055 = vsel %vm8895, %v8863, %v9023
        %v9056 = vsel %vm8896, %v8864, %v9024
        %v9057 = vsel %vm8897, %v8865, %v9025
        %v9058 = vsel %vm8898, %v8866, %v9026
        %v9059 = vsel %vm8899, %v8867, %v9027
        %v9060 = vsel %vm8900, %v8868, %v9028
        %v9061 = vsel %vm8901, %v8869, %v9029
        %v9062 = vsel %vm8902, %v8870, %v9030
        %v9063 = vsel %vm8903, %v8871, %v9031
        %v9064 = vsel %vm8904, %v8872, %v9032
        %v9065 = vsel %vm8905, %v8873, %v9033
        %v9066 = vsel %vm8906, %v8874, %v9034
        %v9067 = vsel %vm8907, %v8875, %v9035
        %v9068 = vsel %vm8908, %v8876, %v9036
        %v9069 = vsel %vm8909, %v8877, %v9037
        %9070 = vst [vmem:[%s314] sm:$0xff] %v9038
        %9071 = vst [vmem:[%s314 + $0x8] sm:$0xff] %v9039
        %9072 = vst [vmem:[%s314 + $0x10] sm:$0xff] %v9040
        %9073 = vst [vmem:[%s314 + $0x18] sm:$0xff] %v9041
        %9074 = vst [vmem:[%s314 + $0x20] sm:$0xff] %v9042
        %9075 = vst [vmem:[%s314 + $0x28] sm:$0xff] %v9043
        %9076 = vst [vmem:[%s314 + $0x30] sm:$0xff] %v9044
        %9077 = vst [vmem:[%s314 + $0x38] sm:$0xff] %v9045
        %9078 = vst [vmem:[%s314 + $0x40] sm:$0xff] %v9046
        %9079 = vst [vmem:[%s314 + $0x48] sm:$0xff] %v9047
        %9080 = vst [vmem:[%s314 + $0x50] sm:$0xff] %v9048
        %9081 = vst [vmem:[%s314 + $0x58] sm:$0xff] %v9049
        %9082 = vst [vmem:[%s314 + $0x60] sm:$0xff] %v9050
        %9083 = vst [vmem:[%s314 + $0x68] sm:$0xff] %v9051
        %9084 = vst [vmem:[%s314 + $0x70] sm:$0xff] %v9052
        %9085 = vst [vmem:[%s314 + $0x78] sm:$0xff] %v9053
        %9086 = vst [vmem:[%s314 + $0x80] sm:$0xff] %v9054
        %9087 = vst [vmem:[%s314 + $0x88] sm:$0xff] %v9055
        %9088 = vst [vmem:[%s314 + $0x90] sm:$0xff] %v9056
        %9089 = vst [vmem:[%s314 + $0x98] sm:$0xff] %v9057
        %9090 = vst [vmem:[%s314 + $0xa0] sm:$0xff] %v9058
        %9091 = vst [vmem:[%s314 + $0xa8] sm:$0xff] %v9059
        %9092 = vst [vmem:[%s314 + $0xb0] sm:$0xff] %v9060
        %9093 = vst [vmem:[%s314 + $0xb8] sm:$0xff] %v9061
        %9094 = vst [vmem:[%s314 + $0xc0] sm:$0xff] %v9062
        %9095 = vst [vmem:[%s314 + $0xc8] sm:$0xff] %v9063
        %9096 = vst [vmem:[%s314 + $0xd0] sm:$0xff] %v9064
        %9097 = vst [vmem:[%s314 + $0xd8] sm:$0xff] %v9065
        %9098 = vst [vmem:[%s314 + $0xe0] sm:$0xff] %v9066
        %9099 = vst [vmem:[%s314 + $0xe8] sm:$0xff] %v9067
        %9100 = vst [vmem:[%s314 + $0xf0] sm:$0xff] %v9068
        %9101 = vst [vmem:[%s314 + $0xf8] sm:$0xff] %v9069
        %p9102 = scmp.lt.s32.totalorder %s20, 1
        %s9103 = scalar_select %p9102, %s20, 1
        %s9104 = smul.addr %s9103, 32
        %s9105 = smul.addr %s9104, 8
        %s9106 = scalar_lea.vmem %s6, %s9105
        // Predicated region
        $region61: #{cnn_forward.1} parent=43 // pred_check
          %p9107 = pneg %p169
        $region62: #{cnn_forward.1} parent=43 // pred_check_branch
          %9109 = sbr.rel (%p9107) target = $region64
        $region63: #{cnn_forward.1} parent=43 // pred_region
          _
        $region64: #{cnn_forward.1} parent=43 // pred_fallthru
          _
      $region44: #{cnn_forward.1} parent=5 // pred_fallthru
        _
      %p9110 = scmp.le.s32.totalorder 2, %s15
      // Predicated region
      $region65: #{cnn_forward.1} parent=5 // pred_check
        %p9111 = pneg %p9110
      $region66: #{cnn_forward.1} parent=5 // pred_check_branch
        %9113 = sbr.rel (%p9111) target = $region68
      $region67: #{cnn_forward.1} parent=5 // pred_region
        %s9114 = ssub.s32 %s15, 2
        // Predicated region
        $region69: #{cnn_forward.1} parent=67 // pred_check
          %p9115 = pneg %p175
        $region70: #{cnn_forward.1} parent=67 // pred_check_branch
          %9117 = sbr.rel (%p9115) target = $region72
        $region71: #{cnn_forward.1} parent=67 // pred_region
          %p9118 = scmp.lt.s32.totalorder %s21, 1
          %s9119 = scalar_select %p9118, %s21, 1
          %s9120 = smul.addr %s9119, 32
          %s9121 = smul.addr %s9120, 8
          %s9122 = scalar_lea.vmem %s6, %s9121
        $region72: #{cnn_forward.1} parent=67 // pred_fallthru
          _
      $region68: #{cnn_forward.1} parent=5 // pred_fallthru
        _
    $region6: #{cnn_forward.1} parent=1 // loop_footer
      %s19 = sadd.s32 1, %s15
    $region7: #{cnn_forward.1} parent=1 // loop_footer_branch
      %14 = sbr.rel target = $region3
    $region8: #{cnn_forward.1} parent=1 // loop_exit
      _
    %9123 = vsyncpa [#allocation3], 1
    %s9124 = scalar_lea.sflag [#allocation3], 1
    %9125 = vsyncpa %s9124, 1
    %9126 = vsyncpa [#allocation5], 1
    %9127 = vsyncpa [#allocation8], 1

</llo_original>
